<compile_context>
chip_gen: v6e
topology: v6e:2x2x1
jax: 0.10.0
libtpu: 0.0.40
codegen_flags: <defaults>
</compile_context>

<pallas_src>
import functools

import jax
import jax.numpy as jnp
import numpy as np
from jax.experimental import pallas as pl
from jax.experimental.pallas import tpu as pltpu


LANES = 128  # lane width of the packed parameter buffer


# -----------------------------------------------------------------------------
# Packed parameter layout (shared by host-side packing and in-kernel unpacking)
# -----------------------------------------------------------------------------
def build_param_layout(model_dim, hidden_dim):
    """Row layout of one layer's parameters inside the packed (ROWS, 128) buffer.

    Every parameter gets an 8-row-aligned slot starting at lane 0, so in-kernel
    unpacking is a static ref slice.  Returns (name -> (row_off, rows, cols),
    rows_per_layer).
    """
    E, H = model_dim, hidden_dim
    assert E <= LANES and 2 * E <= LANES and H <= LANES, "packed lane width exceeded"
    layout = {}
    off = 0

    def slot(name, r, c):
        nonlocal off
        layout[name] = (off, r, c)
        off += -(-r // 8) * 8  # 8-row aligned slots

    for blk in ("a1", "a2"):
        slot(f"{blk}_wq", E, E)         # Q projection (softmax scale folded in)
        slot(f"{blk}_wkv", E, 2 * E)    # fused K|V projection
        slot(f"{blk}_wo", E, E)         # output projection
        slot(f"{blk}_bq", 1, E)
        slot(f"{blk}_bkv", 1, 2 * E)
        slot(f"{blk}_bo", 1, E)
        slot(f"{blk}_g", 1, E)          # AddNorm LayerNorm gamma
        slot(f"{blk}_be", 1, E)         # AddNorm LayerNorm beta
    slot("ff_w1", E, H)
    slot("ff_w2", H, E)
    slot("ff_b1", 1, H)
    slot("ff_b2", 1, E)
    slot("ff_g", 1, E)
    slot("ff_be", 1, E)
    return layout, off


def pack_stack_params(layer_dicts, layout, rows_per_layer):
    rows = len(layer_dicts) * rows_per_layer
    buf = np.zeros((rows, LANES), np.float32)
    for l, pd in enumerate(layer_dicts):
        base = l * rows_per_layer
        for name, (off, r, c) in layout.items():
            buf[base + off:base + off + r, :c] = (
                np.asarray(pd[name], np.float32).reshape(r, c))
    return buf


# -----------------------------------------------------------------------------
# In-kernel building blocks (pure functions on values loaded from refs)
# -----------------------------------------------------------------------------
def _layer_norm(y, gamma, beta, eps=1e-5):
    mu = jnp.mean(y, axis=-1, keepdims=True)
    var = jnp.mean((y - mu) ** 2, axis=-1, keepdims=True)
    return (y - mu) * jax.lax.rsqrt(var + eps) * gamma + beta


def _mha_addnorm(x, mod, mask, wq, bq, wkv, bkv, wo, bo, g, be, *, num_heads):
    """LayerNorm(x + MHA(x, mod, mod)) with batch folded into rows.

    x:    (L*B, E) query / residual rows (row = l*B + b)
    mod:  (S*B, E) key == value source rows
    mask: (L*B, S*B) additive cross-batch mask (0 same batch, -1e30 otherwise)
    wq/bq already carry the 1/sqrt(head_dim) scale; wkv is the fused (E, 2E)
    K|V projection.  Dropout == identity (eval mode).
    """
    LB, E = x.shape
    SB = mod.shape[0]
    hd = E // num_heads

    q = jnp.dot(x, wq, preferred_element_type=jnp.float32) + bq        # (LB, E)
    kv = jnp.dot(mod, wkv, preferred_element_type=jnp.float32) + bkv   # (SB, 2E)
    k = kv[:, :E]
    v = kv[:, E:]

    # Head-major form once: (rows, E) -> (rows, nh, hd) -> (nh, rows, hd).
    qh = pltpu.einshape("mhd->hmd", q.reshape(LB, num_heads, hd))
    kh = pltpu.einshape("mhd->hmd", k.reshape(SB, num_heads, hd))
    vh = pltpu.einshape("mhd->hmd", v.reshape(SB, num_heads, hd))

    # All heads in one batched einsum; cross-batch pairs masked out.
    s = jnp.einsum("hqd,hkd->hqk", qh, kh,
                   preferred_element_type=jnp.float32) + mask          # (nh, LB, SB)
    s = s - jnp.max(s, axis=-1, keepdims=True)
    e = jnp.exp(s)
    p = e / jnp.sum(e, axis=-1, keepdims=True)      # exact softmax (torch parity)
    ctx = jnp.einsum("hqk,hkd->hqd", p, vh,
                     preferred_element_type=jnp.float32)               # (nh, LB, hd)

    # Back to token-major (heads contiguous on lanes) and ONE Wo matmul.
    ctx = pltpu.einshape("hmd->mhd", ctx).reshape(LB, E)
    y = x + jnp.dot(ctx, wo, preferred_element_type=jnp.float32) + bo
    return _layer_norm(y, g, be)


def _ff_addnorm(x, w1, b1, w2, b2, g, be):
    """LayerNorm(x + Linear2(ReLU(Linear1(x)))), x: (L*B, E)."""
    h = jnp.maximum(jnp.dot(x, w1, preferred_element_type=jnp.float32) + b1, 0.0)
    y = x + jnp.dot(h, w2, preferred_element_type=jnp.float32) + b2
    return _layer_norm(y, g, be)


# -----------------------------------------------------------------------------
# The single fused model kernel: grid step = one MultiAttn stack
# -----------------------------------------------------------------------------
def model_kernel(t_ref, a_ref, v_ref, p_ref, o_ref, fav_ref, *,
                 num_heads, num_layers, layout, rows_per_layer, B):
    i = pl.program_id(0)

    # Keep the fused_av scratch well-defined before its first (unused) read.
    @pl.when(i == 0)
    def _():
        fav_ref[...] = jnp.zeros_like(fav_ref)

    t = t_ref[...]
    a = a_ref[...]
    v = v_ref[...]
    fav = fav_ref[...]
    LB, E = t.shape
    SB = LB

    # Per-grid-step input routing (tiny arrays; VPU selects are cheap):
    #   step 0: audio_visual  q=audio,    A=visual,   B=visual
    #   step 1: text          q=text,     A=fused_av, B=fused_av
    #   step 2: audio         q=fused_av, A=text,     B=fused_av
    #   step 3: visual        q=fused_av, A=visual,   B=fused_av
    q_in = jnp.where(i == 0, a, jnp.where(i == 1, t, fav))
    mod_a = jnp.where(i == 0, v, jnp.where(i == 2, t, jnp.where(i == 3, v, fav)))
    mod_b = jnp.where(i == 0, v, fav)

    # Cross-batch additive mask: rows are (L, B)-flattened, so batch = row % B.
    rq = jax.lax.broadcasted_iota(jnp.int32, (LB, SB), 0)
    rk = jax.lax.broadcasted_iota(jnp.int32, (LB, SB), 1)
    mask = jnp.where((rq % B) == (rk % B), 0.0, -1e30).astype(jnp.float32)

    def get(l, name):  # static slice into the packed parameter block
        off, r, c = layout[name]
        base = l * rows_per_layer + off
        return p_ref[base:base + r, :c]

    x = q_in
    for l in range(num_layers):  # static unroll (fine at depth 2; use fori_loop if this grows)
        x = _mha_addnorm(x, mod_a, mask,
                         get(l, "a1_wq"), get(l, "a1_bq"), get(l, "a1_wkv"),
                         get(l, "a1_bkv"), get(l, "a1_wo"), get(l, "a1_bo"),
                         get(l, "a1_g"), get(l, "a1_be"), num_heads=num_heads)
        x = _mha_addnorm(x, mod_b, mask,
                         get(l, "a2_wq"), get(l, "a2_bq"), get(l, "a2_wkv"),
                         get(l, "a2_bkv"), get(l, "a2_wo"), get(l, "a2_bo"),
                         get(l, "a2_g"), get(l, "a2_be"), num_heads=num_heads)
        x = _ff_addnorm(x, get(l, "ff_w1"), get(l, "ff_b1"), get(l, "ff_w2"),
                        get(l, "ff_b2"), get(l, "ff_g"), get(l, "ff_be"))

    o_ref[...] = x.astype(o_ref.dtype)

    # Park the audio_visual result in VMEM for the following three grid steps.
    @pl.when(i == 0)
    def _():
        fav_ref[...] = x


# -----------------------------------------------------------------------------
# Wrapper: one pallas_call for the whole MultiAttnModel forward pass
# -----------------------------------------------------------------------------
def multiattn_model_forward(packed_params, text, audio, visual, *,
                            num_heads, num_layers, hidden_dim):
    # Public I/O follows PyTorch nn.MultiheadAttention default: (L, B, E).
    L, B, E = text.shape
    assert E % num_heads == 0
    LB = L * B
    layout, rows_per_layer = build_param_layout(E, hidden_dim)
    rows = num_layers * rows_per_layer
    assert packed_params.shape == (4, rows, LANES)

    # Contiguous (row-major) flatten; no transposes needed anywhere.
    t2 = text.reshape(LB, E)
    a2 = audio.reshape(LB, E)
    v2 = visual.reshape(LB, E)

    kernel = functools.partial(
        model_kernel, num_heads=num_heads, num_layers=num_layers,
        layout=layout, rows_per_layer=rows_per_layer, B=B)

    out = pl.pallas_call(
        kernel,
        out_shape=jax.ShapeDtypeStruct((4, LB, E), jnp.float32),
        grid=(4,),
        in_specs=[
            pl.BlockSpec((LB, E), lambda i: (0, 0)),               # text
            pl.BlockSpec((LB, E), lambda i: (0, 0)),               # audio
            pl.BlockSpec((LB, E), lambda i: (0, 0)),               # visual
            pl.BlockSpec((None, rows, LANES), lambda i: (i, 0, 0)),  # packed params (1 DMA/step)
        ],
        out_specs=pl.BlockSpec((None, LB, E), lambda i: (i, 0, 0)),
        scratch_shapes=[pltpu.VMEM((LB, E), jnp.float32)],          # fused_av, persists across steps
        compiler_params=pltpu.CompilerParams(
            # Sequential: step 0 produces fused_av consumed by steps 1-3.
            dimension_semantics=("arbitrary",)),
    )(t2, a2, v2, packed_params)

    # Slot 0 is fused_audio_visual (kept only as a scratch mirror); 1..3 are the
    # model outputs in (L*B, E) row order -> contiguous reshape back to (L, B, E).
    return (out[1].reshape(L, B, E),
            out[2].reshape(L, B, E),
            out[3].reshape(L, B, E))


# -----------------------------------------------------------------------------
# Deterministic synthetic parameter initialization (mirrors the module shapes)
# -----------------------------------------------------------------------------
def init_mha_params(key, E, num_heads):
    hd = E // num_heads
    scale = 1.0 / (hd ** 0.5)
    ks = jax.random.split(key, 4)
    in_w = jax.random.normal(ks[0], (3 * E, E), jnp.float32) * 0.05   # in_proj (3E, E)
    in_b = jax.random.normal(ks[1], (3 * E,), jnp.float32) * 0.05
    out_w = jax.random.normal(ks[2], (E, E), jnp.float32) * 0.05      # out_proj (E, E)
    out_b = jax.random.normal(ks[3], (E,), jnp.float32) * 0.05
    wq, wk, wv = jnp.split(in_w, 3, axis=0)
    bq, bk, bv = jnp.split(in_b, 3)
    return {
        "wq": wq.T * scale,                        # softmax scale folded into Q proj
        "bq": bq * scale,
        "wkv": jnp.concatenate([wk.T, wv.T], 1),   # fused (E, 2E) K|V projection
        "bkv": jnp.concatenate([bk, bv]),
        "wo": out_w.T,
        "bo": out_b,
        "g": jnp.ones((E,), jnp.float32),
        "be": jnp.zeros((E,), jnp.float32),
    }


def init_layer_params(key, E, H, num_heads):
    k1, k2, k3 = jax.random.split(key, 3)
    a1 = init_mha_params(k1, E, num_heads)
    a2 = init_mha_params(k2, E, num_heads)
    ks = jax.random.split(k3, 4)
    p = {f"a1_{k}": v for k, v in a1.items()}
    p.update({f"a2_{k}": v for k, v in a2.items()})
    p.update({
        "ff_w1": (jax.random.normal(ks[0], (H, E), jnp.float32) * 0.05).T,
        "ff_b1": jax.random.normal(ks[1], (H,), jnp.float32) * 0.05,
        "ff_w2": (jax.random.normal(ks[2], (E, H), jnp.float32) * 0.05).T,
        "ff_b2": jax.random.normal(ks[3], (E,), jnp.float32) * 0.05,
        "ff_g": jnp.ones((E,), jnp.float32),
        "ff_be": jnp.zeros((E,), jnp.float32),
    })
    return p


def init_model_params(key, num_layers, E, H, num_heads):
    """Returns the packed (4, ROWS, 128) buffer.

    Stack order matches grid steps: 0=audio_visual, 1=text, 2=audio, 3=visual.
    """
    layout, rows_per_layer = build_param_layout(E, H)
    stacks = []
    for k_stack in jax.random.split(key, 4):
        layer_dicts = [init_layer_params(kl, E, H, num_heads)
                       for kl in jax.random.split(k_stack, num_layers)]
        stacks.append(pack_stack_params(layer_dicts, layout, rows_per_layer))
    return jnp.asarray(np.stack(stacks, 0))


# -----------------------------------------------------------------------------
if __name__ == "__main__":
    num_layers = 2
    model_dim = 32
    num_heads = 4
    hidden_dim = 64
    dropout_rate = 0.1      # eval mode => dropout is identity inside the kernel
    L, B = 8, 2

    key = jax.random.PRNGKey(0)
    k_params, k_text, k_audio, k_visual = jax.random.split(key, 4)

    packed_params = init_model_params(k_params, num_layers, model_dim,
                                      hidden_dim, num_heads)

    text_features = jax.random.normal(k_text, (L, B, model_dim), jnp.float32)
    audio_features = jax.random.normal(k_audio, (L, B, model_dim), jnp.float32)
    visual_features = jax.random.normal(k_visual, (L, B, model_dim), jnp.float32)

    fwd = jax.jit(functools.partial(
        multiattn_model_forward, num_heads=num_heads,
        num_layers=num_layers, hidden_dim=hidden_dim))

    fused_text, fused_audio, fused_visual = fwd(
        packed_params, text_features, audio_features, visual_features)
    jax.block_until_ready((fused_text, fused_audio, fused_visual))

    assert fused_text.shape == (L, B, model_dim)
    assert fused_audio.shape == (L, B, model_dim)
    assert fused_visual.shape == (L, B, model_dim)
    print("KERNEL_OK")
</pallas_src>

<mosaic_0001>
module attributes {stable_mosaic.version = 11 : i64} {
  func.func @model_kernel(%arg0: i32, %arg1: memref<16x32xf32, #tpu.memory_space<vmem>>, %arg2: memref<16x32xf32, #tpu.memory_space<vmem>>, %arg3: memref<16x32xf32, #tpu.memory_space<vmem>>, %arg4: memref<1x800x128xf32, #tpu.memory_space<vmem>>, %arg5: memref<1x16x32xf32, #tpu.memory_space<vmem>>, %arg6: memref<16x32xf32, #tpu.memory_space<vmem>>) attributes {dimension_semantics = [#tpu.dimension_semantics<arbitrary>], iteration_bounds = array<i64: 4>, scalar_prefetch = 0 : i64, scratch_operands = 1 : i64, tpu.core_type = #tpu.core_type<tc>, window_params = [{pipeline_mode = #tpu.pipeline_mode<synchronous>, transform_indices = @transform_0, window_bounds = array<i64: 16, 32>}, {pipeline_mode = #tpu.pipeline_mode<synchronous>, transform_indices = @transform_1, window_bounds = array<i64: 16, 32>}, {pipeline_mode = #tpu.pipeline_mode<synchronous>, transform_indices = @transform_2, window_bounds = array<i64: 16, 32>}, {transform_indices = @transform_3, window_bounds = array<i64: 1, 800, 128>}, {transform_indices = @transform_4, window_bounds = array<i64: 1, 16, 32>}]} {
    %c0_i32 = arith.constant 0 : i32
    %0 = arith.cmpi eq, %arg0, %c0_i32 : i32
    %1 = arith.extui %0 : i1 to i32
    %c0_i32_0 = arith.constant 0 : i32
    %2 = arith.cmpi ne, %1, %c0_i32_0 : i32
    scf.if %2 {
      %cst_182 = arith.constant 0.000000e+00 : f32
      %437 = vector.broadcast %cst_182 : f32 to vector<16x32xf32>
      %c0_183 = arith.constant 0 : index
      %c0_184 = arith.constant 0 : index
      %438 = vector.load %arg6[%c0_183, %c0_184] : memref<16x32xf32, #tpu.memory_space<vmem>>, vector<16x32xf32>
      tpu.vector_store %arg6[%c0_183, %c0_184], %437 {strides = array<i32>} : memref<16x32xf32, #tpu.memory_space<vmem>>, vector<16x32xf32>,
    } else {
    }
    %c0 = arith.constant 0 : index
    %c0_1 = arith.constant 0 : index
    %3 = vector.load %arg1[%c0, %c0_1] : memref<16x32xf32, #tpu.memory_space<vmem>>, vector<16x32xf32>
    %c0_2 = arith.constant 0 : index
    %c0_3 = arith.constant 0 : index
    %4 = vector.load %arg2[%c0_2, %c0_3] : memref<16x32xf32, #tpu.memory_space<vmem>>, vector<16x32xf32>
    %c0_4 = arith.constant 0 : index
    %c0_5 = arith.constant 0 : index
    %5 = vector.load %arg3[%c0_4, %c0_5] : memref<16x32xf32, #tpu.memory_space<vmem>>, vector<16x32xf32>
    %c0_6 = arith.constant 0 : index
    %c0_7 = arith.constant 0 : index
    %6 = vector.load %arg6[%c0_6, %c0_7] : memref<16x32xf32, #tpu.memory_space<vmem>>, vector<16x32xf32>
    %c0_i32_8 = arith.constant 0 : i32
    %7 = arith.cmpi eq, %arg0, %c0_i32_8 : i32
    %c1_i32 = arith.constant 1 : i32
    %8 = arith.cmpi eq, %arg0, %c1_i32 : i32
    %9 = arith.select %8, %3, %6 : vector<16x32xf32>
    %10 = arith.select %7, %4, %9 : vector<16x32xf32>
    %c0_i32_9 = arith.constant 0 : i32
    %11 = arith.cmpi eq, %arg0, %c0_i32_9 : i32
    %c2_i32 = arith.constant 2 : i32
    %12 = arith.cmpi eq, %arg0, %c2_i32 : i32
    %c3_i32 = arith.constant 3 : i32
    %13 = arith.cmpi eq, %arg0, %c3_i32 : i32
    %14 = arith.select %13, %5, %6 : vector<16x32xf32>
    %15 = arith.select %12, %3, %14 : vector<16x32xf32>
    %16 = arith.select %11, %5, %15 : vector<16x32xf32>
    %c0_i32_10 = arith.constant 0 : i32
    %17 = arith.cmpi eq, %arg0, %c0_i32_10 : i32
    %18 = arith.select %17, %5, %6 : vector<16x32xf32>
    %19 = tpu.iota {dimensions = array<i32: 0>} : vector<16x16xi32>
    %20 = tpu.iota {dimensions = array<i32: 1>} : vector<16x16xi32>
    %c2_i32_11 = arith.constant 2 : i32
    %c0_i32_12 = arith.constant 0 : i32
    %21 = arith.cmpi eq, %c2_i32_11, %c0_i32_12 : i32
    %c1_i32_13 = arith.constant 1 : i32
    %22 = arith.select %21, %c1_i32_13, %c2_i32_11 : i32
    %23 = vector.broadcast %22 : i32 to vector<16x16xi32>
    %24 = arith.remsi %19, %23 : vector<16x16xi32>
    %c0_i32_14 = arith.constant 0 : i32
    %25 = vector.broadcast %c0_i32_14 : i32 to vector<16x16xi32>
    %26 = arith.cmpi ne, %24, %25 : vector<16x16xi32>
    %c0_i32_15 = arith.constant 0 : i32
    %27 = vector.broadcast %c0_i32_15 : i32 to vector<16x16xi32>
    %28 = arith.cmpi slt, %24, %27 : vector<16x16xi32>
    %c0_i32_16 = arith.constant 0 : i32
    %29 = arith.cmpi slt, %22, %c0_i32_16 : i32
    %30 = vector.broadcast %29 : i1 to vector<16x16xi1>
    %31 = vector.broadcast %30 : vector<16x16xi1> to vector<16x16xi1>
    %32 = arith.xori %28, %31 : vector<16x16xi1>
    %33 = arith.andi %32, %26 : vector<16x16xi1>
    %34 = vector.broadcast %22 : i32 to vector<16x16xi32>
    %35 = arith.addi %24, %34 : vector<16x16xi32>
    %36 = arith.select %33, %35, %24 : vector<16x16xi1>, vector<16x16xi32>
    %c2_i32_17 = arith.constant 2 : i32
    %c0_i32_18 = arith.constant 0 : i32
    %37 = arith.cmpi eq, %c2_i32_17, %c0_i32_18 : i32
    %c1_i32_19 = arith.constant 1 : i32
    %38 = arith.select %37, %c1_i32_19, %c2_i32_17 : i32
    %39 = vector.broadcast %38 : i32 to vector<16x16xi32>
    %40 = arith.remsi %20, %39 : vector<16x16xi32>
    %c0_i32_20 = arith.constant 0 : i32
    %41 = vector.broadcast %c0_i32_20 : i32 to vector<16x16xi32>
    %42 = arith.cmpi ne, %40, %41 : vector<16x16xi32>
    %c0_i32_21 = arith.constant 0 : i32
    %43 = vector.broadcast %c0_i32_21 : i32 to vector<16x16xi32>
    %44 = arith.cmpi slt, %40, %43 : vector<16x16xi32>
    %c0_i32_22 = arith.constant 0 : i32
    %45 = arith.cmpi slt, %38, %c0_i32_22 : i32
    %46 = vector.broadcast %45 : i1 to vector<16x16xi1>
    %47 = vector.broadcast %46 : vector<16x16xi1> to vector<16x16xi1>
    %48 = arith.xori %44, %47 : vector<16x16xi1>
    %49 = arith.andi %48, %42 : vector<16x16xi1>
    %50 = vector.broadcast %38 : i32 to vector<16x16xi32>
    %51 = arith.addi %40, %50 : vector<16x16xi32>
    %52 = arith.select %49, %51, %40 : vector<16x16xi1>, vector<16x16xi32>
    %53 = arith.cmpi eq, %36, %52 : vector<16x16xi32>
    %cst = arith.constant 0.000000e+00 : f32
    %cst_23 = arith.constant -1.000000e+30 : f32
    %54 = vector.broadcast %cst : f32 to vector<16x16xf32>
    %55 = vector.broadcast %cst_23 : f32 to vector<16x16xf32>
    %56 = arith.select %53, %54, %55 : vector<16x16xi1>, vector<16x16xf32>
    %c0_24 = arith.constant 0 : index
    %c0_25 = arith.constant 0 : index
    %c0_26 = arith.constant 0 : index
    %57 = vector.load %arg4[%c0_24, %c0_25, %c0_26] : memref<1x800x128xf32, #tpu.memory_space<vmem>>, vector<1x32x32xf32>
    %58 = vector.shape_cast %57 : vector<1x32x32xf32> to vector<32x32xf32>
    %c0_27 = arith.constant 0 : index
    %c96 = arith.constant 96 : index
    %c0_28 = arith.constant 0 : index
    %59 = vector.load %arg4[%c0_27, %c96, %c0_28] : memref<1x800x128xf32, #tpu.memory_space<vmem>>, vector<1x1x32xf32>
    %60 = vector.shape_cast %59 : vector<1x1x32xf32> to vector<1x32xf32>
    %c0_29 = arith.constant 0 : index
    %c32 = arith.constant 32 : index
    %c0_30 = arith.constant 0 : index
    %61 = vector.load %arg4[%c0_29, %c32, %c0_30] : memref<1x800x128xf32, #tpu.memory_space<vmem>>, vector<1x32x64xf32>
    %62 = vector.shape_cast %61 : vector<1x32x64xf32> to vector<32x64xf32>
    %c0_31 = arith.constant 0 : index
    %c104 = arith.constant 104 : index
    %c0_32 = arith.constant 0 : index
    %63 = vector.load %arg4[%c0_31, %c104, %c0_32] : memref<1x800x128xf32, #tpu.memory_space<vmem>>, vector<1x1x64xf32>
    %64 = vector.shape_cast %63 : vector<1x1x64xf32> to vector<1x64xf32>
    %c0_33 = arith.constant 0 : index
    %c64 = arith.constant 64 : index
    %c0_34 = arith.constant 0 : index
    %65 = vector.load %arg4[%c0_33, %c64, %c0_34] : memref<1x800x128xf32, #tpu.memory_space<vmem>>, vector<1x32x32xf32>
    %66 = vector.shape_cast %65 : vector<1x32x32xf32> to vector<32x32xf32>
    %c0_35 = arith.constant 0 : index
    %c112 = arith.constant 112 : index
    %c0_36 = arith.constant 0 : index
    %67 = vector.load %arg4[%c0_35, %c112, %c0_36] : memref<1x800x128xf32, #tpu.memory_space<vmem>>, vector<1x1x32xf32>
    %68 = vector.shape_cast %67 : vector<1x1x32xf32> to vector<1x32xf32>
    %c0_37 = arith.constant 0 : index
    %c120 = arith.constant 120 : index
    %c0_38 = arith.constant 0 : index
    %69 = vector.load %arg4[%c0_37, %c120, %c0_38] : memref<1x800x128xf32, #tpu.memory_space<vmem>>, vector<1x1x32xf32>
    %70 = vector.shape_cast %69 : vector<1x1x32xf32> to vector<1x32xf32>
    %c0_39 = arith.constant 0 : index
    %c128 = arith.constant 128 : index
    %c0_40 = arith.constant 0 : index
    %71 = vector.load %arg4[%c0_39, %c128, %c0_40] : memref<1x800x128xf32, #tpu.memory_space<vmem>>, vector<1x1x32xf32>
    %72 = vector.shape_cast %71 : vector<1x1x32xf32> to vector<1x32xf32>
    %cst_41 = arith.constant dense<0.000000e+00> : vector<16x32xf32>
    %73 = tpu.matmul %10, %58, %cst_41 {dimension_numbers = #tpu.dot_dimension_numbers<[1], [0], [0], [1], [0, 0, 1, 1], [], []>} : vector<16x32xf32>, vector<32x32xf32>, vector<16x32xf32> -> vector<16x32xf32>
    %74 = vector.broadcast %60 : vector<1x32xf32> to vector<16x32xf32>
    %75 = arith.addf %73, %74 : vector<16x32xf32>
    %cst_42 = arith.constant dense<0.000000e+00> : vector<16x64xf32>
    %76 = tpu.matmul %16, %62, %cst_42 {dimension_numbers = #tpu.dot_dimension_numbers<[1], [0], [0], [1], [0, 0, 1, 1], [], []>} : vector<16x32xf32>, vector<32x64xf32>, vector<16x64xf32> -> vector<16x64xf32>
    %77 = vector.broadcast %64 : vector<1x64xf32> to vector<16x64xf32>
    %78 = arith.addf %76, %77 : vector<16x64xf32>
    %79 = vector.extract_strided_slice %78 {offsets = [0, 0], sizes = [16, 32], strides = [1, 1]} : vector<16x64xf32> to vector<16x32xf32>
    %80 = vector.extract_strided_slice %78 {offsets = [0, 32], sizes = [16, 32], strides = [1, 1]} : vector<16x64xf32> to vector<16x32xf32>
    %81 = vector.shape_cast %75 : vector<16x32xf32> to vector<16x4x8xf32>
    %82 = tpu.transpose %81, [1, 0, 2] : vector<16x4x8xf32> -> vector<4x16x8xf32>
    %83 = vector.shape_cast %79 : vector<16x32xf32> to vector<16x4x8xf32>
    %84 = tpu.transpose %83, [1, 0, 2] : vector<16x4x8xf32> -> vector<4x16x8xf32>
    %85 = vector.shape_cast %80 : vector<16x32xf32> to vector<16x4x8xf32>
    %86 = tpu.transpose %85, [1, 0, 2] : vector<16x4x8xf32> -> vector<4x16x8xf32>
    "tpu.trace_start"() <{level = 10 : i32, message = "hqd,hkd->hqk"}> : () -> ()
    %cst_43 = arith.constant dense<0.000000e+00> : vector<4x16x16xf32>
    %87 = tpu.matmul %82, %84, %cst_43 {dimension_numbers = #tpu.dot_dimension_numbers<[2], [2], [1], [1], [0, 0, 0, 1, 1, 1], [0], [0]>} : vector<4x16x8xf32>, vector<4x16x8xf32>, vector<4x16x16xf32> -> vector<4x16x16xf32>
    "tpu.trace_stop"() : () -> ()
    %88 = vector.shape_cast %56 : vector<16x16xf32> to vector<1x16x16xf32>
    %89 = vector.broadcast %88 : vector<1x16x16xf32> to vector<4x16x16xf32>
    %90 = arith.addf %87, %89 : vector<4x16x16xf32>
    %cst_44 = arith.constant dense<0xFF800000> : vector<4x16xf32>
    %91 = vector.multi_reduction <maximumf>, %90, %cst_44 [2] : vector<4x16x16xf32> to vector<4x16xf32>
    %92 = vector.shape_cast %91 : vector<4x16xf32> to vector<4x16x1xf32>
    %93 = vector.broadcast %92 : vector<4x16x1xf32> to vector<4x16x16xf32>
    %94 = arith.subf %90, %93 : vector<4x16x16xf32>
    %95 = math.exp %94 : vector<4x16x16xf32>
    %cst_45 = arith.constant dense<0.000000e+00> : vector<4x16xf32>
    %96 = vector.multi_reduction <add>, %95, %cst_45 [2] : vector<4x16x16xf32> to vector<4x16xf32>
    %97 = vector.shape_cast %96 : vector<4x16xf32> to vector<4x16x1xf32>
    %98 = vector.broadcast %97 : vector<4x16x1xf32> to vector<4x16x16xf32>
    %99 = arith.divf %95, %98 : vector<4x16x16xf32>
    "tpu.trace_start"() <{level = 10 : i32, message = "hqk,hkd->hqd"}> : () -> ()
    %cst_46 = arith.constant dense<0.000000e+00> : vector<4x16x8xf32>
    %100 = tpu.matmul %99, %86, %cst_46 {dimension_numbers = #tpu.dot_dimension_numbers<[2], [1], [1], [2], [0, 0, 0, 1, 1, 2], [0], [0]>} : vector<4x16x16xf32>, vector<4x16x8xf32>, vector<4x16x8xf32> -> vector<4x16x8xf32>
    "tpu.trace_stop"() : () -> ()
    %101 = tpu.transpose %100, [1, 0, 2] : vector<4x16x8xf32> -> vector<16x4x8xf32>
    %102 = vector.shape_cast %101 : vector<16x4x8xf32> to vector<16x32xf32>
    %cst_47 = arith.constant dense<0.000000e+00> : vector<16x32xf32>
    %103 = tpu.matmul %102, %66, %cst_47 {dimension_numbers = #tpu.dot_dimension_numbers<[1], [0], [0], [1], [0, 0, 1, 1], [], []>} : vector<16x32xf32>, vector<32x32xf32>, vector<16x32xf32> -> vector<16x32xf32>
    %104 = arith.addf %10, %103 : vector<16x32xf32>
    %105 = vector.broadcast %68 : vector<1x32xf32> to vector<16x32xf32>
    %106 = arith.addf %104, %105 : vector<16x32xf32>
    %cst_48 = arith.constant dense<0.000000e+00> : vector<16xf32>
    %107 = vector.multi_reduction <add>, %106, %cst_48 [1] : vector<16x32xf32> to vector<16xf32>
    %108 = vector.shape_cast %107 : vector<16xf32> to vector<16x1xf32>
    %cst_49 = arith.constant 3.200000e+01 : f32
    %109 = vector.broadcast %cst_49 : f32 to vector<16x1xf32>
    %110 = arith.divf %108, %109 : vector<16x1xf32>
    %111 = vector.broadcast %110 : vector<16x1xf32> to vector<16x32xf32>
    %112 = arith.subf %106, %111 : vector<16x32xf32>
    %113 = arith.mulf %112, %112 : vector<16x32xf32>
    %cst_50 = arith.constant dense<0.000000e+00> : vector<16xf32>
    %114 = vector.multi_reduction <add>, %113, %cst_50 [1] : vector<16x32xf32> to vector<16xf32>
    %115 = vector.shape_cast %114 : vector<16xf32> to vector<16x1xf32>
    %cst_51 = arith.constant 3.200000e+01 : f32
    %116 = vector.broadcast %cst_51 : f32 to vector<16x1xf32>
    %117 = arith.divf %115, %116 : vector<16x1xf32>
    %118 = vector.broadcast %110 : vector<16x1xf32> to vector<16x32xf32>
    %119 = arith.subf %106, %118 : vector<16x32xf32>
    %cst_52 = arith.constant 9.99999974E-6 : f32
    %120 = vector.broadcast %cst_52 : f32 to vector<16x1xf32>
    %121 = arith.addf %117, %120 : vector<16x1xf32>
    %122 = math.rsqrt %121 : vector<16x1xf32>
    %123 = vector.broadcast %122 : vector<16x1xf32> to vector<16x32xf32>
    %124 = arith.mulf %119, %123 : vector<16x32xf32>
    %125 = vector.broadcast %70 : vector<1x32xf32> to vector<16x32xf32>
    %126 = arith.mulf %124, %125 : vector<16x32xf32>
    %127 = vector.broadcast %72 : vector<1x32xf32> to vector<16x32xf32>
    %128 = arith.addf %126, %127 : vector<16x32xf32>
    %c0_53 = arith.constant 0 : index
    %c136 = arith.constant 136 : index
    %c0_54 = arith.constant 0 : index
    %129 = vector.load %arg4[%c0_53, %c136, %c0_54] : memref<1x800x128xf32, #tpu.memory_space<vmem>>, vector<1x32x32xf32>
    %130 = vector.shape_cast %129 : vector<1x32x32xf32> to vector<32x32xf32>
    %c0_55 = arith.constant 0 : index
    %c232 = arith.constant 232 : index
    %c0_56 = arith.constant 0 : index
    %131 = vector.load %arg4[%c0_55, %c232, %c0_56] : memref<1x800x128xf32, #tpu.memory_space<vmem>>, vector<1x1x32xf32>
    %132 = vector.shape_cast %131 : vector<1x1x32xf32> to vector<1x32xf32>
    %c0_57 = arith.constant 0 : index
    %c168 = arith.constant 168 : index
    %c0_58 = arith.constant 0 : index
    %133 = vector.load %arg4[%c0_57, %c168, %c0_58] : memref<1x800x128xf32, #tpu.memory_space<vmem>>, vector<1x32x64xf32>
    %134 = vector.shape_cast %133 : vector<1x32x64xf32> to vector<32x64xf32>
    %c0_59 = arith.constant 0 : index
    %c240 = arith.constant 240 : index
    %c0_60 = arith.constant 0 : index
    %135 = vector.load %arg4[%c0_59, %c240, %c0_60] : memref<1x800x128xf32, #tpu.memory_space<vmem>>, vector<1x1x64xf32>
    %136 = vector.shape_cast %135 : vector<1x1x64xf32> to vector<1x64xf32>
    %c0_61 = arith.constant 0 : index
    %c200 = arith.constant 200 : index
    %c0_62 = arith.constant 0 : index
    %137 = vector.load %arg4[%c0_61, %c200, %c0_62] : memref<1x800x128xf32, #tpu.memory_space<vmem>>, vector<1x32x32xf32>
    %138 = vector.shape_cast %137 : vector<1x32x32xf32> to vector<32x32xf32>
    %c0_63 = arith.constant 0 : index
    %c248 = arith.constant 248 : index
    %c0_64 = arith.constant 0 : index
    %139 = vector.load %arg4[%c0_63, %c248, %c0_64] : memref<1x800x128xf32, #tpu.memory_space<vmem>>, vector<1x1x32xf32>
    %140 = vector.shape_cast %139 : vector<1x1x32xf32> to vector<1x32xf32>
    %c0_65 = arith.constant 0 : index
    %c256 = arith.constant 256 : index
    %c0_66 = arith.constant 0 : index
    %141 = vector.load %arg4[%c0_65, %c256, %c0_66] : memref<1x800x128xf32, #tpu.memory_space<vmem>>, vector<1x1x32xf32>
    %142 = vector.shape_cast %141 : vector<1x1x32xf32> to vector<1x32xf32>
    %c0_67 = arith.constant 0 : index
    %c264 = arith.constant 264 : index
    %c0_68 = arith.constant 0 : index
    %143 = vector.load %arg4[%c0_67, %c264, %c0_68] : memref<1x800x128xf32, #tpu.memory_space<vmem>>, vector<1x1x32xf32>
    %144 = vector.shape_cast %143 : vector<1x1x32xf32> to vector<1x32xf32>
    %cst_69 = arith.constant dense<0.000000e+00> : vector<16x32xf32>
    %145 = tpu.matmul %128, %130, %cst_69 {dimension_numbers = #tpu.dot_dimension_numbers<[1], [0], [0], [1], [0, 0, 1, 1], [], []>} : vector<16x32xf32>, vector<32x32xf32>, vector<16x32xf32> -> vector<16x32xf32>
    %146 = vector.broadcast %132 : vector<1x32xf32> to vector<16x32xf32>
    %147 = arith.addf %145, %146 : vector<16x32xf32>
    %cst_70 = arith.constant dense<0.000000e+00> : vector<16x64xf32>
    %148 = tpu.matmul %18, %134, %cst_70 {dimension_numbers = #tpu.dot_dimension_numbers<[1], [0], [0], [1], [0, 0, 1, 1], [], []>} : vector<16x32xf32>, vector<32x64xf32>, vector<16x64xf32> -> vector<16x64xf32>
    %149 = vector.broadcast %136 : vector<1x64xf32> to vector<16x64xf32>
    %150 = arith.addf %148, %149 : vector<16x64xf32>
    %151 = vector.extract_strided_slice %150 {offsets = [0, 0], sizes = [16, 32], strides = [1, 1]} : vector<16x64xf32> to vector<16x32xf32>
    %152 = vector.extract_strided_slice %150 {offsets = [0, 32], sizes = [16, 32], strides = [1, 1]} : vector<16x64xf32> to vector<16x32xf32>
    %153 = vector.shape_cast %147 : vector<16x32xf32> to vector<16x4x8xf32>
    %154 = tpu.transpose %153, [1, 0, 2] : vector<16x4x8xf32> -> vector<4x16x8xf32>
    %155 = vector.shape_cast %151 : vector<16x32xf32> to vector<16x4x8xf32>
    %156 = tpu.transpose %155, [1, 0, 2] : vector<16x4x8xf32> -> vector<4x16x8xf32>
    %157 = vector.shape_cast %152 : vector<16x32xf32> to vector<16x4x8xf32>
    %158 = tpu.transpose %157, [1, 0, 2] : vector<16x4x8xf32> -> vector<4x16x8xf32>
    "tpu.trace_start"() <{level = 10 : i32, message = "hqd,hkd->hqk"}> : () -> ()
    %cst_71 = arith.constant dense<0.000000e+00> : vector<4x16x16xf32>
    %159 = tpu.matmul %154, %156, %cst_71 {dimension_numbers = #tpu.dot_dimension_numbers<[2], [2], [1], [1], [0, 0, 0, 1, 1, 1], [0], [0]>} : vector<4x16x8xf32>, vector<4x16x8xf32>, vector<4x16x16xf32> -> vector<4x16x16xf32>
    "tpu.trace_stop"() : () -> ()
    %160 = vector.shape_cast %56 : vector<16x16xf32> to vector<1x16x16xf32>
    %161 = vector.broadcast %160 : vector<1x16x16xf32> to vector<4x16x16xf32>
    %162 = arith.addf %159, %161 : vector<4x16x16xf32>
    %cst_72 = arith.constant dense<0xFF800000> : vector<4x16xf32>
    %163 = vector.multi_reduction <maximumf>, %162, %cst_72 [2] : vector<4x16x16xf32> to vector<4x16xf32>
    %164 = vector.shape_cast %163 : vector<4x16xf32> to vector<4x16x1xf32>
    %165 = vector.broadcast %164 : vector<4x16x1xf32> to vector<4x16x16xf32>
    %166 = arith.subf %162, %165 : vector<4x16x16xf32>
    %167 = math.exp %166 : vector<4x16x16xf32>
    %cst_73 = arith.constant dense<0.000000e+00> : vector<4x16xf32>
    %168 = vector.multi_reduction <add>, %167, %cst_73 [2] : vector<4x16x16xf32> to vector<4x16xf32>
    %169 = vector.shape_cast %168 : vector<4x16xf32> to vector<4x16x1xf32>
    %170 = vector.broadcast %169 : vector<4x16x1xf32> to vector<4x16x16xf32>
    %171 = arith.divf %167, %170 : vector<4x16x16xf32>
    "tpu.trace_start"() <{level = 10 : i32, message = "hqk,hkd->hqd"}> : () -> ()
    %cst_74 = arith.constant dense<0.000000e+00> : vector<4x16x8xf32>
    %172 = tpu.matmul %171, %158, %cst_74 {dimension_numbers = #tpu.dot_dimension_numbers<[2], [1], [1], [2], [0, 0, 0, 1, 1, 2], [0], [0]>} : vector<4x16x16xf32>, vector<4x16x8xf32>, vector<4x16x8xf32> -> vector<4x16x8xf32>
    "tpu.trace_stop"() : () -> ()
    %173 = tpu.transpose %172, [1, 0, 2] : vector<4x16x8xf32> -> vector<16x4x8xf32>
    %174 = vector.shape_cast %173 : vector<16x4x8xf32> to vector<16x32xf32>
    %cst_75 = arith.constant dense<0.000000e+00> : vector<16x32xf32>
    %175 = tpu.matmul %174, %138, %cst_75 {dimension_numbers = #tpu.dot_dimension_numbers<[1], [0], [0], [1], [0, 0, 1, 1], [], []>} : vector<16x32xf32>, vector<32x32xf32>, vector<16x32xf32> -> vector<16x32xf32>
    %176 = arith.addf %128, %175 : vector<16x32xf32>
    %177 = vector.broadcast %140 : vector<1x32xf32> to vector<16x32xf32>
    %178 = arith.addf %176, %177 : vector<16x32xf32>
    %cst_76 = arith.constant dense<0.000000e+00> : vector<16xf32>
    %179 = vector.multi_reduction <add>, %178, %cst_76 [1] : vector<16x32xf32> to vector<16xf32>
    %180 = vector.shape_cast %179 : vector<16xf32> to vector<16x1xf32>
    %cst_77 = arith.constant 3.200000e+01 : f32
    %181 = vector.broadcast %cst_77 : f32 to vector<16x1xf32>
    %182 = arith.divf %180, %181 : vector<16x1xf32>
    %183 = vector.broadcast %182 : vector<16x1xf32> to vector<16x32xf32>
    %184 = arith.subf %178, %183 : vector<16x32xf32>
    %185 = arith.mulf %184, %184 : vector<16x32xf32>
    %cst_78 = arith.constant dense<0.000000e+00> : vector<16xf32>
    %186 = vector.multi_reduction <add>, %185, %cst_78 [1] : vector<16x32xf32> to vector<16xf32>
    %187 = vector.shape_cast %186 : vector<16xf32> to vector<16x1xf32>
    %cst_79 = arith.constant 3.200000e+01 : f32
    %188 = vector.broadcast %cst_79 : f32 to vector<16x1xf32>
    %189 = arith.divf %187, %188 : vector<16x1xf32>
    %190 = vector.broadcast %182 : vector<16x1xf32> to vector<16x32xf32>
    %191 = arith.subf %178, %190 : vector<16x32xf32>
    %cst_80 = arith.constant 9.99999974E-6 : f32
    %192 = vector.broadcast %cst_80 : f32 to vector<16x1xf32>
    %193 = arith.addf %189, %192 : vector<16x1xf32>
    %194 = math.rsqrt %193 : vector<16x1xf32>
    %195 = vector.broadcast %194 : vector<16x1xf32> to vector<16x32xf32>
    %196 = arith.mulf %191, %195 : vector<16x32xf32>
    %197 = vector.broadcast %142 : vector<1x32xf32> to vector<16x32xf32>
    %198 = arith.mulf %196, %197 : vector<16x32xf32>
    %199 = vector.broadcast %144 : vector<1x32xf32> to vector<16x32xf32>
    %200 = arith.addf %198, %199 : vector<16x32xf32>
    %c0_81 = arith.constant 0 : index
    %c272 = arith.constant 272 : index
    %c0_82 = arith.constant 0 : index
    %201 = vector.load %arg4[%c0_81, %c272, %c0_82] : memref<1x800x128xf32, #tpu.memory_space<vmem>>, vector<1x32x64xf32>
    %202 = vector.shape_cast %201 : vector<1x32x64xf32> to vector<32x64xf32>
    %c0_83 = arith.constant 0 : index
    %c368 = arith.constant 368 : index
    %c0_84 = arith.constant 0 : index
    %203 = vector.load %arg4[%c0_83, %c368, %c0_84] : memref<1x800x128xf32, #tpu.memory_space<vmem>>, vector<1x1x64xf32>
    %204 = vector.shape_cast %203 : vector<1x1x64xf32> to vector<1x64xf32>
    %c0_85 = arith.constant 0 : index
    %c304 = arith.constant 304 : index
    %c0_86 = arith.constant 0 : index
    %205 = vector.load %arg4[%c0_85, %c304, %c0_86] : memref<1x800x128xf32, #tpu.memory_space<vmem>>, vector<1x64x32xf32>
    %206 = vector.shape_cast %205 : vector<1x64x32xf32> to vector<64x32xf32>
    %c0_87 = arith.constant 0 : index
    %c376 = arith.constant 376 : index
    %c0_88 = arith.constant 0 : index
    %207 = vector.load %arg4[%c0_87, %c376, %c0_88] : memref<1x800x128xf32, #tpu.memory_space<vmem>>, vector<1x1x32xf32>
    %208 = vector.shape_cast %207 : vector<1x1x32xf32> to vector<1x32xf32>
    %c0_89 = arith.constant 0 : index
    %c384 = arith.constant 384 : index
    %c0_90 = arith.constant 0 : index
    %209 = vector.load %arg4[%c0_89, %c384, %c0_90] : memref<1x800x128xf32, #tpu.memory_space<vmem>>, vector<1x1x32xf32>
    %210 = vector.shape_cast %209 : vector<1x1x32xf32> to vector<1x32xf32>
    %c0_91 = arith.constant 0 : index
    %c392 = arith.constant 392 : index
    %c0_92 = arith.constant 0 : index
    %211 = vector.load %arg4[%c0_91, %c392, %c0_92] : memref<1x800x128xf32, #tpu.memory_space<vmem>>, vector<1x1x32xf32>
    %212 = vector.shape_cast %211 : vector<1x1x32xf32> to vector<1x32xf32>
    %cst_93 = arith.constant dense<0.000000e+00> : vector<16x64xf32>
    %213 = tpu.matmul %200, %202, %cst_93 {dimension_numbers = #tpu.dot_dimension_numbers<[1], [0], [0], [1], [0, 0, 1, 1], [], []>} : vector<16x32xf32>, vector<32x64xf32>, vector<16x64xf32> -> vector<16x64xf32>
    %214 = vector.broadcast %204 : vector<1x64xf32> to vector<16x64xf32>
    %215 = arith.addf %213, %214 : vector<16x64xf32>
    %cst_94 = arith.constant 0.000000e+00 : f32
    %216 = vector.broadcast %cst_94 : f32 to vector<16x64xf32>
    %217 = arith.maximumf %215, %216 : vector<16x64xf32>
    %cst_95 = arith.constant dense<0.000000e+00> : vector<16x32xf32>
    %218 = tpu.matmul %217, %206, %cst_95 {dimension_numbers = #tpu.dot_dimension_numbers<[1], [0], [0], [1], [0, 0, 1, 1], [], []>} : vector<16x64xf32>, vector<64x32xf32>, vector<16x32xf32> -> vector<16x32xf32>
    %219 = arith.addf %200, %218 : vector<16x32xf32>
    %220 = vector.broadcast %208 : vector<1x32xf32> to vector<16x32xf32>
    %221 = arith.addf %219, %220 : vector<16x32xf32>
    %cst_96 = arith.constant dense<0.000000e+00> : vector<16xf32>
    %222 = vector.multi_reduction <add>, %221, %cst_96 [1] : vector<16x32xf32> to vector<16xf32>
    %223 = vector.shape_cast %222 : vector<16xf32> to vector<16x1xf32>
    %cst_97 = arith.constant 3.200000e+01 : f32
    %224 = vector.broadcast %cst_97 : f32 to vector<16x1xf32>
    %225 = arith.divf %223, %224 : vector<16x1xf32>
    %226 = vector.broadcast %225 : vector<16x1xf32> to vector<16x32xf32>
    %227 = arith.subf %221, %226 : vector<16x32xf32>
    %228 = arith.mulf %227, %227 : vector<16x32xf32>
    %cst_98 = arith.constant dense<0.000000e+00> : vector<16xf32>
    %229 = vector.multi_reduction <add>, %228, %cst_98 [1] : vector<16x32xf32> to vector<16xf32>
    %230 = vector.shape_cast %229 : vector<16xf32> to vector<16x1xf32>
    %cst_99 = arith.constant 3.200000e+01 : f32
    %231 = vector.broadcast %cst_99 : f32 to vector<16x1xf32>
    %232 = arith.divf %230, %231 : vector<16x1xf32>
    %233 = vector.broadcast %225 : vector<16x1xf32> to vector<16x32xf32>
    %234 = arith.subf %221, %233 : vector<16x32xf32>
    %cst_100 = arith.constant 9.99999974E-6 : f32
    %235 = vector.broadcast %cst_100 : f32 to vector<16x1xf32>
    %236 = arith.addf %232, %235 : vector<16x1xf32>
    %237 = math.rsqrt %236 : vector<16x1xf32>
    %238 = vector.broadcast %237 : vector<16x1xf32> to vector<16x32xf32>
    %239 = arith.mulf %234, %238 : vector<16x32xf32>
    %240 = vector.broadcast %210 : vector<1x32xf32> to vector<16x32xf32>
    %241 = arith.mulf %239, %240 : vector<16x32xf32>
    %242 = vector.broadcast %212 : vector<1x32xf32> to vector<16x32xf32>
    %243 = arith.addf %241, %242 : vector<16x32xf32>
    %c0_101 = arith.constant 0 : index
    %c400 = arith.constant 400 : index
    %c0_102 = arith.constant 0 : index
    %244 = vector.load %arg4[%c0_101, %c400, %c0_102] : memref<1x800x128xf32, #tpu.memory_space<vmem>>, vector<1x32x32xf32>
    %245 = vector.shape_cast %244 : vector<1x32x32xf32> to vector<32x32xf32>
    %c0_103 = arith.constant 0 : index
    %c496 = arith.constant 496 : index
    %c0_104 = arith.constant 0 : index
    %246 = vector.load %arg4[%c0_103, %c496, %c0_104] : memref<1x800x128xf32, #tpu.memory_space<vmem>>, vector<1x1x32xf32>
    %247 = vector.shape_cast %246 : vector<1x1x32xf32> to vector<1x32xf32>
    %c0_105 = arith.constant 0 : index
    %c432 = arith.constant 432 : index
    %c0_106 = arith.constant 0 : index
    %248 = vector.load %arg4[%c0_105, %c432, %c0_106] : memref<1x800x128xf32, #tpu.memory_space<vmem>>, vector<1x32x64xf32>
    %249 = vector.shape_cast %248 : vector<1x32x64xf32> to vector<32x64xf32>
    %c0_107 = arith.constant 0 : index
    %c504 = arith.constant 504 : index
    %c0_108 = arith.constant 0 : index
    %250 = vector.load %arg4[%c0_107, %c504, %c0_108] : memref<1x800x128xf32, #tpu.memory_space<vmem>>, vector<1x1x64xf32>
    %251 = vector.shape_cast %250 : vector<1x1x64xf32> to vector<1x64xf32>
    %c0_109 = arith.constant 0 : index
    %c464 = arith.constant 464 : index
    %c0_110 = arith.constant 0 : index
    %252 = vector.load %arg4[%c0_109, %c464, %c0_110] : memref<1x800x128xf32, #tpu.memory_space<vmem>>, vector<1x32x32xf32>
    %253 = vector.shape_cast %252 : vector<1x32x32xf32> to vector<32x32xf32>
    %c0_111 = arith.constant 0 : index
    %c512 = arith.constant 512 : index
    %c0_112 = arith.constant 0 : index
    %254 = vector.load %arg4[%c0_111, %c512, %c0_112] : memref<1x800x128xf32, #tpu.memory_space<vmem>>, vector<1x1x32xf32>
    %255 = vector.shape_cast %254 : vector<1x1x32xf32> to vector<1x32xf32>
    %c0_113 = arith.constant 0 : index
    %c520 = arith.constant 520 : index
    %c0_114 = arith.constant 0 : index
    %256 = vector.load %arg4[%c0_113, %c520, %c0_114] : memref<1x800x128xf32, #tpu.memory_space<vmem>>, vector<1x1x32xf32>
    %257 = vector.shape_cast %256 : vector<1x1x32xf32> to vector<1x32xf32>
    %c0_115 = arith.constant 0 : index
    %c528 = arith.constant 528 : index
    %c0_116 = arith.constant 0 : index
    %258 = vector.load %arg4[%c0_115, %c528, %c0_116] : memref<1x800x128xf32, #tpu.memory_space<vmem>>, vector<1x1x32xf32>
    %259 = vector.shape_cast %258 : vector<1x1x32xf32> to vector<1x32xf32>
    %cst_117 = arith.constant dense<0.000000e+00> : vector<16x32xf32>
    %260 = tpu.matmul %243, %245, %cst_117 {dimension_numbers = #tpu.dot_dimension_numbers<[1], [0], [0], [1], [0, 0, 1, 1], [], []>} : vector<16x32xf32>, vector<32x32xf32>, vector<16x32xf32> -> vector<16x32xf32>
    %261 = vector.broadcast %247 : vector<1x32xf32> to vector<16x32xf32>
    %262 = arith.addf %260, %261 : vector<16x32xf32>
    %cst_118 = arith.constant dense<0.000000e+00> : vector<16x64xf32>
    %263 = tpu.matmul %16, %249, %cst_118 {dimension_numbers = #tpu.dot_dimension_numbers<[1], [0], [0], [1], [0, 0, 1, 1], [], []>} : vector<16x32xf32>, vector<32x64xf32>, vector<16x64xf32> -> vector<16x64xf32>
    %264 = vector.broadcast %251 : vector<1x64xf32> to vector<16x64xf32>
    %265 = arith.addf %263, %264 : vector<16x64xf32>
    %266 = vector.extract_strided_slice %265 {offsets = [0, 0], sizes = [16, 32], strides = [1, 1]} : vector<16x64xf32> to vector<16x32xf32>
    %267 = vector.extract_strided_slice %265 {offsets = [0, 32], sizes = [16, 32], strides = [1, 1]} : vector<16x64xf32> to vector<16x32xf32>
    %268 = vector.shape_cast %262 : vector<16x32xf32> to vector<16x4x8xf32>
    %269 = tpu.transpose %268, [1, 0, 2] : vector<16x4x8xf32> -> vector<4x16x8xf32>
    %270 = vector.shape_cast %266 : vector<16x32xf32> to vector<16x4x8xf32>
    %271 = tpu.transpose %270, [1, 0, 2] : vector<16x4x8xf32> -> vector<4x16x8xf32>
    %272 = vector.shape_cast %267 : vector<16x32xf32> to vector<16x4x8xf32>
    %273 = tpu.transpose %272, [1, 0, 2] : vector<16x4x8xf32> -> vector<4x16x8xf32>
    "tpu.trace_start"() <{level = 10 : i32, message = "hqd,hkd->hqk"}> : () -> ()
    %cst_119 = arith.constant dense<0.000000e+00> : vector<4x16x16xf32>
    %274 = tpu.matmul %269, %271, %cst_119 {dimension_numbers = #tpu.dot_dimension_numbers<[2], [2], [1], [1], [0, 0, 0, 1, 1, 1], [0], [0]>} : vector<4x16x8xf32>, vector<4x16x8xf32>, vector<4x16x16xf32> -> vector<4x16x16xf32>
    "tpu.trace_stop"() : () -> ()
    %275 = vector.shape_cast %56 : vector<16x16xf32> to vector<1x16x16xf32>
    %276 = vector.broadcast %275 : vector<1x16x16xf32> to vector<4x16x16xf32>
    %277 = arith.addf %274, %276 : vector<4x16x16xf32>
    %cst_120 = arith.constant dense<0xFF800000> : vector<4x16xf32>
    %278 = vector.multi_reduction <maximumf>, %277, %cst_120 [2] : vector<4x16x16xf32> to vector<4x16xf32>
    %279 = vector.shape_cast %278 : vector<4x16xf32> to vector<4x16x1xf32>
    %280 = vector.broadcast %279 : vector<4x16x1xf32> to vector<4x16x16xf32>
    %281 = arith.subf %277, %280 : vector<4x16x16xf32>
    %282 = math.exp %281 : vector<4x16x16xf32>
    %cst_121 = arith.constant dense<0.000000e+00> : vector<4x16xf32>
    %283 = vector.multi_reduction <add>, %282, %cst_121 [2] : vector<4x16x16xf32> to vector<4x16xf32>
    %284 = vector.shape_cast %283 : vector<4x16xf32> to vector<4x16x1xf32>
    %285 = vector.broadcast %284 : vector<4x16x1xf32> to vector<4x16x16xf32>
    %286 = arith.divf %282, %285 : vector<4x16x16xf32>
    "tpu.trace_start"() <{level = 10 : i32, message = "hqk,hkd->hqd"}> : () -> ()
    %cst_122 = arith.constant dense<0.000000e+00> : vector<4x16x8xf32>
    %287 = tpu.matmul %286, %273, %cst_122 {dimension_numbers = #tpu.dot_dimension_numbers<[2], [1], [1], [2], [0, 0, 0, 1, 1, 2], [0], [0]>} : vector<4x16x16xf32>, vector<4x16x8xf32>, vector<4x16x8xf32> -> vector<4x16x8xf32>
    "tpu.trace_stop"() : () -> ()
    %288 = tpu.transpose %287, [1, 0, 2] : vector<4x16x8xf32> -> vector<16x4x8xf32>
    %289 = vector.shape_cast %288 : vector<16x4x8xf32> to vector<16x32xf32>
    %cst_123 = arith.constant dense<0.000000e+00> : vector<16x32xf32>
    %290 = tpu.matmul %289, %253, %cst_123 {dimension_numbers = #tpu.dot_dimension_numbers<[1], [0], [0], [1], [0, 0, 1, 1], [], []>} : vector<16x32xf32>, vector<32x32xf32>, vector<16x32xf32> -> vector<16x32xf32>
    %291 = arith.addf %243, %290 : vector<16x32xf32>
    %292 = vector.broadcast %255 : vector<1x32xf32> to vector<16x32xf32>
    %293 = arith.addf %291, %292 : vector<16x32xf32>
    %cst_124 = arith.constant dense<0.000000e+00> : vector<16xf32>
    %294 = vector.multi_reduction <add>, %293, %cst_124 [1] : vector<16x32xf32> to vector<16xf32>
    %295 = vector.shape_cast %294 : vector<16xf32> to vector<16x1xf32>
    %cst_125 = arith.constant 3.200000e+01 : f32
    %296 = vector.broadcast %cst_125 : f32 to vector<16x1xf32>
    %297 = arith.divf %295, %296 : vector<16x1xf32>
    %298 = vector.broadcast %297 : vector<16x1xf32> to vector<16x32xf32>
    %299 = arith.subf %293, %298 : vector<16x32xf32>
    %300 = arith.mulf %299, %299 : vector<16x32xf32>
    %cst_126 = arith.constant dense<0.000000e+00> : vector<16xf32>
    %301 = vector.multi_reduction <add>, %300, %cst_126 [1] : vector<16x32xf32> to vector<16xf32>
    %302 = vector.shape_cast %301 : vector<16xf32> to vector<16x1xf32>
    %cst_127 = arith.constant 3.200000e+01 : f32
    %303 = vector.broadcast %cst_127 : f32 to vector<16x1xf32>
    %304 = arith.divf %302, %303 : vector<16x1xf32>
    %305 = vector.broadcast %297 : vector<16x1xf32> to vector<16x32xf32>
    %306 = arith.subf %293, %305 : vector<16x32xf32>
    %cst_128 = arith.constant 9.99999974E-6 : f32
    %307 = vector.broadcast %cst_128 : f32 to vector<16x1xf32>
    %308 = arith.addf %304, %307 : vector<16x1xf32>
    %309 = math.rsqrt %308 : vector<16x1xf32>
    %310 = vector.broadcast %309 : vector<16x1xf32> to vector<16x32xf32>
    %311 = arith.mulf %306, %310 : vector<16x32xf32>
    %312 = vector.broadcast %257 : vector<1x32xf32> to vector<16x32xf32>
    %313 = arith.mulf %311, %312 : vector<16x32xf32>
    %314 = vector.broadcast %259 : vector<1x32xf32> to vector<16x32xf32>
    %315 = arith.addf %313, %314 : vector<16x32xf32>
    %c0_129 = arith.constant 0 : index
    %c536 = arith.constant 536 : index
    %c0_130 = arith.constant 0 : index
    %316 = vector.load %arg4[%c0_129, %c536, %c0_130] : memref<1x800x128xf32, #tpu.memory_space<vmem>>, vector<1x32x32xf32>
    %317 = vector.shape_cast %316 : vector<1x32x32xf32> to vector<32x32xf32>
    %c0_131 = arith.constant 0 : index
    %c632 = arith.constant 632 : index
    %c0_132 = arith.constant 0 : index
    %318 = vector.load %arg4[%c0_131, %c632, %c0_132] : memref<1x800x128xf32, #tpu.memory_space<vmem>>, vector<1x1x32xf32>
    %319 = vector.shape_cast %318 : vector<1x1x32xf32> to vector<1x32xf32>
    %c0_133 = arith.constant 0 : index
    %c568 = arith.constant 568 : index
    %c0_134 = arith.constant 0 : index
    %320 = vector.load %arg4[%c0_133, %c568, %c0_134] : memref<1x800x128xf32, #tpu.memory_space<vmem>>, vector<1x32x64xf32>
    %321 = vector.shape_cast %320 : vector<1x32x64xf32> to vector<32x64xf32>
    %c0_135 = arith.constant 0 : index
    %c640 = arith.constant 640 : index
    %c0_136 = arith.constant 0 : index
    %322 = vector.load %arg4[%c0_135, %c640, %c0_136] : memref<1x800x128xf32, #tpu.memory_space<vmem>>, vector<1x1x64xf32>
    %323 = vector.shape_cast %322 : vector<1x1x64xf32> to vector<1x64xf32>
    %c0_137 = arith.constant 0 : index
    %c600 = arith.constant 600 : index
    %c0_138 = arith.constant 0 : index
    %324 = vector.load %arg4[%c0_137, %c600, %c0_138] : memref<1x800x128xf32, #tpu.memory_space<vmem>>, vector<1x32x32xf32>
    %325 = vector.shape_cast %324 : vector<1x32x32xf32> to vector<32x32xf32>
    %c0_139 = arith.constant 0 : index
    %c648 = arith.constant 648 : index
    %c0_140 = arith.constant 0 : index
    %326 = vector.load %arg4[%c0_139, %c648, %c0_140] : memref<1x800x128xf32, #tpu.memory_space<vmem>>, vector<1x1x32xf32>
    %327 = vector.shape_cast %326 : vector<1x1x32xf32> to vector<1x32xf32>
    %c0_141 = arith.constant 0 : index
    %c656 = arith.constant 656 : index
    %c0_142 = arith.constant 0 : index
    %328 = vector.load %arg4[%c0_141, %c656, %c0_142] : memref<1x800x128xf32, #tpu.memory_space<vmem>>, vector<1x1x32xf32>
    %329 = vector.shape_cast %328 : vector<1x1x32xf32> to vector<1x32xf32>
    %c0_143 = arith.constant 0 : index
    %c664 = arith.constant 664 : index
    %c0_144 = arith.constant 0 : index
    %330 = vector.load %arg4[%c0_143, %c664, %c0_144] : memref<1x800x128xf32, #tpu.memory_space<vmem>>, vector<1x1x32xf32>
    %331 = vector.shape_cast %330 : vector<1x1x32xf32> to vector<1x32xf32>
    %cst_145 = arith.constant dense<0.000000e+00> : vector<16x32xf32>
    %332 = tpu.matmul %315, %317, %cst_145 {dimension_numbers = #tpu.dot_dimension_numbers<[1], [0], [0], [1], [0, 0, 1, 1], [], []>} : vector<16x32xf32>, vector<32x32xf32>, vector<16x32xf32> -> vector<16x32xf32>
    %333 = vector.broadcast %319 : vector<1x32xf32> to vector<16x32xf32>
    %334 = arith.addf %332, %333 : vector<16x32xf32>
    %cst_146 = arith.constant dense<0.000000e+00> : vector<16x64xf32>
    %335 = tpu.matmul %18, %321, %cst_146 {dimension_numbers = #tpu.dot_dimension_numbers<[1], [0], [0], [1], [0, 0, 1, 1], [], []>} : vector<16x32xf32>, vector<32x64xf32>, vector<16x64xf32> -> vector<16x64xf32>
    %336 = vector.broadcast %323 : vector<1x64xf32> to vector<16x64xf32>
    %337 = arith.addf %335, %336 : vector<16x64xf32>
    %338 = vector.extract_strided_slice %337 {offsets = [0, 0], sizes = [16, 32], strides = [1, 1]} : vector<16x64xf32> to vector<16x32xf32>
    %339 = vector.extract_strided_slice %337 {offsets = [0, 32], sizes = [16, 32], strides = [1, 1]} : vector<16x64xf32> to vector<16x32xf32>
    %340 = vector.shape_cast %334 : vector<16x32xf32> to vector<16x4x8xf32>
    %341 = tpu.transpose %340, [1, 0, 2] : vector<16x4x8xf32> -> vector<4x16x8xf32>
    %342 = vector.shape_cast %338 : vector<16x32xf32> to vector<16x4x8xf32>
    %343 = tpu.transpose %342, [1, 0, 2] : vector<16x4x8xf32> -> vector<4x16x8xf32>
    %344 = vector.shape_cast %339 : vector<16x32xf32> to vector<16x4x8xf32>
    %345 = tpu.transpose %344, [1, 0, 2] : vector<16x4x8xf32> -> vector<4x16x8xf32>
    "tpu.trace_start"() <{level = 10 : i32, message = "hqd,hkd->hqk"}> : () -> ()
    %cst_147 = arith.constant dense<0.000000e+00> : vector<4x16x16xf32>
    %346 = tpu.matmul %341, %343, %cst_147 {dimension_numbers = #tpu.dot_dimension_numbers<[2], [2], [1], [1], [0, 0, 0, 1, 1, 1], [0], [0]>} : vector<4x16x8xf32>, vector<4x16x8xf32>, vector<4x16x16xf32> -> vector<4x16x16xf32>
    "tpu.trace_stop"() : () -> ()
    %347 = vector.shape_cast %56 : vector<16x16xf32> to vector<1x16x16xf32>
    %348 = vector.broadcast %347 : vector<1x16x16xf32> to vector<4x16x16xf32>
    %349 = arith.addf %346, %348 : vector<4x16x16xf32>
    %cst_148 = arith.constant dense<0xFF800000> : vector<4x16xf32>
    %350 = vector.multi_reduction <maximumf>, %349, %cst_148 [2] : vector<4x16x16xf32> to vector<4x16xf32>
    %351 = vector.shape_cast %350 : vector<4x16xf32> to vector<4x16x1xf32>
    %352 = vector.broadcast %351 : vector<4x16x1xf32> to vector<4x16x16xf32>
    %353 = arith.subf %349, %352 : vector<4x16x16xf32>
    %354 = math.exp %353 : vector<4x16x16xf32>
    %cst_149 = arith.constant dense<0.000000e+00> : vector<4x16xf32>
    %355 = vector.multi_reduction <add>, %354, %cst_149 [2] : vector<4x16x16xf32> to vector<4x16xf32>
    %356 = vector.shape_cast %355 : vector<4x16xf32> to vector<4x16x1xf32>
    %357 = vector.broadcast %356 : vector<4x16x1xf32> to vector<4x16x16xf32>
    %358 = arith.divf %354, %357 : vector<4x16x16xf32>
    "tpu.trace_start"() <{level = 10 : i32, message = "hqk,hkd->hqd"}> : () -> ()
    %cst_150 = arith.constant dense<0.000000e+00> : vector<4x16x8xf32>
    %359 = tpu.matmul %358, %345, %cst_150 {dimension_numbers = #tpu.dot_dimension_numbers<[2], [1], [1], [2], [0, 0, 0, 1, 1, 2], [0], [0]>} : vector<4x16x16xf32>, vector<4x16x8xf32>, vector<4x16x8xf32> -> vector<4x16x8xf32>
    "tpu.trace_stop"() : () -> ()
    %360 = tpu.transpose %359, [1, 0, 2] : vector<4x16x8xf32> -> vector<16x4x8xf32>
    %361 = vector.shape_cast %360 : vector<16x4x8xf32> to vector<16x32xf32>
    %cst_151 = arith.constant dense<0.000000e+00> : vector<16x32xf32>
    %362 = tpu.matmul %361, %325, %cst_151 {dimension_numbers = #tpu.dot_dimension_numbers<[1], [0], [0], [1], [0, 0, 1, 1], [], []>} : vector<16x32xf32>, vector<32x32xf32>, vector<16x32xf32> -> vector<16x32xf32>
    %363 = arith.addf %315, %362 : vector<16x32xf32>
    %364 = vector.broadcast %327 : vector<1x32xf32> to vector<16x32xf32>
    %365 = arith.addf %363, %364 : vector<16x32xf32>
    %cst_152 = arith.constant dense<0.000000e+00> : vector<16xf32>
    %366 = vector.multi_reduction <add>, %365, %cst_152 [1] : vector<16x32xf32> to vector<16xf32>
    %367 = vector.shape_cast %366 : vector<16xf32> to vector<16x1xf32>
    %cst_153 = arith.constant 3.200000e+01 : f32
    %368 = vector.broadcast %cst_153 : f32 to vector<16x1xf32>
    %369 = arith.divf %367, %368 : vector<16x1xf32>
    %370 = vector.broadcast %369 : vector<16x1xf32> to vector<16x32xf32>
    %371 = arith.subf %365, %370 : vector<16x32xf32>
    %372 = arith.mulf %371, %371 : vector<16x32xf32>
    %cst_154 = arith.constant dense<0.000000e+00> : vector<16xf32>
    %373 = vector.multi_reduction <add>, %372, %cst_154 [1] : vector<16x32xf32> to vector<16xf32>
    %374 = vector.shape_cast %373 : vector<16xf32> to vector<16x1xf32>
    %cst_155 = arith.constant 3.200000e+01 : f32
    %375 = vector.broadcast %cst_155 : f32 to vector<16x1xf32>
    %376 = arith.divf %374, %375 : vector<16x1xf32>
    %377 = vector.broadcast %369 : vector<16x1xf32> to vector<16x32xf32>
    %378 = arith.subf %365, %377 : vector<16x32xf32>
    %cst_156 = arith.constant 9.99999974E-6 : f32
    %379 = vector.broadcast %cst_156 : f32 to vector<16x1xf32>
    %380 = arith.addf %376, %379 : vector<16x1xf32>
    %381 = math.rsqrt %380 : vector<16x1xf32>
    %382 = vector.broadcast %381 : vector<16x1xf32> to vector<16x32xf32>
    %383 = arith.mulf %378, %382 : vector<16x32xf32>
    %384 = vector.broadcast %329 : vector<1x32xf32> to vector<16x32xf32>
    %385 = arith.mulf %383, %384 : vector<16x32xf32>
    %386 = vector.broadcast %331 : vector<1x32xf32> to vector<16x32xf32>
    %387 = arith.addf %385, %386 : vector<16x32xf32>
    %c0_157 = arith.constant 0 : index
    %c672 = arith.constant 672 : index
    %c0_158 = arith.constant 0 : index
    %388 = vector.load %arg4[%c0_157, %c672, %c0_158] : memref<1x800x128xf32, #tpu.memory_space<vmem>>, vector<1x32x64xf32>
    %389 = vector.shape_cast %388 : vector<1x32x64xf32> to vector<32x64xf32>
    %c0_159 = arith.constant 0 : index
    %c768 = arith.constant 768 : index
    %c0_160 = arith.constant 0 : index
    %390 = vector.load %arg4[%c0_159, %c768, %c0_160] : memref<1x800x128xf32, #tpu.memory_space<vmem>>, vector<1x1x64xf32>
    %391 = vector.shape_cast %390 : vector<1x1x64xf32> to vector<1x64xf32>
    %c0_161 = arith.constant 0 : index
    %c704 = arith.constant 704 : index
    %c0_162 = arith.constant 0 : index
    %392 = vector.load %arg4[%c0_161, %c704, %c0_162] : memref<1x800x128xf32, #tpu.memory_space<vmem>>, vector<1x64x32xf32>
    %393 = vector.shape_cast %392 : vector<1x64x32xf32> to vector<64x32xf32>
    %c0_163 = arith.constant 0 : index
    %c776 = arith.constant 776 : index
    %c0_164 = arith.constant 0 : index
    %394 = vector.load %arg4[%c0_163, %c776, %c0_164] : memref<1x800x128xf32, #tpu.memory_space<vmem>>, vector<1x1x32xf32>
    %395 = vector.shape_cast %394 : vector<1x1x32xf32> to vector<1x32xf32>
    %c0_165 = arith.constant 0 : index
    %c784 = arith.constant 784 : index
    %c0_166 = arith.constant 0 : index
    %396 = vector.load %arg4[%c0_165, %c784, %c0_166] : memref<1x800x128xf32, #tpu.memory_space<vmem>>, vector<1x1x32xf32>
    %397 = vector.shape_cast %396 : vector<1x1x32xf32> to vector<1x32xf32>
    %c0_167 = arith.constant 0 : index
    %c792 = arith.constant 792 : index
    %c0_168 = arith.constant 0 : index
    %398 = vector.load %arg4[%c0_167, %c792, %c0_168] : memref<1x800x128xf32, #tpu.memory_space<vmem>>, vector<1x1x32xf32>
    %399 = vector.shape_cast %398 : vector<1x1x32xf32> to vector<1x32xf32>
    %cst_169 = arith.constant dense<0.000000e+00> : vector<16x64xf32>
    %400 = tpu.matmul %387, %389, %cst_169 {dimension_numbers = #tpu.dot_dimension_numbers<[1], [0], [0], [1], [0, 0, 1, 1], [], []>} : vector<16x32xf32>, vector<32x64xf32>, vector<16x64xf32> -> vector<16x64xf32>
    %401 = vector.broadcast %391 : vector<1x64xf32> to vector<16x64xf32>
    %402 = arith.addf %400, %401 : vector<16x64xf32>
    %cst_170 = arith.constant 0.000000e+00 : f32
    %403 = vector.broadcast %cst_170 : f32 to vector<16x64xf32>
    %404 = arith.maximumf %402, %403 : vector<16x64xf32>
    %cst_171 = arith.constant dense<0.000000e+00> : vector<16x32xf32>
    %405 = tpu.matmul %404, %393, %cst_171 {dimension_numbers = #tpu.dot_dimension_numbers<[1], [0], [0], [1], [0, 0, 1, 1], [], []>} : vector<16x64xf32>, vector<64x32xf32>, vector<16x32xf32> -> vector<16x32xf32>
    %406 = arith.addf %387, %405 : vector<16x32xf32>
    %407 = vector.broadcast %395 : vector<1x32xf32> to vector<16x32xf32>
    %408 = arith.addf %406, %407 : vector<16x32xf32>
    %cst_172 = arith.constant dense<0.000000e+00> : vector<16xf32>
    %409 = vector.multi_reduction <add>, %408, %cst_172 [1] : vector<16x32xf32> to vector<16xf32>
    %410 = vector.shape_cast %409 : vector<16xf32> to vector<16x1xf32>
    %cst_173 = arith.constant 3.200000e+01 : f32
    %411 = vector.broadcast %cst_173 : f32 to vector<16x1xf32>
    %412 = arith.divf %410, %411 : vector<16x1xf32>
    %413 = vector.broadcast %412 : vector<16x1xf32> to vector<16x32xf32>
    %414 = arith.subf %408, %413 : vector<16x32xf32>
    %415 = arith.mulf %414, %414 : vector<16x32xf32>
    %cst_174 = arith.constant dense<0.000000e+00> : vector<16xf32>
    %416 = vector.multi_reduction <add>, %415, %cst_174 [1] : vector<16x32xf32> to vector<16xf32>
    %417 = vector.shape_cast %416 : vector<16xf32> to vector<16x1xf32>
    %cst_175 = arith.constant 3.200000e+01 : f32
    %418 = vector.broadcast %cst_175 : f32 to vector<16x1xf32>
    %419 = arith.divf %417, %418 : vector<16x1xf32>
    %420 = vector.broadcast %412 : vector<16x1xf32> to vector<16x32xf32>
    %421 = arith.subf %408, %420 : vector<16x32xf32>
    %cst_176 = arith.constant 9.99999974E-6 : f32
    %422 = vector.broadcast %cst_176 : f32 to vector<16x1xf32>
    %423 = arith.addf %419, %422 : vector<16x1xf32>
    %424 = math.rsqrt %423 : vector<16x1xf32>
    %425 = vector.broadcast %424 : vector<16x1xf32> to vector<16x32xf32>
    %426 = arith.mulf %421, %425 : vector<16x32xf32>
    %427 = vector.broadcast %397 : vector<1x32xf32> to vector<16x32xf32>
    %428 = arith.mulf %426, %427 : vector<16x32xf32>
    %429 = vector.broadcast %399 : vector<1x32xf32> to vector<16x32xf32>
    %430 = arith.addf %428, %429 : vector<16x32xf32>
    %c0_177 = arith.constant 0 : index
    %c0_178 = arith.constant 0 : index
    %c0_179 = arith.constant 0 : index
    %431 = vector.load %arg5[%c0_177, %c0_178, %c0_179] : memref<1x16x32xf32, #tpu.memory_space<vmem>>, vector<1x16x32xf32>
    %432 = vector.shape_cast %431 : vector<1x16x32xf32> to vector<16x32xf32>
    %433 = vector.shape_cast %430 : vector<16x32xf32> to vector<1x16x32xf32>
    tpu.vector_store %arg5[%c0_177, %c0_178, %c0_179], %433 {strides = array<i32>} : memref<1x16x32xf32, #tpu.memory_space<vmem>>, vector<1x16x32xf32>,
    %c0_i32_180 = arith.constant 0 : i32
    %434 = arith.cmpi eq, %arg0, %c0_i32_180 : i32
    %435 = arith.extui %434 : i1 to i32
    %c0_i32_181 = arith.constant 0 : i32
    %436 = arith.cmpi ne, %435, %c0_i32_181 : i32
    scf.if %436 {
      %c0_182 = arith.constant 0 : index
      %c0_183 = arith.constant 0 : index
      %437 = vector.load %arg6[%c0_182, %c0_183] : memref<16x32xf32, #tpu.memory_space<vmem>>, vector<16x32xf32>
      tpu.vector_store %arg6[%c0_182, %c0_183], %430 {strides = array<i32>} : memref<16x32xf32, #tpu.memory_space<vmem>>, vector<16x32xf32>,
    } else {
    }
    return
  }
  func.func @transform_0(%arg0: i32) -> (i32, i32) {
    %c0_i32 = arith.constant 0 : i32
    %c0_i32_0 = arith.constant 0 : i32
    %c0_i32_1 = arith.constant 0 : i32
    return %c0_i32, %c0_i32_0 : i32, i32
  }
  func.func @transform_1(%arg0: i32) -> (i32, i32) {
    %c0_i32 = arith.constant 0 : i32
    %c0_i32_0 = arith.constant 0 : i32
    %c0_i32_1 = arith.constant 0 : i32
    return %c0_i32, %c0_i32_0 : i32, i32
  }
  func.func @transform_2(%arg0: i32) -> (i32, i32) {
    %c0_i32 = arith.constant 0 : i32
    %c0_i32_0 = arith.constant 0 : i32
    %c0_i32_1 = arith.constant 0 : i32
    return %c0_i32, %c0_i32_0 : i32, i32
  }
  func.func @transform_3(%arg0: i32) -> (i32, i32, i32) {
    %c0_i32 = arith.constant 0 : i32
    %c0_i32_0 = arith.constant 0 : i32
    %c0_i32_1 = arith.constant 0 : i32
    return %arg0, %c0_i32, %c0_i32_0 : i32, i32, i32
  }
  func.func @transform_4(%arg0: i32) -> (i32, i32, i32) {
    %c0_i32 = arith.constant 0 : i32
    %c0_i32_0 = arith.constant 0 : i32
    %c0_i32_1 = arith.constant 0 : i32
    return %arg0, %c0_i32, %c0_i32_0 : i32, i32, i32
  }
}

</mosaic_0001>

<llo_original>
// kernel: multiattn_model_forward.1
$region0: #{multiattn_model_forward.1}
  #allocation0 [shape = 'u32[]', space=smem, size = 0x4, offset = 0x4, fixed_abs, tag = 'smem constant byte address 0x4 - core index']
  #allocation1 [shape = 'u32[144,128]{1,0:T(1,128)}', space=vmem, size = 0x12000, scoped, tag = 'internal scratch']
  #allocation2 [shape = 'f32[16,32]{1,0:T(8,128)}', space=vmem, size = 0x2000, scoped, tag = 'scratch operand']
  %s0 = inlined_call_operand.hbm [shape: f32[16,32], index: 0, kind: input, shape index: {}]
  %s1 = inlined_call_operand.hbm [shape: f32[16,32], index: 1, kind: input, shape index: {}]
  %s2 = inlined_call_operand.hbm [shape: f32[16,32], index: 2, kind: input, shape index: {}]
  %s3 = inlined_call_operand.hbm [shape: f32[4,800,128], index: 3, kind: input, shape index: {}]
  %s4 = inlined_call_operand.vmem [shape: f32[4,16,32], index: 4, kind: output, shape index: {}]
  %s5 = sld [smem:[#allocation0]]
  $region73: #{multiattn_model_forward.1} parent=0
    _
  %s7 = ssub.s32 1, %s5
  %s8 = scalar_select 0, %s7, %s5
  $region1: #{multiattn_model_forward.1} parent=0
    #allocation3 [shape = 'u8[8192]{0}', space=vmem, size = 0x2000, scoped, tag = 'input window, operand 0, single buffered']
    #allocation4 [shape = 's32[2]{0}', space=sflag, size = 0x8, scoped, tag = 'scoped memory for multiattn_model_forward.1']
    #allocation5 [shape = 'u8[8192]{0}', space=vmem, size = 0x2000, scoped, tag = 'input window, operand 1, single buffered']
    #allocation6 [shape = 's32[1]{0}', space=sflag, size = 0x4, scoped, tag = 'scoped memory for multiattn_model_forward.1']
    #allocation7 [shape = 'u8[8192]{0}', space=vmem, size = 0x2000, scoped, tag = 'input window, operand 2, single buffered']
    #allocation8 [shape = 'u8[819200]{0}', space=vmem, size = 0xc8000, scoped, tag = 'input window, operand 3']
    #allocation9 [shape = 's32[2]{0}', space=sflag, size = 0x8, scoped, tag = 'scoped memory for multiattn_model_forward.1']
    %9 = vsyncpa [#allocation4], 0
    %10 = vsyncpa [#allocation6], 0
    %11 = vsyncpa [#allocation9], 0
    %s12 = scalar_lea.sflag [#allocation9], 1
    %13 = vsyncpa %s12, 0
    loop: start=0, step=1, limit=6
    $region2: #{multiattn_model_forward.1} parent=1 // loop_pre_header
      _
    $region3: #{multiattn_model_forward.1} parent=1 // loop_header
      %s15 = sphi 0, %s19
      %p16 = scmp.ge.s32.totalorder %s15, 6
      %s23 = sphi 0, %s23
      %s25 = sphi 0, %s23
      %s26 = sphi 0, %s25
      %s40 = sphi 0, %s26
      %s44 = sphi 0, %s44
      %s46 = sphi 0, %s44
      %s47 = sphi 0, %s46
      %s61 = sphi 0, %s47
      %s65 = sphi 0, %s65
      %s67 = sphi 0, %s65
      %s68 = sphi 0, %s67
      %s82 = sphi 0, %s68
      %s88 = sphi 0, %s90
      %s91 = sphi 0, %s88
      %s92 = sphi 0, %s91
      %s108 = sphi 0, %s92
      %s114 = sphi 0, %s116
      %s117 = sphi 0, %s114
      %s118 = sphi 0, %s117
      %s134 = sphi 0, %s118
    $region4: #{multiattn_model_forward.1} parent=1 // loop_header_branch
      %18 = sbr.rel (%p16) target = $region8
    $region5: #{multiattn_model_forward.1} parent=1 // loop_body
      %s20 = ssub.s32 %s15, 1
      %s21 = ssub.s32 %s15, 2
      %s22 = sadd.s32 %s15, 1
      %s24 = sadd.s32 %s23, 1
      %p27 = scmp.eq.s32.totalorder %s15, 3
      %p28 = scmp.ne.s32.totalorder %s23, %s25
      %p29 = scmp.eq.s32.totalorder %s15, 0
      %p30 = por %p28, %p29
      %p31 = scmp.ne.s32.totalorder %s23, %s25
      %p32 = scmp.eq.s32.totalorder %s20, 3
      %p33 = por %p31, %p32
      %p34 = scmp.ne.s32.totalorder %s25, %s26
      %p35 = scmp.eq.s32.totalorder %s20, 0
      %p36 = por %p34, %p35
      %p37 = scmp.ne.s32.totalorder %s25, %s26
      %p38 = scmp.eq.s32.totalorder %s21, 3
      %p39 = por %p37, %p38
      %p41 = scmp.ne.s32.totalorder %s26, %s40
      %p42 = scmp.eq.s32.totalorder %s21, 0
      %p43 = por %p41, %p42
      %s45 = sadd.s32 %s44, 1
      %p48 = scmp.eq.s32.totalorder %s15, 3
      %p49 = scmp.ne.s32.totalorder %s44, %s46
      %p50 = scmp.eq.s32.totalorder %s15, 0
      %p51 = por %p49, %p50
      %p52 = scmp.ne.s32.totalorder %s44, %s46
      %p53 = scmp.eq.s32.totalorder %s20, 3
      %p54 = por %p52, %p53
      %p55 = scmp.ne.s32.totalorder %s46, %s47
      %p56 = scmp.eq.s32.totalorder %s20, 0
      %p57 = por %p55, %p56
      %p58 = scmp.ne.s32.totalorder %s46, %s47
      %p59 = scmp.eq.s32.totalorder %s21, 3
      %p60 = por %p58, %p59
      %p62 = scmp.ne.s32.totalorder %s47, %s61
      %p63 = scmp.eq.s32.totalorder %s21, 0
      %p64 = por %p62, %p63
      %s66 = sadd.s32 %s65, 1
      %p69 = scmp.eq.s32.totalorder %s15, 3
      %p70 = scmp.ne.s32.totalorder %s65, %s67
      %p71 = scmp.eq.s32.totalorder %s15, 0
      %p72 = por %p70, %p71
      %p73 = scmp.ne.s32.totalorder %s65, %s67
      %p74 = scmp.eq.s32.totalorder %s20, 3
      %p75 = por %p73, %p74
      %p76 = scmp.ne.s32.totalorder %s67, %s68
      %p77 = scmp.eq.s32.totalorder %s20, 0
      %p78 = por %p76, %p77
      %p79 = scmp.ne.s32.totalorder %s67, %s68
      %p80 = scmp.eq.s32.totalorder %s21, 3
      %p81 = por %p79, %p80
      %p83 = scmp.ne.s32.totalorder %s68, %s82
      %p84 = scmp.eq.s32.totalorder %s21, 0
      %p85 = por %p83, %p84
      %s86 = ssub.s32 %s15, %s22
      %p87 = scmp.eq.s32.totalorder %s86, 0
      %s89 = sadd.s32 %s88, 1
      %s90 = scalar_select %p87, %s88, %s89
      %p93 = pneg %p87
      %p94 = scmp.eq.s32.totalorder %s15, 3
      %p95 = por %p93, %p94
      %p96 = scmp.ne.s32.totalorder %s88, %s91
      %p97 = scmp.eq.s32.totalorder %s15, 0
      %p98 = por %p96, %p97
      %p99 = scmp.ne.s32.totalorder %s88, %s91
      %p100 = scmp.eq.s32.totalorder %s20, 3
      %p101 = por %p99, %p100
      %p102 = scmp.ne.s32.totalorder %s91, %s92
      %p103 = scmp.eq.s32.totalorder %s20, 0
      %p104 = por %p102, %p103
      %p105 = scmp.ne.s32.totalorder %s91, %s92
      %p106 = scmp.eq.s32.totalorder %s21, 3
      %p107 = por %p105, %p106
      %p109 = scmp.ne.s32.totalorder %s92, %s108
      %p110 = scmp.eq.s32.totalorder %s21, 0
      %p111 = por %p109, %p110
      %s112 = ssub.s32 %s15, %s22
      %p113 = scmp.eq.s32.totalorder %s112, 0
      %s115 = sadd.s32 %s114, 1
      %s116 = scalar_select %p113, %s114, %s115
      %p119 = pneg %p113
      %p120 = scmp.eq.s32.totalorder %s15, 3
      %p121 = por %p119, %p120
      %p122 = scmp.ne.s32.totalorder %s114, %s117
      %p123 = scmp.eq.s32.totalorder %s15, 0
      %p124 = por %p122, %p123
      %p125 = scmp.ne.s32.totalorder %s114, %s117
      %p126 = scmp.eq.s32.totalorder %s20, 3
      %p127 = por %p125, %p126
      %p128 = scmp.ne.s32.totalorder %s117, %s118
      %p129 = scmp.eq.s32.totalorder %s20, 0
      %p130 = por %p128, %p129
      %p131 = scmp.ne.s32.totalorder %s117, %s118
      %p132 = scmp.eq.s32.totalorder %s21, 3
      %p133 = por %p131, %p132
      %p135 = scmp.ne.s32.totalorder %s118, %s134
      %p136 = scmp.eq.s32.totalorder %s21, 0
      %p137 = por %p135, %p136
      %p138 = scmp.le.s32.totalorder 1, %s15
      %p139 = scmp.lt.s32.totalorder %s15, 5
      %p140 = pnand %p138, %p139
      %p141 = pneg %p140
      // Predicated region
      $region9: #{multiattn_model_forward.1} parent=5 // pred_check
        _
      $region10: #{multiattn_model_forward.1} parent=5 // pred_check_branch
        %143 = sbr.rel (%p140) target = $region12
      $region11: #{multiattn_model_forward.1} parent=5 // pred_region
        %s144 = ssub.s32 %s15, 1
        // Predicated region
        $region13: #{multiattn_model_forward.1} parent=11 // pred_check
          %p145 = pneg %p36
        $region14: #{multiattn_model_forward.1} parent=11 // pred_check_branch
          %147 = sbr.rel (%p145) target = $region16
        $region15: #{multiattn_model_forward.1} parent=11 // pred_region
          %s149 = ssub.s32 256, 256
          %150 = vsyncadd [#allocation4], %s149
          %s151 = sshll.u32 [#allocation3], 4
          %s152 = int_to_ptr.vmem [resolvable:$true] %s151
          %157 = dma.hbm_to_vmem [thread:$0]  %s0, 256, %s152, [#allocation4], 128, 128, 8
        $region16: #{multiattn_model_forward.1} parent=11 // pred_fallthru
          _
        // Predicated region
        $region17: #{multiattn_model_forward.1} parent=11 // pred_check
          %p158 = pneg %p57
        $region18: #{multiattn_model_forward.1} parent=11 // pred_check_branch
          %160 = sbr.rel (%p158) target = $region20
        $region19: #{multiattn_model_forward.1} parent=11 // pred_region
          %s162 = ssub.s32 256, 256
          %163 = vsyncadd [#allocation6], %s162
          %s164 = sshll.u32 [#allocation5], 4
          %s165 = int_to_ptr.vmem [resolvable:$true] %s164
          %170 = dma.hbm_to_vmem [thread:$0]  %s1, 256, %s165, [#allocation6], 128, 128, 8
        $region20: #{multiattn_model_forward.1} parent=11 // pred_fallthru
          _
        // Predicated region
        $region21: #{multiattn_model_forward.1} parent=11 // pred_check
          %p171 = pneg %p78
        $region22: #{multiattn_model_forward.1} parent=11 // pred_check_branch
          %173 = sbr.rel (%p171) target = $region24
        $region23: #{multiattn_model_forward.1} parent=11 // pred_region
          %s175 = ssub.s32 256, 256
          %176 = vsyncadd [#allocation6], %s175
          %s177 = sshll.u32 [#allocation7], 4
          %s178 = int_to_ptr.vmem [resolvable:$true] %s177
          %183 = dma.hbm_to_vmem [thread:$0]  %s2, 256, %s178, [#allocation6], 128, 128, 8
        $region24: #{multiattn_model_forward.1} parent=11 // pred_fallthru
          _
      $region12: #{multiattn_model_forward.1} parent=5 // pred_fallthru
        _
      %p184 = scmp.lt.s32.totalorder %s15, 4
      // Predicated region
      $region25: #{multiattn_model_forward.1} parent=5 // pred_check
        %p185 = pneg %p184
      $region26: #{multiattn_model_forward.1} parent=5 // pred_check_branch
        %187 = sbr.rel (%p185) target = $region28
      $region27: #{multiattn_model_forward.1} parent=5 // pred_region
        // Predicated region
        $region29: #{multiattn_model_forward.1} parent=27 // pred_check
          %p188 = pneg %p98
        $region30: #{multiattn_model_forward.1} parent=27 // pred_check_branch
          %190 = sbr.rel (%p188) target = $region32
        $region31: #{multiattn_model_forward.1} parent=27 // pred_region
          %s191 = sand.u32 %s88, 1
          %s192 = scalar_lea.sflag [#allocation9], %s191
          %s193 = sand.u32 %s88, 1
          %s194 = smul.addr %s193, 800
          %s195 = scalar_lea.vmem [#allocation8], %s194
          %s197 = ssub.s32 12800, 12800
          %198 = vsyncadd %s192, %s197
          %s199 = smul.addr %s15, 100
          %s200 = smul.addr %s199, 128
          %s201 = scalar_lea.hbm %s3, %s200
          %s202 = sshll.u32 %s195, 4
          %s203 = int_to_ptr.vmem [resolvable:$true] %s202
          %208 = dma.hbm_to_vmem [thread:$0]  %s201, 12800, %s203, %s192, 128, 128, 8
        $region32: #{multiattn_model_forward.1} parent=27 // pred_fallthru
          _
      $region28: #{multiattn_model_forward.1} parent=5 // pred_fallthru
        _
      %p209 = scmp.le.s32.totalorder 1, %s15
      %p210 = scmp.lt.s32.totalorder %s15, 5
      %p211 = pnand %p209, %p210
      %p212 = pneg %p211
      // Predicated region
      $region33: #{multiattn_model_forward.1} parent=5 // pred_check
        _
      $region34: #{multiattn_model_forward.1} parent=5 // pred_check_branch
        %214 = sbr.rel (%p211) target = $region36
      $region35: #{multiattn_model_forward.1} parent=5 // pred_region
        %s215 = ssub.s32 %s15, 1
        // Predicated region
        $region37: #{multiattn_model_forward.1} parent=35 // pred_check
          %p216 = pneg %p36
        $region38: #{multiattn_model_forward.1} parent=35 // pred_check_branch
          %218 = sbr.rel (%p216) target = $region40
        $region39: #{multiattn_model_forward.1} parent=35 // pred_region
          %219 = dma.done [#allocation4], 256
        $region40: #{multiattn_model_forward.1} parent=35 // pred_fallthru
          _
        // Predicated region
        $region41: #{multiattn_model_forward.1} parent=35 // pred_check
          %p220 = pneg %p57
        $region42: #{multiattn_model_forward.1} parent=35 // pred_check_branch
          %222 = sbr.rel (%p220) target = $region44
        $region43: #{multiattn_model_forward.1} parent=35 // pred_region
          %223 = dma.done [#allocation6], 256
        $region44: #{multiattn_model_forward.1} parent=35 // pred_fallthru
          _
        // Predicated region
        $region45: #{multiattn_model_forward.1} parent=35 // pred_check
          %p224 = pneg %p78
        $region46: #{multiattn_model_forward.1} parent=35 // pred_check_branch
          %226 = sbr.rel (%p224) target = $region48
        $region47: #{multiattn_model_forward.1} parent=35 // pred_region
          %227 = dma.done [#allocation6], 256
        $region48: #{multiattn_model_forward.1} parent=35 // pred_fallthru
          _
        %s228 = sand.u32 %s91, 1
        %s229 = scalar_lea.sflag [#allocation9], %s228
        %s230 = sand.u32 %s91, 1
        %s231 = smul.addr %s230, 800
        %s232 = scalar_lea.vmem [#allocation8], %s231
        // Predicated region
        $region49: #{multiattn_model_forward.1} parent=35 // pred_check
          %p233 = pneg %p104
        $region50: #{multiattn_model_forward.1} parent=35 // pred_check_branch
          %235 = sbr.rel (%p233) target = $region52
        $region51: #{multiattn_model_forward.1} parent=35 // pred_region
          %236 = dma.done %s229, 12800
        $region52: #{multiattn_model_forward.1} parent=35 // pred_fallthru
          _
        %p237 = pneg %p36
        %p238 = pneg %p33
        %p239 = pneg %p57
        %p240 = pneg %p54
        %p241 = pneg %p78
        %p242 = pneg %p75
        %s243 = sand.u32 %s91, 1
        %s244 = scalar_lea.sflag [#allocation9], %s243
        %s245 = sand.u32 %s91, 1
        %s246 = smul.addr %s245, 800
        %s247 = scalar_lea.vmem [#allocation8], %s246
        %p248 = pneg %p104
        %p249 = pneg %p101
        %p250 = pneg %p130
        %p251 = pneg %p127
        %p252 = scmp.lt.s32.totalorder %s20, 3
        %s253 = scalar_select %p252, %s20, 3
        %s254 = smul.addr %s253, 2
        %s255 = smul.addr %s254, 8
        %s256 = scalar_lea.vmem %s4, %s255
        %p257 = scmp.lt.s32.totalorder %s20, 3
        %s258 = scalar_select %p257, %s20, 3
        %s259 = smul.addr %s258, 2
        %s260 = smul.addr %s259, 8
        %s261 = scalar_lea.vmem %s4, %s260
        %p262 = scmp.eq.s32.totalorder %s20, 0
        // Predicated region
        $region53: #{multiattn_model_forward.1} parent=35 // pred_check
          %p263 = pneg %p262
        $region54: #{multiattn_model_forward.1} parent=35 // pred_check_branch
          %265 = sbr.rel (%p263) target = $region56
        $region55: #{multiattn_model_forward.1} parent=35 // pred_region
          %vm266 = vcmask 261120
          %267 = vst.msk [vmem:[#allocation2] sm:$0xff] %vm266, 0.0
          %268 = vst.msk [vmem:[#allocation2 + $0x8] sm:$0xff] %vm266, 0.0
        $region56: #{multiattn_model_forward.1} parent=35 // pred_fallthru
          _
        %v269 = vld [vmem:[#allocation3] sm:$0xff]
        %v270 = vld [vmem:[#allocation3 + $0x8] sm:$0xff]
        %v271 = vld [vmem:[#allocation5] sm:$0xff]
        %v272 = vld [vmem:[#allocation5 + $0x8] sm:$0xff]
        %v273 = vld [vmem:[#allocation7] sm:$0xff]
        %v274 = vld [vmem:[#allocation7 + $0x8] sm:$0xff]
        %v275 = vld [vmem:[#allocation2] sm:$0xff]
        %v276 = vld [vmem:[#allocation2 + $0x8] sm:$0xff]
        %p277 = scmp.eq.s32.totalorder %s20, 1
        %s278 = scalar_select %p277, 1, 0
        %v279 = vstv %s278
        %vm280 = vcmp.eq.s32.totalorder %v279, 1
        %v281 = vsel %vm280, %v269, %v275
        %v282 = vsel %vm280, %v270, %v276
        %s283 = scalar_select %p262, 1, 0
        %v284 = vstv %s283
        %vm285 = vcmp.eq.s32.totalorder %v284, 1
        %v286 = vsel %vm285, %v271, %v281
        %v287 = vsel %vm285, %v272, %v282
        %p288 = scmp.eq.s32.totalorder %s20, 2
        %p289 = scmp.eq.s32.totalorder %s20, 3
        %s290 = scalar_select %p289, 1, 0
        %v291 = vstv %s290
        %vm292 = vcmp.eq.s32.totalorder %v291, 1
        %v293 = vsel %vm292, %v273, %v275
        %v294 = vsel %vm292, %v274, %v276
        %s295 = scalar_select %p288, 1, 0
        %v296 = vstv %s295
        %vm297 = vcmp.eq.s32.totalorder %v296, 1
        %v298 = vsel %vm297, %v269, %v293
        %v299 = vsel %vm297, %v270, %v294
        %v300 = vsel %vm285, %v273, %v298
        %v301 = vsel %vm285, %v274, %v299
        %v302 = vsel %vm285, %v273, %v275
        %v303 = vsel %vm285, %v274, %v276
        %v304 = vlaneseq
        %v305 = vshrl.u32 %v304, 7
        %v306 = vadd.s32 %v305, 8
        %v307 = vlaneseq
        %v308 = vand.u32 %v307, 127
        %vm309 = vcmp.lt.s32.totalorder %v305, 0
        %v310 = vsub.s32 0, %v305
        %v311 = vsel %vm309, %v310, %v305
        %v312 = vshrl.u32 %v311, 1
        %v313 = vand.u32 %v311, 1
        %v314 = vsub.s32 0, %v313
        %v315 = vsel %vm309, %v314, %v313
        %vm316 = vcmp.lt.s32.totalorder %v306, 0
        %v317 = vsub.s32 0, %v306
        %v318 = vsel %vm316, %v317, %v306
        %v319 = vshrl.u32 %v318, 1
        %v320 = vand.u32 %v318, 1
        %v321 = vsub.s32 0, %v320
        %v322 = vsel %vm316, %v321, %v320
        %vm323 = vcmp.ne.s32.totalorder %v315, 0
        %vm324 = vcmp.ne.s32.totalorder %v322, 0
        %vm325 = vcmp.lt.s32.totalorder %v315, 0
        %vm326 = vcmp.lt.s32.totalorder %v322, 0
        %vm327 = vmand %vm325, %vm323
        %vm328 = vmand %vm326, %vm324
        %v329 = vadd.s32 %v315, 2
        %v330 = vadd.s32 %v322, 2
        %v331 = vsel %vm327, %v329, %v315
        %v332 = vsel %vm328, %v330, %v322
        %vm333 = vcmp.lt.s32.totalorder %v308, 0
        %v334 = vsub.s32 0, %v308
        %v335 = vsel %vm333, %v334, %v308
        %v336 = vshrl.u32 %v335, 1
        %v337 = vand.u32 %v335, 1
        %v338 = vsub.s32 0, %v337
        %v339 = vsel %vm333, %v338, %v337
        %vm340 = vcmp.ne.s32.totalorder %v339, 0
        %vm341 = vcmp.lt.s32.totalorder %v339, 0
        %vm342 = vmand %vm341, %vm340
        %v343 = vadd.s32 %v339, 2
        %v344 = vsel %vm342, %v343, %v339
        %vm345 = vcmp.eq.s32.totalorder %v331, %v344
        %vm346 = vcmp.eq.s32.totalorder %v332, %v344
        %v347 = vsel %vm345, 0.0, -1e+30
        %v348 = vsel %vm346, 0.0, -1e+30
        %v349 = vld [vmem:[%s232] sm:$0xff]
        %v350 = vld [vmem:[%s232 + $0x8] sm:$0xff]
        %v351 = vld [vmem:[%s232 + $0x10] sm:$0xff]
        %v352 = vld [vmem:[%s232 + $0x18] sm:$0xff]
        %v353 = vld [vmem:[%s232 + $0x60] sm:$0x1]
        %v354 = vld [vmem:[%s232 + $0x20] sm:$0xff]
        %v355 = vld [vmem:[%s232 + $0x28] sm:$0xff]
        %v356 = vld [vmem:[%s232 + $0x30] sm:$0xff]
        %v357 = vld [vmem:[%s232 + $0x38] sm:$0xff]
        %v358 = vld [vmem:[%s232 + $0x68] sm:$0x1]
        %v359 = vld [vmem:[%s232 + $0x40] sm:$0xff]
        %v360 = vld [vmem:[%s232 + $0x48] sm:$0xff]
        %v361 = vld [vmem:[%s232 + $0x50] sm:$0xff]
        %v362 = vld [vmem:[%s232 + $0x58] sm:$0xff]
        %v363 = vld [vmem:[%s232 + $0x70] sm:$0x1]
        %v364 = vld [vmem:[%s232 + $0x78] sm:$0x1]
        %v365 = vld [vmem:[%s232 + $0x80] sm:$0x1]
        %v366 = vlaneseq
        %v367 = vshrl.u32 %v366, 7
        %v368 = vsub.s32 0, %v367
        %v369 = vrot.slane %v353, %v368
        %vm370 = vcmask 261120
        %v372 = vsel %vm370, %v286, 0
        %v375 = vsel %vm370, %v287, 0
        %377 = vmatprep.subr.mxu0 0.0
        %378 = vmatpush1.msra.mxu0 0.0
        %379 = vmatprep.subr.mxu0 0.0
        %380 = vmatpush1.msra.mxu0 0.0
        %381 = vmatprep.subr.mxu0 0.0
        %382 = vmatpush1.msra.mxu0 0.0
        %383 = vmatprep.subr.mxu0 0.0
        %384 = vmatpush1.msra.mxu0 0.0
        %385 = vmatprep.subr.mxu0 0.0
        %386 = vmatpush1.msra.mxu0 0.0
        %387 = vmatprep.subr.mxu0 0.0
        %388 = vmatpush1.msra.mxu0 0.0
        %389 = vmatprep.subr.mxu0 0.0
        %390 = vmatpush1.msra.mxu0 0.0
        %391 = vmatprep.subr.mxu0 0.0
        %392 = vmatpush1.msra.mxu0 0.0
        %393 = vmatprep.subr.mxu0 0.0
        %394 = vmatpush1.msra.mxu0 0.0
        %395 = vmatprep.subr.mxu0 0.0
        %396 = vmatpush1.msra.mxu0 0.0
        %397 = vmatprep.subr.mxu0 0.0
        %398 = vmatpush1.msra.mxu0 0.0
        %399 = vmatprep.subr.mxu0 0.0
        %400 = vmatpush1.msra.mxu0 0.0
        %401 = vmatprep.subr.mxu0 0.0
        %402 = vmatpush1.msra.mxu0 %v352
        %403 = vmatprep.subr.mxu0 0.0
        %404 = vmatpush1.msra.mxu0 %v351
        %405 = vmatprep.subr.mxu0 0.0
        %406 = vmatpush1.msra.mxu0 %v350
        %407 = vmatprep.subr.mxu0 0.0
        %408 = vmatpush1.msra.mxu0 %v349
        %409 = vmatprep.subr.mxu0 0.0
        %410 = vmatpush2.msra.mxu0 0.0
        %411 = vmatprep.subr.mxu0 0.0
        %412 = vmatpush2.msra.mxu0 0.0
        %413 = vmatprep.subr.mxu0 0.0
        %414 = vmatpush2.msra.mxu0 0.0
        %415 = vmatprep.subr.mxu0 0.0
        %416 = vmatpush2.msra.mxu0 0.0
        %417 = vmatprep.subr.mxu0 0.0
        %418 = vmatpush2.msra.mxu0 0.0
        %419 = vmatprep.subr.mxu0 0.0
        %420 = vmatpush2.msra.mxu0 0.0
        %421 = vmatprep.subr.mxu0 0.0
        %422 = vmatpush2.msra.mxu0 0.0
        %423 = vmatprep.subr.mxu0 0.0
        %424 = vmatpush2.msra.mxu0 0.0
        %425 = vmatprep.subr.mxu0 0.0
        %426 = vmatpush2.msra.mxu0 0.0
        %427 = vmatprep.subr.mxu0 0.0
        %428 = vmatpush2.msra.mxu0 0.0
        %429 = vmatprep.subr.mxu0 0.0
        %430 = vmatpush2.msra.mxu0 0.0
        %431 = vmatprep.subr.mxu0 0.0
        %432 = vmatpush2.msra.mxu0 0.0
        %433 = vmatprep.subr.mxu0 0.0
        %434 = vmatpush2.msra.mxu0 0.0
        %435 = vmatprep.subr.mxu0 0.0
        %436 = vmatpush2.msra.mxu0 0.0
        %437 = vmatprep.subr.mxu0 0.0
        %438 = vmatpush2.msra.mxu0 0.0
        %439 = vmatprep.subr.mxu0 0.0
        %440 = vmatpush2.msra.mxu0 0.0
        %441 = vmatprep.mubr.f32.mxu0 0.0
        %442 = vmatmul.mubr.f32.gmra.mxu0 %v372
        %v443 = vpop.f32.mrf.mxu0
        %v444 = vadd.f32 %v369, %v443
        %v445 = vpop.f32.mrf.mxu0
        %446 = vmatprep.mubr.f32.mxu0 0.0
        %447 = vmatmul.mubr.f32.gmra.mxu0 %v375
        %v448 = vpop.f32.mrf.mxu0
        %v449 = vadd.f32 %v369, %v448
        %v450 = vpop.f32.mrf.mxu0
        %451 = vdwg.mxu0
        %v452 = vlaneseq
        %v453 = vshrl.u32 %v452, 7
        %v454 = vsub.s32 0, %v453
        %v455 = vrot.slane %v358, %v454
        %v457 = vsel %vm370, %v300, 0
        %v460 = vsel %vm370, %v301, 0
        %462 = vmatprep.subr.mxu0 0.0
        %463 = vmatpush1.msra.mxu0 0.0
        %464 = vmatprep.subr.mxu0 0.0
        %465 = vmatpush1.msra.mxu0 0.0
        %466 = vmatprep.subr.mxu0 0.0
        %467 = vmatpush1.msra.mxu0 0.0
        %468 = vmatprep.subr.mxu0 0.0
        %469 = vmatpush1.msra.mxu0 0.0
        %470 = vmatprep.subr.mxu0 0.0
        %471 = vmatpush1.msra.mxu0 0.0
        %472 = vmatprep.subr.mxu0 0.0
        %473 = vmatpush1.msra.mxu0 0.0
        %474 = vmatprep.subr.mxu0 0.0
        %475 = vmatpush1.msra.mxu0 0.0
        %476 = vmatprep.subr.mxu0 0.0
        %477 = vmatpush1.msra.mxu0 0.0
        %478 = vmatprep.subr.mxu0 0.0
        %479 = vmatpush1.msra.mxu0 0.0
        %480 = vmatprep.subr.mxu0 0.0
        %481 = vmatpush1.msra.mxu0 0.0
        %482 = vmatprep.subr.mxu0 0.0
        %483 = vmatpush1.msra.mxu0 0.0
        %484 = vmatprep.subr.mxu0 0.0
        %485 = vmatpush1.msra.mxu0 0.0
        %486 = vmatprep.subr.mxu0 0.0
        %487 = vmatpush1.msra.mxu0 %v357
        %488 = vmatprep.subr.mxu0 0.0
        %489 = vmatpush1.msra.mxu0 %v356
        %490 = vmatprep.subr.mxu0 0.0
        %491 = vmatpush1.msra.mxu0 %v355
        %492 = vmatprep.subr.mxu0 0.0
        %493 = vmatpush1.msra.mxu0 %v354
        %494 = vmatprep.subr.mxu0 0.0
        %495 = vmatpush2.msra.mxu0 0.0
        %496 = vmatprep.subr.mxu0 0.0
        %497 = vmatpush2.msra.mxu0 0.0
        %498 = vmatprep.subr.mxu0 0.0
        %499 = vmatpush2.msra.mxu0 0.0
        %500 = vmatprep.subr.mxu0 0.0
        %501 = vmatpush2.msra.mxu0 0.0
        %502 = vmatprep.subr.mxu0 0.0
        %503 = vmatpush2.msra.mxu0 0.0
        %504 = vmatprep.subr.mxu0 0.0
        %505 = vmatpush2.msra.mxu0 0.0
        %506 = vmatprep.subr.mxu0 0.0
        %507 = vmatpush2.msra.mxu0 0.0
        %508 = vmatprep.subr.mxu0 0.0
        %509 = vmatpush2.msra.mxu0 0.0
        %510 = vmatprep.subr.mxu0 0.0
        %511 = vmatpush2.msra.mxu0 0.0
        %512 = vmatprep.subr.mxu0 0.0
        %513 = vmatpush2.msra.mxu0 0.0
        %514 = vmatprep.subr.mxu0 0.0
        %515 = vmatpush2.msra.mxu0 0.0
        %516 = vmatprep.subr.mxu0 0.0
        %517 = vmatpush2.msra.mxu0 0.0
        %518 = vmatprep.subr.mxu0 0.0
        %519 = vmatpush2.msra.mxu0 0.0
        %520 = vmatprep.subr.mxu0 0.0
        %521 = vmatpush2.msra.mxu0 0.0
        %522 = vmatprep.subr.mxu0 0.0
        %523 = vmatpush2.msra.mxu0 0.0
        %524 = vmatprep.subr.mxu0 0.0
        %525 = vmatpush2.msra.mxu0 0.0
        %526 = vmatprep.mubr.f32.mxu0 0.0
        %527 = vmatmul.mubr.f32.gmra.mxu0 %v457
        %v528 = vpop.f32.mrf.mxu0
        %v529 = vadd.f32 %v455, %v528
        %v530 = vpop.f32.mrf.mxu0
        %531 = vmatprep.mubr.f32.mxu0 0.0
        %532 = vmatmul.mubr.f32.gmra.mxu0 %v460
        %v533 = vpop.f32.mrf.mxu0
        %v534 = vadd.f32 %v455, %v533
        %v535 = vpop.f32.mrf.mxu0
        %536 = vdwg.mxu0
        %539 = vrot.lane.b32.xlu0 %v444, 120
        %v540 = vpop.permute.xlu0 %539
        %541 = vrot.lane.b32.xlu0 %v449, 120
        %v542 = vpop.permute.xlu0 %541
        %545 = vrot.lane.b32.xlu0 %v444, 112
        %v546 = vpop.permute.xlu0 %545
        %547 = vrot.lane.b32.xlu0 %v449, 112
        %v548 = vpop.permute.xlu0 %547
        %551 = vrot.lane.b32.xlu0 %v444, 104
        %v552 = vpop.permute.xlu0 %551
        %553 = vrot.lane.b32.xlu0 %v449, 104
        %v554 = vpop.permute.xlu0 %553
        %v557 = vcombine.low %v444, %v546
        %v558 = vcombine.high %v444, %v546
        %v560 = vunpack.c.l.s4 1983009808
        %v561 = vunpack.c.0.s8 %v560
        %v562 = vlaneseq
        %v563 = vshrl.u32 %v562, 7
        %v564 = vsub.s32 %v561, %v563
        %v565 = vrot.slane %v557, %v564
        %v567 = vunpack.c.l.s4 1983009808
        %v568 = vunpack.c.0.s8 %v567
        %v569 = vlaneseq
        %v570 = vshrl.u32 %v569, 7
        %v571 = vsub.s32 %v568, %v570
        %v572 = vrot.slane %v558, %v571
        %v573 = vcombine.low %v540, %v552
        %v574 = vcombine.high %v540, %v552
        %v576 = vunpack.c.l.s4 1983009808
        %v577 = vunpack.c.0.s8 %v576
        %v578 = vlaneseq
        %v579 = vshrl.u32 %v578, 7
        %v580 = vsub.s32 %v577, %v579
        %v581 = vrot.slane %v573, %v580
        %v583 = vunpack.c.l.s4 1983009808
        %v584 = vunpack.c.0.s8 %v583
        %v585 = vlaneseq
        %v586 = vshrl.u32 %v585, 7
        %v587 = vsub.s32 %v584, %v586
        %v588 = vrot.slane %v574, %v587
        %v589 = vcombine.low %v565, %v581
        %v590 = vcombine.high %v565, %v581
        %v592 = vunpack.c.l.s4 1934713408
        %v593 = vunpack.c.0.s8 %v592
        %v594 = vlaneseq
        %v595 = vshrl.u32 %v594, 7
        %v596 = vsub.s32 %v593, %v595
        %v597 = vrot.slane %v589, %v596
        %v599 = vunpack.c.l.s4 1934713408
        %v600 = vunpack.c.0.s8 %v599
        %v601 = vlaneseq
        %v602 = vshrl.u32 %v601, 7
        %v603 = vsub.s32 %v600, %v602
        %v604 = vrot.slane %v590, %v603
        %v605 = vcombine.low %v572, %v588
        %v606 = vcombine.high %v572, %v588
        %v608 = vunpack.c.l.s4 1934713408
        %v609 = vunpack.c.0.s8 %v608
        %v610 = vlaneseq
        %v611 = vshrl.u32 %v610, 7
        %v612 = vsub.s32 %v609, %v611
        %v613 = vrot.slane %v605, %v612
        %v615 = vunpack.c.l.s4 1934713408
        %v616 = vunpack.c.0.s8 %v615
        %v617 = vlaneseq
        %v618 = vshrl.u32 %v617, 7
        %v619 = vsub.s32 %v616, %v618
        %v620 = vrot.slane %v606, %v619
        %v621 = vcombine.high %v597, 0.0
        %v622 = vcombine.high %v604, 0.0
        %v623 = vcombine.high %v613, 0.0
        %v624 = vcombine.high %v620, 0.0
        %v625 = vcombine.low %v449, %v548
        %v626 = vcombine.high %v449, %v548
        %v628 = vunpack.c.l.s4 1983009808
        %v629 = vunpack.c.0.s8 %v628
        %v630 = vlaneseq
        %v631 = vshrl.u32 %v630, 7
        %v632 = vsub.s32 %v629, %v631
        %v633 = vrot.slane %v625, %v632
        %v635 = vunpack.c.l.s4 1983009808
        %v636 = vunpack.c.0.s8 %v635
        %v637 = vlaneseq
        %v638 = vshrl.u32 %v637, 7
        %v639 = vsub.s32 %v636, %v638
        %v640 = vrot.slane %v626, %v639
        %v641 = vcombine.low %v542, %v554
        %v642 = vcombine.high %v542, %v554
        %v644 = vunpack.c.l.s4 1983009808
        %v645 = vunpack.c.0.s8 %v644
        %v646 = vlaneseq
        %v647 = vshrl.u32 %v646, 7
        %v648 = vsub.s32 %v645, %v647
        %v649 = vrot.slane %v641, %v648
        %v651 = vunpack.c.l.s4 1983009808
        %v652 = vunpack.c.0.s8 %v651
        %v653 = vlaneseq
        %v654 = vshrl.u32 %v653, 7
        %v655 = vsub.s32 %v652, %v654
        %v656 = vrot.slane %v642, %v655
        %v657 = vcombine.low %v633, %v649
        %v658 = vcombine.high %v633, %v649
        %v660 = vunpack.c.l.s4 1934713408
        %v661 = vunpack.c.0.s8 %v660
        %v662 = vlaneseq
        %v663 = vshrl.u32 %v662, 7
        %v664 = vsub.s32 %v661, %v663
        %v665 = vrot.slane %v657, %v664
        %v667 = vunpack.c.l.s4 1934713408
        %v668 = vunpack.c.0.s8 %v667
        %v669 = vlaneseq
        %v670 = vshrl.u32 %v669, 7
        %v671 = vsub.s32 %v668, %v670
        %v672 = vrot.slane %v658, %v671
        %v673 = vcombine.low %v640, %v656
        %v674 = vcombine.high %v640, %v656
        %v676 = vunpack.c.l.s4 1934713408
        %v677 = vunpack.c.0.s8 %v676
        %v678 = vlaneseq
        %v679 = vshrl.u32 %v678, 7
        %v680 = vsub.s32 %v677, %v679
        %v681 = vrot.slane %v673, %v680
        %v683 = vunpack.c.l.s4 1934713408
        %v684 = vunpack.c.0.s8 %v683
        %v685 = vlaneseq
        %v686 = vshrl.u32 %v685, 7
        %v687 = vsub.s32 %v684, %v686
        %v688 = vrot.slane %v674, %v687
        %v689 = vcombine.high %v665, 0.0
        %v690 = vcombine.high %v672, 0.0
        %v691 = vcombine.high %v681, 0.0
        %v692 = vcombine.high %v688, 0.0
        %v693 = vcombine.low %v597, %v604
        %v695 = vunpack.c.l.s4 1983009808
        %v696 = vunpack.c.0.s8 %v695
        %v697 = vlaneseq
        %v698 = vshrl.u32 %v697, 7
        %v699 = vsub.s32 %v696, %v698
        %v700 = vrot.slane %v693, %v699
        %v701 = vcombine.low %v621, %v622
        %v703 = vunpack.c.l.s4 1983009808
        %v704 = vunpack.c.0.s8 %v703
        %v705 = vlaneseq
        %v706 = vshrl.u32 %v705, 7
        %v707 = vsub.s32 %v704, %v706
        %v708 = vrot.slane %v701, %v707
        %v709 = vcombine.low %v613, %v620
        %v711 = vunpack.c.l.s4 1983009808
        %v712 = vunpack.c.0.s8 %v711
        %v713 = vlaneseq
        %v714 = vshrl.u32 %v713, 7
        %v715 = vsub.s32 %v712, %v714
        %v716 = vrot.slane %v709, %v715
        %v717 = vcombine.low %v623, %v624
        %v719 = vunpack.c.l.s4 1983009808
        %v720 = vunpack.c.0.s8 %v719
        %v721 = vlaneseq
        %v722 = vshrl.u32 %v721, 7
        %v723 = vsub.s32 %v720, %v722
        %v724 = vrot.slane %v717, %v723
        %v725 = vcombine.low %v700, %v708
        %v726 = vcombine.high %v700, %v708
        %v728 = vunpack.c.l.s4 1934713408
        %v729 = vunpack.c.0.s8 %v728
        %v730 = vlaneseq
        %v731 = vshrl.u32 %v730, 7
        %v732 = vsub.s32 %v729, %v731
        %v733 = vrot.slane %v725, %v732
        %v735 = vunpack.c.l.s4 1934713408
        %v736 = vunpack.c.0.s8 %v735
        %v737 = vlaneseq
        %v738 = vshrl.u32 %v737, 7
        %v739 = vsub.s32 %v736, %v738
        %v740 = vrot.slane %v726, %v739
        %v741 = vcombine.low %v716, %v724
        %v742 = vcombine.high %v716, %v724
        %v744 = vunpack.c.l.s4 1934713408
        %v745 = vunpack.c.0.s8 %v744
        %v746 = vlaneseq
        %v747 = vshrl.u32 %v746, 7
        %v748 = vsub.s32 %v745, %v747
        %v749 = vrot.slane %v741, %v748
        %v751 = vunpack.c.l.s4 1934713408
        %v752 = vunpack.c.0.s8 %v751
        %v753 = vlaneseq
        %v754 = vshrl.u32 %v753, 7
        %v755 = vsub.s32 %v752, %v754
        %v756 = vrot.slane %v742, %v755
        %v757 = vcombine.low %v733, %v749
        %v758 = vcombine.high %v733, %v749
        %v759 = vcombine.low %v740, %v756
        %v760 = vcombine.high %v740, %v756
        %v761 = vcombine.low %v665, %v672
        %v763 = vunpack.c.l.s4 1983009808
        %v764 = vunpack.c.0.s8 %v763
        %v765 = vlaneseq
        %v766 = vshrl.u32 %v765, 7
        %v767 = vsub.s32 %v764, %v766
        %v768 = vrot.slane %v761, %v767
        %v769 = vcombine.low %v689, %v690
        %v771 = vunpack.c.l.s4 1983009808
        %v772 = vunpack.c.0.s8 %v771
        %v773 = vlaneseq
        %v774 = vshrl.u32 %v773, 7
        %v775 = vsub.s32 %v772, %v774
        %v776 = vrot.slane %v769, %v775
        %v777 = vcombine.low %v681, %v688
        %v779 = vunpack.c.l.s4 1983009808
        %v780 = vunpack.c.0.s8 %v779
        %v781 = vlaneseq
        %v782 = vshrl.u32 %v781, 7
        %v783 = vsub.s32 %v780, %v782
        %v784 = vrot.slane %v777, %v783
        %v785 = vcombine.low %v691, %v692
        %v787 = vunpack.c.l.s4 1983009808
        %v788 = vunpack.c.0.s8 %v787
        %v789 = vlaneseq
        %v790 = vshrl.u32 %v789, 7
        %v791 = vsub.s32 %v788, %v790
        %v792 = vrot.slane %v785, %v791
        %v793 = vcombine.low %v768, %v776
        %v794 = vcombine.high %v768, %v776
        %v796 = vunpack.c.l.s4 1934713408
        %v797 = vunpack.c.0.s8 %v796
        %v798 = vlaneseq
        %v799 = vshrl.u32 %v798, 7
        %v800 = vsub.s32 %v797, %v799
        %v801 = vrot.slane %v793, %v800
        %v803 = vunpack.c.l.s4 1934713408
        %v804 = vunpack.c.0.s8 %v803
        %v805 = vlaneseq
        %v806 = vshrl.u32 %v805, 7
        %v807 = vsub.s32 %v804, %v806
        %v808 = vrot.slane %v794, %v807
        %v809 = vcombine.low %v784, %v792
        %v810 = vcombine.high %v784, %v792
        %v812 = vunpack.c.l.s4 1934713408
        %v813 = vunpack.c.0.s8 %v812
        %v814 = vlaneseq
        %v815 = vshrl.u32 %v814, 7
        %v816 = vsub.s32 %v813, %v815
        %v817 = vrot.slane %v809, %v816
        %v819 = vunpack.c.l.s4 1934713408
        %v820 = vunpack.c.0.s8 %v819
        %v821 = vlaneseq
        %v822 = vshrl.u32 %v821, 7
        %v823 = vsub.s32 %v820, %v822
        %v824 = vrot.slane %v810, %v823
        %v825 = vcombine.low %v801, %v817
        %v826 = vcombine.high %v801, %v817
        %v827 = vcombine.low %v808, %v824
        %v828 = vcombine.high %v808, %v824
        %831 = vrot.lane.b32.xlu0 %v529, 120
        %v832 = vpop.permute.xlu0 %831
        %833 = vrot.lane.b32.xlu0 %v534, 120
        %v834 = vpop.permute.xlu0 %833
        %837 = vrot.lane.b32.xlu0 %v529, 112
        %v838 = vpop.permute.xlu0 %837
        %839 = vrot.lane.b32.xlu0 %v534, 112
        %v840 = vpop.permute.xlu0 %839
        %843 = vrot.lane.b32.xlu0 %v529, 104
        %v844 = vpop.permute.xlu0 %843
        %845 = vrot.lane.b32.xlu0 %v534, 104
        %v846 = vpop.permute.xlu0 %845
        %v849 = vcombine.low %v529, %v838
        %v850 = vcombine.high %v529, %v838
        %v852 = vunpack.c.l.s4 1983009808
        %v853 = vunpack.c.0.s8 %v852
        %v854 = vlaneseq
        %v855 = vshrl.u32 %v854, 7
        %v856 = vsub.s32 %v853, %v855
        %v857 = vrot.slane %v849, %v856
        %v859 = vunpack.c.l.s4 1983009808
        %v860 = vunpack.c.0.s8 %v859
        %v861 = vlaneseq
        %v862 = vshrl.u32 %v861, 7
        %v863 = vsub.s32 %v860, %v862
        %v864 = vrot.slane %v850, %v863
        %v865 = vcombine.low %v832, %v844
        %v866 = vcombine.high %v832, %v844
        %v868 = vunpack.c.l.s4 1983009808
        %v869 = vunpack.c.0.s8 %v868
        %v870 = vlaneseq
        %v871 = vshrl.u32 %v870, 7
        %v872 = vsub.s32 %v869, %v871
        %v873 = vrot.slane %v865, %v872
        %v875 = vunpack.c.l.s4 1983009808
        %v876 = vunpack.c.0.s8 %v875
        %v877 = vlaneseq
        %v878 = vshrl.u32 %v877, 7
        %v879 = vsub.s32 %v876, %v878
        %v880 = vrot.slane %v866, %v879
        %v881 = vcombine.low %v857, %v873
        %v882 = vcombine.high %v857, %v873
        %v884 = vunpack.c.l.s4 1934713408
        %v885 = vunpack.c.0.s8 %v884
        %v886 = vlaneseq
        %v887 = vshrl.u32 %v886, 7
        %v888 = vsub.s32 %v885, %v887
        %v889 = vrot.slane %v881, %v888
        %v891 = vunpack.c.l.s4 1934713408
        %v892 = vunpack.c.0.s8 %v891
        %v893 = vlaneseq
        %v894 = vshrl.u32 %v893, 7
        %v895 = vsub.s32 %v892, %v894
        %v896 = vrot.slane %v882, %v895
        %v897 = vcombine.low %v864, %v880
        %v898 = vcombine.high %v864, %v880
        %v900 = vunpack.c.l.s4 1934713408
        %v901 = vunpack.c.0.s8 %v900
        %v902 = vlaneseq
        %v903 = vshrl.u32 %v902, 7
        %v904 = vsub.s32 %v901, %v903
        %v905 = vrot.slane %v897, %v904
        %v907 = vunpack.c.l.s4 1934713408
        %v908 = vunpack.c.0.s8 %v907
        %v909 = vlaneseq
        %v910 = vshrl.u32 %v909, 7
        %v911 = vsub.s32 %v908, %v910
        %v912 = vrot.slane %v898, %v911
        %v913 = vcombine.high %v889, 0.0
        %v914 = vcombine.high %v896, 0.0
        %v915 = vcombine.high %v905, 0.0
        %v916 = vcombine.high %v912, 0.0
        %v917 = vcombine.low %v534, %v840
        %v918 = vcombine.high %v534, %v840
        %v920 = vunpack.c.l.s4 1983009808
        %v921 = vunpack.c.0.s8 %v920
        %v922 = vlaneseq
        %v923 = vshrl.u32 %v922, 7
        %v924 = vsub.s32 %v921, %v923
        %v925 = vrot.slane %v917, %v924
        %v927 = vunpack.c.l.s4 1983009808
        %v928 = vunpack.c.0.s8 %v927
        %v929 = vlaneseq
        %v930 = vshrl.u32 %v929, 7
        %v931 = vsub.s32 %v928, %v930
        %v932 = vrot.slane %v918, %v931
        %v933 = vcombine.low %v834, %v846
        %v934 = vcombine.high %v834, %v846
        %v936 = vunpack.c.l.s4 1983009808
        %v937 = vunpack.c.0.s8 %v936
        %v938 = vlaneseq
        %v939 = vshrl.u32 %v938, 7
        %v940 = vsub.s32 %v937, %v939
        %v941 = vrot.slane %v933, %v940
        %v943 = vunpack.c.l.s4 1983009808
        %v944 = vunpack.c.0.s8 %v943
        %v945 = vlaneseq
        %v946 = vshrl.u32 %v945, 7
        %v947 = vsub.s32 %v944, %v946
        %v948 = vrot.slane %v934, %v947
        %v949 = vcombine.low %v925, %v941
        %v950 = vcombine.high %v925, %v941
        %v952 = vunpack.c.l.s4 1934713408
        %v953 = vunpack.c.0.s8 %v952
        %v954 = vlaneseq
        %v955 = vshrl.u32 %v954, 7
        %v956 = vsub.s32 %v953, %v955
        %v957 = vrot.slane %v949, %v956
        %v959 = vunpack.c.l.s4 1934713408
        %v960 = vunpack.c.0.s8 %v959
        %v961 = vlaneseq
        %v962 = vshrl.u32 %v961, 7
        %v963 = vsub.s32 %v960, %v962
        %v964 = vrot.slane %v950, %v963
        %v965 = vcombine.low %v932, %v948
        %v966 = vcombine.high %v932, %v948
        %v968 = vunpack.c.l.s4 1934713408
        %v969 = vunpack.c.0.s8 %v968
        %v970 = vlaneseq
        %v971 = vshrl.u32 %v970, 7
        %v972 = vsub.s32 %v969, %v971
        %v973 = vrot.slane %v965, %v972
        %v975 = vunpack.c.l.s4 1934713408
        %v976 = vunpack.c.0.s8 %v975
        %v977 = vlaneseq
        %v978 = vshrl.u32 %v977, 7
        %v979 = vsub.s32 %v976, %v978
        %v980 = vrot.slane %v966, %v979
        %v981 = vcombine.high %v957, 0.0
        %v982 = vcombine.high %v964, 0.0
        %v983 = vcombine.high %v973, 0.0
        %v984 = vcombine.high %v980, 0.0
        %v985 = vcombine.low %v889, %v896
        %v987 = vunpack.c.l.s4 1983009808
        %v988 = vunpack.c.0.s8 %v987
        %v989 = vlaneseq
        %v990 = vshrl.u32 %v989, 7
        %v991 = vsub.s32 %v988, %v990
        %v992 = vrot.slane %v985, %v991
        %v993 = vcombine.low %v913, %v914
        %v995 = vunpack.c.l.s4 1983009808
        %v996 = vunpack.c.0.s8 %v995
        %v997 = vlaneseq
        %v998 = vshrl.u32 %v997, 7
        %v999 = vsub.s32 %v996, %v998
        %v1000 = vrot.slane %v993, %v999
        %v1001 = vcombine.low %v905, %v912
        %v1003 = vunpack.c.l.s4 1983009808
        %v1004 = vunpack.c.0.s8 %v1003
        %v1005 = vlaneseq
        %v1006 = vshrl.u32 %v1005, 7
        %v1007 = vsub.s32 %v1004, %v1006
        %v1008 = vrot.slane %v1001, %v1007
        %v1009 = vcombine.low %v915, %v916
        %v1011 = vunpack.c.l.s4 1983009808
        %v1012 = vunpack.c.0.s8 %v1011
        %v1013 = vlaneseq
        %v1014 = vshrl.u32 %v1013, 7
        %v1015 = vsub.s32 %v1012, %v1014
        %v1016 = vrot.slane %v1009, %v1015
        %v1017 = vcombine.low %v992, %v1000
        %v1018 = vcombine.high %v992, %v1000
        %v1020 = vunpack.c.l.s4 1934713408
        %v1021 = vunpack.c.0.s8 %v1020
        %v1022 = vlaneseq
        %v1023 = vshrl.u32 %v1022, 7
        %v1024 = vsub.s32 %v1021, %v1023
        %v1025 = vrot.slane %v1017, %v1024
        %v1027 = vunpack.c.l.s4 1934713408
        %v1028 = vunpack.c.0.s8 %v1027
        %v1029 = vlaneseq
        %v1030 = vshrl.u32 %v1029, 7
        %v1031 = vsub.s32 %v1028, %v1030
        %v1032 = vrot.slane %v1018, %v1031
        %v1033 = vcombine.low %v1008, %v1016
        %v1034 = vcombine.high %v1008, %v1016
        %v1036 = vunpack.c.l.s4 1934713408
        %v1037 = vunpack.c.0.s8 %v1036
        %v1038 = vlaneseq
        %v1039 = vshrl.u32 %v1038, 7
        %v1040 = vsub.s32 %v1037, %v1039
        %v1041 = vrot.slane %v1033, %v1040
        %v1043 = vunpack.c.l.s4 1934713408
        %v1044 = vunpack.c.0.s8 %v1043
        %v1045 = vlaneseq
        %v1046 = vshrl.u32 %v1045, 7
        %v1047 = vsub.s32 %v1044, %v1046
        %v1048 = vrot.slane %v1034, %v1047
        %v1049 = vcombine.low %v1025, %v1041
        %v1050 = vcombine.high %v1025, %v1041
        %v1051 = vcombine.low %v1032, %v1048
        %v1052 = vcombine.high %v1032, %v1048
        %v1053 = vcombine.low %v957, %v964
        %v1055 = vunpack.c.l.s4 1983009808
        %v1056 = vunpack.c.0.s8 %v1055
        %v1057 = vlaneseq
        %v1058 = vshrl.u32 %v1057, 7
        %v1059 = vsub.s32 %v1056, %v1058
        %v1060 = vrot.slane %v1053, %v1059
        %v1061 = vcombine.low %v981, %v982
        %v1063 = vunpack.c.l.s4 1983009808
        %v1064 = vunpack.c.0.s8 %v1063
        %v1065 = vlaneseq
        %v1066 = vshrl.u32 %v1065, 7
        %v1067 = vsub.s32 %v1064, %v1066
        %v1068 = vrot.slane %v1061, %v1067
        %v1069 = vcombine.low %v973, %v980
        %v1071 = vunpack.c.l.s4 1983009808
        %v1072 = vunpack.c.0.s8 %v1071
        %v1073 = vlaneseq
        %v1074 = vshrl.u32 %v1073, 7
        %v1075 = vsub.s32 %v1072, %v1074
        %v1076 = vrot.slane %v1069, %v1075
        %v1077 = vcombine.low %v983, %v984
        %v1079 = vunpack.c.l.s4 1983009808
        %v1080 = vunpack.c.0.s8 %v1079
        %v1081 = vlaneseq
        %v1082 = vshrl.u32 %v1081, 7
        %v1083 = vsub.s32 %v1080, %v1082
        %v1084 = vrot.slane %v1077, %v1083
        %v1085 = vcombine.low %v1060, %v1068
        %v1086 = vcombine.high %v1060, %v1068
        %v1088 = vunpack.c.l.s4 1934713408
        %v1089 = vunpack.c.0.s8 %v1088
        %v1090 = vlaneseq
        %v1091 = vshrl.u32 %v1090, 7
        %v1092 = vsub.s32 %v1089, %v1091
        %v1093 = vrot.slane %v1085, %v1092
        %v1095 = vunpack.c.l.s4 1934713408
        %v1096 = vunpack.c.0.s8 %v1095
        %v1097 = vlaneseq
        %v1098 = vshrl.u32 %v1097, 7
        %v1099 = vsub.s32 %v1096, %v1098
        %v1100 = vrot.slane %v1086, %v1099
        %v1101 = vcombine.low %v1076, %v1084
        %v1102 = vcombine.high %v1076, %v1084
        %v1104 = vunpack.c.l.s4 1934713408
        %v1105 = vunpack.c.0.s8 %v1104
        %v1106 = vlaneseq
        %v1107 = vshrl.u32 %v1106, 7
        %v1108 = vsub.s32 %v1105, %v1107
        %v1109 = vrot.slane %v1101, %v1108
        %v1111 = vunpack.c.l.s4 1934713408
        %v1112 = vunpack.c.0.s8 %v1111
        %v1113 = vlaneseq
        %v1114 = vshrl.u32 %v1113, 7
        %v1115 = vsub.s32 %v1112, %v1114
        %v1116 = vrot.slane %v1102, %v1115
        %v1117 = vcombine.low %v1093, %v1109
        %v1118 = vcombine.high %v1093, %v1109
        %v1119 = vcombine.low %v1100, %v1116
        %v1120 = vcombine.high %v1100, %v1116
        %1121 = vrot.lane.b32.xlu0 %v529, 96
        %v1122 = vpop.permute.xlu0 %1121
        %1123 = vrot.lane.b32.xlu0 %v534, 96
        %v1124 = vpop.permute.xlu0 %1123
        %1125 = vrot.lane.b32.xlu0 %v832, 96
        %v1126 = vpop.permute.xlu0 %1125
        %1127 = vrot.lane.b32.xlu0 %v834, 96
        %v1128 = vpop.permute.xlu0 %1127
        %1129 = vrot.lane.b32.xlu0 %v838, 96
        %v1130 = vpop.permute.xlu0 %1129
        %1131 = vrot.lane.b32.xlu0 %v840, 96
        %v1132 = vpop.permute.xlu0 %1131
        %1133 = vrot.lane.b32.xlu0 %v844, 96
        %v1134 = vpop.permute.xlu0 %1133
        %1135 = vrot.lane.b32.xlu0 %v846, 96
        %v1136 = vpop.permute.xlu0 %1135
        %v1145 = vcombine.low %v1122, %v1130
        %v1146 = vcombine.high %v1122, %v1130
        %v1148 = vunpack.c.l.s4 1983009808
        %v1149 = vunpack.c.0.s8 %v1148
        %v1150 = vlaneseq
        %v1151 = vshrl.u32 %v1150, 7
        %v1152 = vsub.s32 %v1149, %v1151
        %v1153 = vrot.slane %v1145, %v1152
        %v1155 = vunpack.c.l.s4 1983009808
        %v1156 = vunpack.c.0.s8 %v1155
        %v1157 = vlaneseq
        %v1158 = vshrl.u32 %v1157, 7
        %v1159 = vsub.s32 %v1156, %v1158
        %v1160 = vrot.slane %v1146, %v1159
        %v1161 = vcombine.low %v1126, %v1134
        %v1162 = vcombine.high %v1126, %v1134
        %v1164 = vunpack.c.l.s4 1983009808
        %v1165 = vunpack.c.0.s8 %v1164
        %v1166 = vlaneseq
        %v1167 = vshrl.u32 %v1166, 7
        %v1168 = vsub.s32 %v1165, %v1167
        %v1169 = vrot.slane %v1161, %v1168
        %v1171 = vunpack.c.l.s4 1983009808
        %v1172 = vunpack.c.0.s8 %v1171
        %v1173 = vlaneseq
        %v1174 = vshrl.u32 %v1173, 7
        %v1175 = vsub.s32 %v1172, %v1174
        %v1176 = vrot.slane %v1162, %v1175
        %v1177 = vcombine.low %v1153, %v1169
        %v1178 = vcombine.high %v1153, %v1169
        %v1180 = vunpack.c.l.s4 1934713408
        %v1181 = vunpack.c.0.s8 %v1180
        %v1182 = vlaneseq
        %v1183 = vshrl.u32 %v1182, 7
        %v1184 = vsub.s32 %v1181, %v1183
        %v1185 = vrot.slane %v1177, %v1184
        %v1187 = vunpack.c.l.s4 1934713408
        %v1188 = vunpack.c.0.s8 %v1187
        %v1189 = vlaneseq
        %v1190 = vshrl.u32 %v1189, 7
        %v1191 = vsub.s32 %v1188, %v1190
        %v1192 = vrot.slane %v1178, %v1191
        %v1193 = vcombine.low %v1160, %v1176
        %v1194 = vcombine.high %v1160, %v1176
        %v1196 = vunpack.c.l.s4 1934713408
        %v1197 = vunpack.c.0.s8 %v1196
        %v1198 = vlaneseq
        %v1199 = vshrl.u32 %v1198, 7
        %v1200 = vsub.s32 %v1197, %v1199
        %v1201 = vrot.slane %v1193, %v1200
        %v1203 = vunpack.c.l.s4 1934713408
        %v1204 = vunpack.c.0.s8 %v1203
        %v1205 = vlaneseq
        %v1206 = vshrl.u32 %v1205, 7
        %v1207 = vsub.s32 %v1204, %v1206
        %v1208 = vrot.slane %v1194, %v1207
        %v1209 = vcombine.high %v1185, 0.0
        %v1210 = vcombine.high %v1192, 0.0
        %v1211 = vcombine.high %v1201, 0.0
        %v1212 = vcombine.high %v1208, 0.0
        %v1213 = vcombine.low %v1124, %v1132
        %v1214 = vcombine.high %v1124, %v1132
        %v1216 = vunpack.c.l.s4 1983009808
        %v1217 = vunpack.c.0.s8 %v1216
        %v1218 = vlaneseq
        %v1219 = vshrl.u32 %v1218, 7
        %v1220 = vsub.s32 %v1217, %v1219
        %v1221 = vrot.slane %v1213, %v1220
        %v1223 = vunpack.c.l.s4 1983009808
        %v1224 = vunpack.c.0.s8 %v1223
        %v1225 = vlaneseq
        %v1226 = vshrl.u32 %v1225, 7
        %v1227 = vsub.s32 %v1224, %v1226
        %v1228 = vrot.slane %v1214, %v1227
        %v1229 = vcombine.low %v1128, %v1136
        %v1230 = vcombine.high %v1128, %v1136
        %v1232 = vunpack.c.l.s4 1983009808
        %v1233 = vunpack.c.0.s8 %v1232
        %v1234 = vlaneseq
        %v1235 = vshrl.u32 %v1234, 7
        %v1236 = vsub.s32 %v1233, %v1235
        %v1237 = vrot.slane %v1229, %v1236
        %v1239 = vunpack.c.l.s4 1983009808
        %v1240 = vunpack.c.0.s8 %v1239
        %v1241 = vlaneseq
        %v1242 = vshrl.u32 %v1241, 7
        %v1243 = vsub.s32 %v1240, %v1242
        %v1244 = vrot.slane %v1230, %v1243
        %v1245 = vcombine.low %v1221, %v1237
        %v1246 = vcombine.high %v1221, %v1237
        %v1248 = vunpack.c.l.s4 1934713408
        %v1249 = vunpack.c.0.s8 %v1248
        %v1250 = vlaneseq
        %v1251 = vshrl.u32 %v1250, 7
        %v1252 = vsub.s32 %v1249, %v1251
        %v1253 = vrot.slane %v1245, %v1252
        %v1255 = vunpack.c.l.s4 1934713408
        %v1256 = vunpack.c.0.s8 %v1255
        %v1257 = vlaneseq
        %v1258 = vshrl.u32 %v1257, 7
        %v1259 = vsub.s32 %v1256, %v1258
        %v1260 = vrot.slane %v1246, %v1259
        %v1261 = vcombine.low %v1228, %v1244
        %v1262 = vcombine.high %v1228, %v1244
        %v1264 = vunpack.c.l.s4 1934713408
        %v1265 = vunpack.c.0.s8 %v1264
        %v1266 = vlaneseq
        %v1267 = vshrl.u32 %v1266, 7
        %v1268 = vsub.s32 %v1265, %v1267
        %v1269 = vrot.slane %v1261, %v1268
        %v1271 = vunpack.c.l.s4 1934713408
        %v1272 = vunpack.c.0.s8 %v1271
        %v1273 = vlaneseq
        %v1274 = vshrl.u32 %v1273, 7
        %v1275 = vsub.s32 %v1272, %v1274
        %v1276 = vrot.slane %v1262, %v1275
        %v1277 = vcombine.high %v1253, 0.0
        %v1278 = vcombine.high %v1260, 0.0
        %v1279 = vcombine.high %v1269, 0.0
        %v1280 = vcombine.high %v1276, 0.0
        %v1281 = vcombine.low %v1185, %v1192
        %v1283 = vunpack.c.l.s4 1983009808
        %v1284 = vunpack.c.0.s8 %v1283
        %v1285 = vlaneseq
        %v1286 = vshrl.u32 %v1285, 7
        %v1287 = vsub.s32 %v1284, %v1286
        %v1288 = vrot.slane %v1281, %v1287
        %v1289 = vcombine.low %v1209, %v1210
        %v1291 = vunpack.c.l.s4 1983009808
        %v1292 = vunpack.c.0.s8 %v1291
        %v1293 = vlaneseq
        %v1294 = vshrl.u32 %v1293, 7
        %v1295 = vsub.s32 %v1292, %v1294
        %v1296 = vrot.slane %v1289, %v1295
        %v1297 = vcombine.low %v1201, %v1208
        %v1299 = vunpack.c.l.s4 1983009808
        %v1300 = vunpack.c.0.s8 %v1299
        %v1301 = vlaneseq
        %v1302 = vshrl.u32 %v1301, 7
        %v1303 = vsub.s32 %v1300, %v1302
        %v1304 = vrot.slane %v1297, %v1303
        %v1305 = vcombine.low %v1211, %v1212
        %v1307 = vunpack.c.l.s4 1983009808
        %v1308 = vunpack.c.0.s8 %v1307
        %v1309 = vlaneseq
        %v1310 = vshrl.u32 %v1309, 7
        %v1311 = vsub.s32 %v1308, %v1310
        %v1312 = vrot.slane %v1305, %v1311
        %v1313 = vcombine.low %v1288, %v1296
        %v1314 = vcombine.high %v1288, %v1296
        %v1316 = vunpack.c.l.s4 1934713408
        %v1317 = vunpack.c.0.s8 %v1316
        %v1318 = vlaneseq
        %v1319 = vshrl.u32 %v1318, 7
        %v1320 = vsub.s32 %v1317, %v1319
        %v1321 = vrot.slane %v1313, %v1320
        %v1323 = vunpack.c.l.s4 1934713408
        %v1324 = vunpack.c.0.s8 %v1323
        %v1325 = vlaneseq
        %v1326 = vshrl.u32 %v1325, 7
        %v1327 = vsub.s32 %v1324, %v1326
        %v1328 = vrot.slane %v1314, %v1327
        %v1329 = vcombine.low %v1304, %v1312
        %v1330 = vcombine.high %v1304, %v1312
        %v1332 = vunpack.c.l.s4 1934713408
        %v1333 = vunpack.c.0.s8 %v1332
        %v1334 = vlaneseq
        %v1335 = vshrl.u32 %v1334, 7
        %v1336 = vsub.s32 %v1333, %v1335
        %v1337 = vrot.slane %v1329, %v1336
        %v1339 = vunpack.c.l.s4 1934713408
        %v1340 = vunpack.c.0.s8 %v1339
        %v1341 = vlaneseq
        %v1342 = vshrl.u32 %v1341, 7
        %v1343 = vsub.s32 %v1340, %v1342
        %v1344 = vrot.slane %v1330, %v1343
        %v1345 = vcombine.low %v1321, %v1337
        %v1346 = vcombine.high %v1321, %v1337
        %v1347 = vcombine.low %v1328, %v1344
        %v1348 = vcombine.high %v1328, %v1344
        %v1349 = vcombine.low %v1253, %v1260
        %v1351 = vunpack.c.l.s4 1983009808
        %v1352 = vunpack.c.0.s8 %v1351
        %v1353 = vlaneseq
        %v1354 = vshrl.u32 %v1353, 7
        %v1355 = vsub.s32 %v1352, %v1354
        %v1356 = vrot.slane %v1349, %v1355
        %v1357 = vcombine.low %v1277, %v1278
        %v1359 = vunpack.c.l.s4 1983009808
        %v1360 = vunpack.c.0.s8 %v1359
        %v1361 = vlaneseq
        %v1362 = vshrl.u32 %v1361, 7
        %v1363 = vsub.s32 %v1360, %v1362
        %v1364 = vrot.slane %v1357, %v1363
        %v1365 = vcombine.low %v1269, %v1276
        %v1367 = vunpack.c.l.s4 1983009808
        %v1368 = vunpack.c.0.s8 %v1367
        %v1369 = vlaneseq
        %v1370 = vshrl.u32 %v1369, 7
        %v1371 = vsub.s32 %v1368, %v1370
        %v1372 = vrot.slane %v1365, %v1371
        %v1373 = vcombine.low %v1279, %v1280
        %v1375 = vunpack.c.l.s4 1983009808
        %v1376 = vunpack.c.0.s8 %v1375
        %v1377 = vlaneseq
        %v1378 = vshrl.u32 %v1377, 7
        %v1379 = vsub.s32 %v1376, %v1378
        %v1380 = vrot.slane %v1373, %v1379
        %v1381 = vcombine.low %v1356, %v1364
        %v1382 = vcombine.high %v1356, %v1364
        %v1384 = vunpack.c.l.s4 1934713408
        %v1385 = vunpack.c.0.s8 %v1384
        %v1386 = vlaneseq
        %v1387 = vshrl.u32 %v1386, 7
        %v1388 = vsub.s32 %v1385, %v1387
        %v1389 = vrot.slane %v1381, %v1388
        %v1391 = vunpack.c.l.s4 1934713408
        %v1392 = vunpack.c.0.s8 %v1391
        %v1393 = vlaneseq
        %v1394 = vshrl.u32 %v1393, 7
        %v1395 = vsub.s32 %v1392, %v1394
        %v1396 = vrot.slane %v1382, %v1395
        %v1397 = vcombine.low %v1372, %v1380
        %v1398 = vcombine.high %v1372, %v1380
        %v1400 = vunpack.c.l.s4 1934713408
        %v1401 = vunpack.c.0.s8 %v1400
        %v1402 = vlaneseq
        %v1403 = vshrl.u32 %v1402, 7
        %v1404 = vsub.s32 %v1401, %v1403
        %v1405 = vrot.slane %v1397, %v1404
        %v1407 = vunpack.c.l.s4 1934713408
        %v1408 = vunpack.c.0.s8 %v1407
        %v1409 = vlaneseq
        %v1410 = vshrl.u32 %v1409, 7
        %v1411 = vsub.s32 %v1408, %v1410
        %v1412 = vrot.slane %v1398, %v1411
        %v1413 = vcombine.low %v1389, %v1405
        %v1414 = vcombine.high %v1389, %v1405
        %v1415 = vcombine.low %v1396, %v1412
        %v1416 = vcombine.high %v1396, %v1412
        %vm1417 = vcmask 64512
        %v1419 = vsel %vm1417, %v757, 0
        %v1422 = vsel %vm1417, %v825, 0
        %v1425 = vsel %vm1417, %v1049, 0
        %v1428 = vsel %vm1417, %v1117, 0
        %1430 = vmatprep.subr.mxu0 0.0
        %1431 = vmatpush1.xpose.msra.mxu0 0.0
        %1432 = vmatprep.subr.mxu0 0.0
        %1433 = vmatpush1.xpose.msra.mxu0 0.0
        %1434 = vmatprep.subr.mxu0 0.0
        %1435 = vmatpush1.xpose.msra.mxu0 0.0
        %1436 = vmatprep.subr.mxu0 0.0
        %1437 = vmatpush1.xpose.msra.mxu0 0.0
        %1438 = vmatprep.subr.mxu0 0.0
        %1439 = vmatpush1.xpose.msra.mxu0 0.0
        %1440 = vmatprep.subr.mxu0 0.0
        %1441 = vmatpush1.xpose.msra.mxu0 0.0
        %1442 = vmatprep.subr.mxu0 0.0
        %1443 = vmatpush1.xpose.msra.mxu0 0.0
        %1444 = vmatprep.subr.mxu0 0.0
        %1445 = vmatpush1.xpose.msra.mxu0 0.0
        %1446 = vmatprep.subr.mxu0 0.0
        %1447 = vmatpush1.xpose.msra.mxu0 0.0
        %1448 = vmatprep.subr.mxu0 0.0
        %1449 = vmatpush1.xpose.msra.mxu0 0.0
        %1450 = vmatprep.subr.mxu0 0.0
        %1451 = vmatpush1.xpose.msra.mxu0 0.0
        %1452 = vmatprep.subr.mxu0 0.0
        %1453 = vmatpush1.xpose.msra.mxu0 0.0
        %1454 = vmatprep.subr.mxu0 0.0
        %1455 = vmatpush1.xpose.msra.mxu0 0.0
        %1456 = vmatprep.subr.mxu0 0.0
        %1457 = vmatpush1.xpose.msra.mxu0 0.0
        %1458 = vmatprep.subr.mxu0 0.0
        %1459 = vmatpush1.xpose.msra.mxu0 %v1428
        %1460 = vmatprep.subr.mxu0 0.0
        %1461 = vmatpush1.xpose.msra.mxu0 %v1425
        %1462 = vmatprep.subr.mxu0 0.0
        %1463 = vmatpush2.xpose.msra.mxu0 0.0
        %1464 = vmatprep.subr.mxu0 0.0
        %1465 = vmatpush2.xpose.msra.mxu0 0.0
        %1466 = vmatprep.subr.mxu0 0.0
        %1467 = vmatpush2.xpose.msra.mxu0 0.0
        %1468 = vmatprep.subr.mxu0 0.0
        %1469 = vmatpush2.xpose.msra.mxu0 0.0
        %1470 = vmatprep.subr.mxu0 0.0
        %1471 = vmatpush2.xpose.msra.mxu0 0.0
        %1472 = vmatprep.subr.mxu0 0.0
        %1473 = vmatpush2.xpose.msra.mxu0 0.0
        %1474 = vmatprep.subr.mxu0 0.0
        %1475 = vmatpush2.xpose.msra.mxu0 0.0
        %1476 = vmatprep.subr.mxu0 0.0
        %1477 = vmatpush2.xpose.msra.mxu0 0.0
        %1478 = vmatprep.subr.mxu0 0.0
        %1479 = vmatpush2.xpose.msra.mxu0 0.0
        %1480 = vmatprep.subr.mxu0 0.0
        %1481 = vmatpush2.xpose.msra.mxu0 0.0
        %1482 = vmatprep.subr.mxu0 0.0
        %1483 = vmatpush2.xpose.msra.mxu0 0.0
        %1484 = vmatprep.subr.mxu0 0.0
        %1485 = vmatpush2.xpose.msra.mxu0 0.0
        %1486 = vmatprep.subr.mxu0 0.0
        %1487 = vmatpush2.xpose.msra.mxu0 0.0
        %1488 = vmatprep.subr.mxu0 0.0
        %1489 = vmatpush2.xpose.msra.mxu0 0.0
        %1490 = vmatprep.subr.mxu0 0.0
        %1491 = vmatpush2.xpose.msra.mxu0 0.0
        %1492 = vmatprep.subr.mxu0 0.0
        %1493 = vmatpush2.xpose.msra.mxu0 0.0
        %1494 = vmatprep.mubr.f32.mxu0 0.0
        %1495 = vmatmul.mubr.f32.gmra.mxu0 %v1419
        %v1496 = vpop.f32.mrf.mxu0
        %v1497 = vadd.f32 %v347, %v1496
        %v1498 = vpop.f32.mrf.mxu0
        %1499 = vmatprep.mubr.f32.mxu0 0.0
        %1500 = vmatmul.mubr.f32.gmra.mxu0 %v1422
        %v1501 = vpop.f32.mrf.mxu0
        %v1502 = vadd.f32 %v348, %v1501
        %v1503 = vpop.f32.mrf.mxu0
        %1504 = vdwg.mxu0
        %v1506 = vsel %vm1417, %v758, 0
        %v1509 = vsel %vm1417, %v826, 0
        %v1512 = vsel %vm1417, %v1050, 0
        %v1515 = vsel %vm1417, %v1118, 0
        %1517 = vmatprep.subr.mxu0 0.0
        %1518 = vmatpush1.xpose.msra.mxu0 0.0
        %1519 = vmatprep.subr.mxu0 0.0
        %1520 = vmatpush1.xpose.msra.mxu0 0.0
        %1521 = vmatprep.subr.mxu0 0.0
        %1522 = vmatpush1.xpose.msra.mxu0 0.0
        %1523 = vmatprep.subr.mxu0 0.0
        %1524 = vmatpush1.xpose.msra.mxu0 0.0
        %1525 = vmatprep.subr.mxu0 0.0
        %1526 = vmatpush1.xpose.msra.mxu0 0.0
        %1527 = vmatprep.subr.mxu0 0.0
        %1528 = vmatpush1.xpose.msra.mxu0 0.0
        %1529 = vmatprep.subr.mxu0 0.0
        %1530 = vmatpush1.xpose.msra.mxu0 0.0
        %1531 = vmatprep.subr.mxu0 0.0
        %1532 = vmatpush1.xpose.msra.mxu0 0.0
        %1533 = vmatprep.subr.mxu0 0.0
        %1534 = vmatpush1.xpose.msra.mxu0 0.0
        %1535 = vmatprep.subr.mxu0 0.0
        %1536 = vmatpush1.xpose.msra.mxu0 0.0
        %1537 = vmatprep.subr.mxu0 0.0
        %1538 = vmatpush1.xpose.msra.mxu0 0.0
        %1539 = vmatprep.subr.mxu0 0.0
        %1540 = vmatpush1.xpose.msra.mxu0 0.0
        %1541 = vmatprep.subr.mxu0 0.0
        %1542 = vmatpush1.xpose.msra.mxu0 0.0
        %1543 = vmatprep.subr.mxu0 0.0
        %1544 = vmatpush1.xpose.msra.mxu0 0.0
        %1545 = vmatprep.subr.mxu0 0.0
        %1546 = vmatpush1.xpose.msra.mxu0 %v1515
        %1547 = vmatprep.subr.mxu0 0.0
        %1548 = vmatpush1.xpose.msra.mxu0 %v1512
        %1549 = vmatprep.subr.mxu0 0.0
        %1550 = vmatpush2.xpose.msra.mxu0 0.0
        %1551 = vmatprep.subr.mxu0 0.0
        %1552 = vmatpush2.xpose.msra.mxu0 0.0
        %1553 = vmatprep.subr.mxu0 0.0
        %1554 = vmatpush2.xpose.msra.mxu0 0.0
        %1555 = vmatprep.subr.mxu0 0.0
        %1556 = vmatpush2.xpose.msra.mxu0 0.0
        %1557 = vmatprep.subr.mxu0 0.0
        %1558 = vmatpush2.xpose.msra.mxu0 0.0
        %1559 = vmatprep.subr.mxu0 0.0
        %1560 = vmatpush2.xpose.msra.mxu0 0.0
        %1561 = vmatprep.subr.mxu0 0.0
        %1562 = vmatpush2.xpose.msra.mxu0 0.0
        %1563 = vmatprep.subr.mxu0 0.0
        %1564 = vmatpush2.xpose.msra.mxu0 0.0
        %1565 = vmatprep.subr.mxu0 0.0
        %1566 = vmatpush2.xpose.msra.mxu0 0.0
        %1567 = vmatprep.subr.mxu0 0.0
        %1568 = vmatpush2.xpose.msra.mxu0 0.0
        %1569 = vmatprep.subr.mxu0 0.0
        %1570 = vmatpush2.xpose.msra.mxu0 0.0
        %1571 = vmatprep.subr.mxu0 0.0
        %1572 = vmatpush2.xpose.msra.mxu0 0.0
        %1573 = vmatprep.subr.mxu0 0.0
        %1574 = vmatpush2.xpose.msra.mxu0 0.0
        %1575 = vmatprep.subr.mxu0 0.0
        %1576 = vmatpush2.xpose.msra.mxu0 0.0
        %1577 = vmatprep.subr.mxu0 0.0
        %1578 = vmatpush2.xpose.msra.mxu0 0.0
        %1579 = vmatprep.subr.mxu0 0.0
        %1580 = vmatpush2.xpose.msra.mxu0 0.0
        %1581 = vmatprep.mubr.f32.mxu0 0.0
        %1582 = vmatmul.mubr.f32.gmra.mxu0 %v1506
        %v1583 = vpop.f32.mrf.mxu0
        %v1584 = vadd.f32 %v347, %v1583
        %v1585 = vpop.f32.mrf.mxu0
        %1586 = vmatprep.mubr.f32.mxu0 0.0
        %1587 = vmatmul.mubr.f32.gmra.mxu0 %v1509
        %v1588 = vpop.f32.mrf.mxu0
        %v1589 = vadd.f32 %v348, %v1588
        %v1590 = vpop.f32.mrf.mxu0
        %1591 = vdwg.mxu0
        %v1593 = vsel %vm1417, %v759, 0
        %v1596 = vsel %vm1417, %v827, 0
        %v1599 = vsel %vm1417, %v1051, 0
        %v1602 = vsel %vm1417, %v1119, 0
        %1604 = vmatprep.subr.mxu0 0.0
        %1605 = vmatpush1.xpose.msra.mxu0 0.0
        %1606 = vmatprep.subr.mxu0 0.0
        %1607 = vmatpush1.xpose.msra.mxu0 0.0
        %1608 = vmatprep.subr.mxu0 0.0
        %1609 = vmatpush1.xpose.msra.mxu0 0.0
        %1610 = vmatprep.subr.mxu0 0.0
        %1611 = vmatpush1.xpose.msra.mxu0 0.0
        %1612 = vmatprep.subr.mxu0 0.0
        %1613 = vmatpush1.xpose.msra.mxu0 0.0
        %1614 = vmatprep.subr.mxu0 0.0
        %1615 = vmatpush1.xpose.msra.mxu0 0.0
        %1616 = vmatprep.subr.mxu0 0.0
        %1617 = vmatpush1.xpose.msra.mxu0 0.0
        %1618 = vmatprep.subr.mxu0 0.0
        %1619 = vmatpush1.xpose.msra.mxu0 0.0
        %1620 = vmatprep.subr.mxu0 0.0
        %1621 = vmatpush1.xpose.msra.mxu0 0.0
        %1622 = vmatprep.subr.mxu0 0.0
        %1623 = vmatpush1.xpose.msra.mxu0 0.0
        %1624 = vmatprep.subr.mxu0 0.0
        %1625 = vmatpush1.xpose.msra.mxu0 0.0
        %1626 = vmatprep.subr.mxu0 0.0
        %1627 = vmatpush1.xpose.msra.mxu0 0.0
        %1628 = vmatprep.subr.mxu0 0.0
        %1629 = vmatpush1.xpose.msra.mxu0 0.0
        %1630 = vmatprep.subr.mxu0 0.0
        %1631 = vmatpush1.xpose.msra.mxu0 0.0
        %1632 = vmatprep.subr.mxu0 0.0
        %1633 = vmatpush1.xpose.msra.mxu0 %v1602
        %1634 = vmatprep.subr.mxu0 0.0
        %1635 = vmatpush1.xpose.msra.mxu0 %v1599
        %1636 = vmatprep.subr.mxu0 0.0
        %1637 = vmatpush2.xpose.msra.mxu0 0.0
        %1638 = vmatprep.subr.mxu0 0.0
        %1639 = vmatpush2.xpose.msra.mxu0 0.0
        %1640 = vmatprep.subr.mxu0 0.0
        %1641 = vmatpush2.xpose.msra.mxu0 0.0
        %1642 = vmatprep.subr.mxu0 0.0
        %1643 = vmatpush2.xpose.msra.mxu0 0.0
        %1644 = vmatprep.subr.mxu0 0.0
        %1645 = vmatpush2.xpose.msra.mxu0 0.0
        %1646 = vmatprep.subr.mxu0 0.0
        %1647 = vmatpush2.xpose.msra.mxu0 0.0
        %1648 = vmatprep.subr.mxu0 0.0
        %1649 = vmatpush2.xpose.msra.mxu0 0.0
        %1650 = vmatprep.subr.mxu0 0.0
        %1651 = vmatpush2.xpose.msra.mxu0 0.0
        %1652 = vmatprep.subr.mxu0 0.0
        %1653 = vmatpush2.xpose.msra.mxu0 0.0
        %1654 = vmatprep.subr.mxu0 0.0
        %1655 = vmatpush2.xpose.msra.mxu0 0.0
        %1656 = vmatprep.subr.mxu0 0.0
        %1657 = vmatpush2.xpose.msra.mxu0 0.0
        %1658 = vmatprep.subr.mxu0 0.0
        %1659 = vmatpush2.xpose.msra.mxu0 0.0
        %1660 = vmatprep.subr.mxu0 0.0
        %1661 = vmatpush2.xpose.msra.mxu0 0.0
        %1662 = vmatprep.subr.mxu0 0.0
        %1663 = vmatpush2.xpose.msra.mxu0 0.0
        %1664 = vmatprep.subr.mxu0 0.0
        %1665 = vmatpush2.xpose.msra.mxu0 0.0
        %1666 = vmatprep.subr.mxu0 0.0
        %1667 = vmatpush2.xpose.msra.mxu0 0.0
        %1668 = vmatprep.mubr.f32.mxu0 0.0
        %1669 = vmatmul.mubr.f32.gmra.mxu0 %v1593
        %v1670 = vpop.f32.mrf.mxu0
        %v1671 = vadd.f32 %v347, %v1670
        %v1672 = vpop.f32.mrf.mxu0
        %1673 = vmatprep.mubr.f32.mxu0 0.0
        %1674 = vmatmul.mubr.f32.gmra.mxu0 %v1596
        %v1675 = vpop.f32.mrf.mxu0
        %v1676 = vadd.f32 %v348, %v1675
        %v1677 = vpop.f32.mrf.mxu0
        %1678 = vdwg.mxu0
        %v1680 = vsel %vm1417, %v760, 0
        %v1683 = vsel %vm1417, %v828, 0
        %v1686 = vsel %vm1417, %v1052, 0
        %v1689 = vsel %vm1417, %v1120, 0
        %1691 = vmatprep.subr.mxu0 0.0
        %1692 = vmatpush1.xpose.msra.mxu0 0.0
        %1693 = vmatprep.subr.mxu0 0.0
        %1694 = vmatpush1.xpose.msra.mxu0 0.0
        %1695 = vmatprep.subr.mxu0 0.0
        %1696 = vmatpush1.xpose.msra.mxu0 0.0
        %1697 = vmatprep.subr.mxu0 0.0
        %1698 = vmatpush1.xpose.msra.mxu0 0.0
        %1699 = vmatprep.subr.mxu0 0.0
        %1700 = vmatpush1.xpose.msra.mxu0 0.0
        %1701 = vmatprep.subr.mxu0 0.0
        %1702 = vmatpush1.xpose.msra.mxu0 0.0
        %1703 = vmatprep.subr.mxu0 0.0
        %1704 = vmatpush1.xpose.msra.mxu0 0.0
        %1705 = vmatprep.subr.mxu0 0.0
        %1706 = vmatpush1.xpose.msra.mxu0 0.0
        %1707 = vmatprep.subr.mxu0 0.0
        %1708 = vmatpush1.xpose.msra.mxu0 0.0
        %1709 = vmatprep.subr.mxu0 0.0
        %1710 = vmatpush1.xpose.msra.mxu0 0.0
        %1711 = vmatprep.subr.mxu0 0.0
        %1712 = vmatpush1.xpose.msra.mxu0 0.0
        %1713 = vmatprep.subr.mxu0 0.0
        %1714 = vmatpush1.xpose.msra.mxu0 0.0
        %1715 = vmatprep.subr.mxu0 0.0
        %1716 = vmatpush1.xpose.msra.mxu0 0.0
        %1717 = vmatprep.subr.mxu0 0.0
        %1718 = vmatpush1.xpose.msra.mxu0 0.0
        %1719 = vmatprep.subr.mxu0 0.0
        %1720 = vmatpush1.xpose.msra.mxu0 %v1689
        %1721 = vmatprep.subr.mxu0 0.0
        %1722 = vmatpush1.xpose.msra.mxu0 %v1686
        %1723 = vmatprep.subr.mxu0 0.0
        %1724 = vmatpush2.xpose.msra.mxu0 0.0
        %1725 = vmatprep.subr.mxu0 0.0
        %1726 = vmatpush2.xpose.msra.mxu0 0.0
        %1727 = vmatprep.subr.mxu0 0.0
        %1728 = vmatpush2.xpose.msra.mxu0 0.0
        %1729 = vmatprep.subr.mxu0 0.0
        %1730 = vmatpush2.xpose.msra.mxu0 0.0
        %1731 = vmatprep.subr.mxu0 0.0
        %1732 = vmatpush2.xpose.msra.mxu0 0.0
        %1733 = vmatprep.subr.mxu0 0.0
        %1734 = vmatpush2.xpose.msra.mxu0 0.0
        %1735 = vmatprep.subr.mxu0 0.0
        %1736 = vmatpush2.xpose.msra.mxu0 0.0
        %1737 = vmatprep.subr.mxu0 0.0
        %1738 = vmatpush2.xpose.msra.mxu0 0.0
        %1739 = vmatprep.subr.mxu0 0.0
        %1740 = vmatpush2.xpose.msra.mxu0 0.0
        %1741 = vmatprep.subr.mxu0 0.0
        %1742 = vmatpush2.xpose.msra.mxu0 0.0
        %1743 = vmatprep.subr.mxu0 0.0
        %1744 = vmatpush2.xpose.msra.mxu0 0.0
        %1745 = vmatprep.subr.mxu0 0.0
        %1746 = vmatpush2.xpose.msra.mxu0 0.0
        %1747 = vmatprep.subr.mxu0 0.0
        %1748 = vmatpush2.xpose.msra.mxu0 0.0
        %1749 = vmatprep.subr.mxu0 0.0
        %1750 = vmatpush2.xpose.msra.mxu0 0.0
        %1751 = vmatprep.subr.mxu0 0.0
        %1752 = vmatpush2.xpose.msra.mxu0 0.0
        %1753 = vmatprep.subr.mxu0 0.0
        %1754 = vmatpush2.xpose.msra.mxu0 0.0
        %1755 = vmatprep.mubr.f32.mxu0 0.0
        %1756 = vmatmul.mubr.f32.gmra.mxu0 %v1680
        %v1757 = vpop.f32.mrf.mxu0
        %v1758 = vadd.f32 %v347, %v1757
        %v1759 = vpop.f32.mrf.mxu0
        %1760 = vmatprep.mubr.f32.mxu0 0.0
        %1761 = vmatmul.mubr.f32.gmra.mxu0 %v1683
        %v1762 = vpop.f32.mrf.mxu0
        %v1763 = vadd.f32 %v348, %v1762
        %v1764 = vpop.f32.mrf.mxu0
        %1765 = vdwg.mxu0
        %vm1766 = vcmask 130048
        %v1767 = vsel %vm1766, %v1497, -inf
        %1768 = vmax.xlane.f32.xlu0 %v1767
        %v1769 = vpop.xlane.xlu0 %1768
        %v1770 = vsel %vm1766, %v1502, -inf
        %1771 = vmax.xlane.f32.xlu0 %v1770
        %v1772 = vpop.xlane.xlu0 %1771
        %v1773 = vsel %vm1766, %v1584, -inf
        %1774 = vmax.xlane.f32.xlu0 %v1773
        %v1775 = vpop.xlane.xlu0 %1774
        %v1776 = vsel %vm1766, %v1589, -inf
        %1777 = vmax.xlane.f32.xlu0 %v1776
        %v1778 = vpop.xlane.xlu0 %1777
        %v1779 = vsel %vm1766, %v1671, -inf
        %1780 = vmax.xlane.f32.xlu0 %v1779
        %v1781 = vpop.xlane.xlu0 %1780
        %v1782 = vsel %vm1766, %v1676, -inf
        %1783 = vmax.xlane.f32.xlu0 %v1782
        %v1784 = vpop.xlane.xlu0 %1783
        %v1785 = vsel %vm1766, %v1758, -inf
        %1786 = vmax.xlane.f32.xlu0 %v1785
        %v1787 = vpop.xlane.xlu0 %1786
        %v1788 = vsel %vm1766, %v1763, -inf
        %1789 = vmax.xlane.f32.xlu0 %v1788
        %v1790 = vpop.xlane.xlu0 %1789
        %v1791 = vsub.f32 %v1497, %v1769
        %v1792 = vsub.f32 %v1502, %v1772
        %v1793 = vsub.f32 %v1584, %v1775
        %v1794 = vsub.f32 %v1589, %v1778
        %v1795 = vsub.f32 %v1671, %v1781
        %v1796 = vsub.f32 %v1676, %v1784
        %v1797 = vsub.f32 %v1758, %v1787
        %v1798 = vsub.f32 %v1763, %v1790
        %v1799 = vmul.f32 %v1791, 1.442695
        %v1800 = vpow.pop %v1799
        %v1801 = vmul.f32 %v1792, 1.442695
        %v1802 = vpow.pop %v1801
        %v1803 = vmul.f32 %v1793, 1.442695
        %v1804 = vpow.pop %v1803
        %v1805 = vmul.f32 %v1794, 1.442695
        %v1806 = vpow.pop %v1805
        %v1807 = vmul.f32 %v1795, 1.442695
        %v1808 = vpow.pop %v1807
        %v1809 = vmul.f32 %v1796, 1.442695
        %v1810 = vpow.pop %v1809
        %v1811 = vmul.f32 %v1797, 1.442695
        %v1812 = vpow.pop %v1811
        %v1813 = vmul.f32 %v1798, 1.442695
        %v1814 = vpow.pop %v1813
        %v1815 = vsel %vm1766, %v1800, 0.0
        %1816 = vadd.xlane.f32.xlu0 %v1815
        %v1817 = vpop.xlane.xlu0 %1816
        %v1818 = vsel %vm1766, %v1802, 0.0
        %1819 = vadd.xlane.f32.xlu0 %v1818
        %v1820 = vpop.xlane.xlu0 %1819
        %v1821 = vsel %vm1766, %v1804, 0.0
        %1822 = vadd.xlane.f32.xlu0 %v1821
        %v1823 = vpop.xlane.xlu0 %1822
        %v1824 = vsel %vm1766, %v1806, 0.0
        %1825 = vadd.xlane.f32.xlu0 %v1824
        %v1826 = vpop.xlane.xlu0 %1825
        %v1827 = vsel %vm1766, %v1808, 0.0
        %1828 = vadd.xlane.f32.xlu0 %v1827
        %v1829 = vpop.xlane.xlu0 %1828
        %v1830 = vsel %vm1766, %v1810, 0.0
        %1831 = vadd.xlane.f32.xlu0 %v1830
        %v1832 = vpop.xlane.xlu0 %1831
        %v1833 = vsel %vm1766, %v1812, 0.0
        %1834 = vadd.xlane.f32.xlu0 %v1833
        %v1835 = vpop.xlane.xlu0 %1834
        %v1836 = vsel %vm1766, %v1814, 0.0
        %1837 = vadd.xlane.f32.xlu0 %v1836
        %v1838 = vpop.xlane.xlu0 %1837
        %v1839 = vrcp.pop %v1817
        %v1840 = vmul.f32 %v1800, %v1839
        %v1841 = vrcp.pop %v1820
        %v1842 = vmul.f32 %v1802, %v1841
        %v1843 = vrcp.pop %v1823
        %v1844 = vmul.f32 %v1804, %v1843
        %v1845 = vrcp.pop %v1826
        %v1846 = vmul.f32 %v1806, %v1845
        %v1847 = vrcp.pop %v1829
        %v1848 = vmul.f32 %v1808, %v1847
        %v1849 = vrcp.pop %v1832
        %v1850 = vmul.f32 %v1810, %v1849
        %v1851 = vrcp.pop %v1835
        %v1852 = vmul.f32 %v1812, %v1851
        %v1853 = vrcp.pop %v1838
        %v1854 = vmul.f32 %v1814, %v1853
        %v1856 = vsel %vm1766, %v1840, 0
        %v1859 = vsel %vm1766, %v1842, 0
        %1861 = vmatprep.subr.mxu0 0.0
        %1862 = vmatpush1.msra.mxu0 0.0
        %1863 = vmatprep.subr.mxu0 0.0
        %1864 = vmatpush1.msra.mxu0 0.0
        %1865 = vmatprep.subr.mxu0 0.0
        %1866 = vmatpush1.msra.mxu0 0.0
        %1867 = vmatprep.subr.mxu0 0.0
        %1868 = vmatpush1.msra.mxu0 0.0
        %1869 = vmatprep.subr.mxu0 0.0
        %1870 = vmatpush1.msra.mxu0 0.0
        %1871 = vmatprep.subr.mxu0 0.0
        %1872 = vmatpush1.msra.mxu0 0.0
        %1873 = vmatprep.subr.mxu0 0.0
        %1874 = vmatpush1.msra.mxu0 0.0
        %1875 = vmatprep.subr.mxu0 0.0
        %1876 = vmatpush1.msra.mxu0 0.0
        %1877 = vmatprep.subr.mxu0 0.0
        %1878 = vmatpush1.msra.mxu0 0.0
        %1879 = vmatprep.subr.mxu0 0.0
        %1880 = vmatpush1.msra.mxu0 0.0
        %1881 = vmatprep.subr.mxu0 0.0
        %1882 = vmatpush1.msra.mxu0 0.0
        %1883 = vmatprep.subr.mxu0 0.0
        %1884 = vmatpush1.msra.mxu0 0.0
        %1885 = vmatprep.subr.mxu0 0.0
        %1886 = vmatpush1.msra.mxu0 0.0
        %1887 = vmatprep.subr.mxu0 0.0
        %1888 = vmatpush1.msra.mxu0 0.0
        %1889 = vmatprep.subr.mxu0 0.0
        %1890 = vmatpush1.msra.mxu0 %v1413
        %1891 = vmatprep.subr.mxu0 0.0
        %1892 = vmatpush1.msra.mxu0 %v1345
        %1893 = vmatprep.subr.mxu0 0.0
        %1894 = vmatpush2.msra.mxu0 0.0
        %1895 = vmatprep.subr.mxu0 0.0
        %1896 = vmatpush2.msra.mxu0 0.0
        %1897 = vmatprep.subr.mxu0 0.0
        %1898 = vmatpush2.msra.mxu0 0.0
        %1899 = vmatprep.subr.mxu0 0.0
        %1900 = vmatpush2.msra.mxu0 0.0
        %1901 = vmatprep.subr.mxu0 0.0
        %1902 = vmatpush2.msra.mxu0 0.0
        %1903 = vmatprep.subr.mxu0 0.0
        %1904 = vmatpush2.msra.mxu0 0.0
        %1905 = vmatprep.subr.mxu0 0.0
        %1906 = vmatpush2.msra.mxu0 0.0
        %1907 = vmatprep.subr.mxu0 0.0
        %1908 = vmatpush2.msra.mxu0 0.0
        %1909 = vmatprep.subr.mxu0 0.0
        %1910 = vmatpush2.msra.mxu0 0.0
        %1911 = vmatprep.subr.mxu0 0.0
        %1912 = vmatpush2.msra.mxu0 0.0
        %1913 = vmatprep.subr.mxu0 0.0
        %1914 = vmatpush2.msra.mxu0 0.0
        %1915 = vmatprep.subr.mxu0 0.0
        %1916 = vmatpush2.msra.mxu0 0.0
        %1917 = vmatprep.subr.mxu0 0.0
        %1918 = vmatpush2.msra.mxu0 0.0
        %1919 = vmatprep.subr.mxu0 0.0
        %1920 = vmatpush2.msra.mxu0 0.0
        %1921 = vmatprep.subr.mxu0 0.0
        %1922 = vmatpush2.msra.mxu0 0.0
        %1923 = vmatprep.subr.mxu0 0.0
        %1924 = vmatpush2.msra.mxu0 0.0
        %1925 = vmatprep.mubr.f32.mxu0 0.0
        %1926 = vmatmul.mubr.f32.gmra.mxu0 %v1856
        %v1927 = vpop.f32.mrf.mxu0
        %v1928 = vadd.f32 0.0, %v1927
        %v1929 = vpop.f32.mrf.mxu0
        %1930 = vmatprep.mubr.f32.mxu0 0.0
        %1931 = vmatmul.mubr.f32.gmra.mxu0 %v1859
        %v1932 = vpop.f32.mrf.mxu0
        %v1933 = vadd.f32 0.0, %v1932
        %v1934 = vpop.f32.mrf.mxu0
        %1935 = vdwg.mxu0
        %v1937 = vsel %vm1766, %v1844, 0
        %v1940 = vsel %vm1766, %v1846, 0
        %1942 = vmatprep.subr.mxu0 0.0
        %1943 = vmatpush1.msra.mxu0 0.0
        %1944 = vmatprep.subr.mxu0 0.0
        %1945 = vmatpush1.msra.mxu0 0.0
        %1946 = vmatprep.subr.mxu0 0.0
        %1947 = vmatpush1.msra.mxu0 0.0
        %1948 = vmatprep.subr.mxu0 0.0
        %1949 = vmatpush1.msra.mxu0 0.0
        %1950 = vmatprep.subr.mxu0 0.0
        %1951 = vmatpush1.msra.mxu0 0.0
        %1952 = vmatprep.subr.mxu0 0.0
        %1953 = vmatpush1.msra.mxu0 0.0
        %1954 = vmatprep.subr.mxu0 0.0
        %1955 = vmatpush1.msra.mxu0 0.0
        %1956 = vmatprep.subr.mxu0 0.0
        %1957 = vmatpush1.msra.mxu0 0.0
        %1958 = vmatprep.subr.mxu0 0.0
        %1959 = vmatpush1.msra.mxu0 0.0
        %1960 = vmatprep.subr.mxu0 0.0
        %1961 = vmatpush1.msra.mxu0 0.0
        %1962 = vmatprep.subr.mxu0 0.0
        %1963 = vmatpush1.msra.mxu0 0.0
        %1964 = vmatprep.subr.mxu0 0.0
        %1965 = vmatpush1.msra.mxu0 0.0
        %1966 = vmatprep.subr.mxu0 0.0
        %1967 = vmatpush1.msra.mxu0 0.0
        %1968 = vmatprep.subr.mxu0 0.0
        %1969 = vmatpush1.msra.mxu0 0.0
        %1970 = vmatprep.subr.mxu0 0.0
        %1971 = vmatpush1.msra.mxu0 %v1414
        %1972 = vmatprep.subr.mxu0 0.0
        %1973 = vmatpush1.msra.mxu0 %v1346
        %1974 = vmatprep.subr.mxu0 0.0
        %1975 = vmatpush2.msra.mxu0 0.0
        %1976 = vmatprep.subr.mxu0 0.0
        %1977 = vmatpush2.msra.mxu0 0.0
        %1978 = vmatprep.subr.mxu0 0.0
        %1979 = vmatpush2.msra.mxu0 0.0
        %1980 = vmatprep.subr.mxu0 0.0
        %1981 = vmatpush2.msra.mxu0 0.0
        %1982 = vmatprep.subr.mxu0 0.0
        %1983 = vmatpush2.msra.mxu0 0.0
        %1984 = vmatprep.subr.mxu0 0.0
        %1985 = vmatpush2.msra.mxu0 0.0
        %1986 = vmatprep.subr.mxu0 0.0
        %1987 = vmatpush2.msra.mxu0 0.0
        %1988 = vmatprep.subr.mxu0 0.0
        %1989 = vmatpush2.msra.mxu0 0.0
        %1990 = vmatprep.subr.mxu0 0.0
        %1991 = vmatpush2.msra.mxu0 0.0
        %1992 = vmatprep.subr.mxu0 0.0
        %1993 = vmatpush2.msra.mxu0 0.0
        %1994 = vmatprep.subr.mxu0 0.0
        %1995 = vmatpush2.msra.mxu0 0.0
        %1996 = vmatprep.subr.mxu0 0.0
        %1997 = vmatpush2.msra.mxu0 0.0
        %1998 = vmatprep.subr.mxu0 0.0
        %1999 = vmatpush2.msra.mxu0 0.0
        %2000 = vmatprep.subr.mxu0 0.0
        %2001 = vmatpush2.msra.mxu0 0.0
        %2002 = vmatprep.subr.mxu0 0.0
        %2003 = vmatpush2.msra.mxu0 0.0
        %2004 = vmatprep.subr.mxu0 0.0
        %2005 = vmatpush2.msra.mxu0 0.0
        %2006 = vmatprep.mubr.f32.mxu0 0.0
        %2007 = vmatmul.mubr.f32.gmra.mxu0 %v1937
        %v2008 = vpop.f32.mrf.mxu0
        %v2009 = vadd.f32 0.0, %v2008
        %v2010 = vpop.f32.mrf.mxu0
        %2011 = vmatprep.mubr.f32.mxu0 0.0
        %2012 = vmatmul.mubr.f32.gmra.mxu0 %v1940
        %v2013 = vpop.f32.mrf.mxu0
        %v2014 = vadd.f32 0.0, %v2013
        %v2015 = vpop.f32.mrf.mxu0
        %2016 = vdwg.mxu0
        %v2018 = vsel %vm1766, %v1848, 0
        %v2021 = vsel %vm1766, %v1850, 0
        %2023 = vmatprep.subr.mxu0 0.0
        %2024 = vmatpush1.msra.mxu0 0.0
        %2025 = vmatprep.subr.mxu0 0.0
        %2026 = vmatpush1.msra.mxu0 0.0
        %2027 = vmatprep.subr.mxu0 0.0
        %2028 = vmatpush1.msra.mxu0 0.0
        %2029 = vmatprep.subr.mxu0 0.0
        %2030 = vmatpush1.msra.mxu0 0.0
        %2031 = vmatprep.subr.mxu0 0.0
        %2032 = vmatpush1.msra.mxu0 0.0
        %2033 = vmatprep.subr.mxu0 0.0
        %2034 = vmatpush1.msra.mxu0 0.0
        %2035 = vmatprep.subr.mxu0 0.0
        %2036 = vmatpush1.msra.mxu0 0.0
        %2037 = vmatprep.subr.mxu0 0.0
        %2038 = vmatpush1.msra.mxu0 0.0
        %2039 = vmatprep.subr.mxu0 0.0
        %2040 = vmatpush1.msra.mxu0 0.0
        %2041 = vmatprep.subr.mxu0 0.0
        %2042 = vmatpush1.msra.mxu0 0.0
        %2043 = vmatprep.subr.mxu0 0.0
        %2044 = vmatpush1.msra.mxu0 0.0
        %2045 = vmatprep.subr.mxu0 0.0
        %2046 = vmatpush1.msra.mxu0 0.0
        %2047 = vmatprep.subr.mxu0 0.0
        %2048 = vmatpush1.msra.mxu0 0.0
        %2049 = vmatprep.subr.mxu0 0.0
        %2050 = vmatpush1.msra.mxu0 0.0
        %2051 = vmatprep.subr.mxu0 0.0
        %2052 = vmatpush1.msra.mxu0 %v1415
        %2053 = vmatprep.subr.mxu0 0.0
        %2054 = vmatpush1.msra.mxu0 %v1347
        %2055 = vmatprep.subr.mxu0 0.0
        %2056 = vmatpush2.msra.mxu0 0.0
        %2057 = vmatprep.subr.mxu0 0.0
        %2058 = vmatpush2.msra.mxu0 0.0
        %2059 = vmatprep.subr.mxu0 0.0
        %2060 = vmatpush2.msra.mxu0 0.0
        %2061 = vmatprep.subr.mxu0 0.0
        %2062 = vmatpush2.msra.mxu0 0.0
        %2063 = vmatprep.subr.mxu0 0.0
        %2064 = vmatpush2.msra.mxu0 0.0
        %2065 = vmatprep.subr.mxu0 0.0
        %2066 = vmatpush2.msra.mxu0 0.0
        %2067 = vmatprep.subr.mxu0 0.0
        %2068 = vmatpush2.msra.mxu0 0.0
        %2069 = vmatprep.subr.mxu0 0.0
        %2070 = vmatpush2.msra.mxu0 0.0
        %2071 = vmatprep.subr.mxu0 0.0
        %2072 = vmatpush2.msra.mxu0 0.0
        %2073 = vmatprep.subr.mxu0 0.0
        %2074 = vmatpush2.msra.mxu0 0.0
        %2075 = vmatprep.subr.mxu0 0.0
        %2076 = vmatpush2.msra.mxu0 0.0
        %2077 = vmatprep.subr.mxu0 0.0
        %2078 = vmatpush2.msra.mxu0 0.0
        %2079 = vmatprep.subr.mxu0 0.0
        %2080 = vmatpush2.msra.mxu0 0.0
        %2081 = vmatprep.subr.mxu0 0.0
        %2082 = vmatpush2.msra.mxu0 0.0
        %2083 = vmatprep.subr.mxu0 0.0
        %2084 = vmatpush2.msra.mxu0 0.0
        %2085 = vmatprep.subr.mxu0 0.0
        %2086 = vmatpush2.msra.mxu0 0.0
        %2087 = vmatprep.mubr.f32.mxu0 0.0
        %2088 = vmatmul.mubr.f32.gmra.mxu0 %v2018
        %v2089 = vpop.f32.mrf.mxu0
        %v2090 = vadd.f32 0.0, %v2089
        %v2091 = vpop.f32.mrf.mxu0
        %2092 = vmatprep.mubr.f32.mxu0 0.0
        %2093 = vmatmul.mubr.f32.gmra.mxu0 %v2021
        %v2094 = vpop.f32.mrf.mxu0
        %v2095 = vadd.f32 0.0, %v2094
        %v2096 = vpop.f32.mrf.mxu0
        %2097 = vdwg.mxu0
        %v2099 = vsel %vm1766, %v1852, 0
        %v2102 = vsel %vm1766, %v1854, 0
        %2104 = vmatprep.subr.mxu0 0.0
        %2105 = vmatpush1.msra.mxu0 0.0
        %2106 = vmatprep.subr.mxu0 0.0
        %2107 = vmatpush1.msra.mxu0 0.0
        %2108 = vmatprep.subr.mxu0 0.0
        %2109 = vmatpush1.msra.mxu0 0.0
        %2110 = vmatprep.subr.mxu0 0.0
        %2111 = vmatpush1.msra.mxu0 0.0
        %2112 = vmatprep.subr.mxu0 0.0
        %2113 = vmatpush1.msra.mxu0 0.0
        %2114 = vmatprep.subr.mxu0 0.0
        %2115 = vmatpush1.msra.mxu0 0.0
        %2116 = vmatprep.subr.mxu0 0.0
        %2117 = vmatpush1.msra.mxu0 0.0
        %2118 = vmatprep.subr.mxu0 0.0
        %2119 = vmatpush1.msra.mxu0 0.0
        %2120 = vmatprep.subr.mxu0 0.0
        %2121 = vmatpush1.msra.mxu0 0.0
        %2122 = vmatprep.subr.mxu0 0.0
        %2123 = vmatpush1.msra.mxu0 0.0
        %2124 = vmatprep.subr.mxu0 0.0
        %2125 = vmatpush1.msra.mxu0 0.0
        %2126 = vmatprep.subr.mxu0 0.0
        %2127 = vmatpush1.msra.mxu0 0.0
        %2128 = vmatprep.subr.mxu0 0.0
        %2129 = vmatpush1.msra.mxu0 0.0
        %2130 = vmatprep.subr.mxu0 0.0
        %2131 = vmatpush1.msra.mxu0 0.0
        %2132 = vmatprep.subr.mxu0 0.0
        %2133 = vmatpush1.msra.mxu0 %v1416
        %2134 = vmatprep.subr.mxu0 0.0
        %2135 = vmatpush1.msra.mxu0 %v1348
        %2136 = vmatprep.subr.mxu0 0.0
        %2137 = vmatpush2.msra.mxu0 0.0
        %2138 = vmatprep.subr.mxu0 0.0
        %2139 = vmatpush2.msra.mxu0 0.0
        %2140 = vmatprep.subr.mxu0 0.0
        %2141 = vmatpush2.msra.mxu0 0.0
        %2142 = vmatprep.subr.mxu0 0.0
        %2143 = vmatpush2.msra.mxu0 0.0
        %2144 = vmatprep.subr.mxu0 0.0
        %2145 = vmatpush2.msra.mxu0 0.0
        %2146 = vmatprep.subr.mxu0 0.0
        %2147 = vmatpush2.msra.mxu0 0.0
        %2148 = vmatprep.subr.mxu0 0.0
        %2149 = vmatpush2.msra.mxu0 0.0
        %2150 = vmatprep.subr.mxu0 0.0
        %2151 = vmatpush2.msra.mxu0 0.0
        %2152 = vmatprep.subr.mxu0 0.0
        %2153 = vmatpush2.msra.mxu0 0.0
        %2154 = vmatprep.subr.mxu0 0.0
        %2155 = vmatpush2.msra.mxu0 0.0
        %2156 = vmatprep.subr.mxu0 0.0
        %2157 = vmatpush2.msra.mxu0 0.0
        %2158 = vmatprep.subr.mxu0 0.0
        %2159 = vmatpush2.msra.mxu0 0.0
        %2160 = vmatprep.subr.mxu0 0.0
        %2161 = vmatpush2.msra.mxu0 0.0
        %2162 = vmatprep.subr.mxu0 0.0
        %2163 = vmatpush2.msra.mxu0 0.0
        %2164 = vmatprep.subr.mxu0 0.0
        %2165 = vmatpush2.msra.mxu0 0.0
        %2166 = vmatprep.subr.mxu0 0.0
        %2167 = vmatpush2.msra.mxu0 0.0
        %2168 = vmatprep.mubr.f32.mxu0 0.0
        %2169 = vmatmul.mubr.f32.gmra.mxu0 %v2099
        %v2170 = vpop.f32.mrf.mxu0
        %v2171 = vadd.f32 0.0, %v2170
        %v2172 = vpop.f32.mrf.mxu0
        %2173 = vmatprep.mubr.f32.mxu0 0.0
        %2174 = vmatmul.mubr.f32.gmra.mxu0 %v2102
        %v2175 = vpop.f32.mrf.mxu0
        %v2176 = vadd.f32 0.0, %v2175
        %v2177 = vpop.f32.mrf.mxu0
        %2178 = vdwg.mxu0
        %v2179 = vcombine.low %v1928, %v2090
        %v2180 = vcombine.high %v1928, %v2090
        %v2182 = vunpack.c.l.s4 1983009808
        %v2183 = vunpack.c.0.s8 %v2182
        %v2184 = vlaneseq
        %v2185 = vshrl.u32 %v2184, 7
        %v2186 = vsub.s32 %v2183, %v2185
        %v2187 = vrot.slane %v2179, %v2186
        %v2189 = vunpack.c.l.s4 1983009808
        %v2190 = vunpack.c.0.s8 %v2189
        %v2191 = vlaneseq
        %v2192 = vshrl.u32 %v2191, 7
        %v2193 = vsub.s32 %v2190, %v2192
        %v2194 = vrot.slane %v2180, %v2193
        %v2195 = vcombine.low %v2009, %v2171
        %v2196 = vcombine.high %v2009, %v2171
        %v2198 = vunpack.c.l.s4 1983009808
        %v2199 = vunpack.c.0.s8 %v2198
        %v2200 = vlaneseq
        %v2201 = vshrl.u32 %v2200, 7
        %v2202 = vsub.s32 %v2199, %v2201
        %v2203 = vrot.slane %v2195, %v2202
        %v2205 = vunpack.c.l.s4 1983009808
        %v2206 = vunpack.c.0.s8 %v2205
        %v2207 = vlaneseq
        %v2208 = vshrl.u32 %v2207, 7
        %v2209 = vsub.s32 %v2206, %v2208
        %v2210 = vrot.slane %v2196, %v2209
        %v2211 = vcombine.low %v2187, %v2203
        %v2212 = vcombine.high %v2187, %v2203
        %v2214 = vunpack.c.l.s4 1934713408
        %v2215 = vunpack.c.0.s8 %v2214
        %v2216 = vlaneseq
        %v2217 = vshrl.u32 %v2216, 7
        %v2218 = vsub.s32 %v2215, %v2217
        %v2219 = vrot.slane %v2211, %v2218
        %v2221 = vunpack.c.l.s4 1934713408
        %v2222 = vunpack.c.0.s8 %v2221
        %v2223 = vlaneseq
        %v2224 = vshrl.u32 %v2223, 7
        %v2225 = vsub.s32 %v2222, %v2224
        %v2226 = vrot.slane %v2212, %v2225
        %v2227 = vcombine.low %v2194, %v2210
        %v2228 = vcombine.high %v2194, %v2210
        %v2230 = vunpack.c.l.s4 1934713408
        %v2231 = vunpack.c.0.s8 %v2230
        %v2232 = vlaneseq
        %v2233 = vshrl.u32 %v2232, 7
        %v2234 = vsub.s32 %v2231, %v2233
        %v2235 = vrot.slane %v2227, %v2234
        %v2237 = vunpack.c.l.s4 1934713408
        %v2238 = vunpack.c.0.s8 %v2237
        %v2239 = vlaneseq
        %v2240 = vshrl.u32 %v2239, 7
        %v2241 = vsub.s32 %v2238, %v2240
        %v2242 = vrot.slane %v2228, %v2241
        %v2243 = vcombine.high %v2219, 0.0
        %v2244 = vcombine.high %v2226, 0.0
        %v2245 = vcombine.high %v2235, 0.0
        %v2246 = vcombine.high %v2242, 0.0
        %v2247 = vcombine.low %v1933, %v2095
        %v2248 = vcombine.high %v1933, %v2095
        %v2250 = vunpack.c.l.s4 1983009808
        %v2251 = vunpack.c.0.s8 %v2250
        %v2252 = vlaneseq
        %v2253 = vshrl.u32 %v2252, 7
        %v2254 = vsub.s32 %v2251, %v2253
        %v2255 = vrot.slane %v2247, %v2254
        %v2257 = vunpack.c.l.s4 1983009808
        %v2258 = vunpack.c.0.s8 %v2257
        %v2259 = vlaneseq
        %v2260 = vshrl.u32 %v2259, 7
        %v2261 = vsub.s32 %v2258, %v2260
        %v2262 = vrot.slane %v2248, %v2261
        %v2263 = vcombine.low %v2014, %v2176
        %v2264 = vcombine.high %v2014, %v2176
        %v2266 = vunpack.c.l.s4 1983009808
        %v2267 = vunpack.c.0.s8 %v2266
        %v2268 = vlaneseq
        %v2269 = vshrl.u32 %v2268, 7
        %v2270 = vsub.s32 %v2267, %v2269
        %v2271 = vrot.slane %v2263, %v2270
        %v2273 = vunpack.c.l.s4 1983009808
        %v2274 = vunpack.c.0.s8 %v2273
        %v2275 = vlaneseq
        %v2276 = vshrl.u32 %v2275, 7
        %v2277 = vsub.s32 %v2274, %v2276
        %v2278 = vrot.slane %v2264, %v2277
        %v2279 = vcombine.low %v2255, %v2271
        %v2280 = vcombine.high %v2255, %v2271
        %v2282 = vunpack.c.l.s4 1934713408
        %v2283 = vunpack.c.0.s8 %v2282
        %v2284 = vlaneseq
        %v2285 = vshrl.u32 %v2284, 7
        %v2286 = vsub.s32 %v2283, %v2285
        %v2287 = vrot.slane %v2279, %v2286
        %v2289 = vunpack.c.l.s4 1934713408
        %v2290 = vunpack.c.0.s8 %v2289
        %v2291 = vlaneseq
        %v2292 = vshrl.u32 %v2291, 7
        %v2293 = vsub.s32 %v2290, %v2292
        %v2294 = vrot.slane %v2280, %v2293
        %v2295 = vcombine.low %v2262, %v2278
        %v2296 = vcombine.high %v2262, %v2278
        %v2298 = vunpack.c.l.s4 1934713408
        %v2299 = vunpack.c.0.s8 %v2298
        %v2300 = vlaneseq
        %v2301 = vshrl.u32 %v2300, 7
        %v2302 = vsub.s32 %v2299, %v2301
        %v2303 = vrot.slane %v2295, %v2302
        %v2305 = vunpack.c.l.s4 1934713408
        %v2306 = vunpack.c.0.s8 %v2305
        %v2307 = vlaneseq
        %v2308 = vshrl.u32 %v2307, 7
        %v2309 = vsub.s32 %v2306, %v2308
        %v2310 = vrot.slane %v2296, %v2309
        %v2311 = vcombine.high %v2287, 0.0
        %v2312 = vcombine.high %v2294, 0.0
        %v2313 = vcombine.high %v2303, 0.0
        %v2314 = vcombine.high %v2310, 0.0
        %v2315 = vcombine.low %v2219, %v2226
        %v2317 = vunpack.c.l.s4 1983009808
        %v2318 = vunpack.c.0.s8 %v2317
        %v2319 = vlaneseq
        %v2320 = vshrl.u32 %v2319, 7
        %v2321 = vsub.s32 %v2318, %v2320
        %v2322 = vrot.slane %v2315, %v2321
        %v2323 = vcombine.low %v2243, %v2244
        %v2325 = vunpack.c.l.s4 1983009808
        %v2326 = vunpack.c.0.s8 %v2325
        %v2327 = vlaneseq
        %v2328 = vshrl.u32 %v2327, 7
        %v2329 = vsub.s32 %v2326, %v2328
        %v2330 = vrot.slane %v2323, %v2329
        %v2331 = vcombine.low %v2235, %v2242
        %v2333 = vunpack.c.l.s4 1983009808
        %v2334 = vunpack.c.0.s8 %v2333
        %v2335 = vlaneseq
        %v2336 = vshrl.u32 %v2335, 7
        %v2337 = vsub.s32 %v2334, %v2336
        %v2338 = vrot.slane %v2331, %v2337
        %v2339 = vcombine.low %v2245, %v2246
        %v2341 = vunpack.c.l.s4 1983009808
        %v2342 = vunpack.c.0.s8 %v2341
        %v2343 = vlaneseq
        %v2344 = vshrl.u32 %v2343, 7
        %v2345 = vsub.s32 %v2342, %v2344
        %v2346 = vrot.slane %v2339, %v2345
        %v2347 = vcombine.low %v2322, %v2330
        %v2348 = vcombine.high %v2322, %v2330
        %v2350 = vunpack.c.l.s4 1934713408
        %v2351 = vunpack.c.0.s8 %v2350
        %v2352 = vlaneseq
        %v2353 = vshrl.u32 %v2352, 7
        %v2354 = vsub.s32 %v2351, %v2353
        %v2355 = vrot.slane %v2347, %v2354
        %v2357 = vunpack.c.l.s4 1934713408
        %v2358 = vunpack.c.0.s8 %v2357
        %v2359 = vlaneseq
        %v2360 = vshrl.u32 %v2359, 7
        %v2361 = vsub.s32 %v2358, %v2360
        %v2362 = vrot.slane %v2348, %v2361
        %v2363 = vcombine.low %v2338, %v2346
        %v2364 = vcombine.high %v2338, %v2346
        %v2366 = vunpack.c.l.s4 1934713408
        %v2367 = vunpack.c.0.s8 %v2366
        %v2368 = vlaneseq
        %v2369 = vshrl.u32 %v2368, 7
        %v2370 = vsub.s32 %v2367, %v2369
        %v2371 = vrot.slane %v2363, %v2370
        %v2373 = vunpack.c.l.s4 1934713408
        %v2374 = vunpack.c.0.s8 %v2373
        %v2375 = vlaneseq
        %v2376 = vshrl.u32 %v2375, 7
        %v2377 = vsub.s32 %v2374, %v2376
        %v2378 = vrot.slane %v2364, %v2377
        %v2379 = vcombine.low %v2355, %v2371
        %v2380 = vcombine.high %v2355, %v2371
        %v2381 = vcombine.low %v2362, %v2378
        %v2382 = vcombine.high %v2362, %v2378
        %v2383 = vcombine.low %v2287, %v2294
        %v2385 = vunpack.c.l.s4 1983009808
        %v2386 = vunpack.c.0.s8 %v2385
        %v2387 = vlaneseq
        %v2388 = vshrl.u32 %v2387, 7
        %v2389 = vsub.s32 %v2386, %v2388
        %v2390 = vrot.slane %v2383, %v2389
        %v2391 = vcombine.low %v2311, %v2312
        %v2393 = vunpack.c.l.s4 1983009808
        %v2394 = vunpack.c.0.s8 %v2393
        %v2395 = vlaneseq
        %v2396 = vshrl.u32 %v2395, 7
        %v2397 = vsub.s32 %v2394, %v2396
        %v2398 = vrot.slane %v2391, %v2397
        %v2399 = vcombine.low %v2303, %v2310
        %v2401 = vunpack.c.l.s4 1983009808
        %v2402 = vunpack.c.0.s8 %v2401
        %v2403 = vlaneseq
        %v2404 = vshrl.u32 %v2403, 7
        %v2405 = vsub.s32 %v2402, %v2404
        %v2406 = vrot.slane %v2399, %v2405
        %v2407 = vcombine.low %v2313, %v2314
        %v2409 = vunpack.c.l.s4 1983009808
        %v2410 = vunpack.c.0.s8 %v2409
        %v2411 = vlaneseq
        %v2412 = vshrl.u32 %v2411, 7
        %v2413 = vsub.s32 %v2410, %v2412
        %v2414 = vrot.slane %v2407, %v2413
        %v2415 = vcombine.low %v2390, %v2398
        %v2416 = vcombine.high %v2390, %v2398
        %v2418 = vunpack.c.l.s4 1934713408
        %v2419 = vunpack.c.0.s8 %v2418
        %v2420 = vlaneseq
        %v2421 = vshrl.u32 %v2420, 7
        %v2422 = vsub.s32 %v2419, %v2421
        %v2423 = vrot.slane %v2415, %v2422
        %v2425 = vunpack.c.l.s4 1934713408
        %v2426 = vunpack.c.0.s8 %v2425
        %v2427 = vlaneseq
        %v2428 = vshrl.u32 %v2427, 7
        %v2429 = vsub.s32 %v2426, %v2428
        %v2430 = vrot.slane %v2416, %v2429
        %v2431 = vcombine.low %v2406, %v2414
        %v2432 = vcombine.high %v2406, %v2414
        %v2434 = vunpack.c.l.s4 1934713408
        %v2435 = vunpack.c.0.s8 %v2434
        %v2436 = vlaneseq
        %v2437 = vshrl.u32 %v2436, 7
        %v2438 = vsub.s32 %v2435, %v2437
        %v2439 = vrot.slane %v2431, %v2438
        %v2441 = vunpack.c.l.s4 1934713408
        %v2442 = vunpack.c.0.s8 %v2441
        %v2443 = vlaneseq
        %v2444 = vshrl.u32 %v2443, 7
        %v2445 = vsub.s32 %v2442, %v2444
        %v2446 = vrot.slane %v2432, %v2445
        %v2447 = vcombine.low %v2423, %v2439
        %v2448 = vcombine.high %v2423, %v2439
        %v2449 = vcombine.low %v2430, %v2446
        %v2450 = vcombine.high %v2430, %v2446
        %2453 = vrot.lane.b32.xlu0 %v2380, 8
        %v2454 = vpop.permute.xlu0 %2453
        %2455 = vrot.lane.b32.xlu0 %v2448, 8
        %v2456 = vpop.permute.xlu0 %2455
        %2461 = vrot.lane.b32.xlu0 %v2381, 16
        %v2462 = vpop.permute.xlu0 %2461
        %2463 = vrot.lane.b32.xlu0 %v2449, 16
        %v2464 = vpop.permute.xlu0 %2463
        %2469 = vrot.lane.b32.xlu0 %v2382, 24
        %v2470 = vpop.permute.xlu0 %2469
        %2471 = vrot.lane.b32.xlu0 %v2450, 24
        %v2472 = vpop.permute.xlu0 %2471
        %v2475 = vsel %vm1417, %v2379, %v2454
        %v2476 = vsel %vm1417, %v2447, %v2456
        %v2477 = vsel %vm1766, %v2475, %v2462
        %v2478 = vsel %vm1766, %v2476, %v2464
        %vm2479 = vcmask 195584
        %v2480 = vsel %vm2479, %v2477, %v2470
        %v2481 = vsel %vm2479, %v2478, %v2472
        %v2483 = vsel %vm370, %v2480, 0
        %v2486 = vsel %vm370, %v2481, 0
        %2488 = vmatprep.subr.mxu0 0.0
        %2489 = vmatpush1.msra.mxu0 0.0
        %2490 = vmatprep.subr.mxu0 0.0
        %2491 = vmatpush1.msra.mxu0 0.0
        %2492 = vmatprep.subr.mxu0 0.0
        %2493 = vmatpush1.msra.mxu0 0.0
        %2494 = vmatprep.subr.mxu0 0.0
        %2495 = vmatpush1.msra.mxu0 0.0
        %2496 = vmatprep.subr.mxu0 0.0
        %2497 = vmatpush1.msra.mxu0 0.0
        %2498 = vmatprep.subr.mxu0 0.0
        %2499 = vmatpush1.msra.mxu0 0.0
        %2500 = vmatprep.subr.mxu0 0.0
        %2501 = vmatpush1.msra.mxu0 0.0
        %2502 = vmatprep.subr.mxu0 0.0
        %2503 = vmatpush1.msra.mxu0 0.0
        %2504 = vmatprep.subr.mxu0 0.0
        %2505 = vmatpush1.msra.mxu0 0.0
        %2506 = vmatprep.subr.mxu0 0.0
        %2507 = vmatpush1.msra.mxu0 0.0
        %2508 = vmatprep.subr.mxu0 0.0
        %2509 = vmatpush1.msra.mxu0 0.0
        %2510 = vmatprep.subr.mxu0 0.0
        %2511 = vmatpush1.msra.mxu0 0.0
        %2512 = vmatprep.subr.mxu0 0.0
        %2513 = vmatpush1.msra.mxu0 %v362
        %2514 = vmatprep.subr.mxu0 0.0
        %2515 = vmatpush1.msra.mxu0 %v361
        %2516 = vmatprep.subr.mxu0 0.0
        %2517 = vmatpush1.msra.mxu0 %v360
        %2518 = vmatprep.subr.mxu0 0.0
        %2519 = vmatpush1.msra.mxu0 %v359
        %2520 = vmatprep.subr.mxu0 0.0
        %2521 = vmatpush2.msra.mxu0 0.0
        %2522 = vmatprep.subr.mxu0 0.0
        %2523 = vmatpush2.msra.mxu0 0.0
        %2524 = vmatprep.subr.mxu0 0.0
        %2525 = vmatpush2.msra.mxu0 0.0
        %2526 = vmatprep.subr.mxu0 0.0
        %2527 = vmatpush2.msra.mxu0 0.0
        %2528 = vmatprep.subr.mxu0 0.0
        %2529 = vmatpush2.msra.mxu0 0.0
        %2530 = vmatprep.subr.mxu0 0.0
        %2531 = vmatpush2.msra.mxu0 0.0
        %2532 = vmatprep.subr.mxu0 0.0
        %2533 = vmatpush2.msra.mxu0 0.0
        %2534 = vmatprep.subr.mxu0 0.0
        %2535 = vmatpush2.msra.mxu0 0.0
        %2536 = vmatprep.subr.mxu0 0.0
        %2537 = vmatpush2.msra.mxu0 0.0
        %2538 = vmatprep.subr.mxu0 0.0
        %2539 = vmatpush2.msra.mxu0 0.0
        %2540 = vmatprep.subr.mxu0 0.0
        %2541 = vmatpush2.msra.mxu0 0.0
        %2542 = vmatprep.subr.mxu0 0.0
        %2543 = vmatpush2.msra.mxu0 0.0
        %2544 = vmatprep.subr.mxu0 0.0
        %2545 = vmatpush2.msra.mxu0 0.0
        %2546 = vmatprep.subr.mxu0 0.0
        %2547 = vmatpush2.msra.mxu0 0.0
        %2548 = vmatprep.subr.mxu0 0.0
        %2549 = vmatpush2.msra.mxu0 0.0
        %2550 = vmatprep.subr.mxu0 0.0
        %2551 = vmatpush2.msra.mxu0 0.0
        %2552 = vmatprep.mubr.f32.mxu0 0.0
        %2553 = vmatmul.mubr.f32.gmra.mxu0 %v2483
        %v2554 = vpop.f32.mrf.mxu0
        %v2555 = vadd.f32 0.0, %v2554
        %v2556 = vpop.f32.mrf.mxu0
        %2557 = vmatprep.mubr.f32.mxu0 0.0
        %2558 = vmatmul.mubr.f32.gmra.mxu0 %v2486
        %v2559 = vpop.f32.mrf.mxu0
        %v2560 = vadd.f32 0.0, %v2559
        %v2561 = vpop.f32.mrf.mxu0
        %2562 = vdwg.mxu0
        %v2563 = vadd.f32 %v286, %v2555
        %v2564 = vadd.f32 %v287, %v2560
        %v2565 = vlaneseq
        %v2566 = vshrl.u32 %v2565, 7
        %v2567 = vsub.s32 0, %v2566
        %v2568 = vrot.slane %v363, %v2567
        %v2569 = vadd.f32 %v2563, %v2568
        %v2570 = vadd.f32 %v2564, %v2568
        %v2571 = vsel %vm370, %v2569, 0.0
        %2572 = vadd.xlane.f32.xlu0 %v2571
        %v2573 = vpop.xlane.xlu0 %2572
        %v2574 = vsel %vm370, %v2570, 0.0
        %2575 = vadd.xlane.f32.xlu0 %v2574
        %v2576 = vpop.xlane.xlu0 %2575
        %v2577 = vrcp.pop 32.0
        %v2578 = vmul.f32 %v2573, %v2577
        %v2579 = vmul.f32 %v2576, %v2577
        %v2580 = vsub.f32 %v2569, %v2578
        %v2581 = vsub.f32 %v2570, %v2579
        %v2582 = vmul.f32 %v2580, %v2580
        %v2583 = vmul.f32 %v2581, %v2581
        %v2584 = vsel %vm370, %v2582, 0.0
        %2585 = vadd.xlane.f32.xlu0 %v2584
        %v2586 = vpop.xlane.xlu0 %2585
        %v2587 = vsel %vm370, %v2583, 0.0
        %2588 = vadd.xlane.f32.xlu0 %v2587
        %v2589 = vpop.xlane.xlu0 %2588
        %v2590 = vmul.f32 %v2586, %v2577
        %v2591 = vmul.f32 %v2589, %v2577
        %v2592 = vadd.f32 %v2590, 1e-05
        %v2593 = vadd.f32 %v2591, 1e-05
        %v2594 = vrsqrt.pop %v2592
        %v2595 = vrsqrt.pop %v2593
        %v2596 = vmul.f32 %v2580, %v2594
        %v2597 = vmul.f32 %v2581, %v2595
        %v2598 = vlaneseq
        %v2599 = vshrl.u32 %v2598, 7
        %v2600 = vsub.s32 0, %v2599
        %v2601 = vrot.slane %v364, %v2600
        %v2602 = vmul.f32 %v2596, %v2601
        %v2603 = vmul.f32 %v2597, %v2601
        %v2604 = vlaneseq
        %v2605 = vshrl.u32 %v2604, 7
        %v2606 = vsub.s32 0, %v2605
        %v2607 = vrot.slane %v365, %v2606
        %v2608 = vadd.f32 %v2602, %v2607
        %v2609 = vadd.f32 %v2603, %v2607
        %v2610 = vld [vmem:[%s232 + $0x88] sm:$0xff]
        %v2611 = vld [vmem:[%s232 + $0x90] sm:$0xff]
        %v2612 = vld [vmem:[%s232 + $0x98] sm:$0xff]
        %v2613 = vld [vmem:[%s232 + $0xa0] sm:$0xff]
        %v2614 = vld [vmem:[%s232 + $0xe8] sm:$0x1]
        %v2615 = vld [vmem:[%s232 + $0xa8] sm:$0xff]
        %v2616 = vld [vmem:[%s232 + $0xb0] sm:$0xff]
        %v2617 = vld [vmem:[%s232 + $0xb8] sm:$0xff]
        %v2618 = vld [vmem:[%s232 + $0xc0] sm:$0xff]
        %v2619 = vld [vmem:[%s232 + $0xf0] sm:$0x1]
        %v2620 = vld [vmem:[%s232 + $0xc8] sm:$0xff]
        %v2621 = vld [vmem:[%s232 + $0xd0] sm:$0xff]
        %v2622 = vld [vmem:[%s232 + $0xd8] sm:$0xff]
        %v2623 = vld [vmem:[%s232 + $0xe0] sm:$0xff]
        %v2624 = vld [vmem:[%s232 + $0xf8] sm:$0x1]
        %v2625 = vld [vmem:[%s232 + $0x100] sm:$0x1]
        %v2626 = vld [vmem:[%s232 + $0x108] sm:$0x1]
        %v2627 = vlaneseq
        %v2628 = vshrl.u32 %v2627, 7
        %v2629 = vsub.s32 0, %v2628
        %v2630 = vrot.slane %v2614, %v2629
        %v2632 = vsel %vm370, %v2608, 0
        %v2635 = vsel %vm370, %v2609, 0
        %2637 = vmatprep.subr.mxu0 0.0
        %2638 = vmatpush1.msra.mxu0 0.0
        %2639 = vmatprep.subr.mxu0 0.0
        %2640 = vmatpush1.msra.mxu0 0.0
        %2641 = vmatprep.subr.mxu0 0.0
        %2642 = vmatpush1.msra.mxu0 0.0
        %2643 = vmatprep.subr.mxu0 0.0
        %2644 = vmatpush1.msra.mxu0 0.0
        %2645 = vmatprep.subr.mxu0 0.0
        %2646 = vmatpush1.msra.mxu0 0.0
        %2647 = vmatprep.subr.mxu0 0.0
        %2648 = vmatpush1.msra.mxu0 0.0
        %2649 = vmatprep.subr.mxu0 0.0
        %2650 = vmatpush1.msra.mxu0 0.0
        %2651 = vmatprep.subr.mxu0 0.0
        %2652 = vmatpush1.msra.mxu0 0.0
        %2653 = vmatprep.subr.mxu0 0.0
        %2654 = vmatpush1.msra.mxu0 0.0
        %2655 = vmatprep.subr.mxu0 0.0
        %2656 = vmatpush1.msra.mxu0 0.0
        %2657 = vmatprep.subr.mxu0 0.0
        %2658 = vmatpush1.msra.mxu0 0.0
        %2659 = vmatprep.subr.mxu0 0.0
        %2660 = vmatpush1.msra.mxu0 0.0
        %2661 = vmatprep.subr.mxu0 0.0
        %2662 = vmatpush1.msra.mxu0 %v2613
        %2663 = vmatprep.subr.mxu0 0.0
        %2664 = vmatpush1.msra.mxu0 %v2612
        %2665 = vmatprep.subr.mxu0 0.0
        %2666 = vmatpush1.msra.mxu0 %v2611
        %2667 = vmatprep.subr.mxu0 0.0
        %2668 = vmatpush1.msra.mxu0 %v2610
        %2669 = vmatprep.subr.mxu0 0.0
        %2670 = vmatpush2.msra.mxu0 0.0
        %2671 = vmatprep.subr.mxu0 0.0
        %2672 = vmatpush2.msra.mxu0 0.0
        %2673 = vmatprep.subr.mxu0 0.0
        %2674 = vmatpush2.msra.mxu0 0.0
        %2675 = vmatprep.subr.mxu0 0.0
        %2676 = vmatpush2.msra.mxu0 0.0
        %2677 = vmatprep.subr.mxu0 0.0
        %2678 = vmatpush2.msra.mxu0 0.0
        %2679 = vmatprep.subr.mxu0 0.0
        %2680 = vmatpush2.msra.mxu0 0.0
        %2681 = vmatprep.subr.mxu0 0.0
        %2682 = vmatpush2.msra.mxu0 0.0
        %2683 = vmatprep.subr.mxu0 0.0
        %2684 = vmatpush2.msra.mxu0 0.0
        %2685 = vmatprep.subr.mxu0 0.0
        %2686 = vmatpush2.msra.mxu0 0.0
        %2687 = vmatprep.subr.mxu0 0.0
        %2688 = vmatpush2.msra.mxu0 0.0
        %2689 = vmatprep.subr.mxu0 0.0
        %2690 = vmatpush2.msra.mxu0 0.0
        %2691 = vmatprep.subr.mxu0 0.0
        %2692 = vmatpush2.msra.mxu0 0.0
        %2693 = vmatprep.subr.mxu0 0.0
        %2694 = vmatpush2.msra.mxu0 0.0
        %2695 = vmatprep.subr.mxu0 0.0
        %2696 = vmatpush2.msra.mxu0 0.0
        %2697 = vmatprep.subr.mxu0 0.0
        %2698 = vmatpush2.msra.mxu0 0.0
        %2699 = vmatprep.subr.mxu0 0.0
        %2700 = vmatpush2.msra.mxu0 0.0
        %2701 = vmatprep.mubr.f32.mxu0 0.0
        %2702 = vmatmul.mubr.f32.gmra.mxu0 %v2632
        %v2703 = vpop.f32.mrf.mxu0
        %v2704 = vadd.f32 %v2630, %v2703
        %v2705 = vpop.f32.mrf.mxu0
        %2706 = vmatprep.mubr.f32.mxu0 0.0
        %2707 = vmatmul.mubr.f32.gmra.mxu0 %v2635
        %v2708 = vpop.f32.mrf.mxu0
        %v2709 = vadd.f32 %v2630, %v2708
        %v2710 = vpop.f32.mrf.mxu0
        %2711 = vdwg.mxu0
        %v2712 = vlaneseq
        %v2713 = vshrl.u32 %v2712, 7
        %v2714 = vsub.s32 0, %v2713
        %v2715 = vrot.slane %v2619, %v2714
        %v2717 = vsel %vm370, %v302, 0
        %v2720 = vsel %vm370, %v303, 0
        %2722 = vmatprep.subr.mxu0 0.0
        %2723 = vmatpush1.msra.mxu0 0.0
        %2724 = vmatprep.subr.mxu0 0.0
        %2725 = vmatpush1.msra.mxu0 0.0
        %2726 = vmatprep.subr.mxu0 0.0
        %2727 = vmatpush1.msra.mxu0 0.0
        %2728 = vmatprep.subr.mxu0 0.0
        %2729 = vmatpush1.msra.mxu0 0.0
        %2730 = vmatprep.subr.mxu0 0.0
        %2731 = vmatpush1.msra.mxu0 0.0
        %2732 = vmatprep.subr.mxu0 0.0
        %2733 = vmatpush1.msra.mxu0 0.0
        %2734 = vmatprep.subr.mxu0 0.0
        %2735 = vmatpush1.msra.mxu0 0.0
        %2736 = vmatprep.subr.mxu0 0.0
        %2737 = vmatpush1.msra.mxu0 0.0
        %2738 = vmatprep.subr.mxu0 0.0
        %2739 = vmatpush1.msra.mxu0 0.0
        %2740 = vmatprep.subr.mxu0 0.0
        %2741 = vmatpush1.msra.mxu0 0.0
        %2742 = vmatprep.subr.mxu0 0.0
        %2743 = vmatpush1.msra.mxu0 0.0
        %2744 = vmatprep.subr.mxu0 0.0
        %2745 = vmatpush1.msra.mxu0 0.0
        %2746 = vmatprep.subr.mxu0 0.0
        %2747 = vmatpush1.msra.mxu0 %v2618
        %2748 = vmatprep.subr.mxu0 0.0
        %2749 = vmatpush1.msra.mxu0 %v2617
        %2750 = vmatprep.subr.mxu0 0.0
        %2751 = vmatpush1.msra.mxu0 %v2616
        %2752 = vmatprep.subr.mxu0 0.0
        %2753 = vmatpush1.msra.mxu0 %v2615
        %2754 = vmatprep.subr.mxu0 0.0
        %2755 = vmatpush2.msra.mxu0 0.0
        %2756 = vmatprep.subr.mxu0 0.0
        %2757 = vmatpush2.msra.mxu0 0.0
        %2758 = vmatprep.subr.mxu0 0.0
        %2759 = vmatpush2.msra.mxu0 0.0
        %2760 = vmatprep.subr.mxu0 0.0
        %2761 = vmatpush2.msra.mxu0 0.0
        %2762 = vmatprep.subr.mxu0 0.0
        %2763 = vmatpush2.msra.mxu0 0.0
        %2764 = vmatprep.subr.mxu0 0.0
        %2765 = vmatpush2.msra.mxu0 0.0
        %2766 = vmatprep.subr.mxu0 0.0
        %2767 = vmatpush2.msra.mxu0 0.0
        %2768 = vmatprep.subr.mxu0 0.0
        %2769 = vmatpush2.msra.mxu0 0.0
        %2770 = vmatprep.subr.mxu0 0.0
        %2771 = vmatpush2.msra.mxu0 0.0
        %2772 = vmatprep.subr.mxu0 0.0
        %2773 = vmatpush2.msra.mxu0 0.0
        %2774 = vmatprep.subr.mxu0 0.0
        %2775 = vmatpush2.msra.mxu0 0.0
        %2776 = vmatprep.subr.mxu0 0.0
        %2777 = vmatpush2.msra.mxu0 0.0
        %2778 = vmatprep.subr.mxu0 0.0
        %2779 = vmatpush2.msra.mxu0 0.0
        %2780 = vmatprep.subr.mxu0 0.0
        %2781 = vmatpush2.msra.mxu0 0.0
        %2782 = vmatprep.subr.mxu0 0.0
        %2783 = vmatpush2.msra.mxu0 0.0
        %2784 = vmatprep.subr.mxu0 0.0
        %2785 = vmatpush2.msra.mxu0 0.0
        %2786 = vmatprep.mubr.f32.mxu0 0.0
        %2787 = vmatmul.mubr.f32.gmra.mxu0 %v2717
        %v2788 = vpop.f32.mrf.mxu0
        %v2789 = vadd.f32 %v2715, %v2788
        %v2790 = vpop.f32.mrf.mxu0
        %2791 = vmatprep.mubr.f32.mxu0 0.0
        %2792 = vmatmul.mubr.f32.gmra.mxu0 %v2720
        %v2793 = vpop.f32.mrf.mxu0
        %v2794 = vadd.f32 %v2715, %v2793
        %v2795 = vpop.f32.mrf.mxu0
        %2796 = vdwg.mxu0
        %2799 = vrot.lane.b32.xlu0 %v2704, 120
        %v2800 = vpop.permute.xlu0 %2799
        %2801 = vrot.lane.b32.xlu0 %v2709, 120
        %v2802 = vpop.permute.xlu0 %2801
        %2805 = vrot.lane.b32.xlu0 %v2704, 112
        %v2806 = vpop.permute.xlu0 %2805
        %2807 = vrot.lane.b32.xlu0 %v2709, 112
        %v2808 = vpop.permute.xlu0 %2807
        %2811 = vrot.lane.b32.xlu0 %v2704, 104
        %v2812 = vpop.permute.xlu0 %2811
        %2813 = vrot.lane.b32.xlu0 %v2709, 104
        %v2814 = vpop.permute.xlu0 %2813
        %v2817 = vcombine.low %v2704, %v2806
        %v2818 = vcombine.high %v2704, %v2806
        %v2820 = vunpack.c.l.s4 1983009808
        %v2821 = vunpack.c.0.s8 %v2820
        %v2822 = vlaneseq
        %v2823 = vshrl.u32 %v2822, 7
        %v2824 = vsub.s32 %v2821, %v2823
        %v2825 = vrot.slane %v2817, %v2824
        %v2827 = vunpack.c.l.s4 1983009808
        %v2828 = vunpack.c.0.s8 %v2827
        %v2829 = vlaneseq
        %v2830 = vshrl.u32 %v2829, 7
        %v2831 = vsub.s32 %v2828, %v2830
        %v2832 = vrot.slane %v2818, %v2831
        %v2833 = vcombine.low %v2800, %v2812
        %v2834 = vcombine.high %v2800, %v2812
        %v2836 = vunpack.c.l.s4 1983009808
        %v2837 = vunpack.c.0.s8 %v2836
        %v2838 = vlaneseq
        %v2839 = vshrl.u32 %v2838, 7
        %v2840 = vsub.s32 %v2837, %v2839
        %v2841 = vrot.slane %v2833, %v2840
        %v2843 = vunpack.c.l.s4 1983009808
        %v2844 = vunpack.c.0.s8 %v2843
        %v2845 = vlaneseq
        %v2846 = vshrl.u32 %v2845, 7
        %v2847 = vsub.s32 %v2844, %v2846
        %v2848 = vrot.slane %v2834, %v2847
        %v2849 = vcombine.low %v2825, %v2841
        %v2850 = vcombine.high %v2825, %v2841
        %v2852 = vunpack.c.l.s4 1934713408
        %v2853 = vunpack.c.0.s8 %v2852
        %v2854 = vlaneseq
        %v2855 = vshrl.u32 %v2854, 7
        %v2856 = vsub.s32 %v2853, %v2855
        %v2857 = vrot.slane %v2849, %v2856
        %v2859 = vunpack.c.l.s4 1934713408
        %v2860 = vunpack.c.0.s8 %v2859
        %v2861 = vlaneseq
        %v2862 = vshrl.u32 %v2861, 7
        %v2863 = vsub.s32 %v2860, %v2862
        %v2864 = vrot.slane %v2850, %v2863
        %v2865 = vcombine.low %v2832, %v2848
        %v2866 = vcombine.high %v2832, %v2848
        %v2868 = vunpack.c.l.s4 1934713408
        %v2869 = vunpack.c.0.s8 %v2868
        %v2870 = vlaneseq
        %v2871 = vshrl.u32 %v2870, 7
        %v2872 = vsub.s32 %v2869, %v2871
        %v2873 = vrot.slane %v2865, %v2872
        %v2875 = vunpack.c.l.s4 1934713408
        %v2876 = vunpack.c.0.s8 %v2875
        %v2877 = vlaneseq
        %v2878 = vshrl.u32 %v2877, 7
        %v2879 = vsub.s32 %v2876, %v2878
        %v2880 = vrot.slane %v2866, %v2879
        %v2881 = vcombine.high %v2857, 0.0
        %v2882 = vcombine.high %v2864, 0.0
        %v2883 = vcombine.high %v2873, 0.0
        %v2884 = vcombine.high %v2880, 0.0
        %v2885 = vcombine.low %v2709, %v2808
        %v2886 = vcombine.high %v2709, %v2808
        %v2888 = vunpack.c.l.s4 1983009808
        %v2889 = vunpack.c.0.s8 %v2888
        %v2890 = vlaneseq
        %v2891 = vshrl.u32 %v2890, 7
        %v2892 = vsub.s32 %v2889, %v2891
        %v2893 = vrot.slane %v2885, %v2892
        %v2895 = vunpack.c.l.s4 1983009808
        %v2896 = vunpack.c.0.s8 %v2895
        %v2897 = vlaneseq
        %v2898 = vshrl.u32 %v2897, 7
        %v2899 = vsub.s32 %v2896, %v2898
        %v2900 = vrot.slane %v2886, %v2899
        %v2901 = vcombine.low %v2802, %v2814
        %v2902 = vcombine.high %v2802, %v2814
        %v2904 = vunpack.c.l.s4 1983009808
        %v2905 = vunpack.c.0.s8 %v2904
        %v2906 = vlaneseq
        %v2907 = vshrl.u32 %v2906, 7
        %v2908 = vsub.s32 %v2905, %v2907
        %v2909 = vrot.slane %v2901, %v2908
        %v2911 = vunpack.c.l.s4 1983009808
        %v2912 = vunpack.c.0.s8 %v2911
        %v2913 = vlaneseq
        %v2914 = vshrl.u32 %v2913, 7
        %v2915 = vsub.s32 %v2912, %v2914
        %v2916 = vrot.slane %v2902, %v2915
        %v2917 = vcombine.low %v2893, %v2909
        %v2918 = vcombine.high %v2893, %v2909
        %v2920 = vunpack.c.l.s4 1934713408
        %v2921 = vunpack.c.0.s8 %v2920
        %v2922 = vlaneseq
        %v2923 = vshrl.u32 %v2922, 7
        %v2924 = vsub.s32 %v2921, %v2923
        %v2925 = vrot.slane %v2917, %v2924
        %v2927 = vunpack.c.l.s4 1934713408
        %v2928 = vunpack.c.0.s8 %v2927
        %v2929 = vlaneseq
        %v2930 = vshrl.u32 %v2929, 7
        %v2931 = vsub.s32 %v2928, %v2930
        %v2932 = vrot.slane %v2918, %v2931
        %v2933 = vcombine.low %v2900, %v2916
        %v2934 = vcombine.high %v2900, %v2916
        %v2936 = vunpack.c.l.s4 1934713408
        %v2937 = vunpack.c.0.s8 %v2936
        %v2938 = vlaneseq
        %v2939 = vshrl.u32 %v2938, 7
        %v2940 = vsub.s32 %v2937, %v2939
        %v2941 = vrot.slane %v2933, %v2940
        %v2943 = vunpack.c.l.s4 1934713408
        %v2944 = vunpack.c.0.s8 %v2943
        %v2945 = vlaneseq
        %v2946 = vshrl.u32 %v2945, 7
        %v2947 = vsub.s32 %v2944, %v2946
        %v2948 = vrot.slane %v2934, %v2947
        %v2949 = vcombine.high %v2925, 0.0
        %v2950 = vcombine.high %v2932, 0.0
        %v2951 = vcombine.high %v2941, 0.0
        %v2952 = vcombine.high %v2948, 0.0
        %v2953 = vcombine.low %v2857, %v2864
        %v2955 = vunpack.c.l.s4 1983009808
        %v2956 = vunpack.c.0.s8 %v2955
        %v2957 = vlaneseq
        %v2958 = vshrl.u32 %v2957, 7
        %v2959 = vsub.s32 %v2956, %v2958
        %v2960 = vrot.slane %v2953, %v2959
        %v2961 = vcombine.low %v2881, %v2882
        %v2963 = vunpack.c.l.s4 1983009808
        %v2964 = vunpack.c.0.s8 %v2963
        %v2965 = vlaneseq
        %v2966 = vshrl.u32 %v2965, 7
        %v2967 = vsub.s32 %v2964, %v2966
        %v2968 = vrot.slane %v2961, %v2967
        %v2969 = vcombine.low %v2873, %v2880
        %v2971 = vunpack.c.l.s4 1983009808
        %v2972 = vunpack.c.0.s8 %v2971
        %v2973 = vlaneseq
        %v2974 = vshrl.u32 %v2973, 7
        %v2975 = vsub.s32 %v2972, %v2974
        %v2976 = vrot.slane %v2969, %v2975
        %v2977 = vcombine.low %v2883, %v2884
        %v2979 = vunpack.c.l.s4 1983009808
        %v2980 = vunpack.c.0.s8 %v2979
        %v2981 = vlaneseq
        %v2982 = vshrl.u32 %v2981, 7
        %v2983 = vsub.s32 %v2980, %v2982
        %v2984 = vrot.slane %v2977, %v2983
        %v2985 = vcombine.low %v2960, %v2968
        %v2986 = vcombine.high %v2960, %v2968
        %v2988 = vunpack.c.l.s4 1934713408
        %v2989 = vunpack.c.0.s8 %v2988
        %v2990 = vlaneseq
        %v2991 = vshrl.u32 %v2990, 7
        %v2992 = vsub.s32 %v2989, %v2991
        %v2993 = vrot.slane %v2985, %v2992
        %v2995 = vunpack.c.l.s4 1934713408
        %v2996 = vunpack.c.0.s8 %v2995
        %v2997 = vlaneseq
        %v2998 = vshrl.u32 %v2997, 7
        %v2999 = vsub.s32 %v2996, %v2998
        %v3000 = vrot.slane %v2986, %v2999
        %v3001 = vcombine.low %v2976, %v2984
        %v3002 = vcombine.high %v2976, %v2984
        %v3004 = vunpack.c.l.s4 1934713408
        %v3005 = vunpack.c.0.s8 %v3004
        %v3006 = vlaneseq
        %v3007 = vshrl.u32 %v3006, 7
        %v3008 = vsub.s32 %v3005, %v3007
        %v3009 = vrot.slane %v3001, %v3008
        %v3011 = vunpack.c.l.s4 1934713408
        %v3012 = vunpack.c.0.s8 %v3011
        %v3013 = vlaneseq
        %v3014 = vshrl.u32 %v3013, 7
        %v3015 = vsub.s32 %v3012, %v3014
        %v3016 = vrot.slane %v3002, %v3015
        %v3017 = vcombine.low %v2993, %v3009
        %v3018 = vcombine.high %v2993, %v3009
        %v3019 = vcombine.low %v3000, %v3016
        %v3020 = vcombine.high %v3000, %v3016
        %v3021 = vcombine.low %v2925, %v2932
        %v3023 = vunpack.c.l.s4 1983009808
        %v3024 = vunpack.c.0.s8 %v3023
        %v3025 = vlaneseq
        %v3026 = vshrl.u32 %v3025, 7
        %v3027 = vsub.s32 %v3024, %v3026
        %v3028 = vrot.slane %v3021, %v3027
        %v3029 = vcombine.low %v2949, %v2950
        %v3031 = vunpack.c.l.s4 1983009808
        %v3032 = vunpack.c.0.s8 %v3031
        %v3033 = vlaneseq
        %v3034 = vshrl.u32 %v3033, 7
        %v3035 = vsub.s32 %v3032, %v3034
        %v3036 = vrot.slane %v3029, %v3035
        %v3037 = vcombine.low %v2941, %v2948
        %v3039 = vunpack.c.l.s4 1983009808
        %v3040 = vunpack.c.0.s8 %v3039
        %v3041 = vlaneseq
        %v3042 = vshrl.u32 %v3041, 7
        %v3043 = vsub.s32 %v3040, %v3042
        %v3044 = vrot.slane %v3037, %v3043
        %v3045 = vcombine.low %v2951, %v2952
        %v3047 = vunpack.c.l.s4 1983009808
        %v3048 = vunpack.c.0.s8 %v3047
        %v3049 = vlaneseq
        %v3050 = vshrl.u32 %v3049, 7
        %v3051 = vsub.s32 %v3048, %v3050
        %v3052 = vrot.slane %v3045, %v3051
        %v3053 = vcombine.low %v3028, %v3036
        %v3054 = vcombine.high %v3028, %v3036
        %v3056 = vunpack.c.l.s4 1934713408
        %v3057 = vunpack.c.0.s8 %v3056
        %v3058 = vlaneseq
        %v3059 = vshrl.u32 %v3058, 7
        %v3060 = vsub.s32 %v3057, %v3059
        %v3061 = vrot.slane %v3053, %v3060
        %v3063 = vunpack.c.l.s4 1934713408
        %v3064 = vunpack.c.0.s8 %v3063
        %v3065 = vlaneseq
        %v3066 = vshrl.u32 %v3065, 7
        %v3067 = vsub.s32 %v3064, %v3066
        %v3068 = vrot.slane %v3054, %v3067
        %v3069 = vcombine.low %v3044, %v3052
        %v3070 = vcombine.high %v3044, %v3052
        %v3072 = vunpack.c.l.s4 1934713408
        %v3073 = vunpack.c.0.s8 %v3072
        %v3074 = vlaneseq
        %v3075 = vshrl.u32 %v3074, 7
        %v3076 = vsub.s32 %v3073, %v3075
        %v3077 = vrot.slane %v3069, %v3076
        %v3079 = vunpack.c.l.s4 1934713408
        %v3080 = vunpack.c.0.s8 %v3079
        %v3081 = vlaneseq
        %v3082 = vshrl.u32 %v3081, 7
        %v3083 = vsub.s32 %v3080, %v3082
        %v3084 = vrot.slane %v3070, %v3083
        %v3085 = vcombine.low %v3061, %v3077
        %v3086 = vcombine.high %v3061, %v3077
        %v3087 = vcombine.low %v3068, %v3084
        %v3088 = vcombine.high %v3068, %v3084
        %3091 = vrot.lane.b32.xlu0 %v2789, 120
        %v3092 = vpop.permute.xlu0 %3091
        %3093 = vrot.lane.b32.xlu0 %v2794, 120
        %v3094 = vpop.permute.xlu0 %3093
        %3097 = vrot.lane.b32.xlu0 %v2789, 112
        %v3098 = vpop.permute.xlu0 %3097
        %3099 = vrot.lane.b32.xlu0 %v2794, 112
        %v3100 = vpop.permute.xlu0 %3099
        %3103 = vrot.lane.b32.xlu0 %v2789, 104
        %v3104 = vpop.permute.xlu0 %3103
        %3105 = vrot.lane.b32.xlu0 %v2794, 104
        %v3106 = vpop.permute.xlu0 %3105
        %v3109 = vcombine.low %v2789, %v3098
        %v3110 = vcombine.high %v2789, %v3098
        %v3112 = vunpack.c.l.s4 1983009808
        %v3113 = vunpack.c.0.s8 %v3112
        %v3114 = vlaneseq
        %v3115 = vshrl.u32 %v3114, 7
        %v3116 = vsub.s32 %v3113, %v3115
        %v3117 = vrot.slane %v3109, %v3116
        %v3119 = vunpack.c.l.s4 1983009808
        %v3120 = vunpack.c.0.s8 %v3119
        %v3121 = vlaneseq
        %v3122 = vshrl.u32 %v3121, 7
        %v3123 = vsub.s32 %v3120, %v3122
        %v3124 = vrot.slane %v3110, %v3123
        %v3125 = vcombine.low %v3092, %v3104
        %v3126 = vcombine.high %v3092, %v3104
        %v3128 = vunpack.c.l.s4 1983009808
        %v3129 = vunpack.c.0.s8 %v3128
        %v3130 = vlaneseq
        %v3131 = vshrl.u32 %v3130, 7
        %v3132 = vsub.s32 %v3129, %v3131
        %v3133 = vrot.slane %v3125, %v3132
        %v3135 = vunpack.c.l.s4 1983009808
        %v3136 = vunpack.c.0.s8 %v3135
        %v3137 = vlaneseq
        %v3138 = vshrl.u32 %v3137, 7
        %v3139 = vsub.s32 %v3136, %v3138
        %v3140 = vrot.slane %v3126, %v3139
        %v3141 = vcombine.low %v3117, %v3133
        %v3142 = vcombine.high %v3117, %v3133
        %v3144 = vunpack.c.l.s4 1934713408
        %v3145 = vunpack.c.0.s8 %v3144
        %v3146 = vlaneseq
        %v3147 = vshrl.u32 %v3146, 7
        %v3148 = vsub.s32 %v3145, %v3147
        %v3149 = vrot.slane %v3141, %v3148
        %v3151 = vunpack.c.l.s4 1934713408
        %v3152 = vunpack.c.0.s8 %v3151
        %v3153 = vlaneseq
        %v3154 = vshrl.u32 %v3153, 7
        %v3155 = vsub.s32 %v3152, %v3154
        %v3156 = vrot.slane %v3142, %v3155
        %v3157 = vcombine.low %v3124, %v3140
        %v3158 = vcombine.high %v3124, %v3140
        %v3160 = vunpack.c.l.s4 1934713408
        %v3161 = vunpack.c.0.s8 %v3160
        %v3162 = vlaneseq
        %v3163 = vshrl.u32 %v3162, 7
        %v3164 = vsub.s32 %v3161, %v3163
        %v3165 = vrot.slane %v3157, %v3164
        %v3167 = vunpack.c.l.s4 1934713408
        %v3168 = vunpack.c.0.s8 %v3167
        %v3169 = vlaneseq
        %v3170 = vshrl.u32 %v3169, 7
        %v3171 = vsub.s32 %v3168, %v3170
        %v3172 = vrot.slane %v3158, %v3171
        %v3173 = vcombine.high %v3149, 0.0
        %v3174 = vcombine.high %v3156, 0.0
        %v3175 = vcombine.high %v3165, 0.0
        %v3176 = vcombine.high %v3172, 0.0
        %v3177 = vcombine.low %v2794, %v3100
        %v3178 = vcombine.high %v2794, %v3100
        %v3180 = vunpack.c.l.s4 1983009808
        %v3181 = vunpack.c.0.s8 %v3180
        %v3182 = vlaneseq
        %v3183 = vshrl.u32 %v3182, 7
        %v3184 = vsub.s32 %v3181, %v3183
        %v3185 = vrot.slane %v3177, %v3184
        %v3187 = vunpack.c.l.s4 1983009808
        %v3188 = vunpack.c.0.s8 %v3187
        %v3189 = vlaneseq
        %v3190 = vshrl.u32 %v3189, 7
        %v3191 = vsub.s32 %v3188, %v3190
        %v3192 = vrot.slane %v3178, %v3191
        %v3193 = vcombine.low %v3094, %v3106
        %v3194 = vcombine.high %v3094, %v3106
        %v3196 = vunpack.c.l.s4 1983009808
        %v3197 = vunpack.c.0.s8 %v3196
        %v3198 = vlaneseq
        %v3199 = vshrl.u32 %v3198, 7
        %v3200 = vsub.s32 %v3197, %v3199
        %v3201 = vrot.slane %v3193, %v3200
        %v3203 = vunpack.c.l.s4 1983009808
        %v3204 = vunpack.c.0.s8 %v3203
        %v3205 = vlaneseq
        %v3206 = vshrl.u32 %v3205, 7
        %v3207 = vsub.s32 %v3204, %v3206
        %v3208 = vrot.slane %v3194, %v3207
        %v3209 = vcombine.low %v3185, %v3201
        %v3210 = vcombine.high %v3185, %v3201
        %v3212 = vunpack.c.l.s4 1934713408
        %v3213 = vunpack.c.0.s8 %v3212
        %v3214 = vlaneseq
        %v3215 = vshrl.u32 %v3214, 7
        %v3216 = vsub.s32 %v3213, %v3215
        %v3217 = vrot.slane %v3209, %v3216
        %v3219 = vunpack.c.l.s4 1934713408
        %v3220 = vunpack.c.0.s8 %v3219
        %v3221 = vlaneseq
        %v3222 = vshrl.u32 %v3221, 7
        %v3223 = vsub.s32 %v3220, %v3222
        %v3224 = vrot.slane %v3210, %v3223
        %v3225 = vcombine.low %v3192, %v3208
        %v3226 = vcombine.high %v3192, %v3208
        %v3228 = vunpack.c.l.s4 1934713408
        %v3229 = vunpack.c.0.s8 %v3228
        %v3230 = vlaneseq
        %v3231 = vshrl.u32 %v3230, 7
        %v3232 = vsub.s32 %v3229, %v3231
        %v3233 = vrot.slane %v3225, %v3232
        %v3235 = vunpack.c.l.s4 1934713408
        %v3236 = vunpack.c.0.s8 %v3235
        %v3237 = vlaneseq
        %v3238 = vshrl.u32 %v3237, 7
        %v3239 = vsub.s32 %v3236, %v3238
        %v3240 = vrot.slane %v3226, %v3239
        %v3241 = vcombine.high %v3217, 0.0
        %v3242 = vcombine.high %v3224, 0.0
        %v3243 = vcombine.high %v3233, 0.0
        %v3244 = vcombine.high %v3240, 0.0
        %v3245 = vcombine.low %v3149, %v3156
        %v3247 = vunpack.c.l.s4 1983009808
        %v3248 = vunpack.c.0.s8 %v3247
        %v3249 = vlaneseq
        %v3250 = vshrl.u32 %v3249, 7
        %v3251 = vsub.s32 %v3248, %v3250
        %v3252 = vrot.slane %v3245, %v3251
        %v3253 = vcombine.low %v3173, %v3174
        %v3255 = vunpack.c.l.s4 1983009808
        %v3256 = vunpack.c.0.s8 %v3255
        %v3257 = vlaneseq
        %v3258 = vshrl.u32 %v3257, 7
        %v3259 = vsub.s32 %v3256, %v3258
        %v3260 = vrot.slane %v3253, %v3259
        %v3261 = vcombine.low %v3165, %v3172
        %v3263 = vunpack.c.l.s4 1983009808
        %v3264 = vunpack.c.0.s8 %v3263
        %v3265 = vlaneseq
        %v3266 = vshrl.u32 %v3265, 7
        %v3267 = vsub.s32 %v3264, %v3266
        %v3268 = vrot.slane %v3261, %v3267
        %v3269 = vcombine.low %v3175, %v3176
        %v3271 = vunpack.c.l.s4 1983009808
        %v3272 = vunpack.c.0.s8 %v3271
        %v3273 = vlaneseq
        %v3274 = vshrl.u32 %v3273, 7
        %v3275 = vsub.s32 %v3272, %v3274
        %v3276 = vrot.slane %v3269, %v3275
        %v3277 = vcombine.low %v3252, %v3260
        %v3278 = vcombine.high %v3252, %v3260
        %v3280 = vunpack.c.l.s4 1934713408
        %v3281 = vunpack.c.0.s8 %v3280
        %v3282 = vlaneseq
        %v3283 = vshrl.u32 %v3282, 7
        %v3284 = vsub.s32 %v3281, %v3283
        %v3285 = vrot.slane %v3277, %v3284
        %v3287 = vunpack.c.l.s4 1934713408
        %v3288 = vunpack.c.0.s8 %v3287
        %v3289 = vlaneseq
        %v3290 = vshrl.u32 %v3289, 7
        %v3291 = vsub.s32 %v3288, %v3290
        %v3292 = vrot.slane %v3278, %v3291
        %v3293 = vcombine.low %v3268, %v3276
        %v3294 = vcombine.high %v3268, %v3276
        %v3296 = vunpack.c.l.s4 1934713408
        %v3297 = vunpack.c.0.s8 %v3296
        %v3298 = vlaneseq
        %v3299 = vshrl.u32 %v3298, 7
        %v3300 = vsub.s32 %v3297, %v3299
        %v3301 = vrot.slane %v3293, %v3300
        %v3303 = vunpack.c.l.s4 1934713408
        %v3304 = vunpack.c.0.s8 %v3303
        %v3305 = vlaneseq
        %v3306 = vshrl.u32 %v3305, 7
        %v3307 = vsub.s32 %v3304, %v3306
        %v3308 = vrot.slane %v3294, %v3307
        %v3309 = vcombine.low %v3285, %v3301
        %v3310 = vcombine.high %v3285, %v3301
        %v3311 = vcombine.low %v3292, %v3308
        %v3312 = vcombine.high %v3292, %v3308
        %v3313 = vcombine.low %v3217, %v3224
        %v3315 = vunpack.c.l.s4 1983009808
        %v3316 = vunpack.c.0.s8 %v3315
        %v3317 = vlaneseq
        %v3318 = vshrl.u32 %v3317, 7
        %v3319 = vsub.s32 %v3316, %v3318
        %v3320 = vrot.slane %v3313, %v3319
        %v3321 = vcombine.low %v3241, %v3242
        %v3323 = vunpack.c.l.s4 1983009808
        %v3324 = vunpack.c.0.s8 %v3323
        %v3325 = vlaneseq
        %v3326 = vshrl.u32 %v3325, 7
        %v3327 = vsub.s32 %v3324, %v3326
        %v3328 = vrot.slane %v3321, %v3327
        %v3329 = vcombine.low %v3233, %v3240
        %v3331 = vunpack.c.l.s4 1983009808
        %v3332 = vunpack.c.0.s8 %v3331
        %v3333 = vlaneseq
        %v3334 = vshrl.u32 %v3333, 7
        %v3335 = vsub.s32 %v3332, %v3334
        %v3336 = vrot.slane %v3329, %v3335
        %v3337 = vcombine.low %v3243, %v3244
        %v3339 = vunpack.c.l.s4 1983009808
        %v3340 = vunpack.c.0.s8 %v3339
        %v3341 = vlaneseq
        %v3342 = vshrl.u32 %v3341, 7
        %v3343 = vsub.s32 %v3340, %v3342
        %v3344 = vrot.slane %v3337, %v3343
        %v3345 = vcombine.low %v3320, %v3328
        %v3346 = vcombine.high %v3320, %v3328
        %v3348 = vunpack.c.l.s4 1934713408
        %v3349 = vunpack.c.0.s8 %v3348
        %v3350 = vlaneseq
        %v3351 = vshrl.u32 %v3350, 7
        %v3352 = vsub.s32 %v3349, %v3351
        %v3353 = vrot.slane %v3345, %v3352
        %v3355 = vunpack.c.l.s4 1934713408
        %v3356 = vunpack.c.0.s8 %v3355
        %v3357 = vlaneseq
        %v3358 = vshrl.u32 %v3357, 7
        %v3359 = vsub.s32 %v3356, %v3358
        %v3360 = vrot.slane %v3346, %v3359
        %v3361 = vcombine.low %v3336, %v3344
        %v3362 = vcombine.high %v3336, %v3344
        %v3364 = vunpack.c.l.s4 1934713408
        %v3365 = vunpack.c.0.s8 %v3364
        %v3366 = vlaneseq
        %v3367 = vshrl.u32 %v3366, 7
        %v3368 = vsub.s32 %v3365, %v3367
        %v3369 = vrot.slane %v3361, %v3368
        %v3371 = vunpack.c.l.s4 1934713408
        %v3372 = vunpack.c.0.s8 %v3371
        %v3373 = vlaneseq
        %v3374 = vshrl.u32 %v3373, 7
        %v3375 = vsub.s32 %v3372, %v3374
        %v3376 = vrot.slane %v3362, %v3375
        %v3377 = vcombine.low %v3353, %v3369
        %v3378 = vcombine.high %v3353, %v3369
        %v3379 = vcombine.low %v3360, %v3376
        %v3380 = vcombine.high %v3360, %v3376
        %3381 = vrot.lane.b32.xlu0 %v2789, 96
        %v3382 = vpop.permute.xlu0 %3381
        %3383 = vrot.lane.b32.xlu0 %v2794, 96
        %v3384 = vpop.permute.xlu0 %3383
        %3385 = vrot.lane.b32.xlu0 %v3092, 96
        %v3386 = vpop.permute.xlu0 %3385
        %3387 = vrot.lane.b32.xlu0 %v3094, 96
        %v3388 = vpop.permute.xlu0 %3387
        %3389 = vrot.lane.b32.xlu0 %v3098, 96
        %v3390 = vpop.permute.xlu0 %3389
        %3391 = vrot.lane.b32.xlu0 %v3100, 96
        %v3392 = vpop.permute.xlu0 %3391
        %3393 = vrot.lane.b32.xlu0 %v3104, 96
        %v3394 = vpop.permute.xlu0 %3393
        %3395 = vrot.lane.b32.xlu0 %v3106, 96
        %v3396 = vpop.permute.xlu0 %3395
        %v3405 = vcombine.low %v3382, %v3390
        %v3406 = vcombine.high %v3382, %v3390
        %v3408 = vunpack.c.l.s4 1983009808
        %v3409 = vunpack.c.0.s8 %v3408
        %v3410 = vlaneseq
        %v3411 = vshrl.u32 %v3410, 7
        %v3412 = vsub.s32 %v3409, %v3411
        %v3413 = vrot.slane %v3405, %v3412
        %v3415 = vunpack.c.l.s4 1983009808
        %v3416 = vunpack.c.0.s8 %v3415
        %v3417 = vlaneseq
        %v3418 = vshrl.u32 %v3417, 7
        %v3419 = vsub.s32 %v3416, %v3418
        %v3420 = vrot.slane %v3406, %v3419
        %v3421 = vcombine.low %v3386, %v3394
        %v3422 = vcombine.high %v3386, %v3394
        %v3424 = vunpack.c.l.s4 1983009808
        %v3425 = vunpack.c.0.s8 %v3424
        %v3426 = vlaneseq
        %v3427 = vshrl.u32 %v3426, 7
        %v3428 = vsub.s32 %v3425, %v3427
        %v3429 = vrot.slane %v3421, %v3428
        %v3431 = vunpack.c.l.s4 1983009808
        %v3432 = vunpack.c.0.s8 %v3431
        %v3433 = vlaneseq
        %v3434 = vshrl.u32 %v3433, 7
        %v3435 = vsub.s32 %v3432, %v3434
        %v3436 = vrot.slane %v3422, %v3435
        %v3437 = vcombine.low %v3413, %v3429
        %v3438 = vcombine.high %v3413, %v3429
        %v3440 = vunpack.c.l.s4 1934713408
        %v3441 = vunpack.c.0.s8 %v3440
        %v3442 = vlaneseq
        %v3443 = vshrl.u32 %v3442, 7
        %v3444 = vsub.s32 %v3441, %v3443
        %v3445 = vrot.slane %v3437, %v3444
        %v3447 = vunpack.c.l.s4 1934713408
        %v3448 = vunpack.c.0.s8 %v3447
        %v3449 = vlaneseq
        %v3450 = vshrl.u32 %v3449, 7
        %v3451 = vsub.s32 %v3448, %v3450
        %v3452 = vrot.slane %v3438, %v3451
        %v3453 = vcombine.low %v3420, %v3436
        %v3454 = vcombine.high %v3420, %v3436
        %v3456 = vunpack.c.l.s4 1934713408
        %v3457 = vunpack.c.0.s8 %v3456
        %v3458 = vlaneseq
        %v3459 = vshrl.u32 %v3458, 7
        %v3460 = vsub.s32 %v3457, %v3459
        %v3461 = vrot.slane %v3453, %v3460
        %v3463 = vunpack.c.l.s4 1934713408
        %v3464 = vunpack.c.0.s8 %v3463
        %v3465 = vlaneseq
        %v3466 = vshrl.u32 %v3465, 7
        %v3467 = vsub.s32 %v3464, %v3466
        %v3468 = vrot.slane %v3454, %v3467
        %v3469 = vcombine.high %v3445, 0.0
        %v3470 = vcombine.high %v3452, 0.0
        %v3471 = vcombine.high %v3461, 0.0
        %v3472 = vcombine.high %v3468, 0.0
        %v3473 = vcombine.low %v3384, %v3392
        %v3474 = vcombine.high %v3384, %v3392
        %v3476 = vunpack.c.l.s4 1983009808
        %v3477 = vunpack.c.0.s8 %v3476
        %v3478 = vlaneseq
        %v3479 = vshrl.u32 %v3478, 7
        %v3480 = vsub.s32 %v3477, %v3479
        %v3481 = vrot.slane %v3473, %v3480
        %v3483 = vunpack.c.l.s4 1983009808
        %v3484 = vunpack.c.0.s8 %v3483
        %v3485 = vlaneseq
        %v3486 = vshrl.u32 %v3485, 7
        %v3487 = vsub.s32 %v3484, %v3486
        %v3488 = vrot.slane %v3474, %v3487
        %v3489 = vcombine.low %v3388, %v3396
        %v3490 = vcombine.high %v3388, %v3396
        %v3492 = vunpack.c.l.s4 1983009808
        %v3493 = vunpack.c.0.s8 %v3492
        %v3494 = vlaneseq
        %v3495 = vshrl.u32 %v3494, 7
        %v3496 = vsub.s32 %v3493, %v3495
        %v3497 = vrot.slane %v3489, %v3496
        %v3499 = vunpack.c.l.s4 1983009808
        %v3500 = vunpack.c.0.s8 %v3499
        %v3501 = vlaneseq
        %v3502 = vshrl.u32 %v3501, 7
        %v3503 = vsub.s32 %v3500, %v3502
        %v3504 = vrot.slane %v3490, %v3503
        %v3505 = vcombine.low %v3481, %v3497
        %v3506 = vcombine.high %v3481, %v3497
        %v3508 = vunpack.c.l.s4 1934713408
        %v3509 = vunpack.c.0.s8 %v3508
        %v3510 = vlaneseq
        %v3511 = vshrl.u32 %v3510, 7
        %v3512 = vsub.s32 %v3509, %v3511
        %v3513 = vrot.slane %v3505, %v3512
        %v3515 = vunpack.c.l.s4 1934713408
        %v3516 = vunpack.c.0.s8 %v3515
        %v3517 = vlaneseq
        %v3518 = vshrl.u32 %v3517, 7
        %v3519 = vsub.s32 %v3516, %v3518
        %v3520 = vrot.slane %v3506, %v3519
        %v3521 = vcombine.low %v3488, %v3504
        %v3522 = vcombine.high %v3488, %v3504
        %v3524 = vunpack.c.l.s4 1934713408
        %v3525 = vunpack.c.0.s8 %v3524
        %v3526 = vlaneseq
        %v3527 = vshrl.u32 %v3526, 7
        %v3528 = vsub.s32 %v3525, %v3527
        %v3529 = vrot.slane %v3521, %v3528
        %v3531 = vunpack.c.l.s4 1934713408
        %v3532 = vunpack.c.0.s8 %v3531
        %v3533 = vlaneseq
        %v3534 = vshrl.u32 %v3533, 7
        %v3535 = vsub.s32 %v3532, %v3534
        %v3536 = vrot.slane %v3522, %v3535
        %v3537 = vcombine.high %v3513, 0.0
        %v3538 = vcombine.high %v3520, 0.0
        %v3539 = vcombine.high %v3529, 0.0
        %v3540 = vcombine.high %v3536, 0.0
        %v3541 = vcombine.low %v3445, %v3452
        %v3543 = vunpack.c.l.s4 1983009808
        %v3544 = vunpack.c.0.s8 %v3543
        %v3545 = vlaneseq
        %v3546 = vshrl.u32 %v3545, 7
        %v3547 = vsub.s32 %v3544, %v3546
        %v3548 = vrot.slane %v3541, %v3547
        %v3549 = vcombine.low %v3469, %v3470
        %v3551 = vunpack.c.l.s4 1983009808
        %v3552 = vunpack.c.0.s8 %v3551
        %v3553 = vlaneseq
        %v3554 = vshrl.u32 %v3553, 7
        %v3555 = vsub.s32 %v3552, %v3554
        %v3556 = vrot.slane %v3549, %v3555
        %v3557 = vcombine.low %v3461, %v3468
        %v3559 = vunpack.c.l.s4 1983009808
        %v3560 = vunpack.c.0.s8 %v3559
        %v3561 = vlaneseq
        %v3562 = vshrl.u32 %v3561, 7
        %v3563 = vsub.s32 %v3560, %v3562
        %v3564 = vrot.slane %v3557, %v3563
        %v3565 = vcombine.low %v3471, %v3472
        %v3567 = vunpack.c.l.s4 1983009808
        %v3568 = vunpack.c.0.s8 %v3567
        %v3569 = vlaneseq
        %v3570 = vshrl.u32 %v3569, 7
        %v3571 = vsub.s32 %v3568, %v3570
        %v3572 = vrot.slane %v3565, %v3571
        %v3573 = vcombine.low %v3548, %v3556
        %v3574 = vcombine.high %v3548, %v3556
        %v3576 = vunpack.c.l.s4 1934713408
        %v3577 = vunpack.c.0.s8 %v3576
        %v3578 = vlaneseq
        %v3579 = vshrl.u32 %v3578, 7
        %v3580 = vsub.s32 %v3577, %v3579
        %v3581 = vrot.slane %v3573, %v3580
        %v3583 = vunpack.c.l.s4 1934713408
        %v3584 = vunpack.c.0.s8 %v3583
        %v3585 = vlaneseq
        %v3586 = vshrl.u32 %v3585, 7
        %v3587 = vsub.s32 %v3584, %v3586
        %v3588 = vrot.slane %v3574, %v3587
        %v3589 = vcombine.low %v3564, %v3572
        %v3590 = vcombine.high %v3564, %v3572
        %v3592 = vunpack.c.l.s4 1934713408
        %v3593 = vunpack.c.0.s8 %v3592
        %v3594 = vlaneseq
        %v3595 = vshrl.u32 %v3594, 7
        %v3596 = vsub.s32 %v3593, %v3595
        %v3597 = vrot.slane %v3589, %v3596
        %v3599 = vunpack.c.l.s4 1934713408
        %v3600 = vunpack.c.0.s8 %v3599
        %v3601 = vlaneseq
        %v3602 = vshrl.u32 %v3601, 7
        %v3603 = vsub.s32 %v3600, %v3602
        %v3604 = vrot.slane %v3590, %v3603
        %v3605 = vcombine.low %v3581, %v3597
        %v3606 = vcombine.high %v3581, %v3597
        %v3607 = vcombine.low %v3588, %v3604
        %v3608 = vcombine.high %v3588, %v3604
        %v3609 = vcombine.low %v3513, %v3520
        %v3611 = vunpack.c.l.s4 1983009808
        %v3612 = vunpack.c.0.s8 %v3611
        %v3613 = vlaneseq
        %v3614 = vshrl.u32 %v3613, 7
        %v3615 = vsub.s32 %v3612, %v3614
        %v3616 = vrot.slane %v3609, %v3615
        %v3617 = vcombine.low %v3537, %v3538
        %v3619 = vunpack.c.l.s4 1983009808
        %v3620 = vunpack.c.0.s8 %v3619
        %v3621 = vlaneseq
        %v3622 = vshrl.u32 %v3621, 7
        %v3623 = vsub.s32 %v3620, %v3622
        %v3624 = vrot.slane %v3617, %v3623
        %v3625 = vcombine.low %v3529, %v3536
        %v3627 = vunpack.c.l.s4 1983009808
        %v3628 = vunpack.c.0.s8 %v3627
        %v3629 = vlaneseq
        %v3630 = vshrl.u32 %v3629, 7
        %v3631 = vsub.s32 %v3628, %v3630
        %v3632 = vrot.slane %v3625, %v3631
        %v3633 = vcombine.low %v3539, %v3540
        %v3635 = vunpack.c.l.s4 1983009808
        %v3636 = vunpack.c.0.s8 %v3635
        %v3637 = vlaneseq
        %v3638 = vshrl.u32 %v3637, 7
        %v3639 = vsub.s32 %v3636, %v3638
        %v3640 = vrot.slane %v3633, %v3639
        %v3641 = vcombine.low %v3616, %v3624
        %v3642 = vcombine.high %v3616, %v3624
        %v3644 = vunpack.c.l.s4 1934713408
        %v3645 = vunpack.c.0.s8 %v3644
        %v3646 = vlaneseq
        %v3647 = vshrl.u32 %v3646, 7
        %v3648 = vsub.s32 %v3645, %v3647
        %v3649 = vrot.slane %v3641, %v3648
        %v3651 = vunpack.c.l.s4 1934713408
        %v3652 = vunpack.c.0.s8 %v3651
        %v3653 = vlaneseq
        %v3654 = vshrl.u32 %v3653, 7
        %v3655 = vsub.s32 %v3652, %v3654
        %v3656 = vrot.slane %v3642, %v3655
        %v3657 = vcombine.low %v3632, %v3640
        %v3658 = vcombine.high %v3632, %v3640
        %v3660 = vunpack.c.l.s4 1934713408
        %v3661 = vunpack.c.0.s8 %v3660
        %v3662 = vlaneseq
        %v3663 = vshrl.u32 %v3662, 7
        %v3664 = vsub.s32 %v3661, %v3663
        %v3665 = vrot.slane %v3657, %v3664
        %v3667 = vunpack.c.l.s4 1934713408
        %v3668 = vunpack.c.0.s8 %v3667
        %v3669 = vlaneseq
        %v3670 = vshrl.u32 %v3669, 7
        %v3671 = vsub.s32 %v3668, %v3670
        %v3672 = vrot.slane %v3658, %v3671
        %v3673 = vcombine.low %v3649, %v3665
        %v3674 = vcombine.high %v3649, %v3665
        %v3675 = vcombine.low %v3656, %v3672
        %v3676 = vcombine.high %v3656, %v3672
        %v3678 = vsel %vm1417, %v3017, 0
        %v3681 = vsel %vm1417, %v3085, 0
        %v3684 = vsel %vm1417, %v3309, 0
        %v3687 = vsel %vm1417, %v3377, 0
        %3689 = vmatprep.subr.mxu0 0.0
        %3690 = vmatpush1.xpose.msra.mxu0 0.0
        %3691 = vmatprep.subr.mxu0 0.0
        %3692 = vmatpush1.xpose.msra.mxu0 0.0
        %3693 = vmatprep.subr.mxu0 0.0
        %3694 = vmatpush1.xpose.msra.mxu0 0.0
        %3695 = vmatprep.subr.mxu0 0.0
        %3696 = vmatpush1.xpose.msra.mxu0 0.0
        %3697 = vmatprep.subr.mxu0 0.0
        %3698 = vmatpush1.xpose.msra.mxu0 0.0
        %3699 = vmatprep.subr.mxu0 0.0
        %3700 = vmatpush1.xpose.msra.mxu0 0.0
        %3701 = vmatprep.subr.mxu0 0.0
        %3702 = vmatpush1.xpose.msra.mxu0 0.0
        %3703 = vmatprep.subr.mxu0 0.0
        %3704 = vmatpush1.xpose.msra.mxu0 0.0
        %3705 = vmatprep.subr.mxu0 0.0
        %3706 = vmatpush1.xpose.msra.mxu0 0.0
        %3707 = vmatprep.subr.mxu0 0.0
        %3708 = vmatpush1.xpose.msra.mxu0 0.0
        %3709 = vmatprep.subr.mxu0 0.0
        %3710 = vmatpush1.xpose.msra.mxu0 0.0
        %3711 = vmatprep.subr.mxu0 0.0
        %3712 = vmatpush1.xpose.msra.mxu0 0.0
        %3713 = vmatprep.subr.mxu0 0.0
        %3714 = vmatpush1.xpose.msra.mxu0 0.0
        %3715 = vmatprep.subr.mxu0 0.0
        %3716 = vmatpush1.xpose.msra.mxu0 0.0
        %3717 = vmatprep.subr.mxu0 0.0
        %3718 = vmatpush1.xpose.msra.mxu0 %v3687
        %3719 = vmatprep.subr.mxu0 0.0
        %3720 = vmatpush1.xpose.msra.mxu0 %v3684
        %3721 = vmatprep.subr.mxu0 0.0
        %3722 = vmatpush2.xpose.msra.mxu0 0.0
        %3723 = vmatprep.subr.mxu0 0.0
        %3724 = vmatpush2.xpose.msra.mxu0 0.0
        %3725 = vmatprep.subr.mxu0 0.0
        %3726 = vmatpush2.xpose.msra.mxu0 0.0
        %3727 = vmatprep.subr.mxu0 0.0
        %3728 = vmatpush2.xpose.msra.mxu0 0.0
        %3729 = vmatprep.subr.mxu0 0.0
        %3730 = vmatpush2.xpose.msra.mxu0 0.0
        %3731 = vmatprep.subr.mxu0 0.0
        %3732 = vmatpush2.xpose.msra.mxu0 0.0
        %3733 = vmatprep.subr.mxu0 0.0
        %3734 = vmatpush2.xpose.msra.mxu0 0.0
        %3735 = vmatprep.subr.mxu0 0.0
        %3736 = vmatpush2.xpose.msra.mxu0 0.0
        %3737 = vmatprep.subr.mxu0 0.0
        %3738 = vmatpush2.xpose.msra.mxu0 0.0
        %3739 = vmatprep.subr.mxu0 0.0
        %3740 = vmatpush2.xpose.msra.mxu0 0.0
        %3741 = vmatprep.subr.mxu0 0.0
        %3742 = vmatpush2.xpose.msra.mxu0 0.0
        %3743 = vmatprep.subr.mxu0 0.0
        %3744 = vmatpush2.xpose.msra.mxu0 0.0
        %3745 = vmatprep.subr.mxu0 0.0
        %3746 = vmatpush2.xpose.msra.mxu0 0.0
        %3747 = vmatprep.subr.mxu0 0.0
        %3748 = vmatpush2.xpose.msra.mxu0 0.0
        %3749 = vmatprep.subr.mxu0 0.0
        %3750 = vmatpush2.xpose.msra.mxu0 0.0
        %3751 = vmatprep.subr.mxu0 0.0
        %3752 = vmatpush2.xpose.msra.mxu0 0.0
        %3753 = vmatprep.mubr.f32.mxu0 0.0
        %3754 = vmatmul.mubr.f32.gmra.mxu0 %v3678
        %v3755 = vpop.f32.mrf.mxu0
        %v3756 = vadd.f32 %v347, %v3755
        %v3757 = vpop.f32.mrf.mxu0
        %3758 = vmatprep.mubr.f32.mxu0 0.0
        %3759 = vmatmul.mubr.f32.gmra.mxu0 %v3681
        %v3760 = vpop.f32.mrf.mxu0
        %v3761 = vadd.f32 %v348, %v3760
        %v3762 = vpop.f32.mrf.mxu0
        %3763 = vdwg.mxu0
        %v3765 = vsel %vm1417, %v3018, 0
        %v3768 = vsel %vm1417, %v3086, 0
        %v3771 = vsel %vm1417, %v3310, 0
        %v3774 = vsel %vm1417, %v3378, 0
        %3776 = vmatprep.subr.mxu0 0.0
        %3777 = vmatpush1.xpose.msra.mxu0 0.0
        %3778 = vmatprep.subr.mxu0 0.0
        %3779 = vmatpush1.xpose.msra.mxu0 0.0
        %3780 = vmatprep.subr.mxu0 0.0
        %3781 = vmatpush1.xpose.msra.mxu0 0.0
        %3782 = vmatprep.subr.mxu0 0.0
        %3783 = vmatpush1.xpose.msra.mxu0 0.0
        %3784 = vmatprep.subr.mxu0 0.0
        %3785 = vmatpush1.xpose.msra.mxu0 0.0
        %3786 = vmatprep.subr.mxu0 0.0
        %3787 = vmatpush1.xpose.msra.mxu0 0.0
        %3788 = vmatprep.subr.mxu0 0.0
        %3789 = vmatpush1.xpose.msra.mxu0 0.0
        %3790 = vmatprep.subr.mxu0 0.0
        %3791 = vmatpush1.xpose.msra.mxu0 0.0
        %3792 = vmatprep.subr.mxu0 0.0
        %3793 = vmatpush1.xpose.msra.mxu0 0.0
        %3794 = vmatprep.subr.mxu0 0.0
        %3795 = vmatpush1.xpose.msra.mxu0 0.0
        %3796 = vmatprep.subr.mxu0 0.0
        %3797 = vmatpush1.xpose.msra.mxu0 0.0
        %3798 = vmatprep.subr.mxu0 0.0
        %3799 = vmatpush1.xpose.msra.mxu0 0.0
        %3800 = vmatprep.subr.mxu0 0.0
        %3801 = vmatpush1.xpose.msra.mxu0 0.0
        %3802 = vmatprep.subr.mxu0 0.0
        %3803 = vmatpush1.xpose.msra.mxu0 0.0
        %3804 = vmatprep.subr.mxu0 0.0
        %3805 = vmatpush1.xpose.msra.mxu0 %v3774
        %3806 = vmatprep.subr.mxu0 0.0
        %3807 = vmatpush1.xpose.msra.mxu0 %v3771
        %3808 = vmatprep.subr.mxu0 0.0
        %3809 = vmatpush2.xpose.msra.mxu0 0.0
        %3810 = vmatprep.subr.mxu0 0.0
        %3811 = vmatpush2.xpose.msra.mxu0 0.0
        %3812 = vmatprep.subr.mxu0 0.0
        %3813 = vmatpush2.xpose.msra.mxu0 0.0
        %3814 = vmatprep.subr.mxu0 0.0
        %3815 = vmatpush2.xpose.msra.mxu0 0.0
        %3816 = vmatprep.subr.mxu0 0.0
        %3817 = vmatpush2.xpose.msra.mxu0 0.0
        %3818 = vmatprep.subr.mxu0 0.0
        %3819 = vmatpush2.xpose.msra.mxu0 0.0
        %3820 = vmatprep.subr.mxu0 0.0
        %3821 = vmatpush2.xpose.msra.mxu0 0.0
        %3822 = vmatprep.subr.mxu0 0.0
        %3823 = vmatpush2.xpose.msra.mxu0 0.0
        %3824 = vmatprep.subr.mxu0 0.0
        %3825 = vmatpush2.xpose.msra.mxu0 0.0
        %3826 = vmatprep.subr.mxu0 0.0
        %3827 = vmatpush2.xpose.msra.mxu0 0.0
        %3828 = vmatprep.subr.mxu0 0.0
        %3829 = vmatpush2.xpose.msra.mxu0 0.0
        %3830 = vmatprep.subr.mxu0 0.0
        %3831 = vmatpush2.xpose.msra.mxu0 0.0
        %3832 = vmatprep.subr.mxu0 0.0
        %3833 = vmatpush2.xpose.msra.mxu0 0.0
        %3834 = vmatprep.subr.mxu0 0.0
        %3835 = vmatpush2.xpose.msra.mxu0 0.0
        %3836 = vmatprep.subr.mxu0 0.0
        %3837 = vmatpush2.xpose.msra.mxu0 0.0
        %3838 = vmatprep.subr.mxu0 0.0
        %3839 = vmatpush2.xpose.msra.mxu0 0.0
        %3840 = vmatprep.mubr.f32.mxu0 0.0
        %3841 = vmatmul.mubr.f32.gmra.mxu0 %v3765
        %v3842 = vpop.f32.mrf.mxu0
        %v3843 = vadd.f32 %v347, %v3842
        %v3844 = vpop.f32.mrf.mxu0
        %3845 = vmatprep.mubr.f32.mxu0 0.0
        %3846 = vmatmul.mubr.f32.gmra.mxu0 %v3768
        %v3847 = vpop.f32.mrf.mxu0
        %v3848 = vadd.f32 %v348, %v3847
        %v3849 = vpop.f32.mrf.mxu0
        %3850 = vdwg.mxu0
        %v3852 = vsel %vm1417, %v3019, 0
        %v3855 = vsel %vm1417, %v3087, 0
        %v3858 = vsel %vm1417, %v3311, 0
        %v3861 = vsel %vm1417, %v3379, 0
        %3863 = vmatprep.subr.mxu0 0.0
        %3864 = vmatpush1.xpose.msra.mxu0 0.0
        %3865 = vmatprep.subr.mxu0 0.0
        %3866 = vmatpush1.xpose.msra.mxu0 0.0
        %3867 = vmatprep.subr.mxu0 0.0
        %3868 = vmatpush1.xpose.msra.mxu0 0.0
        %3869 = vmatprep.subr.mxu0 0.0
        %3870 = vmatpush1.xpose.msra.mxu0 0.0
        %3871 = vmatprep.subr.mxu0 0.0
        %3872 = vmatpush1.xpose.msra.mxu0 0.0
        %3873 = vmatprep.subr.mxu0 0.0
        %3874 = vmatpush1.xpose.msra.mxu0 0.0
        %3875 = vmatprep.subr.mxu0 0.0
        %3876 = vmatpush1.xpose.msra.mxu0 0.0
        %3877 = vmatprep.subr.mxu0 0.0
        %3878 = vmatpush1.xpose.msra.mxu0 0.0
        %3879 = vmatprep.subr.mxu0 0.0
        %3880 = vmatpush1.xpose.msra.mxu0 0.0
        %3881 = vmatprep.subr.mxu0 0.0
        %3882 = vmatpush1.xpose.msra.mxu0 0.0
        %3883 = vmatprep.subr.mxu0 0.0
        %3884 = vmatpush1.xpose.msra.mxu0 0.0
        %3885 = vmatprep.subr.mxu0 0.0
        %3886 = vmatpush1.xpose.msra.mxu0 0.0
        %3887 = vmatprep.subr.mxu0 0.0
        %3888 = vmatpush1.xpose.msra.mxu0 0.0
        %3889 = vmatprep.subr.mxu0 0.0
        %3890 = vmatpush1.xpose.msra.mxu0 0.0
        %3891 = vmatprep.subr.mxu0 0.0
        %3892 = vmatpush1.xpose.msra.mxu0 %v3861
        %3893 = vmatprep.subr.mxu0 0.0
        %3894 = vmatpush1.xpose.msra.mxu0 %v3858
        %3895 = vmatprep.subr.mxu0 0.0
        %3896 = vmatpush2.xpose.msra.mxu0 0.0
        %3897 = vmatprep.subr.mxu0 0.0
        %3898 = vmatpush2.xpose.msra.mxu0 0.0
        %3899 = vmatprep.subr.mxu0 0.0
        %3900 = vmatpush2.xpose.msra.mxu0 0.0
        %3901 = vmatprep.subr.mxu0 0.0
        %3902 = vmatpush2.xpose.msra.mxu0 0.0
        %3903 = vmatprep.subr.mxu0 0.0
        %3904 = vmatpush2.xpose.msra.mxu0 0.0
        %3905 = vmatprep.subr.mxu0 0.0
        %3906 = vmatpush2.xpose.msra.mxu0 0.0
        %3907 = vmatprep.subr.mxu0 0.0
        %3908 = vmatpush2.xpose.msra.mxu0 0.0
        %3909 = vmatprep.subr.mxu0 0.0
        %3910 = vmatpush2.xpose.msra.mxu0 0.0
        %3911 = vmatprep.subr.mxu0 0.0
        %3912 = vmatpush2.xpose.msra.mxu0 0.0
        %3913 = vmatprep.subr.mxu0 0.0
        %3914 = vmatpush2.xpose.msra.mxu0 0.0
        %3915 = vmatprep.subr.mxu0 0.0
        %3916 = vmatpush2.xpose.msra.mxu0 0.0
        %3917 = vmatprep.subr.mxu0 0.0
        %3918 = vmatpush2.xpose.msra.mxu0 0.0
        %3919 = vmatprep.subr.mxu0 0.0
        %3920 = vmatpush2.xpose.msra.mxu0 0.0
        %3921 = vmatprep.subr.mxu0 0.0
        %3922 = vmatpush2.xpose.msra.mxu0 0.0
        %3923 = vmatprep.subr.mxu0 0.0
        %3924 = vmatpush2.xpose.msra.mxu0 0.0
        %3925 = vmatprep.subr.mxu0 0.0
        %3926 = vmatpush2.xpose.msra.mxu0 0.0
        %3927 = vmatprep.mubr.f32.mxu0 0.0
        %3928 = vmatmul.mubr.f32.gmra.mxu0 %v3852
        %v3929 = vpop.f32.mrf.mxu0
        %v3930 = vadd.f32 %v347, %v3929
        %v3931 = vpop.f32.mrf.mxu0
        %3932 = vmatprep.mubr.f32.mxu0 0.0
        %3933 = vmatmul.mubr.f32.gmra.mxu0 %v3855
        %v3934 = vpop.f32.mrf.mxu0
        %v3935 = vadd.f32 %v348, %v3934
        %v3936 = vpop.f32.mrf.mxu0
        %3937 = vdwg.mxu0
        %v3939 = vsel %vm1417, %v3020, 0
        %v3942 = vsel %vm1417, %v3088, 0
        %v3945 = vsel %vm1417, %v3312, 0
        %v3948 = vsel %vm1417, %v3380, 0
        %3950 = vmatprep.subr.mxu0 0.0
        %3951 = vmatpush1.xpose.msra.mxu0 0.0
        %3952 = vmatprep.subr.mxu0 0.0
        %3953 = vmatpush1.xpose.msra.mxu0 0.0
        %3954 = vmatprep.subr.mxu0 0.0
        %3955 = vmatpush1.xpose.msra.mxu0 0.0
        %3956 = vmatprep.subr.mxu0 0.0
        %3957 = vmatpush1.xpose.msra.mxu0 0.0
        %3958 = vmatprep.subr.mxu0 0.0
        %3959 = vmatpush1.xpose.msra.mxu0 0.0
        %3960 = vmatprep.subr.mxu0 0.0
        %3961 = vmatpush1.xpose.msra.mxu0 0.0
        %3962 = vmatprep.subr.mxu0 0.0
        %3963 = vmatpush1.xpose.msra.mxu0 0.0
        %3964 = vmatprep.subr.mxu0 0.0
        %3965 = vmatpush1.xpose.msra.mxu0 0.0
        %3966 = vmatprep.subr.mxu0 0.0
        %3967 = vmatpush1.xpose.msra.mxu0 0.0
        %3968 = vmatprep.subr.mxu0 0.0
        %3969 = vmatpush1.xpose.msra.mxu0 0.0
        %3970 = vmatprep.subr.mxu0 0.0
        %3971 = vmatpush1.xpose.msra.mxu0 0.0
        %3972 = vmatprep.subr.mxu0 0.0
        %3973 = vmatpush1.xpose.msra.mxu0 0.0
        %3974 = vmatprep.subr.mxu0 0.0
        %3975 = vmatpush1.xpose.msra.mxu0 0.0
        %3976 = vmatprep.subr.mxu0 0.0
        %3977 = vmatpush1.xpose.msra.mxu0 0.0
        %3978 = vmatprep.subr.mxu0 0.0
        %3979 = vmatpush1.xpose.msra.mxu0 %v3948
        %3980 = vmatprep.subr.mxu0 0.0
        %3981 = vmatpush1.xpose.msra.mxu0 %v3945
        %3982 = vmatprep.subr.mxu0 0.0
        %3983 = vmatpush2.xpose.msra.mxu0 0.0
        %3984 = vmatprep.subr.mxu0 0.0
        %3985 = vmatpush2.xpose.msra.mxu0 0.0
        %3986 = vmatprep.subr.mxu0 0.0
        %3987 = vmatpush2.xpose.msra.mxu0 0.0
        %3988 = vmatprep.subr.mxu0 0.0
        %3989 = vmatpush2.xpose.msra.mxu0 0.0
        %3990 = vmatprep.subr.mxu0 0.0
        %3991 = vmatpush2.xpose.msra.mxu0 0.0
        %3992 = vmatprep.subr.mxu0 0.0
        %3993 = vmatpush2.xpose.msra.mxu0 0.0
        %3994 = vmatprep.subr.mxu0 0.0
        %3995 = vmatpush2.xpose.msra.mxu0 0.0
        %3996 = vmatprep.subr.mxu0 0.0
        %3997 = vmatpush2.xpose.msra.mxu0 0.0
        %3998 = vmatprep.subr.mxu0 0.0
        %3999 = vmatpush2.xpose.msra.mxu0 0.0
        %4000 = vmatprep.subr.mxu0 0.0
        %4001 = vmatpush2.xpose.msra.mxu0 0.0
        %4002 = vmatprep.subr.mxu0 0.0
        %4003 = vmatpush2.xpose.msra.mxu0 0.0
        %4004 = vmatprep.subr.mxu0 0.0
        %4005 = vmatpush2.xpose.msra.mxu0 0.0
        %4006 = vmatprep.subr.mxu0 0.0
        %4007 = vmatpush2.xpose.msra.mxu0 0.0
        %4008 = vmatprep.subr.mxu0 0.0
        %4009 = vmatpush2.xpose.msra.mxu0 0.0
        %4010 = vmatprep.subr.mxu0 0.0
        %4011 = vmatpush2.xpose.msra.mxu0 0.0
        %4012 = vmatprep.subr.mxu0 0.0
        %4013 = vmatpush2.xpose.msra.mxu0 0.0
        %4014 = vmatprep.mubr.f32.mxu0 0.0
        %4015 = vmatmul.mubr.f32.gmra.mxu0 %v3939
        %v4016 = vpop.f32.mrf.mxu0
        %v4017 = vadd.f32 %v347, %v4016
        %v4018 = vpop.f32.mrf.mxu0
        %4019 = vmatprep.mubr.f32.mxu0 0.0
        %4020 = vmatmul.mubr.f32.gmra.mxu0 %v3942
        %v4021 = vpop.f32.mrf.mxu0
        %v4022 = vadd.f32 %v348, %v4021
        %v4023 = vpop.f32.mrf.mxu0
        %4024 = vdwg.mxu0
        %v4025 = vsel %vm1766, %v3756, -inf
        %4026 = vmax.xlane.f32.xlu0 %v4025
        %v4027 = vpop.xlane.xlu0 %4026
        %v4028 = vsel %vm1766, %v3761, -inf
        %4029 = vmax.xlane.f32.xlu0 %v4028
        %v4030 = vpop.xlane.xlu0 %4029
        %v4031 = vsel %vm1766, %v3843, -inf
        %4032 = vmax.xlane.f32.xlu0 %v4031
        %v4033 = vpop.xlane.xlu0 %4032
        %v4034 = vsel %vm1766, %v3848, -inf
        %4035 = vmax.xlane.f32.xlu0 %v4034
        %v4036 = vpop.xlane.xlu0 %4035
        %v4037 = vsel %vm1766, %v3930, -inf
        %4038 = vmax.xlane.f32.xlu0 %v4037
        %v4039 = vpop.xlane.xlu0 %4038
        %v4040 = vsel %vm1766, %v3935, -inf
        %4041 = vmax.xlane.f32.xlu0 %v4040
        %v4042 = vpop.xlane.xlu0 %4041
        %v4043 = vsel %vm1766, %v4017, -inf
        %4044 = vmax.xlane.f32.xlu0 %v4043
        %v4045 = vpop.xlane.xlu0 %4044
        %v4046 = vsel %vm1766, %v4022, -inf
        %4047 = vmax.xlane.f32.xlu0 %v4046
        %v4048 = vpop.xlane.xlu0 %4047
        %v4049 = vsub.f32 %v3756, %v4027
        %v4050 = vsub.f32 %v3761, %v4030
        %v4051 = vsub.f32 %v3843, %v4033
        %v4052 = vsub.f32 %v3848, %v4036
        %v4053 = vsub.f32 %v3930, %v4039
        %v4054 = vsub.f32 %v3935, %v4042
        %v4055 = vsub.f32 %v4017, %v4045
        %v4056 = vsub.f32 %v4022, %v4048
        %v4057 = vmul.f32 %v4049, 1.442695
        %v4058 = vpow.pop %v4057
        %v4059 = vmul.f32 %v4050, 1.442695
        %v4060 = vpow.pop %v4059
        %v4061 = vmul.f32 %v4051, 1.442695
        %v4062 = vpow.pop %v4061
        %v4063 = vmul.f32 %v4052, 1.442695
        %v4064 = vpow.pop %v4063
        %v4065 = vmul.f32 %v4053, 1.442695
        %v4066 = vpow.pop %v4065
        %v4067 = vmul.f32 %v4054, 1.442695
        %v4068 = vpow.pop %v4067
        %v4069 = vmul.f32 %v4055, 1.442695
        %v4070 = vpow.pop %v4069
        %v4071 = vmul.f32 %v4056, 1.442695
        %v4072 = vpow.pop %v4071
        %v4073 = vsel %vm1766, %v4058, 0.0
        %4074 = vadd.xlane.f32.xlu0 %v4073
        %v4075 = vpop.xlane.xlu0 %4074
        %v4076 = vsel %vm1766, %v4060, 0.0
        %4077 = vadd.xlane.f32.xlu0 %v4076
        %v4078 = vpop.xlane.xlu0 %4077
        %v4079 = vsel %vm1766, %v4062, 0.0
        %4080 = vadd.xlane.f32.xlu0 %v4079
        %v4081 = vpop.xlane.xlu0 %4080
        %v4082 = vsel %vm1766, %v4064, 0.0
        %4083 = vadd.xlane.f32.xlu0 %v4082
        %v4084 = vpop.xlane.xlu0 %4083
        %v4085 = vsel %vm1766, %v4066, 0.0
        %4086 = vadd.xlane.f32.xlu0 %v4085
        %v4087 = vpop.xlane.xlu0 %4086
        %v4088 = vsel %vm1766, %v4068, 0.0
        %4089 = vadd.xlane.f32.xlu0 %v4088
        %v4090 = vpop.xlane.xlu0 %4089
        %v4091 = vsel %vm1766, %v4070, 0.0
        %4092 = vadd.xlane.f32.xlu0 %v4091
        %v4093 = vpop.xlane.xlu0 %4092
        %v4094 = vsel %vm1766, %v4072, 0.0
        %4095 = vadd.xlane.f32.xlu0 %v4094
        %v4096 = vpop.xlane.xlu0 %4095
        %v4097 = vrcp.pop %v4075
        %v4098 = vmul.f32 %v4058, %v4097
        %v4099 = vrcp.pop %v4078
        %v4100 = vmul.f32 %v4060, %v4099
        %v4101 = vrcp.pop %v4081
        %v4102 = vmul.f32 %v4062, %v4101
        %v4103 = vrcp.pop %v4084
        %v4104 = vmul.f32 %v4064, %v4103
        %v4105 = vrcp.pop %v4087
        %v4106 = vmul.f32 %v4066, %v4105
        %v4107 = vrcp.pop %v4090
        %v4108 = vmul.f32 %v4068, %v4107
        %v4109 = vrcp.pop %v4093
        %v4110 = vmul.f32 %v4070, %v4109
        %v4111 = vrcp.pop %v4096
        %v4112 = vmul.f32 %v4072, %v4111
        %v4114 = vsel %vm1766, %v4098, 0
        %v4117 = vsel %vm1766, %v4100, 0
        %4119 = vmatprep.subr.mxu0 0.0
        %4120 = vmatpush1.msra.mxu0 0.0
        %4121 = vmatprep.subr.mxu0 0.0
        %4122 = vmatpush1.msra.mxu0 0.0
        %4123 = vmatprep.subr.mxu0 0.0
        %4124 = vmatpush1.msra.mxu0 0.0
        %4125 = vmatprep.subr.mxu0 0.0
        %4126 = vmatpush1.msra.mxu0 0.0
        %4127 = vmatprep.subr.mxu0 0.0
        %4128 = vmatpush1.msra.mxu0 0.0
        %4129 = vmatprep.subr.mxu0 0.0
        %4130 = vmatpush1.msra.mxu0 0.0
        %4131 = vmatprep.subr.mxu0 0.0
        %4132 = vmatpush1.msra.mxu0 0.0
        %4133 = vmatprep.subr.mxu0 0.0
        %4134 = vmatpush1.msra.mxu0 0.0
        %4135 = vmatprep.subr.mxu0 0.0
        %4136 = vmatpush1.msra.mxu0 0.0
        %4137 = vmatprep.subr.mxu0 0.0
        %4138 = vmatpush1.msra.mxu0 0.0
        %4139 = vmatprep.subr.mxu0 0.0
        %4140 = vmatpush1.msra.mxu0 0.0
        %4141 = vmatprep.subr.mxu0 0.0
        %4142 = vmatpush1.msra.mxu0 0.0
        %4143 = vmatprep.subr.mxu0 0.0
        %4144 = vmatpush1.msra.mxu0 0.0
        %4145 = vmatprep.subr.mxu0 0.0
        %4146 = vmatpush1.msra.mxu0 0.0
        %4147 = vmatprep.subr.mxu0 0.0
        %4148 = vmatpush1.msra.mxu0 %v3673
        %4149 = vmatprep.subr.mxu0 0.0
        %4150 = vmatpush1.msra.mxu0 %v3605
        %4151 = vmatprep.subr.mxu0 0.0
        %4152 = vmatpush2.msra.mxu0 0.0
        %4153 = vmatprep.subr.mxu0 0.0
        %4154 = vmatpush2.msra.mxu0 0.0
        %4155 = vmatprep.subr.mxu0 0.0
        %4156 = vmatpush2.msra.mxu0 0.0
        %4157 = vmatprep.subr.mxu0 0.0
        %4158 = vmatpush2.msra.mxu0 0.0
        %4159 = vmatprep.subr.mxu0 0.0
        %4160 = vmatpush2.msra.mxu0 0.0
        %4161 = vmatprep.subr.mxu0 0.0
        %4162 = vmatpush2.msra.mxu0 0.0
        %4163 = vmatprep.subr.mxu0 0.0
        %4164 = vmatpush2.msra.mxu0 0.0
        %4165 = vmatprep.subr.mxu0 0.0
        %4166 = vmatpush2.msra.mxu0 0.0
        %4167 = vmatprep.subr.mxu0 0.0
        %4168 = vmatpush2.msra.mxu0 0.0
        %4169 = vmatprep.subr.mxu0 0.0
        %4170 = vmatpush2.msra.mxu0 0.0
        %4171 = vmatprep.subr.mxu0 0.0
        %4172 = vmatpush2.msra.mxu0 0.0
        %4173 = vmatprep.subr.mxu0 0.0
        %4174 = vmatpush2.msra.mxu0 0.0
        %4175 = vmatprep.subr.mxu0 0.0
        %4176 = vmatpush2.msra.mxu0 0.0
        %4177 = vmatprep.subr.mxu0 0.0
        %4178 = vmatpush2.msra.mxu0 0.0
        %4179 = vmatprep.subr.mxu0 0.0
        %4180 = vmatpush2.msra.mxu0 0.0
        %4181 = vmatprep.subr.mxu0 0.0
        %4182 = vmatpush2.msra.mxu0 0.0
        %4183 = vmatprep.mubr.f32.mxu0 0.0
        %4184 = vmatmul.mubr.f32.gmra.mxu0 %v4114
        %v4185 = vpop.f32.mrf.mxu0
        %v4186 = vadd.f32 0.0, %v4185
        %v4187 = vpop.f32.mrf.mxu0
        %4188 = vmatprep.mubr.f32.mxu0 0.0
        %4189 = vmatmul.mubr.f32.gmra.mxu0 %v4117
        %v4190 = vpop.f32.mrf.mxu0
        %v4191 = vadd.f32 0.0, %v4190
        %v4192 = vpop.f32.mrf.mxu0
        %4193 = vdwg.mxu0
        %v4195 = vsel %vm1766, %v4102, 0
        %v4198 = vsel %vm1766, %v4104, 0
        %4200 = vmatprep.subr.mxu0 0.0
        %4201 = vmatpush1.msra.mxu0 0.0
        %4202 = vmatprep.subr.mxu0 0.0
        %4203 = vmatpush1.msra.mxu0 0.0
        %4204 = vmatprep.subr.mxu0 0.0
        %4205 = vmatpush1.msra.mxu0 0.0
        %4206 = vmatprep.subr.mxu0 0.0
        %4207 = vmatpush1.msra.mxu0 0.0
        %4208 = vmatprep.subr.mxu0 0.0
        %4209 = vmatpush1.msra.mxu0 0.0
        %4210 = vmatprep.subr.mxu0 0.0
        %4211 = vmatpush1.msra.mxu0 0.0
        %4212 = vmatprep.subr.mxu0 0.0
        %4213 = vmatpush1.msra.mxu0 0.0
        %4214 = vmatprep.subr.mxu0 0.0
        %4215 = vmatpush1.msra.mxu0 0.0
        %4216 = vmatprep.subr.mxu0 0.0
        %4217 = vmatpush1.msra.mxu0 0.0
        %4218 = vmatprep.subr.mxu0 0.0
        %4219 = vmatpush1.msra.mxu0 0.0
        %4220 = vmatprep.subr.mxu0 0.0
        %4221 = vmatpush1.msra.mxu0 0.0
        %4222 = vmatprep.subr.mxu0 0.0
        %4223 = vmatpush1.msra.mxu0 0.0
        %4224 = vmatprep.subr.mxu0 0.0
        %4225 = vmatpush1.msra.mxu0 0.0
        %4226 = vmatprep.subr.mxu0 0.0
        %4227 = vmatpush1.msra.mxu0 0.0
        %4228 = vmatprep.subr.mxu0 0.0
        %4229 = vmatpush1.msra.mxu0 %v3674
        %4230 = vmatprep.subr.mxu0 0.0
        %4231 = vmatpush1.msra.mxu0 %v3606
        %4232 = vmatprep.subr.mxu0 0.0
        %4233 = vmatpush2.msra.mxu0 0.0
        %4234 = vmatprep.subr.mxu0 0.0
        %4235 = vmatpush2.msra.mxu0 0.0
        %4236 = vmatprep.subr.mxu0 0.0
        %4237 = vmatpush2.msra.mxu0 0.0
        %4238 = vmatprep.subr.mxu0 0.0
        %4239 = vmatpush2.msra.mxu0 0.0
        %4240 = vmatprep.subr.mxu0 0.0
        %4241 = vmatpush2.msra.mxu0 0.0
        %4242 = vmatprep.subr.mxu0 0.0
        %4243 = vmatpush2.msra.mxu0 0.0
        %4244 = vmatprep.subr.mxu0 0.0
        %4245 = vmatpush2.msra.mxu0 0.0
        %4246 = vmatprep.subr.mxu0 0.0
        %4247 = vmatpush2.msra.mxu0 0.0
        %4248 = vmatprep.subr.mxu0 0.0
        %4249 = vmatpush2.msra.mxu0 0.0
        %4250 = vmatprep.subr.mxu0 0.0
        %4251 = vmatpush2.msra.mxu0 0.0
        %4252 = vmatprep.subr.mxu0 0.0
        %4253 = vmatpush2.msra.mxu0 0.0
        %4254 = vmatprep.subr.mxu0 0.0
        %4255 = vmatpush2.msra.mxu0 0.0
        %4256 = vmatprep.subr.mxu0 0.0
        %4257 = vmatpush2.msra.mxu0 0.0
        %4258 = vmatprep.subr.mxu0 0.0
        %4259 = vmatpush2.msra.mxu0 0.0
        %4260 = vmatprep.subr.mxu0 0.0
        %4261 = vmatpush2.msra.mxu0 0.0
        %4262 = vmatprep.subr.mxu0 0.0
        %4263 = vmatpush2.msra.mxu0 0.0
        %4264 = vmatprep.mubr.f32.mxu0 0.0
        %4265 = vmatmul.mubr.f32.gmra.mxu0 %v4195
        %v4266 = vpop.f32.mrf.mxu0
        %v4267 = vadd.f32 0.0, %v4266
        %v4268 = vpop.f32.mrf.mxu0
        %4269 = vmatprep.mubr.f32.mxu0 0.0
        %4270 = vmatmul.mubr.f32.gmra.mxu0 %v4198
        %v4271 = vpop.f32.mrf.mxu0
        %v4272 = vadd.f32 0.0, %v4271
        %v4273 = vpop.f32.mrf.mxu0
        %4274 = vdwg.mxu0
        %v4276 = vsel %vm1766, %v4106, 0
        %v4279 = vsel %vm1766, %v4108, 0
        %4281 = vmatprep.subr.mxu0 0.0
        %4282 = vmatpush1.msra.mxu0 0.0
        %4283 = vmatprep.subr.mxu0 0.0
        %4284 = vmatpush1.msra.mxu0 0.0
        %4285 = vmatprep.subr.mxu0 0.0
        %4286 = vmatpush1.msra.mxu0 0.0
        %4287 = vmatprep.subr.mxu0 0.0
        %4288 = vmatpush1.msra.mxu0 0.0
        %4289 = vmatprep.subr.mxu0 0.0
        %4290 = vmatpush1.msra.mxu0 0.0
        %4291 = vmatprep.subr.mxu0 0.0
        %4292 = vmatpush1.msra.mxu0 0.0
        %4293 = vmatprep.subr.mxu0 0.0
        %4294 = vmatpush1.msra.mxu0 0.0
        %4295 = vmatprep.subr.mxu0 0.0
        %4296 = vmatpush1.msra.mxu0 0.0
        %4297 = vmatprep.subr.mxu0 0.0
        %4298 = vmatpush1.msra.mxu0 0.0
        %4299 = vmatprep.subr.mxu0 0.0
        %4300 = vmatpush1.msra.mxu0 0.0
        %4301 = vmatprep.subr.mxu0 0.0
        %4302 = vmatpush1.msra.mxu0 0.0
        %4303 = vmatprep.subr.mxu0 0.0
        %4304 = vmatpush1.msra.mxu0 0.0
        %4305 = vmatprep.subr.mxu0 0.0
        %4306 = vmatpush1.msra.mxu0 0.0
        %4307 = vmatprep.subr.mxu0 0.0
        %4308 = vmatpush1.msra.mxu0 0.0
        %4309 = vmatprep.subr.mxu0 0.0
        %4310 = vmatpush1.msra.mxu0 %v3675
        %4311 = vmatprep.subr.mxu0 0.0
        %4312 = vmatpush1.msra.mxu0 %v3607
        %4313 = vmatprep.subr.mxu0 0.0
        %4314 = vmatpush2.msra.mxu0 0.0
        %4315 = vmatprep.subr.mxu0 0.0
        %4316 = vmatpush2.msra.mxu0 0.0
        %4317 = vmatprep.subr.mxu0 0.0
        %4318 = vmatpush2.msra.mxu0 0.0
        %4319 = vmatprep.subr.mxu0 0.0
        %4320 = vmatpush2.msra.mxu0 0.0
        %4321 = vmatprep.subr.mxu0 0.0
        %4322 = vmatpush2.msra.mxu0 0.0
        %4323 = vmatprep.subr.mxu0 0.0
        %4324 = vmatpush2.msra.mxu0 0.0
        %4325 = vmatprep.subr.mxu0 0.0
        %4326 = vmatpush2.msra.mxu0 0.0
        %4327 = vmatprep.subr.mxu0 0.0
        %4328 = vmatpush2.msra.mxu0 0.0
        %4329 = vmatprep.subr.mxu0 0.0
        %4330 = vmatpush2.msra.mxu0 0.0
        %4331 = vmatprep.subr.mxu0 0.0
        %4332 = vmatpush2.msra.mxu0 0.0
        %4333 = vmatprep.subr.mxu0 0.0
        %4334 = vmatpush2.msra.mxu0 0.0
        %4335 = vmatprep.subr.mxu0 0.0
        %4336 = vmatpush2.msra.mxu0 0.0
        %4337 = vmatprep.subr.mxu0 0.0
        %4338 = vmatpush2.msra.mxu0 0.0
        %4339 = vmatprep.subr.mxu0 0.0
        %4340 = vmatpush2.msra.mxu0 0.0
        %4341 = vmatprep.subr.mxu0 0.0
        %4342 = vmatpush2.msra.mxu0 0.0
        %4343 = vmatprep.subr.mxu0 0.0
        %4344 = vmatpush2.msra.mxu0 0.0
        %4345 = vmatprep.mubr.f32.mxu0 0.0
        %4346 = vmatmul.mubr.f32.gmra.mxu0 %v4276
        %v4347 = vpop.f32.mrf.mxu0
        %v4348 = vadd.f32 0.0, %v4347
        %v4349 = vpop.f32.mrf.mxu0
        %4350 = vmatprep.mubr.f32.mxu0 0.0
        %4351 = vmatmul.mubr.f32.gmra.mxu0 %v4279
        %v4352 = vpop.f32.mrf.mxu0
        %v4353 = vadd.f32 0.0, %v4352
        %v4354 = vpop.f32.mrf.mxu0
        %4355 = vdwg.mxu0
        %v4357 = vsel %vm1766, %v4110, 0
        %v4360 = vsel %vm1766, %v4112, 0
        %4362 = vmatprep.subr.mxu0 0.0
        %4363 = vmatpush1.msra.mxu0 0.0
        %4364 = vmatprep.subr.mxu0 0.0
        %4365 = vmatpush1.msra.mxu0 0.0
        %4366 = vmatprep.subr.mxu0 0.0
        %4367 = vmatpush1.msra.mxu0 0.0
        %4368 = vmatprep.subr.mxu0 0.0
        %4369 = vmatpush1.msra.mxu0 0.0
        %4370 = vmatprep.subr.mxu0 0.0
        %4371 = vmatpush1.msra.mxu0 0.0
        %4372 = vmatprep.subr.mxu0 0.0
        %4373 = vmatpush1.msra.mxu0 0.0
        %4374 = vmatprep.subr.mxu0 0.0
        %4375 = vmatpush1.msra.mxu0 0.0
        %4376 = vmatprep.subr.mxu0 0.0
        %4377 = vmatpush1.msra.mxu0 0.0
        %4378 = vmatprep.subr.mxu0 0.0
        %4379 = vmatpush1.msra.mxu0 0.0
        %4380 = vmatprep.subr.mxu0 0.0
        %4381 = vmatpush1.msra.mxu0 0.0
        %4382 = vmatprep.subr.mxu0 0.0
        %4383 = vmatpush1.msra.mxu0 0.0
        %4384 = vmatprep.subr.mxu0 0.0
        %4385 = vmatpush1.msra.mxu0 0.0
        %4386 = vmatprep.subr.mxu0 0.0
        %4387 = vmatpush1.msra.mxu0 0.0
        %4388 = vmatprep.subr.mxu0 0.0
        %4389 = vmatpush1.msra.mxu0 0.0
        %4390 = vmatprep.subr.mxu0 0.0
        %4391 = vmatpush1.msra.mxu0 %v3676
        %4392 = vmatprep.subr.mxu0 0.0
        %4393 = vmatpush1.msra.mxu0 %v3608
        %4394 = vmatprep.subr.mxu0 0.0
        %4395 = vmatpush2.msra.mxu0 0.0
        %4396 = vmatprep.subr.mxu0 0.0
        %4397 = vmatpush2.msra.mxu0 0.0
        %4398 = vmatprep.subr.mxu0 0.0
        %4399 = vmatpush2.msra.mxu0 0.0
        %4400 = vmatprep.subr.mxu0 0.0
        %4401 = vmatpush2.msra.mxu0 0.0
        %4402 = vmatprep.subr.mxu0 0.0
        %4403 = vmatpush2.msra.mxu0 0.0
        %4404 = vmatprep.subr.mxu0 0.0
        %4405 = vmatpush2.msra.mxu0 0.0
        %4406 = vmatprep.subr.mxu0 0.0
        %4407 = vmatpush2.msra.mxu0 0.0
        %4408 = vmatprep.subr.mxu0 0.0
        %4409 = vmatpush2.msra.mxu0 0.0
        %4410 = vmatprep.subr.mxu0 0.0
        %4411 = vmatpush2.msra.mxu0 0.0
        %4412 = vmatprep.subr.mxu0 0.0
        %4413 = vmatpush2.msra.mxu0 0.0
        %4414 = vmatprep.subr.mxu0 0.0
        %4415 = vmatpush2.msra.mxu0 0.0
        %4416 = vmatprep.subr.mxu0 0.0
        %4417 = vmatpush2.msra.mxu0 0.0
        %4418 = vmatprep.subr.mxu0 0.0
        %4419 = vmatpush2.msra.mxu0 0.0
        %4420 = vmatprep.subr.mxu0 0.0
        %4421 = vmatpush2.msra.mxu0 0.0
        %4422 = vmatprep.subr.mxu0 0.0
        %4423 = vmatpush2.msra.mxu0 0.0
        %4424 = vmatprep.subr.mxu0 0.0
        %4425 = vmatpush2.msra.mxu0 0.0
        %4426 = vmatprep.mubr.f32.mxu0 0.0
        %4427 = vmatmul.mubr.f32.gmra.mxu0 %v4357
        %v4428 = vpop.f32.mrf.mxu0
        %v4429 = vadd.f32 0.0, %v4428
        %v4430 = vpop.f32.mrf.mxu0
        %4431 = vmatprep.mubr.f32.mxu0 0.0
        %4432 = vmatmul.mubr.f32.gmra.mxu0 %v4360
        %v4433 = vpop.f32.mrf.mxu0
        %v4434 = vadd.f32 0.0, %v4433
        %v4435 = vpop.f32.mrf.mxu0
        %4436 = vdwg.mxu0
        %v4437 = vcombine.low %v4186, %v4348
        %v4438 = vcombine.high %v4186, %v4348
        %v4440 = vunpack.c.l.s4 1983009808
        %v4441 = vunpack.c.0.s8 %v4440
        %v4442 = vlaneseq
        %v4443 = vshrl.u32 %v4442, 7
        %v4444 = vsub.s32 %v4441, %v4443
        %v4445 = vrot.slane %v4437, %v4444
        %v4447 = vunpack.c.l.s4 1983009808
        %v4448 = vunpack.c.0.s8 %v4447
        %v4449 = vlaneseq
        %v4450 = vshrl.u32 %v4449, 7
        %v4451 = vsub.s32 %v4448, %v4450
        %v4452 = vrot.slane %v4438, %v4451
        %v4453 = vcombine.low %v4267, %v4429
        %v4454 = vcombine.high %v4267, %v4429
        %v4456 = vunpack.c.l.s4 1983009808
        %v4457 = vunpack.c.0.s8 %v4456
        %v4458 = vlaneseq
        %v4459 = vshrl.u32 %v4458, 7
        %v4460 = vsub.s32 %v4457, %v4459
        %v4461 = vrot.slane %v4453, %v4460
        %v4463 = vunpack.c.l.s4 1983009808
        %v4464 = vunpack.c.0.s8 %v4463
        %v4465 = vlaneseq
        %v4466 = vshrl.u32 %v4465, 7
        %v4467 = vsub.s32 %v4464, %v4466
        %v4468 = vrot.slane %v4454, %v4467
        %v4469 = vcombine.low %v4445, %v4461
        %v4470 = vcombine.high %v4445, %v4461
        %v4472 = vunpack.c.l.s4 1934713408
        %v4473 = vunpack.c.0.s8 %v4472
        %v4474 = vlaneseq
        %v4475 = vshrl.u32 %v4474, 7
        %v4476 = vsub.s32 %v4473, %v4475
        %v4477 = vrot.slane %v4469, %v4476
        %v4479 = vunpack.c.l.s4 1934713408
        %v4480 = vunpack.c.0.s8 %v4479
        %v4481 = vlaneseq
        %v4482 = vshrl.u32 %v4481, 7
        %v4483 = vsub.s32 %v4480, %v4482
        %v4484 = vrot.slane %v4470, %v4483
        %v4485 = vcombine.low %v4452, %v4468
        %v4486 = vcombine.high %v4452, %v4468
        %v4488 = vunpack.c.l.s4 1934713408
        %v4489 = vunpack.c.0.s8 %v4488
        %v4490 = vlaneseq
        %v4491 = vshrl.u32 %v4490, 7
        %v4492 = vsub.s32 %v4489, %v4491
        %v4493 = vrot.slane %v4485, %v4492
        %v4495 = vunpack.c.l.s4 1934713408
        %v4496 = vunpack.c.0.s8 %v4495
        %v4497 = vlaneseq
        %v4498 = vshrl.u32 %v4497, 7
        %v4499 = vsub.s32 %v4496, %v4498
        %v4500 = vrot.slane %v4486, %v4499
        %v4501 = vcombine.high %v4477, 0.0
        %v4502 = vcombine.high %v4484, 0.0
        %v4503 = vcombine.high %v4493, 0.0
        %v4504 = vcombine.high %v4500, 0.0
        %v4505 = vcombine.low %v4191, %v4353
        %v4506 = vcombine.high %v4191, %v4353
        %v4508 = vunpack.c.l.s4 1983009808
        %v4509 = vunpack.c.0.s8 %v4508
        %v4510 = vlaneseq
        %v4511 = vshrl.u32 %v4510, 7
        %v4512 = vsub.s32 %v4509, %v4511
        %v4513 = vrot.slane %v4505, %v4512
        %v4515 = vunpack.c.l.s4 1983009808
        %v4516 = vunpack.c.0.s8 %v4515
        %v4517 = vlaneseq
        %v4518 = vshrl.u32 %v4517, 7
        %v4519 = vsub.s32 %v4516, %v4518
        %v4520 = vrot.slane %v4506, %v4519
        %v4521 = vcombine.low %v4272, %v4434
        %v4522 = vcombine.high %v4272, %v4434
        %v4524 = vunpack.c.l.s4 1983009808
        %v4525 = vunpack.c.0.s8 %v4524
        %v4526 = vlaneseq
        %v4527 = vshrl.u32 %v4526, 7
        %v4528 = vsub.s32 %v4525, %v4527
        %v4529 = vrot.slane %v4521, %v4528
        %v4531 = vunpack.c.l.s4 1983009808
        %v4532 = vunpack.c.0.s8 %v4531
        %v4533 = vlaneseq
        %v4534 = vshrl.u32 %v4533, 7
        %v4535 = vsub.s32 %v4532, %v4534
        %v4536 = vrot.slane %v4522, %v4535
        %v4537 = vcombine.low %v4513, %v4529
        %v4538 = vcombine.high %v4513, %v4529
        %v4540 = vunpack.c.l.s4 1934713408
        %v4541 = vunpack.c.0.s8 %v4540
        %v4542 = vlaneseq
        %v4543 = vshrl.u32 %v4542, 7
        %v4544 = vsub.s32 %v4541, %v4543
        %v4545 = vrot.slane %v4537, %v4544
        %v4547 = vunpack.c.l.s4 1934713408
        %v4548 = vunpack.c.0.s8 %v4547
        %v4549 = vlaneseq
        %v4550 = vshrl.u32 %v4549, 7
        %v4551 = vsub.s32 %v4548, %v4550
        %v4552 = vrot.slane %v4538, %v4551
        %v4553 = vcombine.low %v4520, %v4536
        %v4554 = vcombine.high %v4520, %v4536
        %v4556 = vunpack.c.l.s4 1934713408
        %v4557 = vunpack.c.0.s8 %v4556
        %v4558 = vlaneseq
        %v4559 = vshrl.u32 %v4558, 7
        %v4560 = vsub.s32 %v4557, %v4559
        %v4561 = vrot.slane %v4553, %v4560
        %v4563 = vunpack.c.l.s4 1934713408
        %v4564 = vunpack.c.0.s8 %v4563
        %v4565 = vlaneseq
        %v4566 = vshrl.u32 %v4565, 7
        %v4567 = vsub.s32 %v4564, %v4566
        %v4568 = vrot.slane %v4554, %v4567
        %v4569 = vcombine.high %v4545, 0.0
        %v4570 = vcombine.high %v4552, 0.0
        %v4571 = vcombine.high %v4561, 0.0
        %v4572 = vcombine.high %v4568, 0.0
        %v4573 = vcombine.low %v4477, %v4484
        %v4575 = vunpack.c.l.s4 1983009808
        %v4576 = vunpack.c.0.s8 %v4575
        %v4577 = vlaneseq
        %v4578 = vshrl.u32 %v4577, 7
        %v4579 = vsub.s32 %v4576, %v4578
        %v4580 = vrot.slane %v4573, %v4579
        %v4581 = vcombine.low %v4501, %v4502
        %v4583 = vunpack.c.l.s4 1983009808
        %v4584 = vunpack.c.0.s8 %v4583
        %v4585 = vlaneseq
        %v4586 = vshrl.u32 %v4585, 7
        %v4587 = vsub.s32 %v4584, %v4586
        %v4588 = vrot.slane %v4581, %v4587
        %v4589 = vcombine.low %v4493, %v4500
        %v4591 = vunpack.c.l.s4 1983009808
        %v4592 = vunpack.c.0.s8 %v4591
        %v4593 = vlaneseq
        %v4594 = vshrl.u32 %v4593, 7
        %v4595 = vsub.s32 %v4592, %v4594
        %v4596 = vrot.slane %v4589, %v4595
        %v4597 = vcombine.low %v4503, %v4504
        %v4599 = vunpack.c.l.s4 1983009808
        %v4600 = vunpack.c.0.s8 %v4599
        %v4601 = vlaneseq
        %v4602 = vshrl.u32 %v4601, 7
        %v4603 = vsub.s32 %v4600, %v4602
        %v4604 = vrot.slane %v4597, %v4603
        %v4605 = vcombine.low %v4580, %v4588
        %v4606 = vcombine.high %v4580, %v4588
        %v4608 = vunpack.c.l.s4 1934713408
        %v4609 = vunpack.c.0.s8 %v4608
        %v4610 = vlaneseq
        %v4611 = vshrl.u32 %v4610, 7
        %v4612 = vsub.s32 %v4609, %v4611
        %v4613 = vrot.slane %v4605, %v4612
        %v4615 = vunpack.c.l.s4 1934713408
        %v4616 = vunpack.c.0.s8 %v4615
        %v4617 = vlaneseq
        %v4618 = vshrl.u32 %v4617, 7
        %v4619 = vsub.s32 %v4616, %v4618
        %v4620 = vrot.slane %v4606, %v4619
        %v4621 = vcombine.low %v4596, %v4604
        %v4622 = vcombine.high %v4596, %v4604
        %v4624 = vunpack.c.l.s4 1934713408
        %v4625 = vunpack.c.0.s8 %v4624
        %v4626 = vlaneseq
        %v4627 = vshrl.u32 %v4626, 7
        %v4628 = vsub.s32 %v4625, %v4627
        %v4629 = vrot.slane %v4621, %v4628
        %v4631 = vunpack.c.l.s4 1934713408
        %v4632 = vunpack.c.0.s8 %v4631
        %v4633 = vlaneseq
        %v4634 = vshrl.u32 %v4633, 7
        %v4635 = vsub.s32 %v4632, %v4634
        %v4636 = vrot.slane %v4622, %v4635
        %v4637 = vcombine.low %v4613, %v4629
        %v4638 = vcombine.high %v4613, %v4629
        %v4639 = vcombine.low %v4620, %v4636
        %v4640 = vcombine.high %v4620, %v4636
        %v4641 = vcombine.low %v4545, %v4552
        %v4643 = vunpack.c.l.s4 1983009808
        %v4644 = vunpack.c.0.s8 %v4643
        %v4645 = vlaneseq
        %v4646 = vshrl.u32 %v4645, 7
        %v4647 = vsub.s32 %v4644, %v4646
        %v4648 = vrot.slane %v4641, %v4647
        %v4649 = vcombine.low %v4569, %v4570
        %v4651 = vunpack.c.l.s4 1983009808
        %v4652 = vunpack.c.0.s8 %v4651
        %v4653 = vlaneseq
        %v4654 = vshrl.u32 %v4653, 7
        %v4655 = vsub.s32 %v4652, %v4654
        %v4656 = vrot.slane %v4649, %v4655
        %v4657 = vcombine.low %v4561, %v4568
        %v4659 = vunpack.c.l.s4 1983009808
        %v4660 = vunpack.c.0.s8 %v4659
        %v4661 = vlaneseq
        %v4662 = vshrl.u32 %v4661, 7
        %v4663 = vsub.s32 %v4660, %v4662
        %v4664 = vrot.slane %v4657, %v4663
        %v4665 = vcombine.low %v4571, %v4572
        %v4667 = vunpack.c.l.s4 1983009808
        %v4668 = vunpack.c.0.s8 %v4667
        %v4669 = vlaneseq
        %v4670 = vshrl.u32 %v4669, 7
        %v4671 = vsub.s32 %v4668, %v4670
        %v4672 = vrot.slane %v4665, %v4671
        %v4673 = vcombine.low %v4648, %v4656
        %v4674 = vcombine.high %v4648, %v4656
        %v4676 = vunpack.c.l.s4 1934713408
        %v4677 = vunpack.c.0.s8 %v4676
        %v4678 = vlaneseq
        %v4679 = vshrl.u32 %v4678, 7
        %v4680 = vsub.s32 %v4677, %v4679
        %v4681 = vrot.slane %v4673, %v4680
        %v4683 = vunpack.c.l.s4 1934713408
        %v4684 = vunpack.c.0.s8 %v4683
        %v4685 = vlaneseq
        %v4686 = vshrl.u32 %v4685, 7
        %v4687 = vsub.s32 %v4684, %v4686
        %v4688 = vrot.slane %v4674, %v4687
        %v4689 = vcombine.low %v4664, %v4672
        %v4690 = vcombine.high %v4664, %v4672
        %v4692 = vunpack.c.l.s4 1934713408
        %v4693 = vunpack.c.0.s8 %v4692
        %v4694 = vlaneseq
        %v4695 = vshrl.u32 %v4694, 7
        %v4696 = vsub.s32 %v4693, %v4695
        %v4697 = vrot.slane %v4689, %v4696
        %v4699 = vunpack.c.l.s4 1934713408
        %v4700 = vunpack.c.0.s8 %v4699
        %v4701 = vlaneseq
        %v4702 = vshrl.u32 %v4701, 7
        %v4703 = vsub.s32 %v4700, %v4702
        %v4704 = vrot.slane %v4690, %v4703
        %v4705 = vcombine.low %v4681, %v4697
        %v4706 = vcombine.high %v4681, %v4697
        %v4707 = vcombine.low %v4688, %v4704
        %v4708 = vcombine.high %v4688, %v4704
        %4711 = vrot.lane.b32.xlu0 %v4638, 8
        %v4712 = vpop.permute.xlu0 %4711
        %4713 = vrot.lane.b32.xlu0 %v4706, 8
        %v4714 = vpop.permute.xlu0 %4713
        %4719 = vrot.lane.b32.xlu0 %v4639, 16
        %v4720 = vpop.permute.xlu0 %4719
        %4721 = vrot.lane.b32.xlu0 %v4707, 16
        %v4722 = vpop.permute.xlu0 %4721
        %4727 = vrot.lane.b32.xlu0 %v4640, 24
        %v4728 = vpop.permute.xlu0 %4727
        %4729 = vrot.lane.b32.xlu0 %v4708, 24
        %v4730 = vpop.permute.xlu0 %4729
        %v4733 = vsel %vm1417, %v4637, %v4712
        %v4734 = vsel %vm1417, %v4705, %v4714
        %v4735 = vsel %vm1766, %v4733, %v4720
        %v4736 = vsel %vm1766, %v4734, %v4722
        %v4737 = vsel %vm2479, %v4735, %v4728
        %v4738 = vsel %vm2479, %v4736, %v4730
        %v4740 = vsel %vm370, %v4737, 0
        %v4743 = vsel %vm370, %v4738, 0
        %4745 = vmatprep.subr.mxu0 0.0
        %4746 = vmatpush1.msra.mxu0 0.0
        %4747 = vmatprep.subr.mxu0 0.0
        %4748 = vmatpush1.msra.mxu0 0.0
        %4749 = vmatprep.subr.mxu0 0.0
        %4750 = vmatpush1.msra.mxu0 0.0
        %4751 = vmatprep.subr.mxu0 0.0
        %4752 = vmatpush1.msra.mxu0 0.0
        %4753 = vmatprep.subr.mxu0 0.0
        %4754 = vmatpush1.msra.mxu0 0.0
        %4755 = vmatprep.subr.mxu0 0.0
        %4756 = vmatpush1.msra.mxu0 0.0
        %4757 = vmatprep.subr.mxu0 0.0
        %4758 = vmatpush1.msra.mxu0 0.0
        %4759 = vmatprep.subr.mxu0 0.0
        %4760 = vmatpush1.msra.mxu0 0.0
        %4761 = vmatprep.subr.mxu0 0.0
        %4762 = vmatpush1.msra.mxu0 0.0
        %4763 = vmatprep.subr.mxu0 0.0
        %4764 = vmatpush1.msra.mxu0 0.0
        %4765 = vmatprep.subr.mxu0 0.0
        %4766 = vmatpush1.msra.mxu0 0.0
        %4767 = vmatprep.subr.mxu0 0.0
        %4768 = vmatpush1.msra.mxu0 0.0
        %4769 = vmatprep.subr.mxu0 0.0
        %4770 = vmatpush1.msra.mxu0 %v2623
        %4771 = vmatprep.subr.mxu0 0.0
        %4772 = vmatpush1.msra.mxu0 %v2622
        %4773 = vmatprep.subr.mxu0 0.0
        %4774 = vmatpush1.msra.mxu0 %v2621
        %4775 = vmatprep.subr.mxu0 0.0
        %4776 = vmatpush1.msra.mxu0 %v2620
        %4777 = vmatprep.subr.mxu0 0.0
        %4778 = vmatpush2.msra.mxu0 0.0
        %4779 = vmatprep.subr.mxu0 0.0
        %4780 = vmatpush2.msra.mxu0 0.0
        %4781 = vmatprep.subr.mxu0 0.0
        %4782 = vmatpush2.msra.mxu0 0.0
        %4783 = vmatprep.subr.mxu0 0.0
        %4784 = vmatpush2.msra.mxu0 0.0
        %4785 = vmatprep.subr.mxu0 0.0
        %4786 = vmatpush2.msra.mxu0 0.0
        %4787 = vmatprep.subr.mxu0 0.0
        %4788 = vmatpush2.msra.mxu0 0.0
        %4789 = vmatprep.subr.mxu0 0.0
        %4790 = vmatpush2.msra.mxu0 0.0
        %4791 = vmatprep.subr.mxu0 0.0
        %4792 = vmatpush2.msra.mxu0 0.0
        %4793 = vmatprep.subr.mxu0 0.0
        %4794 = vmatpush2.msra.mxu0 0.0
        %4795 = vmatprep.subr.mxu0 0.0
        %4796 = vmatpush2.msra.mxu0 0.0
        %4797 = vmatprep.subr.mxu0 0.0
        %4798 = vmatpush2.msra.mxu0 0.0
        %4799 = vmatprep.subr.mxu0 0.0
        %4800 = vmatpush2.msra.mxu0 0.0
        %4801 = vmatprep.subr.mxu0 0.0
        %4802 = vmatpush2.msra.mxu0 0.0
        %4803 = vmatprep.subr.mxu0 0.0
        %4804 = vmatpush2.msra.mxu0 0.0
        %4805 = vmatprep.subr.mxu0 0.0
        %4806 = vmatpush2.msra.mxu0 0.0
        %4807 = vmatprep.subr.mxu0 0.0
        %4808 = vmatpush2.msra.mxu0 0.0
        %4809 = vmatprep.mubr.f32.mxu0 0.0
        %4810 = vmatmul.mubr.f32.gmra.mxu0 %v4740
        %v4811 = vpop.f32.mrf.mxu0
        %v4812 = vadd.f32 0.0, %v4811
        %v4813 = vpop.f32.mrf.mxu0
        %4814 = vmatprep.mubr.f32.mxu0 0.0
        %4815 = vmatmul.mubr.f32.gmra.mxu0 %v4743
        %v4816 = vpop.f32.mrf.mxu0
        %v4817 = vadd.f32 0.0, %v4816
        %v4818 = vpop.f32.mrf.mxu0
        %4819 = vdwg.mxu0
        %v4820 = vadd.f32 %v2608, %v4812
        %v4821 = vadd.f32 %v2609, %v4817
        %v4822 = vlaneseq
        %v4823 = vshrl.u32 %v4822, 7
        %v4824 = vsub.s32 0, %v4823
        %v4825 = vrot.slane %v2624, %v4824
        %v4826 = vadd.f32 %v4820, %v4825
        %v4827 = vadd.f32 %v4821, %v4825
        %v4828 = vsel %vm370, %v4826, 0.0
        %4829 = vadd.xlane.f32.xlu0 %v4828
        %v4830 = vpop.xlane.xlu0 %4829
        %v4831 = vsel %vm370, %v4827, 0.0
        %4832 = vadd.xlane.f32.xlu0 %v4831
        %v4833 = vpop.xlane.xlu0 %4832
        %v4834 = vmul.f32 %v4830, %v2577
        %v4835 = vmul.f32 %v4833, %v2577
        %v4836 = vsub.f32 %v4826, %v4834
        %v4837 = vsub.f32 %v4827, %v4835
        %v4838 = vmul.f32 %v4836, %v4836
        %v4839 = vmul.f32 %v4837, %v4837
        %v4840 = vsel %vm370, %v4838, 0.0
        %4841 = vadd.xlane.f32.xlu0 %v4840
        %v4842 = vpop.xlane.xlu0 %4841
        %v4843 = vsel %vm370, %v4839, 0.0
        %4844 = vadd.xlane.f32.xlu0 %v4843
        %v4845 = vpop.xlane.xlu0 %4844
        %v4846 = vmul.f32 %v4842, %v2577
        %v4847 = vmul.f32 %v4845, %v2577
        %v4848 = vadd.f32 %v4846, 1e-05
        %v4849 = vadd.f32 %v4847, 1e-05
        %v4850 = vrsqrt.pop %v4848
        %v4851 = vrsqrt.pop %v4849
        %v4852 = vmul.f32 %v4836, %v4850
        %v4853 = vmul.f32 %v4837, %v4851
        %v4854 = vlaneseq
        %v4855 = vshrl.u32 %v4854, 7
        %v4856 = vsub.s32 0, %v4855
        %v4857 = vrot.slane %v2625, %v4856
        %v4858 = vmul.f32 %v4852, %v4857
        %v4859 = vmul.f32 %v4853, %v4857
        %v4860 = vlaneseq
        %v4861 = vshrl.u32 %v4860, 7
        %v4862 = vsub.s32 0, %v4861
        %v4863 = vrot.slane %v2626, %v4862
        %v4864 = vadd.f32 %v4858, %v4863
        %v4865 = vadd.f32 %v4859, %v4863
        %v4866 = vld [vmem:[%s232 + $0x110] sm:$0xff]
        %v4867 = vld [vmem:[%s232 + $0x118] sm:$0xff]
        %v4868 = vld [vmem:[%s232 + $0x120] sm:$0xff]
        %v4869 = vld [vmem:[%s232 + $0x128] sm:$0xff]
        %v4870 = vld [vmem:[%s232 + $0x170] sm:$0x1]
        %v4871 = vld [vmem:[%s232 + $0x130] sm:$0xff]
        %v4872 = vld [vmem:[%s232 + $0x138] sm:$0xff]
        %v4873 = vld [vmem:[%s232 + $0x140] sm:$0xff]
        %v4874 = vld [vmem:[%s232 + $0x148] sm:$0xff]
        %v4875 = vld [vmem:[%s232 + $0x150] sm:$0xff]
        %v4876 = vld [vmem:[%s232 + $0x158] sm:$0xff]
        %v4877 = vld [vmem:[%s232 + $0x160] sm:$0xff]
        %v4878 = vld [vmem:[%s232 + $0x168] sm:$0xff]
        %v4879 = vld [vmem:[%s232 + $0x178] sm:$0x1]
        %v4880 = vld [vmem:[%s232 + $0x180] sm:$0x1]
        %v4881 = vld [vmem:[%s232 + $0x188] sm:$0x1]
        %v4882 = vlaneseq
        %v4883 = vshrl.u32 %v4882, 7
        %v4884 = vsub.s32 0, %v4883
        %v4885 = vrot.slane %v4870, %v4884
        %v4887 = vsel %vm370, %v4864, 0
        %v4890 = vsel %vm370, %v4865, 0
        %4892 = vmatprep.subr.mxu0 0.0
        %4893 = vmatpush1.msra.mxu0 0.0
        %4894 = vmatprep.subr.mxu0 0.0
        %4895 = vmatpush1.msra.mxu0 0.0
        %4896 = vmatprep.subr.mxu0 0.0
        %4897 = vmatpush1.msra.mxu0 0.0
        %4898 = vmatprep.subr.mxu0 0.0
        %4899 = vmatpush1.msra.mxu0 0.0
        %4900 = vmatprep.subr.mxu0 0.0
        %4901 = vmatpush1.msra.mxu0 0.0
        %4902 = vmatprep.subr.mxu0 0.0
        %4903 = vmatpush1.msra.mxu0 0.0
        %4904 = vmatprep.subr.mxu0 0.0
        %4905 = vmatpush1.msra.mxu0 0.0
        %4906 = vmatprep.subr.mxu0 0.0
        %4907 = vmatpush1.msra.mxu0 0.0
        %4908 = vmatprep.subr.mxu0 0.0
        %4909 = vmatpush1.msra.mxu0 0.0
        %4910 = vmatprep.subr.mxu0 0.0
        %4911 = vmatpush1.msra.mxu0 0.0
        %4912 = vmatprep.subr.mxu0 0.0
        %4913 = vmatpush1.msra.mxu0 0.0
        %4914 = vmatprep.subr.mxu0 0.0
        %4915 = vmatpush1.msra.mxu0 0.0
        %4916 = vmatprep.subr.mxu0 0.0
        %4917 = vmatpush1.msra.mxu0 %v4869
        %4918 = vmatprep.subr.mxu0 0.0
        %4919 = vmatpush1.msra.mxu0 %v4868
        %4920 = vmatprep.subr.mxu0 0.0
        %4921 = vmatpush1.msra.mxu0 %v4867
        %4922 = vmatprep.subr.mxu0 0.0
        %4923 = vmatpush1.msra.mxu0 %v4866
        %4924 = vmatprep.subr.mxu0 0.0
        %4925 = vmatpush2.msra.mxu0 0.0
        %4926 = vmatprep.subr.mxu0 0.0
        %4927 = vmatpush2.msra.mxu0 0.0
        %4928 = vmatprep.subr.mxu0 0.0
        %4929 = vmatpush2.msra.mxu0 0.0
        %4930 = vmatprep.subr.mxu0 0.0
        %4931 = vmatpush2.msra.mxu0 0.0
        %4932 = vmatprep.subr.mxu0 0.0
        %4933 = vmatpush2.msra.mxu0 0.0
        %4934 = vmatprep.subr.mxu0 0.0
        %4935 = vmatpush2.msra.mxu0 0.0
        %4936 = vmatprep.subr.mxu0 0.0
        %4937 = vmatpush2.msra.mxu0 0.0
        %4938 = vmatprep.subr.mxu0 0.0
        %4939 = vmatpush2.msra.mxu0 0.0
        %4940 = vmatprep.subr.mxu0 0.0
        %4941 = vmatpush2.msra.mxu0 0.0
        %4942 = vmatprep.subr.mxu0 0.0
        %4943 = vmatpush2.msra.mxu0 0.0
        %4944 = vmatprep.subr.mxu0 0.0
        %4945 = vmatpush2.msra.mxu0 0.0
        %4946 = vmatprep.subr.mxu0 0.0
        %4947 = vmatpush2.msra.mxu0 0.0
        %4948 = vmatprep.subr.mxu0 0.0
        %4949 = vmatpush2.msra.mxu0 0.0
        %4950 = vmatprep.subr.mxu0 0.0
        %4951 = vmatpush2.msra.mxu0 0.0
        %4952 = vmatprep.subr.mxu0 0.0
        %4953 = vmatpush2.msra.mxu0 0.0
        %4954 = vmatprep.subr.mxu0 0.0
        %4955 = vmatpush2.msra.mxu0 0.0
        %4956 = vmatprep.mubr.f32.mxu0 0.0
        %4957 = vmatmul.mubr.f32.gmra.mxu0 %v4887
        %v4958 = vpop.f32.mrf.mxu0
        %v4959 = vadd.f32 %v4885, %v4958
        %v4960 = vpop.f32.mrf.mxu0
        %4961 = vmatprep.mubr.f32.mxu0 0.0
        %4962 = vmatmul.mubr.f32.gmra.mxu0 %v4890
        %v4963 = vpop.f32.mrf.mxu0
        %v4964 = vadd.f32 %v4885, %v4963
        %v4965 = vpop.f32.mrf.mxu0
        %4966 = vdwg.mxu0
        %v4967 = vmax.f32 %v4959, 0.0
        %v4968 = vmax.f32 %v4964, 0.0
        %vm4969 = vcmask 523264
        %v4971 = vsel %vm4969, %v4967, 0
        %v4974 = vsel %vm4969, %v4968, 0
        %4976 = vmatprep.subr.mxu0 0.0
        %4977 = vmatpush1.msra.mxu0 0.0
        %4978 = vmatprep.subr.mxu0 0.0
        %4979 = vmatpush1.msra.mxu0 0.0
        %4980 = vmatprep.subr.mxu0 0.0
        %4981 = vmatpush1.msra.mxu0 0.0
        %4982 = vmatprep.subr.mxu0 0.0
        %4983 = vmatpush1.msra.mxu0 0.0
        %4984 = vmatprep.subr.mxu0 0.0
        %4985 = vmatpush1.msra.mxu0 0.0
        %4986 = vmatprep.subr.mxu0 0.0
        %4987 = vmatpush1.msra.mxu0 0.0
        %4988 = vmatprep.subr.mxu0 0.0
        %4989 = vmatpush1.msra.mxu0 0.0
        %4990 = vmatprep.subr.mxu0 0.0
        %4991 = vmatpush1.msra.mxu0 0.0
        %4992 = vmatprep.subr.mxu0 0.0
        %4993 = vmatpush1.msra.mxu0 %v4878
        %4994 = vmatprep.subr.mxu0 0.0
        %4995 = vmatpush1.msra.mxu0 %v4877
        %4996 = vmatprep.subr.mxu0 0.0
        %4997 = vmatpush1.msra.mxu0 %v4876
        %4998 = vmatprep.subr.mxu0 0.0
        %4999 = vmatpush1.msra.mxu0 %v4875
        %5000 = vmatprep.subr.mxu0 0.0
        %5001 = vmatpush1.msra.mxu0 %v4874
        %5002 = vmatprep.subr.mxu0 0.0
        %5003 = vmatpush1.msra.mxu0 %v4873
        %5004 = vmatprep.subr.mxu0 0.0
        %5005 = vmatpush1.msra.mxu0 %v4872
        %5006 = vmatprep.subr.mxu0 0.0
        %5007 = vmatpush1.msra.mxu0 %v4871
        %5008 = vmatprep.subr.mxu0 0.0
        %5009 = vmatpush2.msra.mxu0 0.0
        %5010 = vmatprep.subr.mxu0 0.0
        %5011 = vmatpush2.msra.mxu0 0.0
        %5012 = vmatprep.subr.mxu0 0.0
        %5013 = vmatpush2.msra.mxu0 0.0
        %5014 = vmatprep.subr.mxu0 0.0
        %5015 = vmatpush2.msra.mxu0 0.0
        %5016 = vmatprep.subr.mxu0 0.0
        %5017 = vmatpush2.msra.mxu0 0.0
        %5018 = vmatprep.subr.mxu0 0.0
        %5019 = vmatpush2.msra.mxu0 0.0
        %5020 = vmatprep.subr.mxu0 0.0
        %5021 = vmatpush2.msra.mxu0 0.0
        %5022 = vmatprep.subr.mxu0 0.0
        %5023 = vmatpush2.msra.mxu0 0.0
        %5024 = vmatprep.subr.mxu0 0.0
        %5025 = vmatpush2.msra.mxu0 0.0
        %5026 = vmatprep.subr.mxu0 0.0
        %5027 = vmatpush2.msra.mxu0 0.0
        %5028 = vmatprep.subr.mxu0 0.0
        %5029 = vmatpush2.msra.mxu0 0.0
        %5030 = vmatprep.subr.mxu0 0.0
        %5031 = vmatpush2.msra.mxu0 0.0
        %5032 = vmatprep.subr.mxu0 0.0
        %5033 = vmatpush2.msra.mxu0 0.0
        %5034 = vmatprep.subr.mxu0 0.0
        %5035 = vmatpush2.msra.mxu0 0.0
        %5036 = vmatprep.subr.mxu0 0.0
        %5037 = vmatpush2.msra.mxu0 0.0
        %5038 = vmatprep.subr.mxu0 0.0
        %5039 = vmatpush2.msra.mxu0 0.0
        %5040 = vmatprep.mubr.f32.mxu0 0.0
        %5041 = vmatmul.mubr.f32.gmra.mxu0 %v4971
        %v5042 = vpop.f32.mrf.mxu0
        %v5043 = vadd.f32 0.0, %v5042
        %v5044 = vpop.f32.mrf.mxu0
        %5045 = vmatprep.mubr.f32.mxu0 0.0
        %5046 = vmatmul.mubr.f32.gmra.mxu0 %v4974
        %v5047 = vpop.f32.mrf.mxu0
        %v5048 = vadd.f32 0.0, %v5047
        %v5049 = vpop.f32.mrf.mxu0
        %5050 = vdwg.mxu0
        %v5051 = vadd.f32 %v4864, %v5043
        %v5052 = vadd.f32 %v4865, %v5048
        %v5053 = vlaneseq
        %v5054 = vshrl.u32 %v5053, 7
        %v5055 = vsub.s32 0, %v5054
        %v5056 = vrot.slane %v4879, %v5055
        %v5057 = vadd.f32 %v5051, %v5056
        %v5058 = vadd.f32 %v5052, %v5056
        %v5059 = vsel %vm370, %v5057, 0.0
        %5060 = vadd.xlane.f32.xlu0 %v5059
        %v5061 = vpop.xlane.xlu0 %5060
        %v5062 = vsel %vm370, %v5058, 0.0
        %5063 = vadd.xlane.f32.xlu0 %v5062
        %v5064 = vpop.xlane.xlu0 %5063
        %v5065 = vmul.f32 %v5061, %v2577
        %v5066 = vmul.f32 %v5064, %v2577
        %v5067 = vsub.f32 %v5057, %v5065
        %v5068 = vsub.f32 %v5058, %v5066
        %v5069 = vmul.f32 %v5067, %v5067
        %v5070 = vmul.f32 %v5068, %v5068
        %v5071 = vsel %vm370, %v5069, 0.0
        %5072 = vadd.xlane.f32.xlu0 %v5071
        %v5073 = vpop.xlane.xlu0 %5072
        %v5074 = vsel %vm370, %v5070, 0.0
        %5075 = vadd.xlane.f32.xlu0 %v5074
        %v5076 = vpop.xlane.xlu0 %5075
        %v5077 = vmul.f32 %v5073, %v2577
        %v5078 = vmul.f32 %v5076, %v2577
        %v5079 = vadd.f32 %v5077, 1e-05
        %v5080 = vadd.f32 %v5078, 1e-05
        %v5081 = vrsqrt.pop %v5079
        %v5082 = vrsqrt.pop %v5080
        %v5083 = vmul.f32 %v5067, %v5081
        %v5084 = vmul.f32 %v5068, %v5082
        %v5085 = vlaneseq
        %v5086 = vshrl.u32 %v5085, 7
        %v5087 = vsub.s32 0, %v5086
        %v5088 = vrot.slane %v4880, %v5087
        %v5089 = vmul.f32 %v5083, %v5088
        %v5090 = vmul.f32 %v5084, %v5088
        %v5091 = vlaneseq
        %v5092 = vshrl.u32 %v5091, 7
        %v5093 = vsub.s32 0, %v5092
        %v5094 = vrot.slane %v4881, %v5093
        %v5095 = vadd.f32 %v5089, %v5094
        %v5096 = vadd.f32 %v5090, %v5094
        %v5097 = vld [vmem:[%s232 + $0x190] sm:$0xff]
        %v5098 = vld [vmem:[%s232 + $0x198] sm:$0xff]
        %v5099 = vld [vmem:[%s232 + $0x1a0] sm:$0xff]
        %v5100 = vld [vmem:[%s232 + $0x1a8] sm:$0xff]
        %v5101 = vld [vmem:[%s232 + $0x1f0] sm:$0x1]
        %v5102 = vld [vmem:[%s232 + $0x1b0] sm:$0xff]
        %v5103 = vld [vmem:[%s232 + $0x1b8] sm:$0xff]
        %v5104 = vld [vmem:[%s232 + $0x1c0] sm:$0xff]
        %v5105 = vld [vmem:[%s232 + $0x1c8] sm:$0xff]
        %v5106 = vld [vmem:[%s232 + $0x1f8] sm:$0x1]
        %v5107 = vld [vmem:[%s232 + $0x1d0] sm:$0xff]
        %v5108 = vld [vmem:[%s232 + $0x1d8] sm:$0xff]
        %v5109 = vld [vmem:[%s232 + $0x1e0] sm:$0xff]
        %v5110 = vld [vmem:[%s232 + $0x1e8] sm:$0xff]
        %v5111 = vld [vmem:[%s232 + $0x200] sm:$0x1]
        %v5112 = vld [vmem:[%s232 + $0x208] sm:$0x1]
        %v5113 = vld [vmem:[%s232 + $0x210] sm:$0x1]
        %v5114 = vlaneseq
        %v5115 = vshrl.u32 %v5114, 7
        %v5116 = vsub.s32 0, %v5115
        %v5117 = vrot.slane %v5101, %v5116
        %v5119 = vsel %vm370, %v5095, 0
        %v5122 = vsel %vm370, %v5096, 0
        %5124 = vmatprep.subr.mxu0 0.0
        %5125 = vmatpush1.msra.mxu0 0.0
        %5126 = vmatprep.subr.mxu0 0.0
        %5127 = vmatpush1.msra.mxu0 0.0
        %5128 = vmatprep.subr.mxu0 0.0
        %5129 = vmatpush1.msra.mxu0 0.0
        %5130 = vmatprep.subr.mxu0 0.0
        %5131 = vmatpush1.msra.mxu0 0.0
        %5132 = vmatprep.subr.mxu0 0.0
        %5133 = vmatpush1.msra.mxu0 0.0
        %5134 = vmatprep.subr.mxu0 0.0
        %5135 = vmatpush1.msra.mxu0 0.0
        %5136 = vmatprep.subr.mxu0 0.0
        %5137 = vmatpush1.msra.mxu0 0.0
        %5138 = vmatprep.subr.mxu0 0.0
        %5139 = vmatpush1.msra.mxu0 0.0
        %5140 = vmatprep.subr.mxu0 0.0
        %5141 = vmatpush1.msra.mxu0 0.0
        %5142 = vmatprep.subr.mxu0 0.0
        %5143 = vmatpush1.msra.mxu0 0.0
        %5144 = vmatprep.subr.mxu0 0.0
        %5145 = vmatpush1.msra.mxu0 0.0
        %5146 = vmatprep.subr.mxu0 0.0
        %5147 = vmatpush1.msra.mxu0 0.0
        %5148 = vmatprep.subr.mxu0 0.0
        %5149 = vmatpush1.msra.mxu0 %v5100
        %5150 = vmatprep.subr.mxu0 0.0
        %5151 = vmatpush1.msra.mxu0 %v5099
        %5152 = vmatprep.subr.mxu0 0.0
        %5153 = vmatpush1.msra.mxu0 %v5098
        %5154 = vmatprep.subr.mxu0 0.0
        %5155 = vmatpush1.msra.mxu0 %v5097
        %5156 = vmatprep.subr.mxu0 0.0
        %5157 = vmatpush2.msra.mxu0 0.0
        %5158 = vmatprep.subr.mxu0 0.0
        %5159 = vmatpush2.msra.mxu0 0.0
        %5160 = vmatprep.subr.mxu0 0.0
        %5161 = vmatpush2.msra.mxu0 0.0
        %5162 = vmatprep.subr.mxu0 0.0
        %5163 = vmatpush2.msra.mxu0 0.0
        %5164 = vmatprep.subr.mxu0 0.0
        %5165 = vmatpush2.msra.mxu0 0.0
        %5166 = vmatprep.subr.mxu0 0.0
        %5167 = vmatpush2.msra.mxu0 0.0
        %5168 = vmatprep.subr.mxu0 0.0
        %5169 = vmatpush2.msra.mxu0 0.0
        %5170 = vmatprep.subr.mxu0 0.0
        %5171 = vmatpush2.msra.mxu0 0.0
        %5172 = vmatprep.subr.mxu0 0.0
        %5173 = vmatpush2.msra.mxu0 0.0
        %5174 = vmatprep.subr.mxu0 0.0
        %5175 = vmatpush2.msra.mxu0 0.0
        %5176 = vmatprep.subr.mxu0 0.0
        %5177 = vmatpush2.msra.mxu0 0.0
        %5178 = vmatprep.subr.mxu0 0.0
        %5179 = vmatpush2.msra.mxu0 0.0
        %5180 = vmatprep.subr.mxu0 0.0
        %5181 = vmatpush2.msra.mxu0 0.0
        %5182 = vmatprep.subr.mxu0 0.0
        %5183 = vmatpush2.msra.mxu0 0.0
        %5184 = vmatprep.subr.mxu0 0.0
        %5185 = vmatpush2.msra.mxu0 0.0
        %5186 = vmatprep.subr.mxu0 0.0
        %5187 = vmatpush2.msra.mxu0 0.0
        %5188 = vmatprep.mubr.f32.mxu0 0.0
        %5189 = vmatmul.mubr.f32.gmra.mxu0 %v5119
        %v5190 = vpop.f32.mrf.mxu0
        %v5191 = vadd.f32 %v5117, %v5190
        %v5192 = vpop.f32.mrf.mxu0
        %5193 = vmatprep.mubr.f32.mxu0 0.0
        %5194 = vmatmul.mubr.f32.gmra.mxu0 %v5122
        %v5195 = vpop.f32.mrf.mxu0
        %v5196 = vadd.f32 %v5117, %v5195
        %v5197 = vpop.f32.mrf.mxu0
        %5198 = vdwg.mxu0
        %v5199 = vlaneseq
        %v5200 = vshrl.u32 %v5199, 7
        %v5201 = vsub.s32 0, %v5200
        %v5202 = vrot.slane %v5106, %v5201
        %5203 = vmatprep.subr.mxu0 0.0
        %5204 = vmatpush1.msra.mxu0 0.0
        %5205 = vmatprep.subr.mxu0 0.0
        %5206 = vmatpush1.msra.mxu0 0.0
        %5207 = vmatprep.subr.mxu0 0.0
        %5208 = vmatpush1.msra.mxu0 0.0
        %5209 = vmatprep.subr.mxu0 0.0
        %5210 = vmatpush1.msra.mxu0 0.0
        %5211 = vmatprep.subr.mxu0 0.0
        %5212 = vmatpush1.msra.mxu0 0.0
        %5213 = vmatprep.subr.mxu0 0.0
        %5214 = vmatpush1.msra.mxu0 0.0
        %5215 = vmatprep.subr.mxu0 0.0
        %5216 = vmatpush1.msra.mxu0 0.0
        %5217 = vmatprep.subr.mxu0 0.0
        %5218 = vmatpush1.msra.mxu0 0.0
        %5219 = vmatprep.subr.mxu0 0.0
        %5220 = vmatpush1.msra.mxu0 0.0
        %5221 = vmatprep.subr.mxu0 0.0
        %5222 = vmatpush1.msra.mxu0 0.0
        %5223 = vmatprep.subr.mxu0 0.0
        %5224 = vmatpush1.msra.mxu0 0.0
        %5225 = vmatprep.subr.mxu0 0.0
        %5226 = vmatpush1.msra.mxu0 0.0
        %5227 = vmatprep.subr.mxu0 0.0
        %5228 = vmatpush1.msra.mxu0 %v5105
        %5229 = vmatprep.subr.mxu0 0.0
        %5230 = vmatpush1.msra.mxu0 %v5104
        %5231 = vmatprep.subr.mxu0 0.0
        %5232 = vmatpush1.msra.mxu0 %v5103
        %5233 = vmatprep.subr.mxu0 0.0
        %5234 = vmatpush1.msra.mxu0 %v5102
        %5235 = vmatprep.subr.mxu0 0.0
        %5236 = vmatpush2.msra.mxu0 0.0
        %5237 = vmatprep.subr.mxu0 0.0
        %5238 = vmatpush2.msra.mxu0 0.0
        %5239 = vmatprep.subr.mxu0 0.0
        %5240 = vmatpush2.msra.mxu0 0.0
        %5241 = vmatprep.subr.mxu0 0.0
        %5242 = vmatpush2.msra.mxu0 0.0
        %5243 = vmatprep.subr.mxu0 0.0
        %5244 = vmatpush2.msra.mxu0 0.0
        %5245 = vmatprep.subr.mxu0 0.0
        %5246 = vmatpush2.msra.mxu0 0.0
        %5247 = vmatprep.subr.mxu0 0.0
        %5248 = vmatpush2.msra.mxu0 0.0
        %5249 = vmatprep.subr.mxu0 0.0
        %5250 = vmatpush2.msra.mxu0 0.0
        %5251 = vmatprep.subr.mxu0 0.0
        %5252 = vmatpush2.msra.mxu0 0.0
        %5253 = vmatprep.subr.mxu0 0.0
        %5254 = vmatpush2.msra.mxu0 0.0
        %5255 = vmatprep.subr.mxu0 0.0
        %5256 = vmatpush2.msra.mxu0 0.0
        %5257 = vmatprep.subr.mxu0 0.0
        %5258 = vmatpush2.msra.mxu0 0.0
        %5259 = vmatprep.subr.mxu0 0.0
        %5260 = vmatpush2.msra.mxu0 0.0
        %5261 = vmatprep.subr.mxu0 0.0
        %5262 = vmatpush2.msra.mxu0 0.0
        %5263 = vmatprep.subr.mxu0 0.0
        %5264 = vmatpush2.msra.mxu0 0.0
        %5265 = vmatprep.subr.mxu0 0.0
        %5266 = vmatpush2.msra.mxu0 0.0
        %5267 = vmatprep.mubr.f32.mxu0 0.0
        %5268 = vmatmul.mubr.f32.gmra.mxu0 %v457
        %v5269 = vpop.f32.mrf.mxu0
        %v5270 = vadd.f32 %v5202, %v5269
        %v5271 = vpop.f32.mrf.mxu0
        %5272 = vmatprep.mubr.f32.mxu0 0.0
        %5273 = vmatmul.mubr.f32.gmra.mxu0 %v460
        %v5274 = vpop.f32.mrf.mxu0
        %v5275 = vadd.f32 %v5202, %v5274
        %v5276 = vpop.f32.mrf.mxu0
        %5277 = vdwg.mxu0
        %5280 = vrot.lane.b32.xlu0 %v5191, 120
        %v5281 = vpop.permute.xlu0 %5280
        %5282 = vrot.lane.b32.xlu0 %v5196, 120
        %v5283 = vpop.permute.xlu0 %5282
        %5286 = vrot.lane.b32.xlu0 %v5191, 112
        %v5287 = vpop.permute.xlu0 %5286
        %5288 = vrot.lane.b32.xlu0 %v5196, 112
        %v5289 = vpop.permute.xlu0 %5288
        %5292 = vrot.lane.b32.xlu0 %v5191, 104
        %v5293 = vpop.permute.xlu0 %5292
        %5294 = vrot.lane.b32.xlu0 %v5196, 104
        %v5295 = vpop.permute.xlu0 %5294
        %v5298 = vcombine.low %v5191, %v5287
        %v5299 = vcombine.high %v5191, %v5287
        %v5301 = vunpack.c.l.s4 1983009808
        %v5302 = vunpack.c.0.s8 %v5301
        %v5303 = vlaneseq
        %v5304 = vshrl.u32 %v5303, 7
        %v5305 = vsub.s32 %v5302, %v5304
        %v5306 = vrot.slane %v5298, %v5305
        %v5308 = vunpack.c.l.s4 1983009808
        %v5309 = vunpack.c.0.s8 %v5308
        %v5310 = vlaneseq
        %v5311 = vshrl.u32 %v5310, 7
        %v5312 = vsub.s32 %v5309, %v5311
        %v5313 = vrot.slane %v5299, %v5312
        %v5314 = vcombine.low %v5281, %v5293
        %v5315 = vcombine.high %v5281, %v5293
        %v5317 = vunpack.c.l.s4 1983009808
        %v5318 = vunpack.c.0.s8 %v5317
        %v5319 = vlaneseq
        %v5320 = vshrl.u32 %v5319, 7
        %v5321 = vsub.s32 %v5318, %v5320
        %v5322 = vrot.slane %v5314, %v5321
        %v5324 = vunpack.c.l.s4 1983009808
        %v5325 = vunpack.c.0.s8 %v5324
        %v5326 = vlaneseq
        %v5327 = vshrl.u32 %v5326, 7
        %v5328 = vsub.s32 %v5325, %v5327
        %v5329 = vrot.slane %v5315, %v5328
        %v5330 = vcombine.low %v5306, %v5322
        %v5331 = vcombine.high %v5306, %v5322
        %v5333 = vunpack.c.l.s4 1934713408
        %v5334 = vunpack.c.0.s8 %v5333
        %v5335 = vlaneseq
        %v5336 = vshrl.u32 %v5335, 7
        %v5337 = vsub.s32 %v5334, %v5336
        %v5338 = vrot.slane %v5330, %v5337
        %v5340 = vunpack.c.l.s4 1934713408
        %v5341 = vunpack.c.0.s8 %v5340
        %v5342 = vlaneseq
        %v5343 = vshrl.u32 %v5342, 7
        %v5344 = vsub.s32 %v5341, %v5343
        %v5345 = vrot.slane %v5331, %v5344
        %v5346 = vcombine.low %v5313, %v5329
        %v5347 = vcombine.high %v5313, %v5329
        %v5349 = vunpack.c.l.s4 1934713408
        %v5350 = vunpack.c.0.s8 %v5349
        %v5351 = vlaneseq
        %v5352 = vshrl.u32 %v5351, 7
        %v5353 = vsub.s32 %v5350, %v5352
        %v5354 = vrot.slane %v5346, %v5353
        %v5356 = vunpack.c.l.s4 1934713408
        %v5357 = vunpack.c.0.s8 %v5356
        %v5358 = vlaneseq
        %v5359 = vshrl.u32 %v5358, 7
        %v5360 = vsub.s32 %v5357, %v5359
        %v5361 = vrot.slane %v5347, %v5360
        %v5362 = vcombine.high %v5338, 0.0
        %v5363 = vcombine.high %v5345, 0.0
        %v5364 = vcombine.high %v5354, 0.0
        %v5365 = vcombine.high %v5361, 0.0
        %v5366 = vcombine.low %v5196, %v5289
        %v5367 = vcombine.high %v5196, %v5289
        %v5369 = vunpack.c.l.s4 1983009808
        %v5370 = vunpack.c.0.s8 %v5369
        %v5371 = vlaneseq
        %v5372 = vshrl.u32 %v5371, 7
        %v5373 = vsub.s32 %v5370, %v5372
        %v5374 = vrot.slane %v5366, %v5373
        %v5376 = vunpack.c.l.s4 1983009808
        %v5377 = vunpack.c.0.s8 %v5376
        %v5378 = vlaneseq
        %v5379 = vshrl.u32 %v5378, 7
        %v5380 = vsub.s32 %v5377, %v5379
        %v5381 = vrot.slane %v5367, %v5380
        %v5382 = vcombine.low %v5283, %v5295
        %v5383 = vcombine.high %v5283, %v5295
        %v5385 = vunpack.c.l.s4 1983009808
        %v5386 = vunpack.c.0.s8 %v5385
        %v5387 = vlaneseq
        %v5388 = vshrl.u32 %v5387, 7
        %v5389 = vsub.s32 %v5386, %v5388
        %v5390 = vrot.slane %v5382, %v5389
        %v5392 = vunpack.c.l.s4 1983009808
        %v5393 = vunpack.c.0.s8 %v5392
        %v5394 = vlaneseq
        %v5395 = vshrl.u32 %v5394, 7
        %v5396 = vsub.s32 %v5393, %v5395
        %v5397 = vrot.slane %v5383, %v5396
        %v5398 = vcombine.low %v5374, %v5390
        %v5399 = vcombine.high %v5374, %v5390
        %v5401 = vunpack.c.l.s4 1934713408
        %v5402 = vunpack.c.0.s8 %v5401
        %v5403 = vlaneseq
        %v5404 = vshrl.u32 %v5403, 7
        %v5405 = vsub.s32 %v5402, %v5404
        %v5406 = vrot.slane %v5398, %v5405
        %v5408 = vunpack.c.l.s4 1934713408
        %v5409 = vunpack.c.0.s8 %v5408
        %v5410 = vlaneseq
        %v5411 = vshrl.u32 %v5410, 7
        %v5412 = vsub.s32 %v5409, %v5411
        %v5413 = vrot.slane %v5399, %v5412
        %v5414 = vcombine.low %v5381, %v5397
        %v5415 = vcombine.high %v5381, %v5397
        %v5417 = vunpack.c.l.s4 1934713408
        %v5418 = vunpack.c.0.s8 %v5417
        %v5419 = vlaneseq
        %v5420 = vshrl.u32 %v5419, 7
        %v5421 = vsub.s32 %v5418, %v5420
        %v5422 = vrot.slane %v5414, %v5421
        %v5424 = vunpack.c.l.s4 1934713408
        %v5425 = vunpack.c.0.s8 %v5424
        %v5426 = vlaneseq
        %v5427 = vshrl.u32 %v5426, 7
        %v5428 = vsub.s32 %v5425, %v5427
        %v5429 = vrot.slane %v5415, %v5428
        %v5430 = vcombine.high %v5406, 0.0
        %v5431 = vcombine.high %v5413, 0.0
        %v5432 = vcombine.high %v5422, 0.0
        %v5433 = vcombine.high %v5429, 0.0
        %v5434 = vcombine.low %v5338, %v5345
        %v5436 = vunpack.c.l.s4 1983009808
        %v5437 = vunpack.c.0.s8 %v5436
        %v5438 = vlaneseq
        %v5439 = vshrl.u32 %v5438, 7
        %v5440 = vsub.s32 %v5437, %v5439
        %v5441 = vrot.slane %v5434, %v5440
        %v5442 = vcombine.low %v5362, %v5363
        %v5444 = vunpack.c.l.s4 1983009808
        %v5445 = vunpack.c.0.s8 %v5444
        %v5446 = vlaneseq
        %v5447 = vshrl.u32 %v5446, 7
        %v5448 = vsub.s32 %v5445, %v5447
        %v5449 = vrot.slane %v5442, %v5448
        %v5450 = vcombine.low %v5354, %v5361
        %v5452 = vunpack.c.l.s4 1983009808
        %v5453 = vunpack.c.0.s8 %v5452
        %v5454 = vlaneseq
        %v5455 = vshrl.u32 %v5454, 7
        %v5456 = vsub.s32 %v5453, %v5455
        %v5457 = vrot.slane %v5450, %v5456
        %v5458 = vcombine.low %v5364, %v5365
        %v5460 = vunpack.c.l.s4 1983009808
        %v5461 = vunpack.c.0.s8 %v5460
        %v5462 = vlaneseq
        %v5463 = vshrl.u32 %v5462, 7
        %v5464 = vsub.s32 %v5461, %v5463
        %v5465 = vrot.slane %v5458, %v5464
        %v5466 = vcombine.low %v5441, %v5449
        %v5467 = vcombine.high %v5441, %v5449
        %v5469 = vunpack.c.l.s4 1934713408
        %v5470 = vunpack.c.0.s8 %v5469
        %v5471 = vlaneseq
        %v5472 = vshrl.u32 %v5471, 7
        %v5473 = vsub.s32 %v5470, %v5472
        %v5474 = vrot.slane %v5466, %v5473
        %v5476 = vunpack.c.l.s4 1934713408
        %v5477 = vunpack.c.0.s8 %v5476
        %v5478 = vlaneseq
        %v5479 = vshrl.u32 %v5478, 7
        %v5480 = vsub.s32 %v5477, %v5479
        %v5481 = vrot.slane %v5467, %v5480
        %v5482 = vcombine.low %v5457, %v5465
        %v5483 = vcombine.high %v5457, %v5465
        %v5485 = vunpack.c.l.s4 1934713408
        %v5486 = vunpack.c.0.s8 %v5485
        %v5487 = vlaneseq
        %v5488 = vshrl.u32 %v5487, 7
        %v5489 = vsub.s32 %v5486, %v5488
        %v5490 = vrot.slane %v5482, %v5489
        %v5492 = vunpack.c.l.s4 1934713408
        %v5493 = vunpack.c.0.s8 %v5492
        %v5494 = vlaneseq
        %v5495 = vshrl.u32 %v5494, 7
        %v5496 = vsub.s32 %v5493, %v5495
        %v5497 = vrot.slane %v5483, %v5496
        %v5498 = vcombine.low %v5474, %v5490
        %v5499 = vcombine.high %v5474, %v5490
        %v5500 = vcombine.low %v5481, %v5497
        %v5501 = vcombine.high %v5481, %v5497
        %v5502 = vcombine.low %v5406, %v5413
        %v5504 = vunpack.c.l.s4 1983009808
        %v5505 = vunpack.c.0.s8 %v5504
        %v5506 = vlaneseq
        %v5507 = vshrl.u32 %v5506, 7
        %v5508 = vsub.s32 %v5505, %v5507
        %v5509 = vrot.slane %v5502, %v5508
        %v5510 = vcombine.low %v5430, %v5431
        %v5512 = vunpack.c.l.s4 1983009808
        %v5513 = vunpack.c.0.s8 %v5512
        %v5514 = vlaneseq
        %v5515 = vshrl.u32 %v5514, 7
        %v5516 = vsub.s32 %v5513, %v5515
        %v5517 = vrot.slane %v5510, %v5516
        %v5518 = vcombine.low %v5422, %v5429
        %v5520 = vunpack.c.l.s4 1983009808
        %v5521 = vunpack.c.0.s8 %v5520
        %v5522 = vlaneseq
        %v5523 = vshrl.u32 %v5522, 7
        %v5524 = vsub.s32 %v5521, %v5523
        %v5525 = vrot.slane %v5518, %v5524
        %v5526 = vcombine.low %v5432, %v5433
        %v5528 = vunpack.c.l.s4 1983009808
        %v5529 = vunpack.c.0.s8 %v5528
        %v5530 = vlaneseq
        %v5531 = vshrl.u32 %v5530, 7
        %v5532 = vsub.s32 %v5529, %v5531
        %v5533 = vrot.slane %v5526, %v5532
        %v5534 = vcombine.low %v5509, %v5517
        %v5535 = vcombine.high %v5509, %v5517
        %v5537 = vunpack.c.l.s4 1934713408
        %v5538 = vunpack.c.0.s8 %v5537
        %v5539 = vlaneseq
        %v5540 = vshrl.u32 %v5539, 7
        %v5541 = vsub.s32 %v5538, %v5540
        %v5542 = vrot.slane %v5534, %v5541
        %v5544 = vunpack.c.l.s4 1934713408
        %v5545 = vunpack.c.0.s8 %v5544
        %v5546 = vlaneseq
        %v5547 = vshrl.u32 %v5546, 7
        %v5548 = vsub.s32 %v5545, %v5547
        %v5549 = vrot.slane %v5535, %v5548
        %v5550 = vcombine.low %v5525, %v5533
        %v5551 = vcombine.high %v5525, %v5533
        %v5553 = vunpack.c.l.s4 1934713408
        %v5554 = vunpack.c.0.s8 %v5553
        %v5555 = vlaneseq
        %v5556 = vshrl.u32 %v5555, 7
        %v5557 = vsub.s32 %v5554, %v5556
        %v5558 = vrot.slane %v5550, %v5557
        %v5560 = vunpack.c.l.s4 1934713408
        %v5561 = vunpack.c.0.s8 %v5560
        %v5562 = vlaneseq
        %v5563 = vshrl.u32 %v5562, 7
        %v5564 = vsub.s32 %v5561, %v5563
        %v5565 = vrot.slane %v5551, %v5564
        %v5566 = vcombine.low %v5542, %v5558
        %v5567 = vcombine.high %v5542, %v5558
        %v5568 = vcombine.low %v5549, %v5565
        %v5569 = vcombine.high %v5549, %v5565
        %5572 = vrot.lane.b32.xlu0 %v5270, 120
        %v5573 = vpop.permute.xlu0 %5572
        %5574 = vrot.lane.b32.xlu0 %v5275, 120
        %v5575 = vpop.permute.xlu0 %5574
        %5578 = vrot.lane.b32.xlu0 %v5270, 112
        %v5579 = vpop.permute.xlu0 %5578
        %5580 = vrot.lane.b32.xlu0 %v5275, 112
        %v5581 = vpop.permute.xlu0 %5580
        %5584 = vrot.lane.b32.xlu0 %v5270, 104
        %v5585 = vpop.permute.xlu0 %5584
        %5586 = vrot.lane.b32.xlu0 %v5275, 104
        %v5587 = vpop.permute.xlu0 %5586
        %v5590 = vcombine.low %v5270, %v5579
        %v5591 = vcombine.high %v5270, %v5579
        %v5593 = vunpack.c.l.s4 1983009808
        %v5594 = vunpack.c.0.s8 %v5593
        %v5595 = vlaneseq
        %v5596 = vshrl.u32 %v5595, 7
        %v5597 = vsub.s32 %v5594, %v5596
        %v5598 = vrot.slane %v5590, %v5597
        %v5600 = vunpack.c.l.s4 1983009808
        %v5601 = vunpack.c.0.s8 %v5600
        %v5602 = vlaneseq
        %v5603 = vshrl.u32 %v5602, 7
        %v5604 = vsub.s32 %v5601, %v5603
        %v5605 = vrot.slane %v5591, %v5604
        %v5606 = vcombine.low %v5573, %v5585
        %v5607 = vcombine.high %v5573, %v5585
        %v5609 = vunpack.c.l.s4 1983009808
        %v5610 = vunpack.c.0.s8 %v5609
        %v5611 = vlaneseq
        %v5612 = vshrl.u32 %v5611, 7
        %v5613 = vsub.s32 %v5610, %v5612
        %v5614 = vrot.slane %v5606, %v5613
        %v5616 = vunpack.c.l.s4 1983009808
        %v5617 = vunpack.c.0.s8 %v5616
        %v5618 = vlaneseq
        %v5619 = vshrl.u32 %v5618, 7
        %v5620 = vsub.s32 %v5617, %v5619
        %v5621 = vrot.slane %v5607, %v5620
        %v5622 = vcombine.low %v5598, %v5614
        %v5623 = vcombine.high %v5598, %v5614
        %v5625 = vunpack.c.l.s4 1934713408
        %v5626 = vunpack.c.0.s8 %v5625
        %v5627 = vlaneseq
        %v5628 = vshrl.u32 %v5627, 7
        %v5629 = vsub.s32 %v5626, %v5628
        %v5630 = vrot.slane %v5622, %v5629
        %v5632 = vunpack.c.l.s4 1934713408
        %v5633 = vunpack.c.0.s8 %v5632
        %v5634 = vlaneseq
        %v5635 = vshrl.u32 %v5634, 7
        %v5636 = vsub.s32 %v5633, %v5635
        %v5637 = vrot.slane %v5623, %v5636
        %v5638 = vcombine.low %v5605, %v5621
        %v5639 = vcombine.high %v5605, %v5621
        %v5641 = vunpack.c.l.s4 1934713408
        %v5642 = vunpack.c.0.s8 %v5641
        %v5643 = vlaneseq
        %v5644 = vshrl.u32 %v5643, 7
        %v5645 = vsub.s32 %v5642, %v5644
        %v5646 = vrot.slane %v5638, %v5645
        %v5648 = vunpack.c.l.s4 1934713408
        %v5649 = vunpack.c.0.s8 %v5648
        %v5650 = vlaneseq
        %v5651 = vshrl.u32 %v5650, 7
        %v5652 = vsub.s32 %v5649, %v5651
        %v5653 = vrot.slane %v5639, %v5652
        %v5654 = vcombine.high %v5630, 0.0
        %v5655 = vcombine.high %v5637, 0.0
        %v5656 = vcombine.high %v5646, 0.0
        %v5657 = vcombine.high %v5653, 0.0
        %v5658 = vcombine.low %v5275, %v5581
        %v5659 = vcombine.high %v5275, %v5581
        %v5661 = vunpack.c.l.s4 1983009808
        %v5662 = vunpack.c.0.s8 %v5661
        %v5663 = vlaneseq
        %v5664 = vshrl.u32 %v5663, 7
        %v5665 = vsub.s32 %v5662, %v5664
        %v5666 = vrot.slane %v5658, %v5665
        %v5668 = vunpack.c.l.s4 1983009808
        %v5669 = vunpack.c.0.s8 %v5668
        %v5670 = vlaneseq
        %v5671 = vshrl.u32 %v5670, 7
        %v5672 = vsub.s32 %v5669, %v5671
        %v5673 = vrot.slane %v5659, %v5672
        %v5674 = vcombine.low %v5575, %v5587
        %v5675 = vcombine.high %v5575, %v5587
        %v5677 = vunpack.c.l.s4 1983009808
        %v5678 = vunpack.c.0.s8 %v5677
        %v5679 = vlaneseq
        %v5680 = vshrl.u32 %v5679, 7
        %v5681 = vsub.s32 %v5678, %v5680
        %v5682 = vrot.slane %v5674, %v5681
        %v5684 = vunpack.c.l.s4 1983009808
        %v5685 = vunpack.c.0.s8 %v5684
        %v5686 = vlaneseq
        %v5687 = vshrl.u32 %v5686, 7
        %v5688 = vsub.s32 %v5685, %v5687
        %v5689 = vrot.slane %v5675, %v5688
        %v5690 = vcombine.low %v5666, %v5682
        %v5691 = vcombine.high %v5666, %v5682
        %v5693 = vunpack.c.l.s4 1934713408
        %v5694 = vunpack.c.0.s8 %v5693
        %v5695 = vlaneseq
        %v5696 = vshrl.u32 %v5695, 7
        %v5697 = vsub.s32 %v5694, %v5696
        %v5698 = vrot.slane %v5690, %v5697
        %v5700 = vunpack.c.l.s4 1934713408
        %v5701 = vunpack.c.0.s8 %v5700
        %v5702 = vlaneseq
        %v5703 = vshrl.u32 %v5702, 7
        %v5704 = vsub.s32 %v5701, %v5703
        %v5705 = vrot.slane %v5691, %v5704
        %v5706 = vcombine.low %v5673, %v5689
        %v5707 = vcombine.high %v5673, %v5689
        %v5709 = vunpack.c.l.s4 1934713408
        %v5710 = vunpack.c.0.s8 %v5709
        %v5711 = vlaneseq
        %v5712 = vshrl.u32 %v5711, 7
        %v5713 = vsub.s32 %v5710, %v5712
        %v5714 = vrot.slane %v5706, %v5713
        %v5716 = vunpack.c.l.s4 1934713408
        %v5717 = vunpack.c.0.s8 %v5716
        %v5718 = vlaneseq
        %v5719 = vshrl.u32 %v5718, 7
        %v5720 = vsub.s32 %v5717, %v5719
        %v5721 = vrot.slane %v5707, %v5720
        %v5722 = vcombine.high %v5698, 0.0
        %v5723 = vcombine.high %v5705, 0.0
        %v5724 = vcombine.high %v5714, 0.0
        %v5725 = vcombine.high %v5721, 0.0
        %v5726 = vcombine.low %v5630, %v5637
        %v5728 = vunpack.c.l.s4 1983009808
        %v5729 = vunpack.c.0.s8 %v5728
        %v5730 = vlaneseq
        %v5731 = vshrl.u32 %v5730, 7
        %v5732 = vsub.s32 %v5729, %v5731
        %v5733 = vrot.slane %v5726, %v5732
        %v5734 = vcombine.low %v5654, %v5655
        %v5736 = vunpack.c.l.s4 1983009808
        %v5737 = vunpack.c.0.s8 %v5736
        %v5738 = vlaneseq
        %v5739 = vshrl.u32 %v5738, 7
        %v5740 = vsub.s32 %v5737, %v5739
        %v5741 = vrot.slane %v5734, %v5740
        %v5742 = vcombine.low %v5646, %v5653
        %v5744 = vunpack.c.l.s4 1983009808
        %v5745 = vunpack.c.0.s8 %v5744
        %v5746 = vlaneseq
        %v5747 = vshrl.u32 %v5746, 7
        %v5748 = vsub.s32 %v5745, %v5747
        %v5749 = vrot.slane %v5742, %v5748
        %v5750 = vcombine.low %v5656, %v5657
        %v5752 = vunpack.c.l.s4 1983009808
        %v5753 = vunpack.c.0.s8 %v5752
        %v5754 = vlaneseq
        %v5755 = vshrl.u32 %v5754, 7
        %v5756 = vsub.s32 %v5753, %v5755
        %v5757 = vrot.slane %v5750, %v5756
        %v5758 = vcombine.low %v5733, %v5741
        %v5759 = vcombine.high %v5733, %v5741
        %v5761 = vunpack.c.l.s4 1934713408
        %v5762 = vunpack.c.0.s8 %v5761
        %v5763 = vlaneseq
        %v5764 = vshrl.u32 %v5763, 7
        %v5765 = vsub.s32 %v5762, %v5764
        %v5766 = vrot.slane %v5758, %v5765
        %v5768 = vunpack.c.l.s4 1934713408
        %v5769 = vunpack.c.0.s8 %v5768
        %v5770 = vlaneseq
        %v5771 = vshrl.u32 %v5770, 7
        %v5772 = vsub.s32 %v5769, %v5771
        %v5773 = vrot.slane %v5759, %v5772
        %v5774 = vcombine.low %v5749, %v5757
        %v5775 = vcombine.high %v5749, %v5757
        %v5777 = vunpack.c.l.s4 1934713408
        %v5778 = vunpack.c.0.s8 %v5777
        %v5779 = vlaneseq
        %v5780 = vshrl.u32 %v5779, 7
        %v5781 = vsub.s32 %v5778, %v5780
        %v5782 = vrot.slane %v5774, %v5781
        %v5784 = vunpack.c.l.s4 1934713408
        %v5785 = vunpack.c.0.s8 %v5784
        %v5786 = vlaneseq
        %v5787 = vshrl.u32 %v5786, 7
        %v5788 = vsub.s32 %v5785, %v5787
        %v5789 = vrot.slane %v5775, %v5788
        %v5790 = vcombine.low %v5766, %v5782
        %v5791 = vcombine.high %v5766, %v5782
        %v5792 = vcombine.low %v5773, %v5789
        %v5793 = vcombine.high %v5773, %v5789
        %v5794 = vcombine.low %v5698, %v5705
        %v5796 = vunpack.c.l.s4 1983009808
        %v5797 = vunpack.c.0.s8 %v5796
        %v5798 = vlaneseq
        %v5799 = vshrl.u32 %v5798, 7
        %v5800 = vsub.s32 %v5797, %v5799
        %v5801 = vrot.slane %v5794, %v5800
        %v5802 = vcombine.low %v5722, %v5723
        %v5804 = vunpack.c.l.s4 1983009808
        %v5805 = vunpack.c.0.s8 %v5804
        %v5806 = vlaneseq
        %v5807 = vshrl.u32 %v5806, 7
        %v5808 = vsub.s32 %v5805, %v5807
        %v5809 = vrot.slane %v5802, %v5808
        %v5810 = vcombine.low %v5714, %v5721
        %v5812 = vunpack.c.l.s4 1983009808
        %v5813 = vunpack.c.0.s8 %v5812
        %v5814 = vlaneseq
        %v5815 = vshrl.u32 %v5814, 7
        %v5816 = vsub.s32 %v5813, %v5815
        %v5817 = vrot.slane %v5810, %v5816
        %v5818 = vcombine.low %v5724, %v5725
        %v5820 = vunpack.c.l.s4 1983009808
        %v5821 = vunpack.c.0.s8 %v5820
        %v5822 = vlaneseq
        %v5823 = vshrl.u32 %v5822, 7
        %v5824 = vsub.s32 %v5821, %v5823
        %v5825 = vrot.slane %v5818, %v5824
        %v5826 = vcombine.low %v5801, %v5809
        %v5827 = vcombine.high %v5801, %v5809
        %v5829 = vunpack.c.l.s4 1934713408
        %v5830 = vunpack.c.0.s8 %v5829
        %v5831 = vlaneseq
        %v5832 = vshrl.u32 %v5831, 7
        %v5833 = vsub.s32 %v5830, %v5832
        %v5834 = vrot.slane %v5826, %v5833
        %v5836 = vunpack.c.l.s4 1934713408
        %v5837 = vunpack.c.0.s8 %v5836
        %v5838 = vlaneseq
        %v5839 = vshrl.u32 %v5838, 7
        %v5840 = vsub.s32 %v5837, %v5839
        %v5841 = vrot.slane %v5827, %v5840
        %v5842 = vcombine.low %v5817, %v5825
        %v5843 = vcombine.high %v5817, %v5825
        %v5845 = vunpack.c.l.s4 1934713408
        %v5846 = vunpack.c.0.s8 %v5845
        %v5847 = vlaneseq
        %v5848 = vshrl.u32 %v5847, 7
        %v5849 = vsub.s32 %v5846, %v5848
        %v5850 = vrot.slane %v5842, %v5849
        %v5852 = vunpack.c.l.s4 1934713408
        %v5853 = vunpack.c.0.s8 %v5852
        %v5854 = vlaneseq
        %v5855 = vshrl.u32 %v5854, 7
        %v5856 = vsub.s32 %v5853, %v5855
        %v5857 = vrot.slane %v5843, %v5856
        %v5858 = vcombine.low %v5834, %v5850
        %v5859 = vcombine.high %v5834, %v5850
        %v5860 = vcombine.low %v5841, %v5857
        %v5861 = vcombine.high %v5841, %v5857
        %5862 = vrot.lane.b32.xlu0 %v5270, 96
        %v5863 = vpop.permute.xlu0 %5862
        %5864 = vrot.lane.b32.xlu0 %v5275, 96
        %v5865 = vpop.permute.xlu0 %5864
        %5866 = vrot.lane.b32.xlu0 %v5573, 96
        %v5867 = vpop.permute.xlu0 %5866
        %5868 = vrot.lane.b32.xlu0 %v5575, 96
        %v5869 = vpop.permute.xlu0 %5868
        %5870 = vrot.lane.b32.xlu0 %v5579, 96
        %v5871 = vpop.permute.xlu0 %5870
        %5872 = vrot.lane.b32.xlu0 %v5581, 96
        %v5873 = vpop.permute.xlu0 %5872
        %5874 = vrot.lane.b32.xlu0 %v5585, 96
        %v5875 = vpop.permute.xlu0 %5874
        %5876 = vrot.lane.b32.xlu0 %v5587, 96
        %v5877 = vpop.permute.xlu0 %5876
        %v5886 = vcombine.low %v5863, %v5871
        %v5887 = vcombine.high %v5863, %v5871
        %v5889 = vunpack.c.l.s4 1983009808
        %v5890 = vunpack.c.0.s8 %v5889
        %v5891 = vlaneseq
        %v5892 = vshrl.u32 %v5891, 7
        %v5893 = vsub.s32 %v5890, %v5892
        %v5894 = vrot.slane %v5886, %v5893
        %v5896 = vunpack.c.l.s4 1983009808
        %v5897 = vunpack.c.0.s8 %v5896
        %v5898 = vlaneseq
        %v5899 = vshrl.u32 %v5898, 7
        %v5900 = vsub.s32 %v5897, %v5899
        %v5901 = vrot.slane %v5887, %v5900
        %v5902 = vcombine.low %v5867, %v5875
        %v5903 = vcombine.high %v5867, %v5875
        %v5905 = vunpack.c.l.s4 1983009808
        %v5906 = vunpack.c.0.s8 %v5905
        %v5907 = vlaneseq
        %v5908 = vshrl.u32 %v5907, 7
        %v5909 = vsub.s32 %v5906, %v5908
        %v5910 = vrot.slane %v5902, %v5909
        %v5912 = vunpack.c.l.s4 1983009808
        %v5913 = vunpack.c.0.s8 %v5912
        %v5914 = vlaneseq
        %v5915 = vshrl.u32 %v5914, 7
        %v5916 = vsub.s32 %v5913, %v5915
        %v5917 = vrot.slane %v5903, %v5916
        %v5918 = vcombine.low %v5894, %v5910
        %v5919 = vcombine.high %v5894, %v5910
        %v5921 = vunpack.c.l.s4 1934713408
        %v5922 = vunpack.c.0.s8 %v5921
        %v5923 = vlaneseq
        %v5924 = vshrl.u32 %v5923, 7
        %v5925 = vsub.s32 %v5922, %v5924
        %v5926 = vrot.slane %v5918, %v5925
        %v5928 = vunpack.c.l.s4 1934713408
        %v5929 = vunpack.c.0.s8 %v5928
        %v5930 = vlaneseq
        %v5931 = vshrl.u32 %v5930, 7
        %v5932 = vsub.s32 %v5929, %v5931
        %v5933 = vrot.slane %v5919, %v5932
        %v5934 = vcombine.low %v5901, %v5917
        %v5935 = vcombine.high %v5901, %v5917
        %v5937 = vunpack.c.l.s4 1934713408
        %v5938 = vunpack.c.0.s8 %v5937
        %v5939 = vlaneseq
        %v5940 = vshrl.u32 %v5939, 7
        %v5941 = vsub.s32 %v5938, %v5940
        %v5942 = vrot.slane %v5934, %v5941
        %v5944 = vunpack.c.l.s4 1934713408
        %v5945 = vunpack.c.0.s8 %v5944
        %v5946 = vlaneseq
        %v5947 = vshrl.u32 %v5946, 7
        %v5948 = vsub.s32 %v5945, %v5947
        %v5949 = vrot.slane %v5935, %v5948
        %v5950 = vcombine.high %v5926, 0.0
        %v5951 = vcombine.high %v5933, 0.0
        %v5952 = vcombine.high %v5942, 0.0
        %v5953 = vcombine.high %v5949, 0.0
        %v5954 = vcombine.low %v5865, %v5873
        %v5955 = vcombine.high %v5865, %v5873
        %v5957 = vunpack.c.l.s4 1983009808
        %v5958 = vunpack.c.0.s8 %v5957
        %v5959 = vlaneseq
        %v5960 = vshrl.u32 %v5959, 7
        %v5961 = vsub.s32 %v5958, %v5960
        %v5962 = vrot.slane %v5954, %v5961
        %v5964 = vunpack.c.l.s4 1983009808
        %v5965 = vunpack.c.0.s8 %v5964
        %v5966 = vlaneseq
        %v5967 = vshrl.u32 %v5966, 7
        %v5968 = vsub.s32 %v5965, %v5967
        %v5969 = vrot.slane %v5955, %v5968
        %v5970 = vcombine.low %v5869, %v5877
        %v5971 = vcombine.high %v5869, %v5877
        %v5973 = vunpack.c.l.s4 1983009808
        %v5974 = vunpack.c.0.s8 %v5973
        %v5975 = vlaneseq
        %v5976 = vshrl.u32 %v5975, 7
        %v5977 = vsub.s32 %v5974, %v5976
        %v5978 = vrot.slane %v5970, %v5977
        %v5980 = vunpack.c.l.s4 1983009808
        %v5981 = vunpack.c.0.s8 %v5980
        %v5982 = vlaneseq
        %v5983 = vshrl.u32 %v5982, 7
        %v5984 = vsub.s32 %v5981, %v5983
        %v5985 = vrot.slane %v5971, %v5984
        %v5986 = vcombine.low %v5962, %v5978
        %v5987 = vcombine.high %v5962, %v5978
        %v5989 = vunpack.c.l.s4 1934713408
        %v5990 = vunpack.c.0.s8 %v5989
        %v5991 = vlaneseq
        %v5992 = vshrl.u32 %v5991, 7
        %v5993 = vsub.s32 %v5990, %v5992
        %v5994 = vrot.slane %v5986, %v5993
        %v5996 = vunpack.c.l.s4 1934713408
        %v5997 = vunpack.c.0.s8 %v5996
        %v5998 = vlaneseq
        %v5999 = vshrl.u32 %v5998, 7
        %v6000 = vsub.s32 %v5997, %v5999
        %v6001 = vrot.slane %v5987, %v6000
        %v6002 = vcombine.low %v5969, %v5985
        %v6003 = vcombine.high %v5969, %v5985
        %v6005 = vunpack.c.l.s4 1934713408
        %v6006 = vunpack.c.0.s8 %v6005
        %v6007 = vlaneseq
        %v6008 = vshrl.u32 %v6007, 7
        %v6009 = vsub.s32 %v6006, %v6008
        %v6010 = vrot.slane %v6002, %v6009
        %v6012 = vunpack.c.l.s4 1934713408
        %v6013 = vunpack.c.0.s8 %v6012
        %v6014 = vlaneseq
        %v6015 = vshrl.u32 %v6014, 7
        %v6016 = vsub.s32 %v6013, %v6015
        %v6017 = vrot.slane %v6003, %v6016
        %v6018 = vcombine.high %v5994, 0.0
        %v6019 = vcombine.high %v6001, 0.0
        %v6020 = vcombine.high %v6010, 0.0
        %v6021 = vcombine.high %v6017, 0.0
        %v6022 = vcombine.low %v5926, %v5933
        %v6024 = vunpack.c.l.s4 1983009808
        %v6025 = vunpack.c.0.s8 %v6024
        %v6026 = vlaneseq
        %v6027 = vshrl.u32 %v6026, 7
        %v6028 = vsub.s32 %v6025, %v6027
        %v6029 = vrot.slane %v6022, %v6028
        %v6030 = vcombine.low %v5950, %v5951
        %v6032 = vunpack.c.l.s4 1983009808
        %v6033 = vunpack.c.0.s8 %v6032
        %v6034 = vlaneseq
        %v6035 = vshrl.u32 %v6034, 7
        %v6036 = vsub.s32 %v6033, %v6035
        %v6037 = vrot.slane %v6030, %v6036
        %v6038 = vcombine.low %v5942, %v5949
        %v6040 = vunpack.c.l.s4 1983009808
        %v6041 = vunpack.c.0.s8 %v6040
        %v6042 = vlaneseq
        %v6043 = vshrl.u32 %v6042, 7
        %v6044 = vsub.s32 %v6041, %v6043
        %v6045 = vrot.slane %v6038, %v6044
        %v6046 = vcombine.low %v5952, %v5953
        %v6048 = vunpack.c.l.s4 1983009808
        %v6049 = vunpack.c.0.s8 %v6048
        %v6050 = vlaneseq
        %v6051 = vshrl.u32 %v6050, 7
        %v6052 = vsub.s32 %v6049, %v6051
        %v6053 = vrot.slane %v6046, %v6052
        %v6054 = vcombine.low %v6029, %v6037
        %v6055 = vcombine.high %v6029, %v6037
        %v6057 = vunpack.c.l.s4 1934713408
        %v6058 = vunpack.c.0.s8 %v6057
        %v6059 = vlaneseq
        %v6060 = vshrl.u32 %v6059, 7
        %v6061 = vsub.s32 %v6058, %v6060
        %v6062 = vrot.slane %v6054, %v6061
        %v6064 = vunpack.c.l.s4 1934713408
        %v6065 = vunpack.c.0.s8 %v6064
        %v6066 = vlaneseq
        %v6067 = vshrl.u32 %v6066, 7
        %v6068 = vsub.s32 %v6065, %v6067
        %v6069 = vrot.slane %v6055, %v6068
        %v6070 = vcombine.low %v6045, %v6053
        %v6071 = vcombine.high %v6045, %v6053
        %v6073 = vunpack.c.l.s4 1934713408
        %v6074 = vunpack.c.0.s8 %v6073
        %v6075 = vlaneseq
        %v6076 = vshrl.u32 %v6075, 7
        %v6077 = vsub.s32 %v6074, %v6076
        %v6078 = vrot.slane %v6070, %v6077
        %v6080 = vunpack.c.l.s4 1934713408
        %v6081 = vunpack.c.0.s8 %v6080
        %v6082 = vlaneseq
        %v6083 = vshrl.u32 %v6082, 7
        %v6084 = vsub.s32 %v6081, %v6083
        %v6085 = vrot.slane %v6071, %v6084
        %v6086 = vcombine.low %v6062, %v6078
        %v6087 = vcombine.high %v6062, %v6078
        %v6088 = vcombine.low %v6069, %v6085
        %v6089 = vcombine.high %v6069, %v6085
        %v6090 = vcombine.low %v5994, %v6001
        %v6092 = vunpack.c.l.s4 1983009808
        %v6093 = vunpack.c.0.s8 %v6092
        %v6094 = vlaneseq
        %v6095 = vshrl.u32 %v6094, 7
        %v6096 = vsub.s32 %v6093, %v6095
        %v6097 = vrot.slane %v6090, %v6096
        %v6098 = vcombine.low %v6018, %v6019
        %v6100 = vunpack.c.l.s4 1983009808
        %v6101 = vunpack.c.0.s8 %v6100
        %v6102 = vlaneseq
        %v6103 = vshrl.u32 %v6102, 7
        %v6104 = vsub.s32 %v6101, %v6103
        %v6105 = vrot.slane %v6098, %v6104
        %v6106 = vcombine.low %v6010, %v6017
        %v6108 = vunpack.c.l.s4 1983009808
        %v6109 = vunpack.c.0.s8 %v6108
        %v6110 = vlaneseq
        %v6111 = vshrl.u32 %v6110, 7
        %v6112 = vsub.s32 %v6109, %v6111
        %v6113 = vrot.slane %v6106, %v6112
        %v6114 = vcombine.low %v6020, %v6021
        %v6116 = vunpack.c.l.s4 1983009808
        %v6117 = vunpack.c.0.s8 %v6116
        %v6118 = vlaneseq
        %v6119 = vshrl.u32 %v6118, 7
        %v6120 = vsub.s32 %v6117, %v6119
        %v6121 = vrot.slane %v6114, %v6120
        %v6122 = vcombine.low %v6097, %v6105
        %v6123 = vcombine.high %v6097, %v6105
        %v6125 = vunpack.c.l.s4 1934713408
        %v6126 = vunpack.c.0.s8 %v6125
        %v6127 = vlaneseq
        %v6128 = vshrl.u32 %v6127, 7
        %v6129 = vsub.s32 %v6126, %v6128
        %v6130 = vrot.slane %v6122, %v6129
        %v6132 = vunpack.c.l.s4 1934713408
        %v6133 = vunpack.c.0.s8 %v6132
        %v6134 = vlaneseq
        %v6135 = vshrl.u32 %v6134, 7
        %v6136 = vsub.s32 %v6133, %v6135
        %v6137 = vrot.slane %v6123, %v6136
        %v6138 = vcombine.low %v6113, %v6121
        %v6139 = vcombine.high %v6113, %v6121
        %v6141 = vunpack.c.l.s4 1934713408
        %v6142 = vunpack.c.0.s8 %v6141
        %v6143 = vlaneseq
        %v6144 = vshrl.u32 %v6143, 7
        %v6145 = vsub.s32 %v6142, %v6144
        %v6146 = vrot.slane %v6138, %v6145
        %v6148 = vunpack.c.l.s4 1934713408
        %v6149 = vunpack.c.0.s8 %v6148
        %v6150 = vlaneseq
        %v6151 = vshrl.u32 %v6150, 7
        %v6152 = vsub.s32 %v6149, %v6151
        %v6153 = vrot.slane %v6139, %v6152
        %v6154 = vcombine.low %v6130, %v6146
        %v6155 = vcombine.high %v6130, %v6146
        %v6156 = vcombine.low %v6137, %v6153
        %v6157 = vcombine.high %v6137, %v6153
        %v6159 = vsel %vm1417, %v5498, 0
        %v6162 = vsel %vm1417, %v5566, 0
        %v6165 = vsel %vm1417, %v5790, 0
        %v6168 = vsel %vm1417, %v5858, 0
        %6170 = vmatprep.subr.mxu0 0.0
        %6171 = vmatpush1.xpose.msra.mxu0 0.0
        %6172 = vmatprep.subr.mxu0 0.0
        %6173 = vmatpush1.xpose.msra.mxu0 0.0
        %6174 = vmatprep.subr.mxu0 0.0
        %6175 = vmatpush1.xpose.msra.mxu0 0.0
        %6176 = vmatprep.subr.mxu0 0.0
        %6177 = vmatpush1.xpose.msra.mxu0 0.0
        %6178 = vmatprep.subr.mxu0 0.0
        %6179 = vmatpush1.xpose.msra.mxu0 0.0
        %6180 = vmatprep.subr.mxu0 0.0
        %6181 = vmatpush1.xpose.msra.mxu0 0.0
        %6182 = vmatprep.subr.mxu0 0.0
        %6183 = vmatpush1.xpose.msra.mxu0 0.0
        %6184 = vmatprep.subr.mxu0 0.0
        %6185 = vmatpush1.xpose.msra.mxu0 0.0
        %6186 = vmatprep.subr.mxu0 0.0
        %6187 = vmatpush1.xpose.msra.mxu0 0.0
        %6188 = vmatprep.subr.mxu0 0.0
        %6189 = vmatpush1.xpose.msra.mxu0 0.0
        %6190 = vmatprep.subr.mxu0 0.0
        %6191 = vmatpush1.xpose.msra.mxu0 0.0
        %6192 = vmatprep.subr.mxu0 0.0
        %6193 = vmatpush1.xpose.msra.mxu0 0.0
        %6194 = vmatprep.subr.mxu0 0.0
        %6195 = vmatpush1.xpose.msra.mxu0 0.0
        %6196 = vmatprep.subr.mxu0 0.0
        %6197 = vmatpush1.xpose.msra.mxu0 0.0
        %6198 = vmatprep.subr.mxu0 0.0
        %6199 = vmatpush1.xpose.msra.mxu0 %v6168
        %6200 = vmatprep.subr.mxu0 0.0
        %6201 = vmatpush1.xpose.msra.mxu0 %v6165
        %6202 = vmatprep.subr.mxu0 0.0
        %6203 = vmatpush2.xpose.msra.mxu0 0.0
        %6204 = vmatprep.subr.mxu0 0.0
        %6205 = vmatpush2.xpose.msra.mxu0 0.0
        %6206 = vmatprep.subr.mxu0 0.0
        %6207 = vmatpush2.xpose.msra.mxu0 0.0
        %6208 = vmatprep.subr.mxu0 0.0
        %6209 = vmatpush2.xpose.msra.mxu0 0.0
        %6210 = vmatprep.subr.mxu0 0.0
        %6211 = vmatpush2.xpose.msra.mxu0 0.0
        %6212 = vmatprep.subr.mxu0 0.0
        %6213 = vmatpush2.xpose.msra.mxu0 0.0
        %6214 = vmatprep.subr.mxu0 0.0
        %6215 = vmatpush2.xpose.msra.mxu0 0.0
        %6216 = vmatprep.subr.mxu0 0.0
        %6217 = vmatpush2.xpose.msra.mxu0 0.0
        %6218 = vmatprep.subr.mxu0 0.0
        %6219 = vmatpush2.xpose.msra.mxu0 0.0
        %6220 = vmatprep.subr.mxu0 0.0
        %6221 = vmatpush2.xpose.msra.mxu0 0.0
        %6222 = vmatprep.subr.mxu0 0.0
        %6223 = vmatpush2.xpose.msra.mxu0 0.0
        %6224 = vmatprep.subr.mxu0 0.0
        %6225 = vmatpush2.xpose.msra.mxu0 0.0
        %6226 = vmatprep.subr.mxu0 0.0
        %6227 = vmatpush2.xpose.msra.mxu0 0.0
        %6228 = vmatprep.subr.mxu0 0.0
        %6229 = vmatpush2.xpose.msra.mxu0 0.0
        %6230 = vmatprep.subr.mxu0 0.0
        %6231 = vmatpush2.xpose.msra.mxu0 0.0
        %6232 = vmatprep.subr.mxu0 0.0
        %6233 = vmatpush2.xpose.msra.mxu0 0.0
        %6234 = vmatprep.mubr.f32.mxu0 0.0
        %6235 = vmatmul.mubr.f32.gmra.mxu0 %v6159
        %v6236 = vpop.f32.mrf.mxu0
        %v6237 = vadd.f32 %v347, %v6236
        %v6238 = vpop.f32.mrf.mxu0
        %6239 = vmatprep.mubr.f32.mxu0 0.0
        %6240 = vmatmul.mubr.f32.gmra.mxu0 %v6162
        %v6241 = vpop.f32.mrf.mxu0
        %v6242 = vadd.f32 %v348, %v6241
        %v6243 = vpop.f32.mrf.mxu0
        %6244 = vdwg.mxu0
        %v6246 = vsel %vm1417, %v5499, 0
        %v6249 = vsel %vm1417, %v5567, 0
        %v6252 = vsel %vm1417, %v5791, 0
        %v6255 = vsel %vm1417, %v5859, 0
        %6257 = vmatprep.subr.mxu0 0.0
        %6258 = vmatpush1.xpose.msra.mxu0 0.0
        %6259 = vmatprep.subr.mxu0 0.0
        %6260 = vmatpush1.xpose.msra.mxu0 0.0
        %6261 = vmatprep.subr.mxu0 0.0
        %6262 = vmatpush1.xpose.msra.mxu0 0.0
        %6263 = vmatprep.subr.mxu0 0.0
        %6264 = vmatpush1.xpose.msra.mxu0 0.0
        %6265 = vmatprep.subr.mxu0 0.0
        %6266 = vmatpush1.xpose.msra.mxu0 0.0
        %6267 = vmatprep.subr.mxu0 0.0
        %6268 = vmatpush1.xpose.msra.mxu0 0.0
        %6269 = vmatprep.subr.mxu0 0.0
        %6270 = vmatpush1.xpose.msra.mxu0 0.0
        %6271 = vmatprep.subr.mxu0 0.0
        %6272 = vmatpush1.xpose.msra.mxu0 0.0
        %6273 = vmatprep.subr.mxu0 0.0
        %6274 = vmatpush1.xpose.msra.mxu0 0.0
        %6275 = vmatprep.subr.mxu0 0.0
        %6276 = vmatpush1.xpose.msra.mxu0 0.0
        %6277 = vmatprep.subr.mxu0 0.0
        %6278 = vmatpush1.xpose.msra.mxu0 0.0
        %6279 = vmatprep.subr.mxu0 0.0
        %6280 = vmatpush1.xpose.msra.mxu0 0.0
        %6281 = vmatprep.subr.mxu0 0.0
        %6282 = vmatpush1.xpose.msra.mxu0 0.0
        %6283 = vmatprep.subr.mxu0 0.0
        %6284 = vmatpush1.xpose.msra.mxu0 0.0
        %6285 = vmatprep.subr.mxu0 0.0
        %6286 = vmatpush1.xpose.msra.mxu0 %v6255
        %6287 = vmatprep.subr.mxu0 0.0
        %6288 = vmatpush1.xpose.msra.mxu0 %v6252
        %6289 = vmatprep.subr.mxu0 0.0
        %6290 = vmatpush2.xpose.msra.mxu0 0.0
        %6291 = vmatprep.subr.mxu0 0.0
        %6292 = vmatpush2.xpose.msra.mxu0 0.0
        %6293 = vmatprep.subr.mxu0 0.0
        %6294 = vmatpush2.xpose.msra.mxu0 0.0
        %6295 = vmatprep.subr.mxu0 0.0
        %6296 = vmatpush2.xpose.msra.mxu0 0.0
        %6297 = vmatprep.subr.mxu0 0.0
        %6298 = vmatpush2.xpose.msra.mxu0 0.0
        %6299 = vmatprep.subr.mxu0 0.0
        %6300 = vmatpush2.xpose.msra.mxu0 0.0
        %6301 = vmatprep.subr.mxu0 0.0
        %6302 = vmatpush2.xpose.msra.mxu0 0.0
        %6303 = vmatprep.subr.mxu0 0.0
        %6304 = vmatpush2.xpose.msra.mxu0 0.0
        %6305 = vmatprep.subr.mxu0 0.0
        %6306 = vmatpush2.xpose.msra.mxu0 0.0
        %6307 = vmatprep.subr.mxu0 0.0
        %6308 = vmatpush2.xpose.msra.mxu0 0.0
        %6309 = vmatprep.subr.mxu0 0.0
        %6310 = vmatpush2.xpose.msra.mxu0 0.0
        %6311 = vmatprep.subr.mxu0 0.0
        %6312 = vmatpush2.xpose.msra.mxu0 0.0
        %6313 = vmatprep.subr.mxu0 0.0
        %6314 = vmatpush2.xpose.msra.mxu0 0.0
        %6315 = vmatprep.subr.mxu0 0.0
        %6316 = vmatpush2.xpose.msra.mxu0 0.0
        %6317 = vmatprep.subr.mxu0 0.0
        %6318 = vmatpush2.xpose.msra.mxu0 0.0
        %6319 = vmatprep.subr.mxu0 0.0
        %6320 = vmatpush2.xpose.msra.mxu0 0.0
        %6321 = vmatprep.mubr.f32.mxu0 0.0
        %6322 = vmatmul.mubr.f32.gmra.mxu0 %v6246
        %v6323 = vpop.f32.mrf.mxu0
        %v6324 = vadd.f32 %v347, %v6323
        %v6325 = vpop.f32.mrf.mxu0
        %6326 = vmatprep.mubr.f32.mxu0 0.0
        %6327 = vmatmul.mubr.f32.gmra.mxu0 %v6249
        %v6328 = vpop.f32.mrf.mxu0
        %v6329 = vadd.f32 %v348, %v6328
        %v6330 = vpop.f32.mrf.mxu0
        %6331 = vdwg.mxu0
        %v6333 = vsel %vm1417, %v5500, 0
        %v6336 = vsel %vm1417, %v5568, 0
        %v6339 = vsel %vm1417, %v5792, 0
        %v6342 = vsel %vm1417, %v5860, 0
        %6344 = vmatprep.subr.mxu0 0.0
        %6345 = vmatpush1.xpose.msra.mxu0 0.0
        %6346 = vmatprep.subr.mxu0 0.0
        %6347 = vmatpush1.xpose.msra.mxu0 0.0
        %6348 = vmatprep.subr.mxu0 0.0
        %6349 = vmatpush1.xpose.msra.mxu0 0.0
        %6350 = vmatprep.subr.mxu0 0.0
        %6351 = vmatpush1.xpose.msra.mxu0 0.0
        %6352 = vmatprep.subr.mxu0 0.0
        %6353 = vmatpush1.xpose.msra.mxu0 0.0
        %6354 = vmatprep.subr.mxu0 0.0
        %6355 = vmatpush1.xpose.msra.mxu0 0.0
        %6356 = vmatprep.subr.mxu0 0.0
        %6357 = vmatpush1.xpose.msra.mxu0 0.0
        %6358 = vmatprep.subr.mxu0 0.0
        %6359 = vmatpush1.xpose.msra.mxu0 0.0
        %6360 = vmatprep.subr.mxu0 0.0
        %6361 = vmatpush1.xpose.msra.mxu0 0.0
        %6362 = vmatprep.subr.mxu0 0.0
        %6363 = vmatpush1.xpose.msra.mxu0 0.0
        %6364 = vmatprep.subr.mxu0 0.0
        %6365 = vmatpush1.xpose.msra.mxu0 0.0
        %6366 = vmatprep.subr.mxu0 0.0
        %6367 = vmatpush1.xpose.msra.mxu0 0.0
        %6368 = vmatprep.subr.mxu0 0.0
        %6369 = vmatpush1.xpose.msra.mxu0 0.0
        %6370 = vmatprep.subr.mxu0 0.0
        %6371 = vmatpush1.xpose.msra.mxu0 0.0
        %6372 = vmatprep.subr.mxu0 0.0
        %6373 = vmatpush1.xpose.msra.mxu0 %v6342
        %6374 = vmatprep.subr.mxu0 0.0
        %6375 = vmatpush1.xpose.msra.mxu0 %v6339
        %6376 = vmatprep.subr.mxu0 0.0
        %6377 = vmatpush2.xpose.msra.mxu0 0.0
        %6378 = vmatprep.subr.mxu0 0.0
        %6379 = vmatpush2.xpose.msra.mxu0 0.0
        %6380 = vmatprep.subr.mxu0 0.0
        %6381 = vmatpush2.xpose.msra.mxu0 0.0
        %6382 = vmatprep.subr.mxu0 0.0
        %6383 = vmatpush2.xpose.msra.mxu0 0.0
        %6384 = vmatprep.subr.mxu0 0.0
        %6385 = vmatpush2.xpose.msra.mxu0 0.0
        %6386 = vmatprep.subr.mxu0 0.0
        %6387 = vmatpush2.xpose.msra.mxu0 0.0
        %6388 = vmatprep.subr.mxu0 0.0
        %6389 = vmatpush2.xpose.msra.mxu0 0.0
        %6390 = vmatprep.subr.mxu0 0.0
        %6391 = vmatpush2.xpose.msra.mxu0 0.0
        %6392 = vmatprep.subr.mxu0 0.0
        %6393 = vmatpush2.xpose.msra.mxu0 0.0
        %6394 = vmatprep.subr.mxu0 0.0
        %6395 = vmatpush2.xpose.msra.mxu0 0.0
        %6396 = vmatprep.subr.mxu0 0.0
        %6397 = vmatpush2.xpose.msra.mxu0 0.0
        %6398 = vmatprep.subr.mxu0 0.0
        %6399 = vmatpush2.xpose.msra.mxu0 0.0
        %6400 = vmatprep.subr.mxu0 0.0
        %6401 = vmatpush2.xpose.msra.mxu0 0.0
        %6402 = vmatprep.subr.mxu0 0.0
        %6403 = vmatpush2.xpose.msra.mxu0 0.0
        %6404 = vmatprep.subr.mxu0 0.0
        %6405 = vmatpush2.xpose.msra.mxu0 0.0
        %6406 = vmatprep.subr.mxu0 0.0
        %6407 = vmatpush2.xpose.msra.mxu0 0.0
        %6408 = vmatprep.mubr.f32.mxu0 0.0
        %6409 = vmatmul.mubr.f32.gmra.mxu0 %v6333
        %v6410 = vpop.f32.mrf.mxu0
        %v6411 = vadd.f32 %v347, %v6410
        %v6412 = vpop.f32.mrf.mxu0
        %6413 = vmatprep.mubr.f32.mxu0 0.0
        %6414 = vmatmul.mubr.f32.gmra.mxu0 %v6336
        %v6415 = vpop.f32.mrf.mxu0
        %v6416 = vadd.f32 %v348, %v6415
        %v6417 = vpop.f32.mrf.mxu0
        %6418 = vdwg.mxu0
        %v6420 = vsel %vm1417, %v5501, 0
        %v6423 = vsel %vm1417, %v5569, 0
        %v6426 = vsel %vm1417, %v5793, 0
        %v6429 = vsel %vm1417, %v5861, 0
        %6431 = vmatprep.subr.mxu0 0.0
        %6432 = vmatpush1.xpose.msra.mxu0 0.0
        %6433 = vmatprep.subr.mxu0 0.0
        %6434 = vmatpush1.xpose.msra.mxu0 0.0
        %6435 = vmatprep.subr.mxu0 0.0
        %6436 = vmatpush1.xpose.msra.mxu0 0.0
        %6437 = vmatprep.subr.mxu0 0.0
        %6438 = vmatpush1.xpose.msra.mxu0 0.0
        %6439 = vmatprep.subr.mxu0 0.0
        %6440 = vmatpush1.xpose.msra.mxu0 0.0
        %6441 = vmatprep.subr.mxu0 0.0
        %6442 = vmatpush1.xpose.msra.mxu0 0.0
        %6443 = vmatprep.subr.mxu0 0.0
        %6444 = vmatpush1.xpose.msra.mxu0 0.0
        %6445 = vmatprep.subr.mxu0 0.0
        %6446 = vmatpush1.xpose.msra.mxu0 0.0
        %6447 = vmatprep.subr.mxu0 0.0
        %6448 = vmatpush1.xpose.msra.mxu0 0.0
        %6449 = vmatprep.subr.mxu0 0.0
        %6450 = vmatpush1.xpose.msra.mxu0 0.0
        %6451 = vmatprep.subr.mxu0 0.0
        %6452 = vmatpush1.xpose.msra.mxu0 0.0
        %6453 = vmatprep.subr.mxu0 0.0
        %6454 = vmatpush1.xpose.msra.mxu0 0.0
        %6455 = vmatprep.subr.mxu0 0.0
        %6456 = vmatpush1.xpose.msra.mxu0 0.0
        %6457 = vmatprep.subr.mxu0 0.0
        %6458 = vmatpush1.xpose.msra.mxu0 0.0
        %6459 = vmatprep.subr.mxu0 0.0
        %6460 = vmatpush1.xpose.msra.mxu0 %v6429
        %6461 = vmatprep.subr.mxu0 0.0
        %6462 = vmatpush1.xpose.msra.mxu0 %v6426
        %6463 = vmatprep.subr.mxu0 0.0
        %6464 = vmatpush2.xpose.msra.mxu0 0.0
        %6465 = vmatprep.subr.mxu0 0.0
        %6466 = vmatpush2.xpose.msra.mxu0 0.0
        %6467 = vmatprep.subr.mxu0 0.0
        %6468 = vmatpush2.xpose.msra.mxu0 0.0
        %6469 = vmatprep.subr.mxu0 0.0
        %6470 = vmatpush2.xpose.msra.mxu0 0.0
        %6471 = vmatprep.subr.mxu0 0.0
        %6472 = vmatpush2.xpose.msra.mxu0 0.0
        %6473 = vmatprep.subr.mxu0 0.0
        %6474 = vmatpush2.xpose.msra.mxu0 0.0
        %6475 = vmatprep.subr.mxu0 0.0
        %6476 = vmatpush2.xpose.msra.mxu0 0.0
        %6477 = vmatprep.subr.mxu0 0.0
        %6478 = vmatpush2.xpose.msra.mxu0 0.0
        %6479 = vmatprep.subr.mxu0 0.0
        %6480 = vmatpush2.xpose.msra.mxu0 0.0
        %6481 = vmatprep.subr.mxu0 0.0
        %6482 = vmatpush2.xpose.msra.mxu0 0.0
        %6483 = vmatprep.subr.mxu0 0.0
        %6484 = vmatpush2.xpose.msra.mxu0 0.0
        %6485 = vmatprep.subr.mxu0 0.0
        %6486 = vmatpush2.xpose.msra.mxu0 0.0
        %6487 = vmatprep.subr.mxu0 0.0
        %6488 = vmatpush2.xpose.msra.mxu0 0.0
        %6489 = vmatprep.subr.mxu0 0.0
        %6490 = vmatpush2.xpose.msra.mxu0 0.0
        %6491 = vmatprep.subr.mxu0 0.0
        %6492 = vmatpush2.xpose.msra.mxu0 0.0
        %6493 = vmatprep.subr.mxu0 0.0
        %6494 = vmatpush2.xpose.msra.mxu0 0.0
        %6495 = vmatprep.mubr.f32.mxu0 0.0
        %6496 = vmatmul.mubr.f32.gmra.mxu0 %v6420
        %v6497 = vpop.f32.mrf.mxu0
        %v6498 = vadd.f32 %v347, %v6497
        %v6499 = vpop.f32.mrf.mxu0
        %6500 = vmatprep.mubr.f32.mxu0 0.0
        %6501 = vmatmul.mubr.f32.gmra.mxu0 %v6423
        %v6502 = vpop.f32.mrf.mxu0
        %v6503 = vadd.f32 %v348, %v6502
        %v6504 = vpop.f32.mrf.mxu0
        %6505 = vdwg.mxu0
        %v6506 = vsel %vm1766, %v6237, -inf
        %6507 = vmax.xlane.f32.xlu0 %v6506
        %v6508 = vpop.xlane.xlu0 %6507
        %v6509 = vsel %vm1766, %v6242, -inf
        %6510 = vmax.xlane.f32.xlu0 %v6509
        %v6511 = vpop.xlane.xlu0 %6510
        %v6512 = vsel %vm1766, %v6324, -inf
        %6513 = vmax.xlane.f32.xlu0 %v6512
        %v6514 = vpop.xlane.xlu0 %6513
        %v6515 = vsel %vm1766, %v6329, -inf
        %6516 = vmax.xlane.f32.xlu0 %v6515
        %v6517 = vpop.xlane.xlu0 %6516
        %v6518 = vsel %vm1766, %v6411, -inf
        %6519 = vmax.xlane.f32.xlu0 %v6518
        %v6520 = vpop.xlane.xlu0 %6519
        %v6521 = vsel %vm1766, %v6416, -inf
        %6522 = vmax.xlane.f32.xlu0 %v6521
        %v6523 = vpop.xlane.xlu0 %6522
        %v6524 = vsel %vm1766, %v6498, -inf
        %6525 = vmax.xlane.f32.xlu0 %v6524
        %v6526 = vpop.xlane.xlu0 %6525
        %v6527 = vsel %vm1766, %v6503, -inf
        %6528 = vmax.xlane.f32.xlu0 %v6527
        %v6529 = vpop.xlane.xlu0 %6528
        %v6530 = vsub.f32 %v6237, %v6508
        %v6531 = vsub.f32 %v6242, %v6511
        %v6532 = vsub.f32 %v6324, %v6514
        %v6533 = vsub.f32 %v6329, %v6517
        %v6534 = vsub.f32 %v6411, %v6520
        %v6535 = vsub.f32 %v6416, %v6523
        %v6536 = vsub.f32 %v6498, %v6526
        %v6537 = vsub.f32 %v6503, %v6529
        %v6538 = vmul.f32 %v6530, 1.442695
        %v6539 = vpow.pop %v6538
        %v6540 = vmul.f32 %v6531, 1.442695
        %v6541 = vpow.pop %v6540
        %v6542 = vmul.f32 %v6532, 1.442695
        %v6543 = vpow.pop %v6542
        %v6544 = vmul.f32 %v6533, 1.442695
        %v6545 = vpow.pop %v6544
        %v6546 = vmul.f32 %v6534, 1.442695
        %v6547 = vpow.pop %v6546
        %v6548 = vmul.f32 %v6535, 1.442695
        %v6549 = vpow.pop %v6548
        %v6550 = vmul.f32 %v6536, 1.442695
        %v6551 = vpow.pop %v6550
        %v6552 = vmul.f32 %v6537, 1.442695
        %v6553 = vpow.pop %v6552
        %v6554 = vsel %vm1766, %v6539, 0.0
        %6555 = vadd.xlane.f32.xlu0 %v6554
        %v6556 = vpop.xlane.xlu0 %6555
        %v6557 = vsel %vm1766, %v6541, 0.0
        %6558 = vadd.xlane.f32.xlu0 %v6557
        %v6559 = vpop.xlane.xlu0 %6558
        %v6560 = vsel %vm1766, %v6543, 0.0
        %6561 = vadd.xlane.f32.xlu0 %v6560
        %v6562 = vpop.xlane.xlu0 %6561
        %v6563 = vsel %vm1766, %v6545, 0.0
        %6564 = vadd.xlane.f32.xlu0 %v6563
        %v6565 = vpop.xlane.xlu0 %6564
        %v6566 = vsel %vm1766, %v6547, 0.0
        %6567 = vadd.xlane.f32.xlu0 %v6566
        %v6568 = vpop.xlane.xlu0 %6567
        %v6569 = vsel %vm1766, %v6549, 0.0
        %6570 = vadd.xlane.f32.xlu0 %v6569
        %v6571 = vpop.xlane.xlu0 %6570
        %v6572 = vsel %vm1766, %v6551, 0.0
        %6573 = vadd.xlane.f32.xlu0 %v6572
        %v6574 = vpop.xlane.xlu0 %6573
        %v6575 = vsel %vm1766, %v6553, 0.0
        %6576 = vadd.xlane.f32.xlu0 %v6575
        %v6577 = vpop.xlane.xlu0 %6576
        %v6578 = vrcp.pop %v6556
        %v6579 = vmul.f32 %v6539, %v6578
        %v6580 = vrcp.pop %v6559
        %v6581 = vmul.f32 %v6541, %v6580
        %v6582 = vrcp.pop %v6562
        %v6583 = vmul.f32 %v6543, %v6582
        %v6584 = vrcp.pop %v6565
        %v6585 = vmul.f32 %v6545, %v6584
        %v6586 = vrcp.pop %v6568
        %v6587 = vmul.f32 %v6547, %v6586
        %v6588 = vrcp.pop %v6571
        %v6589 = vmul.f32 %v6549, %v6588
        %v6590 = vrcp.pop %v6574
        %v6591 = vmul.f32 %v6551, %v6590
        %v6592 = vrcp.pop %v6577
        %v6593 = vmul.f32 %v6553, %v6592
        %v6595 = vsel %vm1766, %v6579, 0
        %v6598 = vsel %vm1766, %v6581, 0
        %6600 = vmatprep.subr.mxu0 0.0
        %6601 = vmatpush1.msra.mxu0 0.0
        %6602 = vmatprep.subr.mxu0 0.0
        %6603 = vmatpush1.msra.mxu0 0.0
        %6604 = vmatprep.subr.mxu0 0.0
        %6605 = vmatpush1.msra.mxu0 0.0
        %6606 = vmatprep.subr.mxu0 0.0
        %6607 = vmatpush1.msra.mxu0 0.0
        %6608 = vmatprep.subr.mxu0 0.0
        %6609 = vmatpush1.msra.mxu0 0.0
        %6610 = vmatprep.subr.mxu0 0.0
        %6611 = vmatpush1.msra.mxu0 0.0
        %6612 = vmatprep.subr.mxu0 0.0
        %6613 = vmatpush1.msra.mxu0 0.0
        %6614 = vmatprep.subr.mxu0 0.0
        %6615 = vmatpush1.msra.mxu0 0.0
        %6616 = vmatprep.subr.mxu0 0.0
        %6617 = vmatpush1.msra.mxu0 0.0
        %6618 = vmatprep.subr.mxu0 0.0
        %6619 = vmatpush1.msra.mxu0 0.0
        %6620 = vmatprep.subr.mxu0 0.0
        %6621 = vmatpush1.msra.mxu0 0.0
        %6622 = vmatprep.subr.mxu0 0.0
        %6623 = vmatpush1.msra.mxu0 0.0
        %6624 = vmatprep.subr.mxu0 0.0
        %6625 = vmatpush1.msra.mxu0 0.0
        %6626 = vmatprep.subr.mxu0 0.0
        %6627 = vmatpush1.msra.mxu0 0.0
        %6628 = vmatprep.subr.mxu0 0.0
        %6629 = vmatpush1.msra.mxu0 %v6154
        %6630 = vmatprep.subr.mxu0 0.0
        %6631 = vmatpush1.msra.mxu0 %v6086
        %6632 = vmatprep.subr.mxu0 0.0
        %6633 = vmatpush2.msra.mxu0 0.0
        %6634 = vmatprep.subr.mxu0 0.0
        %6635 = vmatpush2.msra.mxu0 0.0
        %6636 = vmatprep.subr.mxu0 0.0
        %6637 = vmatpush2.msra.mxu0 0.0
        %6638 = vmatprep.subr.mxu0 0.0
        %6639 = vmatpush2.msra.mxu0 0.0
        %6640 = vmatprep.subr.mxu0 0.0
        %6641 = vmatpush2.msra.mxu0 0.0
        %6642 = vmatprep.subr.mxu0 0.0
        %6643 = vmatpush2.msra.mxu0 0.0
        %6644 = vmatprep.subr.mxu0 0.0
        %6645 = vmatpush2.msra.mxu0 0.0
        %6646 = vmatprep.subr.mxu0 0.0
        %6647 = vmatpush2.msra.mxu0 0.0
        %6648 = vmatprep.subr.mxu0 0.0
        %6649 = vmatpush2.msra.mxu0 0.0
        %6650 = vmatprep.subr.mxu0 0.0
        %6651 = vmatpush2.msra.mxu0 0.0
        %6652 = vmatprep.subr.mxu0 0.0
        %6653 = vmatpush2.msra.mxu0 0.0
        %6654 = vmatprep.subr.mxu0 0.0
        %6655 = vmatpush2.msra.mxu0 0.0
        %6656 = vmatprep.subr.mxu0 0.0
        %6657 = vmatpush2.msra.mxu0 0.0
        %6658 = vmatprep.subr.mxu0 0.0
        %6659 = vmatpush2.msra.mxu0 0.0
        %6660 = vmatprep.subr.mxu0 0.0
        %6661 = vmatpush2.msra.mxu0 0.0
        %6662 = vmatprep.subr.mxu0 0.0
        %6663 = vmatpush2.msra.mxu0 0.0
        %6664 = vmatprep.mubr.f32.mxu0 0.0
        %6665 = vmatmul.mubr.f32.gmra.mxu0 %v6595
        %v6666 = vpop.f32.mrf.mxu0
        %v6667 = vadd.f32 0.0, %v6666
        %v6668 = vpop.f32.mrf.mxu0
        %6669 = vmatprep.mubr.f32.mxu0 0.0
        %6670 = vmatmul.mubr.f32.gmra.mxu0 %v6598
        %v6671 = vpop.f32.mrf.mxu0
        %v6672 = vadd.f32 0.0, %v6671
        %v6673 = vpop.f32.mrf.mxu0
        %6674 = vdwg.mxu0
        %v6676 = vsel %vm1766, %v6583, 0
        %v6679 = vsel %vm1766, %v6585, 0
        %6681 = vmatprep.subr.mxu0 0.0
        %6682 = vmatpush1.msra.mxu0 0.0
        %6683 = vmatprep.subr.mxu0 0.0
        %6684 = vmatpush1.msra.mxu0 0.0
        %6685 = vmatprep.subr.mxu0 0.0
        %6686 = vmatpush1.msra.mxu0 0.0
        %6687 = vmatprep.subr.mxu0 0.0
        %6688 = vmatpush1.msra.mxu0 0.0
        %6689 = vmatprep.subr.mxu0 0.0
        %6690 = vmatpush1.msra.mxu0 0.0
        %6691 = vmatprep.subr.mxu0 0.0
        %6692 = vmatpush1.msra.mxu0 0.0
        %6693 = vmatprep.subr.mxu0 0.0
        %6694 = vmatpush1.msra.mxu0 0.0
        %6695 = vmatprep.subr.mxu0 0.0
        %6696 = vmatpush1.msra.mxu0 0.0
        %6697 = vmatprep.subr.mxu0 0.0
        %6698 = vmatpush1.msra.mxu0 0.0
        %6699 = vmatprep.subr.mxu0 0.0
        %6700 = vmatpush1.msra.mxu0 0.0
        %6701 = vmatprep.subr.mxu0 0.0
        %6702 = vmatpush1.msra.mxu0 0.0
        %6703 = vmatprep.subr.mxu0 0.0
        %6704 = vmatpush1.msra.mxu0 0.0
        %6705 = vmatprep.subr.mxu0 0.0
        %6706 = vmatpush1.msra.mxu0 0.0
        %6707 = vmatprep.subr.mxu0 0.0
        %6708 = vmatpush1.msra.mxu0 0.0
        %6709 = vmatprep.subr.mxu0 0.0
        %6710 = vmatpush1.msra.mxu0 %v6155
        %6711 = vmatprep.subr.mxu0 0.0
        %6712 = vmatpush1.msra.mxu0 %v6087
        %6713 = vmatprep.subr.mxu0 0.0
        %6714 = vmatpush2.msra.mxu0 0.0
        %6715 = vmatprep.subr.mxu0 0.0
        %6716 = vmatpush2.msra.mxu0 0.0
        %6717 = vmatprep.subr.mxu0 0.0
        %6718 = vmatpush2.msra.mxu0 0.0
        %6719 = vmatprep.subr.mxu0 0.0
        %6720 = vmatpush2.msra.mxu0 0.0
        %6721 = vmatprep.subr.mxu0 0.0
        %6722 = vmatpush2.msra.mxu0 0.0
        %6723 = vmatprep.subr.mxu0 0.0
        %6724 = vmatpush2.msra.mxu0 0.0
        %6725 = vmatprep.subr.mxu0 0.0
        %6726 = vmatpush2.msra.mxu0 0.0
        %6727 = vmatprep.subr.mxu0 0.0
        %6728 = vmatpush2.msra.mxu0 0.0
        %6729 = vmatprep.subr.mxu0 0.0
        %6730 = vmatpush2.msra.mxu0 0.0
        %6731 = vmatprep.subr.mxu0 0.0
        %6732 = vmatpush2.msra.mxu0 0.0
        %6733 = vmatprep.subr.mxu0 0.0
        %6734 = vmatpush2.msra.mxu0 0.0
        %6735 = vmatprep.subr.mxu0 0.0
        %6736 = vmatpush2.msra.mxu0 0.0
        %6737 = vmatprep.subr.mxu0 0.0
        %6738 = vmatpush2.msra.mxu0 0.0
        %6739 = vmatprep.subr.mxu0 0.0
        %6740 = vmatpush2.msra.mxu0 0.0
        %6741 = vmatprep.subr.mxu0 0.0
        %6742 = vmatpush2.msra.mxu0 0.0
        %6743 = vmatprep.subr.mxu0 0.0
        %6744 = vmatpush2.msra.mxu0 0.0
        %6745 = vmatprep.mubr.f32.mxu0 0.0
        %6746 = vmatmul.mubr.f32.gmra.mxu0 %v6676
        %v6747 = vpop.f32.mrf.mxu0
        %v6748 = vadd.f32 0.0, %v6747
        %v6749 = vpop.f32.mrf.mxu0
        %6750 = vmatprep.mubr.f32.mxu0 0.0
        %6751 = vmatmul.mubr.f32.gmra.mxu0 %v6679
        %v6752 = vpop.f32.mrf.mxu0
        %v6753 = vadd.f32 0.0, %v6752
        %v6754 = vpop.f32.mrf.mxu0
        %6755 = vdwg.mxu0
        %v6757 = vsel %vm1766, %v6587, 0
        %v6760 = vsel %vm1766, %v6589, 0
        %6762 = vmatprep.subr.mxu0 0.0
        %6763 = vmatpush1.msra.mxu0 0.0
        %6764 = vmatprep.subr.mxu0 0.0
        %6765 = vmatpush1.msra.mxu0 0.0
        %6766 = vmatprep.subr.mxu0 0.0
        %6767 = vmatpush1.msra.mxu0 0.0
        %6768 = vmatprep.subr.mxu0 0.0
        %6769 = vmatpush1.msra.mxu0 0.0
        %6770 = vmatprep.subr.mxu0 0.0
        %6771 = vmatpush1.msra.mxu0 0.0
        %6772 = vmatprep.subr.mxu0 0.0
        %6773 = vmatpush1.msra.mxu0 0.0
        %6774 = vmatprep.subr.mxu0 0.0
        %6775 = vmatpush1.msra.mxu0 0.0
        %6776 = vmatprep.subr.mxu0 0.0
        %6777 = vmatpush1.msra.mxu0 0.0
        %6778 = vmatprep.subr.mxu0 0.0
        %6779 = vmatpush1.msra.mxu0 0.0
        %6780 = vmatprep.subr.mxu0 0.0
        %6781 = vmatpush1.msra.mxu0 0.0
        %6782 = vmatprep.subr.mxu0 0.0
        %6783 = vmatpush1.msra.mxu0 0.0
        %6784 = vmatprep.subr.mxu0 0.0
        %6785 = vmatpush1.msra.mxu0 0.0
        %6786 = vmatprep.subr.mxu0 0.0
        %6787 = vmatpush1.msra.mxu0 0.0
        %6788 = vmatprep.subr.mxu0 0.0
        %6789 = vmatpush1.msra.mxu0 0.0
        %6790 = vmatprep.subr.mxu0 0.0
        %6791 = vmatpush1.msra.mxu0 %v6156
        %6792 = vmatprep.subr.mxu0 0.0
        %6793 = vmatpush1.msra.mxu0 %v6088
        %6794 = vmatprep.subr.mxu0 0.0
        %6795 = vmatpush2.msra.mxu0 0.0
        %6796 = vmatprep.subr.mxu0 0.0
        %6797 = vmatpush2.msra.mxu0 0.0
        %6798 = vmatprep.subr.mxu0 0.0
        %6799 = vmatpush2.msra.mxu0 0.0
        %6800 = vmatprep.subr.mxu0 0.0
        %6801 = vmatpush2.msra.mxu0 0.0
        %6802 = vmatprep.subr.mxu0 0.0
        %6803 = vmatpush2.msra.mxu0 0.0
        %6804 = vmatprep.subr.mxu0 0.0
        %6805 = vmatpush2.msra.mxu0 0.0
        %6806 = vmatprep.subr.mxu0 0.0
        %6807 = vmatpush2.msra.mxu0 0.0
        %6808 = vmatprep.subr.mxu0 0.0
        %6809 = vmatpush2.msra.mxu0 0.0
        %6810 = vmatprep.subr.mxu0 0.0
        %6811 = vmatpush2.msra.mxu0 0.0
        %6812 = vmatprep.subr.mxu0 0.0
        %6813 = vmatpush2.msra.mxu0 0.0
        %6814 = vmatprep.subr.mxu0 0.0
        %6815 = vmatpush2.msra.mxu0 0.0
        %6816 = vmatprep.subr.mxu0 0.0
        %6817 = vmatpush2.msra.mxu0 0.0
        %6818 = vmatprep.subr.mxu0 0.0
        %6819 = vmatpush2.msra.mxu0 0.0
        %6820 = vmatprep.subr.mxu0 0.0
        %6821 = vmatpush2.msra.mxu0 0.0
        %6822 = vmatprep.subr.mxu0 0.0
        %6823 = vmatpush2.msra.mxu0 0.0
        %6824 = vmatprep.subr.mxu0 0.0
        %6825 = vmatpush2.msra.mxu0 0.0
        %6826 = vmatprep.mubr.f32.mxu0 0.0
        %6827 = vmatmul.mubr.f32.gmra.mxu0 %v6757
        %v6828 = vpop.f32.mrf.mxu0
        %v6829 = vadd.f32 0.0, %v6828
        %v6830 = vpop.f32.mrf.mxu0
        %6831 = vmatprep.mubr.f32.mxu0 0.0
        %6832 = vmatmul.mubr.f32.gmra.mxu0 %v6760
        %v6833 = vpop.f32.mrf.mxu0
        %v6834 = vadd.f32 0.0, %v6833
        %v6835 = vpop.f32.mrf.mxu0
        %6836 = vdwg.mxu0
        %v6838 = vsel %vm1766, %v6591, 0
        %v6841 = vsel %vm1766, %v6593, 0
        %6843 = vmatprep.subr.mxu0 0.0
        %6844 = vmatpush1.msra.mxu0 0.0
        %6845 = vmatprep.subr.mxu0 0.0
        %6846 = vmatpush1.msra.mxu0 0.0
        %6847 = vmatprep.subr.mxu0 0.0
        %6848 = vmatpush1.msra.mxu0 0.0
        %6849 = vmatprep.subr.mxu0 0.0
        %6850 = vmatpush1.msra.mxu0 0.0
        %6851 = vmatprep.subr.mxu0 0.0
        %6852 = vmatpush1.msra.mxu0 0.0
        %6853 = vmatprep.subr.mxu0 0.0
        %6854 = vmatpush1.msra.mxu0 0.0
        %6855 = vmatprep.subr.mxu0 0.0
        %6856 = vmatpush1.msra.mxu0 0.0
        %6857 = vmatprep.subr.mxu0 0.0
        %6858 = vmatpush1.msra.mxu0 0.0
        %6859 = vmatprep.subr.mxu0 0.0
        %6860 = vmatpush1.msra.mxu0 0.0
        %6861 = vmatprep.subr.mxu0 0.0
        %6862 = vmatpush1.msra.mxu0 0.0
        %6863 = vmatprep.subr.mxu0 0.0
        %6864 = vmatpush1.msra.mxu0 0.0
        %6865 = vmatprep.subr.mxu0 0.0
        %6866 = vmatpush1.msra.mxu0 0.0
        %6867 = vmatprep.subr.mxu0 0.0
        %6868 = vmatpush1.msra.mxu0 0.0
        %6869 = vmatprep.subr.mxu0 0.0
        %6870 = vmatpush1.msra.mxu0 0.0
        %6871 = vmatprep.subr.mxu0 0.0
        %6872 = vmatpush1.msra.mxu0 %v6157
        %6873 = vmatprep.subr.mxu0 0.0
        %6874 = vmatpush1.msra.mxu0 %v6089
        %6875 = vmatprep.subr.mxu0 0.0
        %6876 = vmatpush2.msra.mxu0 0.0
        %6877 = vmatprep.subr.mxu0 0.0
        %6878 = vmatpush2.msra.mxu0 0.0
        %6879 = vmatprep.subr.mxu0 0.0
        %6880 = vmatpush2.msra.mxu0 0.0
        %6881 = vmatprep.subr.mxu0 0.0
        %6882 = vmatpush2.msra.mxu0 0.0
        %6883 = vmatprep.subr.mxu0 0.0
        %6884 = vmatpush2.msra.mxu0 0.0
        %6885 = vmatprep.subr.mxu0 0.0
        %6886 = vmatpush2.msra.mxu0 0.0
        %6887 = vmatprep.subr.mxu0 0.0
        %6888 = vmatpush2.msra.mxu0 0.0
        %6889 = vmatprep.subr.mxu0 0.0
        %6890 = vmatpush2.msra.mxu0 0.0
        %6891 = vmatprep.subr.mxu0 0.0
        %6892 = vmatpush2.msra.mxu0 0.0
        %6893 = vmatprep.subr.mxu0 0.0
        %6894 = vmatpush2.msra.mxu0 0.0
        %6895 = vmatprep.subr.mxu0 0.0
        %6896 = vmatpush2.msra.mxu0 0.0
        %6897 = vmatprep.subr.mxu0 0.0
        %6898 = vmatpush2.msra.mxu0 0.0
        %6899 = vmatprep.subr.mxu0 0.0
        %6900 = vmatpush2.msra.mxu0 0.0
        %6901 = vmatprep.subr.mxu0 0.0
        %6902 = vmatpush2.msra.mxu0 0.0
        %6903 = vmatprep.subr.mxu0 0.0
        %6904 = vmatpush2.msra.mxu0 0.0
        %6905 = vmatprep.subr.mxu0 0.0
        %6906 = vmatpush2.msra.mxu0 0.0
        %6907 = vmatprep.mubr.f32.mxu0 0.0
        %6908 = vmatmul.mubr.f32.gmra.mxu0 %v6838
        %v6909 = vpop.f32.mrf.mxu0
        %v6910 = vadd.f32 0.0, %v6909
        %v6911 = vpop.f32.mrf.mxu0
        %6912 = vmatprep.mubr.f32.mxu0 0.0
        %6913 = vmatmul.mubr.f32.gmra.mxu0 %v6841
        %v6914 = vpop.f32.mrf.mxu0
        %v6915 = vadd.f32 0.0, %v6914
        %v6916 = vpop.f32.mrf.mxu0
        %6917 = vdwg.mxu0
        %v6918 = vcombine.low %v6667, %v6829
        %v6919 = vcombine.high %v6667, %v6829
        %v6921 = vunpack.c.l.s4 1983009808
        %v6922 = vunpack.c.0.s8 %v6921
        %v6923 = vlaneseq
        %v6924 = vshrl.u32 %v6923, 7
        %v6925 = vsub.s32 %v6922, %v6924
        %v6926 = vrot.slane %v6918, %v6925
        %v6928 = vunpack.c.l.s4 1983009808
        %v6929 = vunpack.c.0.s8 %v6928
        %v6930 = vlaneseq
        %v6931 = vshrl.u32 %v6930, 7
        %v6932 = vsub.s32 %v6929, %v6931
        %v6933 = vrot.slane %v6919, %v6932
        %v6934 = vcombine.low %v6748, %v6910
        %v6935 = vcombine.high %v6748, %v6910
        %v6937 = vunpack.c.l.s4 1983009808
        %v6938 = vunpack.c.0.s8 %v6937
        %v6939 = vlaneseq
        %v6940 = vshrl.u32 %v6939, 7
        %v6941 = vsub.s32 %v6938, %v6940
        %v6942 = vrot.slane %v6934, %v6941
        %v6944 = vunpack.c.l.s4 1983009808
        %v6945 = vunpack.c.0.s8 %v6944
        %v6946 = vlaneseq
        %v6947 = vshrl.u32 %v6946, 7
        %v6948 = vsub.s32 %v6945, %v6947
        %v6949 = vrot.slane %v6935, %v6948
        %v6950 = vcombine.low %v6926, %v6942
        %v6951 = vcombine.high %v6926, %v6942
        %v6953 = vunpack.c.l.s4 1934713408
        %v6954 = vunpack.c.0.s8 %v6953
        %v6955 = vlaneseq
        %v6956 = vshrl.u32 %v6955, 7
        %v6957 = vsub.s32 %v6954, %v6956
        %v6958 = vrot.slane %v6950, %v6957
        %v6960 = vunpack.c.l.s4 1934713408
        %v6961 = vunpack.c.0.s8 %v6960
        %v6962 = vlaneseq
        %v6963 = vshrl.u32 %v6962, 7
        %v6964 = vsub.s32 %v6961, %v6963
        %v6965 = vrot.slane %v6951, %v6964
        %v6966 = vcombine.low %v6933, %v6949
        %v6967 = vcombine.high %v6933, %v6949
        %v6969 = vunpack.c.l.s4 1934713408
        %v6970 = vunpack.c.0.s8 %v6969
        %v6971 = vlaneseq
        %v6972 = vshrl.u32 %v6971, 7
        %v6973 = vsub.s32 %v6970, %v6972
        %v6974 = vrot.slane %v6966, %v6973
        %v6976 = vunpack.c.l.s4 1934713408
        %v6977 = vunpack.c.0.s8 %v6976
        %v6978 = vlaneseq
        %v6979 = vshrl.u32 %v6978, 7
        %v6980 = vsub.s32 %v6977, %v6979
        %v6981 = vrot.slane %v6967, %v6980
        %v6982 = vcombine.high %v6958, 0.0
        %v6983 = vcombine.high %v6965, 0.0
        %v6984 = vcombine.high %v6974, 0.0
        %v6985 = vcombine.high %v6981, 0.0
        %v6986 = vcombine.low %v6672, %v6834
        %v6987 = vcombine.high %v6672, %v6834
        %v6989 = vunpack.c.l.s4 1983009808
        %v6990 = vunpack.c.0.s8 %v6989
        %v6991 = vlaneseq
        %v6992 = vshrl.u32 %v6991, 7
        %v6993 = vsub.s32 %v6990, %v6992
        %v6994 = vrot.slane %v6986, %v6993
        %v6996 = vunpack.c.l.s4 1983009808
        %v6997 = vunpack.c.0.s8 %v6996
        %v6998 = vlaneseq
        %v6999 = vshrl.u32 %v6998, 7
        %v7000 = vsub.s32 %v6997, %v6999
        %v7001 = vrot.slane %v6987, %v7000
        %v7002 = vcombine.low %v6753, %v6915
        %v7003 = vcombine.high %v6753, %v6915
        %v7005 = vunpack.c.l.s4 1983009808
        %v7006 = vunpack.c.0.s8 %v7005
        %v7007 = vlaneseq
        %v7008 = vshrl.u32 %v7007, 7
        %v7009 = vsub.s32 %v7006, %v7008
        %v7010 = vrot.slane %v7002, %v7009
        %v7012 = vunpack.c.l.s4 1983009808
        %v7013 = vunpack.c.0.s8 %v7012
        %v7014 = vlaneseq
        %v7015 = vshrl.u32 %v7014, 7
        %v7016 = vsub.s32 %v7013, %v7015
        %v7017 = vrot.slane %v7003, %v7016
        %v7018 = vcombine.low %v6994, %v7010
        %v7019 = vcombine.high %v6994, %v7010
        %v7021 = vunpack.c.l.s4 1934713408
        %v7022 = vunpack.c.0.s8 %v7021
        %v7023 = vlaneseq
        %v7024 = vshrl.u32 %v7023, 7
        %v7025 = vsub.s32 %v7022, %v7024
        %v7026 = vrot.slane %v7018, %v7025
        %v7028 = vunpack.c.l.s4 1934713408
        %v7029 = vunpack.c.0.s8 %v7028
        %v7030 = vlaneseq
        %v7031 = vshrl.u32 %v7030, 7
        %v7032 = vsub.s32 %v7029, %v7031
        %v7033 = vrot.slane %v7019, %v7032
        %v7034 = vcombine.low %v7001, %v7017
        %v7035 = vcombine.high %v7001, %v7017
        %v7037 = vunpack.c.l.s4 1934713408
        %v7038 = vunpack.c.0.s8 %v7037
        %v7039 = vlaneseq
        %v7040 = vshrl.u32 %v7039, 7
        %v7041 = vsub.s32 %v7038, %v7040
        %v7042 = vrot.slane %v7034, %v7041
        %v7044 = vunpack.c.l.s4 1934713408
        %v7045 = vunpack.c.0.s8 %v7044
        %v7046 = vlaneseq
        %v7047 = vshrl.u32 %v7046, 7
        %v7048 = vsub.s32 %v7045, %v7047
        %v7049 = vrot.slane %v7035, %v7048
        %v7050 = vcombine.high %v7026, 0.0
        %v7051 = vcombine.high %v7033, 0.0
        %v7052 = vcombine.high %v7042, 0.0
        %v7053 = vcombine.high %v7049, 0.0
        %v7054 = vcombine.low %v6958, %v6965
        %v7056 = vunpack.c.l.s4 1983009808
        %v7057 = vunpack.c.0.s8 %v7056
        %v7058 = vlaneseq
        %v7059 = vshrl.u32 %v7058, 7
        %v7060 = vsub.s32 %v7057, %v7059
        %v7061 = vrot.slane %v7054, %v7060
        %v7062 = vcombine.low %v6982, %v6983
        %v7064 = vunpack.c.l.s4 1983009808
        %v7065 = vunpack.c.0.s8 %v7064
        %v7066 = vlaneseq
        %v7067 = vshrl.u32 %v7066, 7
        %v7068 = vsub.s32 %v7065, %v7067
        %v7069 = vrot.slane %v7062, %v7068
        %v7070 = vcombine.low %v6974, %v6981
        %v7072 = vunpack.c.l.s4 1983009808
        %v7073 = vunpack.c.0.s8 %v7072
        %v7074 = vlaneseq
        %v7075 = vshrl.u32 %v7074, 7
        %v7076 = vsub.s32 %v7073, %v7075
        %v7077 = vrot.slane %v7070, %v7076
        %v7078 = vcombine.low %v6984, %v6985
        %v7080 = vunpack.c.l.s4 1983009808
        %v7081 = vunpack.c.0.s8 %v7080
        %v7082 = vlaneseq
        %v7083 = vshrl.u32 %v7082, 7
        %v7084 = vsub.s32 %v7081, %v7083
        %v7085 = vrot.slane %v7078, %v7084
        %v7086 = vcombine.low %v7061, %v7069
        %v7087 = vcombine.high %v7061, %v7069
        %v7089 = vunpack.c.l.s4 1934713408
        %v7090 = vunpack.c.0.s8 %v7089
        %v7091 = vlaneseq
        %v7092 = vshrl.u32 %v7091, 7
        %v7093 = vsub.s32 %v7090, %v7092
        %v7094 = vrot.slane %v7086, %v7093
        %v7096 = vunpack.c.l.s4 1934713408
        %v7097 = vunpack.c.0.s8 %v7096
        %v7098 = vlaneseq
        %v7099 = vshrl.u32 %v7098, 7
        %v7100 = vsub.s32 %v7097, %v7099
        %v7101 = vrot.slane %v7087, %v7100
        %v7102 = vcombine.low %v7077, %v7085
        %v7103 = vcombine.high %v7077, %v7085
        %v7105 = vunpack.c.l.s4 1934713408
        %v7106 = vunpack.c.0.s8 %v7105
        %v7107 = vlaneseq
        %v7108 = vshrl.u32 %v7107, 7
        %v7109 = vsub.s32 %v7106, %v7108
        %v7110 = vrot.slane %v7102, %v7109
        %v7112 = vunpack.c.l.s4 1934713408
        %v7113 = vunpack.c.0.s8 %v7112
        %v7114 = vlaneseq
        %v7115 = vshrl.u32 %v7114, 7
        %v7116 = vsub.s32 %v7113, %v7115
        %v7117 = vrot.slane %v7103, %v7116
        %v7118 = vcombine.low %v7094, %v7110
        %v7119 = vcombine.high %v7094, %v7110
        %v7120 = vcombine.low %v7101, %v7117
        %v7121 = vcombine.high %v7101, %v7117
        %v7122 = vcombine.low %v7026, %v7033
        %v7124 = vunpack.c.l.s4 1983009808
        %v7125 = vunpack.c.0.s8 %v7124
        %v7126 = vlaneseq
        %v7127 = vshrl.u32 %v7126, 7
        %v7128 = vsub.s32 %v7125, %v7127
        %v7129 = vrot.slane %v7122, %v7128
        %v7130 = vcombine.low %v7050, %v7051
        %v7132 = vunpack.c.l.s4 1983009808
        %v7133 = vunpack.c.0.s8 %v7132
        %v7134 = vlaneseq
        %v7135 = vshrl.u32 %v7134, 7
        %v7136 = vsub.s32 %v7133, %v7135
        %v7137 = vrot.slane %v7130, %v7136
        %v7138 = vcombine.low %v7042, %v7049
        %v7140 = vunpack.c.l.s4 1983009808
        %v7141 = vunpack.c.0.s8 %v7140
        %v7142 = vlaneseq
        %v7143 = vshrl.u32 %v7142, 7
        %v7144 = vsub.s32 %v7141, %v7143
        %v7145 = vrot.slane %v7138, %v7144
        %v7146 = vcombine.low %v7052, %v7053
        %v7148 = vunpack.c.l.s4 1983009808
        %v7149 = vunpack.c.0.s8 %v7148
        %v7150 = vlaneseq
        %v7151 = vshrl.u32 %v7150, 7
        %v7152 = vsub.s32 %v7149, %v7151
        %v7153 = vrot.slane %v7146, %v7152
        %v7154 = vcombine.low %v7129, %v7137
        %v7155 = vcombine.high %v7129, %v7137
        %v7157 = vunpack.c.l.s4 1934713408
        %v7158 = vunpack.c.0.s8 %v7157
        %v7159 = vlaneseq
        %v7160 = vshrl.u32 %v7159, 7
        %v7161 = vsub.s32 %v7158, %v7160
        %v7162 = vrot.slane %v7154, %v7161
        %v7164 = vunpack.c.l.s4 1934713408
        %v7165 = vunpack.c.0.s8 %v7164
        %v7166 = vlaneseq
        %v7167 = vshrl.u32 %v7166, 7
        %v7168 = vsub.s32 %v7165, %v7167
        %v7169 = vrot.slane %v7155, %v7168
        %v7170 = vcombine.low %v7145, %v7153
        %v7171 = vcombine.high %v7145, %v7153
        %v7173 = vunpack.c.l.s4 1934713408
        %v7174 = vunpack.c.0.s8 %v7173
        %v7175 = vlaneseq
        %v7176 = vshrl.u32 %v7175, 7
        %v7177 = vsub.s32 %v7174, %v7176
        %v7178 = vrot.slane %v7170, %v7177
        %v7180 = vunpack.c.l.s4 1934713408
        %v7181 = vunpack.c.0.s8 %v7180
        %v7182 = vlaneseq
        %v7183 = vshrl.u32 %v7182, 7
        %v7184 = vsub.s32 %v7181, %v7183
        %v7185 = vrot.slane %v7171, %v7184
        %v7186 = vcombine.low %v7162, %v7178
        %v7187 = vcombine.high %v7162, %v7178
        %v7188 = vcombine.low %v7169, %v7185
        %v7189 = vcombine.high %v7169, %v7185
        %7192 = vrot.lane.b32.xlu0 %v7119, 8
        %v7193 = vpop.permute.xlu0 %7192
        %7194 = vrot.lane.b32.xlu0 %v7187, 8
        %v7195 = vpop.permute.xlu0 %7194
        %7200 = vrot.lane.b32.xlu0 %v7120, 16
        %v7201 = vpop.permute.xlu0 %7200
        %7202 = vrot.lane.b32.xlu0 %v7188, 16
        %v7203 = vpop.permute.xlu0 %7202
        %7208 = vrot.lane.b32.xlu0 %v7121, 24
        %v7209 = vpop.permute.xlu0 %7208
        %7210 = vrot.lane.b32.xlu0 %v7189, 24
        %v7211 = vpop.permute.xlu0 %7210
        %v7214 = vsel %vm1417, %v7118, %v7193
        %v7215 = vsel %vm1417, %v7186, %v7195
        %v7216 = vsel %vm1766, %v7214, %v7201
        %v7217 = vsel %vm1766, %v7215, %v7203
        %v7218 = vsel %vm2479, %v7216, %v7209
        %v7219 = vsel %vm2479, %v7217, %v7211
        %v7221 = vsel %vm370, %v7218, 0
        %v7224 = vsel %vm370, %v7219, 0
        %7226 = vmatprep.subr.mxu0 0.0
        %7227 = vmatpush1.msra.mxu0 0.0
        %7228 = vmatprep.subr.mxu0 0.0
        %7229 = vmatpush1.msra.mxu0 0.0
        %7230 = vmatprep.subr.mxu0 0.0
        %7231 = vmatpush1.msra.mxu0 0.0
        %7232 = vmatprep.subr.mxu0 0.0
        %7233 = vmatpush1.msra.mxu0 0.0
        %7234 = vmatprep.subr.mxu0 0.0
        %7235 = vmatpush1.msra.mxu0 0.0
        %7236 = vmatprep.subr.mxu0 0.0
        %7237 = vmatpush1.msra.mxu0 0.0
        %7238 = vmatprep.subr.mxu0 0.0
        %7239 = vmatpush1.msra.mxu0 0.0
        %7240 = vmatprep.subr.mxu0 0.0
        %7241 = vmatpush1.msra.mxu0 0.0
        %7242 = vmatprep.subr.mxu0 0.0
        %7243 = vmatpush1.msra.mxu0 0.0
        %7244 = vmatprep.subr.mxu0 0.0
        %7245 = vmatpush1.msra.mxu0 0.0
        %7246 = vmatprep.subr.mxu0 0.0
        %7247 = vmatpush1.msra.mxu0 0.0
        %7248 = vmatprep.subr.mxu0 0.0
        %7249 = vmatpush1.msra.mxu0 0.0
        %7250 = vmatprep.subr.mxu0 0.0
        %7251 = vmatpush1.msra.mxu0 %v5110
        %7252 = vmatprep.subr.mxu0 0.0
        %7253 = vmatpush1.msra.mxu0 %v5109
        %7254 = vmatprep.subr.mxu0 0.0
        %7255 = vmatpush1.msra.mxu0 %v5108
        %7256 = vmatprep.subr.mxu0 0.0
        %7257 = vmatpush1.msra.mxu0 %v5107
        %7258 = vmatprep.subr.mxu0 0.0
        %7259 = vmatpush2.msra.mxu0 0.0
        %7260 = vmatprep.subr.mxu0 0.0
        %7261 = vmatpush2.msra.mxu0 0.0
        %7262 = vmatprep.subr.mxu0 0.0
        %7263 = vmatpush2.msra.mxu0 0.0
        %7264 = vmatprep.subr.mxu0 0.0
        %7265 = vmatpush2.msra.mxu0 0.0
        %7266 = vmatprep.subr.mxu0 0.0
        %7267 = vmatpush2.msra.mxu0 0.0
        %7268 = vmatprep.subr.mxu0 0.0
        %7269 = vmatpush2.msra.mxu0 0.0
        %7270 = vmatprep.subr.mxu0 0.0
        %7271 = vmatpush2.msra.mxu0 0.0
        %7272 = vmatprep.subr.mxu0 0.0
        %7273 = vmatpush2.msra.mxu0 0.0
        %7274 = vmatprep.subr.mxu0 0.0
        %7275 = vmatpush2.msra.mxu0 0.0
        %7276 = vmatprep.subr.mxu0 0.0
        %7277 = vmatpush2.msra.mxu0 0.0
        %7278 = vmatprep.subr.mxu0 0.0
        %7279 = vmatpush2.msra.mxu0 0.0
        %7280 = vmatprep.subr.mxu0 0.0
        %7281 = vmatpush2.msra.mxu0 0.0
        %7282 = vmatprep.subr.mxu0 0.0
        %7283 = vmatpush2.msra.mxu0 0.0
        %7284 = vmatprep.subr.mxu0 0.0
        %7285 = vmatpush2.msra.mxu0 0.0
        %7286 = vmatprep.subr.mxu0 0.0
        %7287 = vmatpush2.msra.mxu0 0.0
        %7288 = vmatprep.subr.mxu0 0.0
        %7289 = vmatpush2.msra.mxu0 0.0
        %7290 = vmatprep.mubr.f32.mxu0 0.0
        %7291 = vmatmul.mubr.f32.gmra.mxu0 %v7221
        %v7292 = vpop.f32.mrf.mxu0
        %v7293 = vadd.f32 0.0, %v7292
        %v7294 = vpop.f32.mrf.mxu0
        %7295 = vmatprep.mubr.f32.mxu0 0.0
        %7296 = vmatmul.mubr.f32.gmra.mxu0 %v7224
        %v7297 = vpop.f32.mrf.mxu0
        %v7298 = vadd.f32 0.0, %v7297
        %v7299 = vpop.f32.mrf.mxu0
        %7300 = vdwg.mxu0
        %v7301 = vadd.f32 %v5095, %v7293
        %v7302 = vadd.f32 %v5096, %v7298
        %v7303 = vlaneseq
        %v7304 = vshrl.u32 %v7303, 7
        %v7305 = vsub.s32 0, %v7304
        %v7306 = vrot.slane %v5111, %v7305
        %v7307 = vadd.f32 %v7301, %v7306
        %v7308 = vadd.f32 %v7302, %v7306
        %v7309 = vsel %vm370, %v7307, 0.0
        %7310 = vadd.xlane.f32.xlu0 %v7309
        %v7311 = vpop.xlane.xlu0 %7310
        %v7312 = vsel %vm370, %v7308, 0.0
        %7313 = vadd.xlane.f32.xlu0 %v7312
        %v7314 = vpop.xlane.xlu0 %7313
        %v7315 = vmul.f32 %v7311, %v2577
        %v7316 = vmul.f32 %v7314, %v2577
        %v7317 = vsub.f32 %v7307, %v7315
        %v7318 = vsub.f32 %v7308, %v7316
        %v7319 = vmul.f32 %v7317, %v7317
        %v7320 = vmul.f32 %v7318, %v7318
        %v7321 = vsel %vm370, %v7319, 0.0
        %7322 = vadd.xlane.f32.xlu0 %v7321
        %v7323 = vpop.xlane.xlu0 %7322
        %v7324 = vsel %vm370, %v7320, 0.0
        %7325 = vadd.xlane.f32.xlu0 %v7324
        %v7326 = vpop.xlane.xlu0 %7325
        %v7327 = vmul.f32 %v7323, %v2577
        %v7328 = vmul.f32 %v7326, %v2577
        %v7329 = vadd.f32 %v7327, 1e-05
        %v7330 = vadd.f32 %v7328, 1e-05
        %v7331 = vrsqrt.pop %v7329
        %v7332 = vrsqrt.pop %v7330
        %v7333 = vmul.f32 %v7317, %v7331
        %v7334 = vmul.f32 %v7318, %v7332
        %v7335 = vlaneseq
        %v7336 = vshrl.u32 %v7335, 7
        %v7337 = vsub.s32 0, %v7336
        %v7338 = vrot.slane %v5112, %v7337
        %v7339 = vmul.f32 %v7333, %v7338
        %v7340 = vmul.f32 %v7334, %v7338
        %v7341 = vlaneseq
        %v7342 = vshrl.u32 %v7341, 7
        %v7343 = vsub.s32 0, %v7342
        %v7344 = vrot.slane %v5113, %v7343
        %v7345 = vadd.f32 %v7339, %v7344
        %v7346 = vadd.f32 %v7340, %v7344
        %v7347 = vld [vmem:[%s232 + $0x218] sm:$0xff]
        %v7348 = vld [vmem:[%s232 + $0x220] sm:$0xff]
        %v7349 = vld [vmem:[%s232 + $0x228] sm:$0xff]
        %v7350 = vld [vmem:[%s232 + $0x230] sm:$0xff]
        %v7351 = vld [vmem:[%s232 + $0x278] sm:$0x1]
        %v7352 = vld [vmem:[%s232 + $0x238] sm:$0xff]
        %v7353 = vld [vmem:[%s232 + $0x240] sm:$0xff]
        %v7354 = vld [vmem:[%s232 + $0x248] sm:$0xff]
        %v7355 = vld [vmem:[%s232 + $0x250] sm:$0xff]
        %v7356 = vld [vmem:[%s232 + $0x280] sm:$0x1]
        %v7357 = vld [vmem:[%s232 + $0x258] sm:$0xff]
        %v7358 = vld [vmem:[%s232 + $0x260] sm:$0xff]
        %v7359 = vld [vmem:[%s232 + $0x268] sm:$0xff]
        %v7360 = vld [vmem:[%s232 + $0x270] sm:$0xff]
        %v7361 = vld [vmem:[%s232 + $0x288] sm:$0x1]
        %v7362 = vld [vmem:[%s232 + $0x290] sm:$0x1]
        %v7363 = vld [vmem:[%s232 + $0x298] sm:$0x1]
        %v7364 = vlaneseq
        %v7365 = vshrl.u32 %v7364, 7
        %v7366 = vsub.s32 0, %v7365
        %v7367 = vrot.slane %v7351, %v7366
        %v7369 = vsel %vm370, %v7345, 0
        %v7372 = vsel %vm370, %v7346, 0
        %7374 = vmatprep.subr.mxu0 0.0
        %7375 = vmatpush1.msra.mxu0 0.0
        %7376 = vmatprep.subr.mxu0 0.0
        %7377 = vmatpush1.msra.mxu0 0.0
        %7378 = vmatprep.subr.mxu0 0.0
        %7379 = vmatpush1.msra.mxu0 0.0
        %7380 = vmatprep.subr.mxu0 0.0
        %7381 = vmatpush1.msra.mxu0 0.0
        %7382 = vmatprep.subr.mxu0 0.0
        %7383 = vmatpush1.msra.mxu0 0.0
        %7384 = vmatprep.subr.mxu0 0.0
        %7385 = vmatpush1.msra.mxu0 0.0
        %7386 = vmatprep.subr.mxu0 0.0
        %7387 = vmatpush1.msra.mxu0 0.0
        %7388 = vmatprep.subr.mxu0 0.0
        %7389 = vmatpush1.msra.mxu0 0.0
        %7390 = vmatprep.subr.mxu0 0.0
        %7391 = vmatpush1.msra.mxu0 0.0
        %7392 = vmatprep.subr.mxu0 0.0
        %7393 = vmatpush1.msra.mxu0 0.0
        %7394 = vmatprep.subr.mxu0 0.0
        %7395 = vmatpush1.msra.mxu0 0.0
        %7396 = vmatprep.subr.mxu0 0.0
        %7397 = vmatpush1.msra.mxu0 0.0
        %7398 = vmatprep.subr.mxu0 0.0
        %7399 = vmatpush1.msra.mxu0 %v7350
        %7400 = vmatprep.subr.mxu0 0.0
        %7401 = vmatpush1.msra.mxu0 %v7349
        %7402 = vmatprep.subr.mxu0 0.0
        %7403 = vmatpush1.msra.mxu0 %v7348
        %7404 = vmatprep.subr.mxu0 0.0
        %7405 = vmatpush1.msra.mxu0 %v7347
        %7406 = vmatprep.subr.mxu0 0.0
        %7407 = vmatpush2.msra.mxu0 0.0
        %7408 = vmatprep.subr.mxu0 0.0
        %7409 = vmatpush2.msra.mxu0 0.0
        %7410 = vmatprep.subr.mxu0 0.0
        %7411 = vmatpush2.msra.mxu0 0.0
        %7412 = vmatprep.subr.mxu0 0.0
        %7413 = vmatpush2.msra.mxu0 0.0
        %7414 = vmatprep.subr.mxu0 0.0
        %7415 = vmatpush2.msra.mxu0 0.0
        %7416 = vmatprep.subr.mxu0 0.0
        %7417 = vmatpush2.msra.mxu0 0.0
        %7418 = vmatprep.subr.mxu0 0.0
        %7419 = vmatpush2.msra.mxu0 0.0
        %7420 = vmatprep.subr.mxu0 0.0
        %7421 = vmatpush2.msra.mxu0 0.0
        %7422 = vmatprep.subr.mxu0 0.0
        %7423 = vmatpush2.msra.mxu0 0.0
        %7424 = vmatprep.subr.mxu0 0.0
        %7425 = vmatpush2.msra.mxu0 0.0
        %7426 = vmatprep.subr.mxu0 0.0
        %7427 = vmatpush2.msra.mxu0 0.0
        %7428 = vmatprep.subr.mxu0 0.0
        %7429 = vmatpush2.msra.mxu0 0.0
        %7430 = vmatprep.subr.mxu0 0.0
        %7431 = vmatpush2.msra.mxu0 0.0
        %7432 = vmatprep.subr.mxu0 0.0
        %7433 = vmatpush2.msra.mxu0 0.0
        %7434 = vmatprep.subr.mxu0 0.0
        %7435 = vmatpush2.msra.mxu0 0.0
        %7436 = vmatprep.subr.mxu0 0.0
        %7437 = vmatpush2.msra.mxu0 0.0
        %7438 = vmatprep.mubr.f32.mxu0 0.0
        %7439 = vmatmul.mubr.f32.gmra.mxu0 %v7369
        %v7440 = vpop.f32.mrf.mxu0
        %v7441 = vadd.f32 %v7367, %v7440
        %v7442 = vpop.f32.mrf.mxu0
        %7443 = vmatprep.mubr.f32.mxu0 0.0
        %7444 = vmatmul.mubr.f32.gmra.mxu0 %v7372
        %v7445 = vpop.f32.mrf.mxu0
        %v7446 = vadd.f32 %v7367, %v7445
        %v7447 = vpop.f32.mrf.mxu0
        %7448 = vdwg.mxu0
        %v7449 = vlaneseq
        %v7450 = vshrl.u32 %v7449, 7
        %v7451 = vsub.s32 0, %v7450
        %v7452 = vrot.slane %v7356, %v7451
        %7453 = vmatprep.subr.mxu0 0.0
        %7454 = vmatpush1.msra.mxu0 0.0
        %7455 = vmatprep.subr.mxu0 0.0
        %7456 = vmatpush1.msra.mxu0 0.0
        %7457 = vmatprep.subr.mxu0 0.0
        %7458 = vmatpush1.msra.mxu0 0.0
        %7459 = vmatprep.subr.mxu0 0.0
        %7460 = vmatpush1.msra.mxu0 0.0
        %7461 = vmatprep.subr.mxu0 0.0
        %7462 = vmatpush1.msra.mxu0 0.0
        %7463 = vmatprep.subr.mxu0 0.0
        %7464 = vmatpush1.msra.mxu0 0.0
        %7465 = vmatprep.subr.mxu0 0.0
        %7466 = vmatpush1.msra.mxu0 0.0
        %7467 = vmatprep.subr.mxu0 0.0
        %7468 = vmatpush1.msra.mxu0 0.0
        %7469 = vmatprep.subr.mxu0 0.0
        %7470 = vmatpush1.msra.mxu0 0.0
        %7471 = vmatprep.subr.mxu0 0.0
        %7472 = vmatpush1.msra.mxu0 0.0
        %7473 = vmatprep.subr.mxu0 0.0
        %7474 = vmatpush1.msra.mxu0 0.0
        %7475 = vmatprep.subr.mxu0 0.0
        %7476 = vmatpush1.msra.mxu0 0.0
        %7477 = vmatprep.subr.mxu0 0.0
        %7478 = vmatpush1.msra.mxu0 %v7355
        %7479 = vmatprep.subr.mxu0 0.0
        %7480 = vmatpush1.msra.mxu0 %v7354
        %7481 = vmatprep.subr.mxu0 0.0
        %7482 = vmatpush1.msra.mxu0 %v7353
        %7483 = vmatprep.subr.mxu0 0.0
        %7484 = vmatpush1.msra.mxu0 %v7352
        %7485 = vmatprep.subr.mxu0 0.0
        %7486 = vmatpush2.msra.mxu0 0.0
        %7487 = vmatprep.subr.mxu0 0.0
        %7488 = vmatpush2.msra.mxu0 0.0
        %7489 = vmatprep.subr.mxu0 0.0
        %7490 = vmatpush2.msra.mxu0 0.0
        %7491 = vmatprep.subr.mxu0 0.0
        %7492 = vmatpush2.msra.mxu0 0.0
        %7493 = vmatprep.subr.mxu0 0.0
        %7494 = vmatpush2.msra.mxu0 0.0
        %7495 = vmatprep.subr.mxu0 0.0
        %7496 = vmatpush2.msra.mxu0 0.0
        %7497 = vmatprep.subr.mxu0 0.0
        %7498 = vmatpush2.msra.mxu0 0.0
        %7499 = vmatprep.subr.mxu0 0.0
        %7500 = vmatpush2.msra.mxu0 0.0
        %7501 = vmatprep.subr.mxu0 0.0
        %7502 = vmatpush2.msra.mxu0 0.0
        %7503 = vmatprep.subr.mxu0 0.0
        %7504 = vmatpush2.msra.mxu0 0.0
        %7505 = vmatprep.subr.mxu0 0.0
        %7506 = vmatpush2.msra.mxu0 0.0
        %7507 = vmatprep.subr.mxu0 0.0
        %7508 = vmatpush2.msra.mxu0 0.0
        %7509 = vmatprep.subr.mxu0 0.0
        %7510 = vmatpush2.msra.mxu0 0.0
        %7511 = vmatprep.subr.mxu0 0.0
        %7512 = vmatpush2.msra.mxu0 0.0
        %7513 = vmatprep.subr.mxu0 0.0
        %7514 = vmatpush2.msra.mxu0 0.0
        %7515 = vmatprep.subr.mxu0 0.0
        %7516 = vmatpush2.msra.mxu0 0.0
        %7517 = vmatprep.mubr.f32.mxu0 0.0
        %7518 = vmatmul.mubr.f32.gmra.mxu0 %v2717
        %v7519 = vpop.f32.mrf.mxu0
        %v7520 = vadd.f32 %v7452, %v7519
        %v7521 = vpop.f32.mrf.mxu0
        %7522 = vmatprep.mubr.f32.mxu0 0.0
        %7523 = vmatmul.mubr.f32.gmra.mxu0 %v2720
        %v7524 = vpop.f32.mrf.mxu0
        %v7525 = vadd.f32 %v7452, %v7524
        %v7526 = vpop.f32.mrf.mxu0
        %7527 = vdwg.mxu0
        %7530 = vrot.lane.b32.xlu0 %v7441, 120
        %v7531 = vpop.permute.xlu0 %7530
        %7532 = vrot.lane.b32.xlu0 %v7446, 120
        %v7533 = vpop.permute.xlu0 %7532
        %7536 = vrot.lane.b32.xlu0 %v7441, 112
        %v7537 = vpop.permute.xlu0 %7536
        %7538 = vrot.lane.b32.xlu0 %v7446, 112
        %v7539 = vpop.permute.xlu0 %7538
        %7542 = vrot.lane.b32.xlu0 %v7441, 104
        %v7543 = vpop.permute.xlu0 %7542
        %7544 = vrot.lane.b32.xlu0 %v7446, 104
        %v7545 = vpop.permute.xlu0 %7544
        %v7548 = vcombine.low %v7441, %v7537
        %v7549 = vcombine.high %v7441, %v7537
        %v7551 = vunpack.c.l.s4 1983009808
        %v7552 = vunpack.c.0.s8 %v7551
        %v7553 = vlaneseq
        %v7554 = vshrl.u32 %v7553, 7
        %v7555 = vsub.s32 %v7552, %v7554
        %v7556 = vrot.slane %v7548, %v7555
        %v7558 = vunpack.c.l.s4 1983009808
        %v7559 = vunpack.c.0.s8 %v7558
        %v7560 = vlaneseq
        %v7561 = vshrl.u32 %v7560, 7
        %v7562 = vsub.s32 %v7559, %v7561
        %v7563 = vrot.slane %v7549, %v7562
        %v7564 = vcombine.low %v7531, %v7543
        %v7565 = vcombine.high %v7531, %v7543
        %v7567 = vunpack.c.l.s4 1983009808
        %v7568 = vunpack.c.0.s8 %v7567
        %v7569 = vlaneseq
        %v7570 = vshrl.u32 %v7569, 7
        %v7571 = vsub.s32 %v7568, %v7570
        %v7572 = vrot.slane %v7564, %v7571
        %v7574 = vunpack.c.l.s4 1983009808
        %v7575 = vunpack.c.0.s8 %v7574
        %v7576 = vlaneseq
        %v7577 = vshrl.u32 %v7576, 7
        %v7578 = vsub.s32 %v7575, %v7577
        %v7579 = vrot.slane %v7565, %v7578
        %v7580 = vcombine.low %v7556, %v7572
        %v7581 = vcombine.high %v7556, %v7572
        %v7583 = vunpack.c.l.s4 1934713408
        %v7584 = vunpack.c.0.s8 %v7583
        %v7585 = vlaneseq
        %v7586 = vshrl.u32 %v7585, 7
        %v7587 = vsub.s32 %v7584, %v7586
        %v7588 = vrot.slane %v7580, %v7587
        %v7590 = vunpack.c.l.s4 1934713408
        %v7591 = vunpack.c.0.s8 %v7590
        %v7592 = vlaneseq
        %v7593 = vshrl.u32 %v7592, 7
        %v7594 = vsub.s32 %v7591, %v7593
        %v7595 = vrot.slane %v7581, %v7594
        %v7596 = vcombine.low %v7563, %v7579
        %v7597 = vcombine.high %v7563, %v7579
        %v7599 = vunpack.c.l.s4 1934713408
        %v7600 = vunpack.c.0.s8 %v7599
        %v7601 = vlaneseq
        %v7602 = vshrl.u32 %v7601, 7
        %v7603 = vsub.s32 %v7600, %v7602
        %v7604 = vrot.slane %v7596, %v7603
        %v7606 = vunpack.c.l.s4 1934713408
        %v7607 = vunpack.c.0.s8 %v7606
        %v7608 = vlaneseq
        %v7609 = vshrl.u32 %v7608, 7
        %v7610 = vsub.s32 %v7607, %v7609
        %v7611 = vrot.slane %v7597, %v7610
        %v7612 = vcombine.high %v7588, 0.0
        %v7613 = vcombine.high %v7595, 0.0
        %v7614 = vcombine.high %v7604, 0.0
        %v7615 = vcombine.high %v7611, 0.0
        %v7616 = vcombine.low %v7446, %v7539
        %v7617 = vcombine.high %v7446, %v7539
        %v7619 = vunpack.c.l.s4 1983009808
        %v7620 = vunpack.c.0.s8 %v7619
        %v7621 = vlaneseq
        %v7622 = vshrl.u32 %v7621, 7
        %v7623 = vsub.s32 %v7620, %v7622
        %v7624 = vrot.slane %v7616, %v7623
        %v7626 = vunpack.c.l.s4 1983009808
        %v7627 = vunpack.c.0.s8 %v7626
        %v7628 = vlaneseq
        %v7629 = vshrl.u32 %v7628, 7
        %v7630 = vsub.s32 %v7627, %v7629
        %v7631 = vrot.slane %v7617, %v7630
        %v7632 = vcombine.low %v7533, %v7545
        %v7633 = vcombine.high %v7533, %v7545
        %v7635 = vunpack.c.l.s4 1983009808
        %v7636 = vunpack.c.0.s8 %v7635
        %v7637 = vlaneseq
        %v7638 = vshrl.u32 %v7637, 7
        %v7639 = vsub.s32 %v7636, %v7638
        %v7640 = vrot.slane %v7632, %v7639
        %v7642 = vunpack.c.l.s4 1983009808
        %v7643 = vunpack.c.0.s8 %v7642
        %v7644 = vlaneseq
        %v7645 = vshrl.u32 %v7644, 7
        %v7646 = vsub.s32 %v7643, %v7645
        %v7647 = vrot.slane %v7633, %v7646
        %v7648 = vcombine.low %v7624, %v7640
        %v7649 = vcombine.high %v7624, %v7640
        %v7651 = vunpack.c.l.s4 1934713408
        %v7652 = vunpack.c.0.s8 %v7651
        %v7653 = vlaneseq
        %v7654 = vshrl.u32 %v7653, 7
        %v7655 = vsub.s32 %v7652, %v7654
        %v7656 = vrot.slane %v7648, %v7655
        %v7658 = vunpack.c.l.s4 1934713408
        %v7659 = vunpack.c.0.s8 %v7658
        %v7660 = vlaneseq
        %v7661 = vshrl.u32 %v7660, 7
        %v7662 = vsub.s32 %v7659, %v7661
        %v7663 = vrot.slane %v7649, %v7662
        %v7664 = vcombine.low %v7631, %v7647
        %v7665 = vcombine.high %v7631, %v7647
        %v7667 = vunpack.c.l.s4 1934713408
        %v7668 = vunpack.c.0.s8 %v7667
        %v7669 = vlaneseq
        %v7670 = vshrl.u32 %v7669, 7
        %v7671 = vsub.s32 %v7668, %v7670
        %v7672 = vrot.slane %v7664, %v7671
        %v7674 = vunpack.c.l.s4 1934713408
        %v7675 = vunpack.c.0.s8 %v7674
        %v7676 = vlaneseq
        %v7677 = vshrl.u32 %v7676, 7
        %v7678 = vsub.s32 %v7675, %v7677
        %v7679 = vrot.slane %v7665, %v7678
        %v7680 = vcombine.high %v7656, 0.0
        %v7681 = vcombine.high %v7663, 0.0
        %v7682 = vcombine.high %v7672, 0.0
        %v7683 = vcombine.high %v7679, 0.0
        %v7684 = vcombine.low %v7588, %v7595
        %v7686 = vunpack.c.l.s4 1983009808
        %v7687 = vunpack.c.0.s8 %v7686
        %v7688 = vlaneseq
        %v7689 = vshrl.u32 %v7688, 7
        %v7690 = vsub.s32 %v7687, %v7689
        %v7691 = vrot.slane %v7684, %v7690
        %v7692 = vcombine.low %v7612, %v7613
        %v7694 = vunpack.c.l.s4 1983009808
        %v7695 = vunpack.c.0.s8 %v7694
        %v7696 = vlaneseq
        %v7697 = vshrl.u32 %v7696, 7
        %v7698 = vsub.s32 %v7695, %v7697
        %v7699 = vrot.slane %v7692, %v7698
        %v7700 = vcombine.low %v7604, %v7611
        %v7702 = vunpack.c.l.s4 1983009808
        %v7703 = vunpack.c.0.s8 %v7702
        %v7704 = vlaneseq
        %v7705 = vshrl.u32 %v7704, 7
        %v7706 = vsub.s32 %v7703, %v7705
        %v7707 = vrot.slane %v7700, %v7706
        %v7708 = vcombine.low %v7614, %v7615
        %v7710 = vunpack.c.l.s4 1983009808
        %v7711 = vunpack.c.0.s8 %v7710
        %v7712 = vlaneseq
        %v7713 = vshrl.u32 %v7712, 7
        %v7714 = vsub.s32 %v7711, %v7713
        %v7715 = vrot.slane %v7708, %v7714
        %v7716 = vcombine.low %v7691, %v7699
        %v7717 = vcombine.high %v7691, %v7699
        %v7719 = vunpack.c.l.s4 1934713408
        %v7720 = vunpack.c.0.s8 %v7719
        %v7721 = vlaneseq
        %v7722 = vshrl.u32 %v7721, 7
        %v7723 = vsub.s32 %v7720, %v7722
        %v7724 = vrot.slane %v7716, %v7723
        %v7726 = vunpack.c.l.s4 1934713408
        %v7727 = vunpack.c.0.s8 %v7726
        %v7728 = vlaneseq
        %v7729 = vshrl.u32 %v7728, 7
        %v7730 = vsub.s32 %v7727, %v7729
        %v7731 = vrot.slane %v7717, %v7730
        %v7732 = vcombine.low %v7707, %v7715
        %v7733 = vcombine.high %v7707, %v7715
        %v7735 = vunpack.c.l.s4 1934713408
        %v7736 = vunpack.c.0.s8 %v7735
        %v7737 = vlaneseq
        %v7738 = vshrl.u32 %v7737, 7
        %v7739 = vsub.s32 %v7736, %v7738
        %v7740 = vrot.slane %v7732, %v7739
        %v7742 = vunpack.c.l.s4 1934713408
        %v7743 = vunpack.c.0.s8 %v7742
        %v7744 = vlaneseq
        %v7745 = vshrl.u32 %v7744, 7
        %v7746 = vsub.s32 %v7743, %v7745
        %v7747 = vrot.slane %v7733, %v7746
        %v7748 = vcombine.low %v7724, %v7740
        %v7749 = vcombine.high %v7724, %v7740
        %v7750 = vcombine.low %v7731, %v7747
        %v7751 = vcombine.high %v7731, %v7747
        %v7752 = vcombine.low %v7656, %v7663
        %v7754 = vunpack.c.l.s4 1983009808
        %v7755 = vunpack.c.0.s8 %v7754
        %v7756 = vlaneseq
        %v7757 = vshrl.u32 %v7756, 7
        %v7758 = vsub.s32 %v7755, %v7757
        %v7759 = vrot.slane %v7752, %v7758
        %v7760 = vcombine.low %v7680, %v7681
        %v7762 = vunpack.c.l.s4 1983009808
        %v7763 = vunpack.c.0.s8 %v7762
        %v7764 = vlaneseq
        %v7765 = vshrl.u32 %v7764, 7
        %v7766 = vsub.s32 %v7763, %v7765
        %v7767 = vrot.slane %v7760, %v7766
        %v7768 = vcombine.low %v7672, %v7679
        %v7770 = vunpack.c.l.s4 1983009808
        %v7771 = vunpack.c.0.s8 %v7770
        %v7772 = vlaneseq
        %v7773 = vshrl.u32 %v7772, 7
        %v7774 = vsub.s32 %v7771, %v7773
        %v7775 = vrot.slane %v7768, %v7774
        %v7776 = vcombine.low %v7682, %v7683
        %v7778 = vunpack.c.l.s4 1983009808
        %v7779 = vunpack.c.0.s8 %v7778
        %v7780 = vlaneseq
        %v7781 = vshrl.u32 %v7780, 7
        %v7782 = vsub.s32 %v7779, %v7781
        %v7783 = vrot.slane %v7776, %v7782
        %v7784 = vcombine.low %v7759, %v7767
        %v7785 = vcombine.high %v7759, %v7767
        %v7787 = vunpack.c.l.s4 1934713408
        %v7788 = vunpack.c.0.s8 %v7787
        %v7789 = vlaneseq
        %v7790 = vshrl.u32 %v7789, 7
        %v7791 = vsub.s32 %v7788, %v7790
        %v7792 = vrot.slane %v7784, %v7791
        %v7794 = vunpack.c.l.s4 1934713408
        %v7795 = vunpack.c.0.s8 %v7794
        %v7796 = vlaneseq
        %v7797 = vshrl.u32 %v7796, 7
        %v7798 = vsub.s32 %v7795, %v7797
        %v7799 = vrot.slane %v7785, %v7798
        %v7800 = vcombine.low %v7775, %v7783
        %v7801 = vcombine.high %v7775, %v7783
        %v7803 = vunpack.c.l.s4 1934713408
        %v7804 = vunpack.c.0.s8 %v7803
        %v7805 = vlaneseq
        %v7806 = vshrl.u32 %v7805, 7
        %v7807 = vsub.s32 %v7804, %v7806
        %v7808 = vrot.slane %v7800, %v7807
        %v7810 = vunpack.c.l.s4 1934713408
        %v7811 = vunpack.c.0.s8 %v7810
        %v7812 = vlaneseq
        %v7813 = vshrl.u32 %v7812, 7
        %v7814 = vsub.s32 %v7811, %v7813
        %v7815 = vrot.slane %v7801, %v7814
        %v7816 = vcombine.low %v7792, %v7808
        %v7817 = vcombine.high %v7792, %v7808
        %v7818 = vcombine.low %v7799, %v7815
        %v7819 = vcombine.high %v7799, %v7815
        %7822 = vrot.lane.b32.xlu0 %v7520, 120
        %v7823 = vpop.permute.xlu0 %7822
        %7824 = vrot.lane.b32.xlu0 %v7525, 120
        %v7825 = vpop.permute.xlu0 %7824
        %7828 = vrot.lane.b32.xlu0 %v7520, 112
        %v7829 = vpop.permute.xlu0 %7828
        %7830 = vrot.lane.b32.xlu0 %v7525, 112
        %v7831 = vpop.permute.xlu0 %7830
        %7834 = vrot.lane.b32.xlu0 %v7520, 104
        %v7835 = vpop.permute.xlu0 %7834
        %7836 = vrot.lane.b32.xlu0 %v7525, 104
        %v7837 = vpop.permute.xlu0 %7836
        %v7840 = vcombine.low %v7520, %v7829
        %v7841 = vcombine.high %v7520, %v7829
        %v7843 = vunpack.c.l.s4 1983009808
        %v7844 = vunpack.c.0.s8 %v7843
        %v7845 = vlaneseq
        %v7846 = vshrl.u32 %v7845, 7
        %v7847 = vsub.s32 %v7844, %v7846
        %v7848 = vrot.slane %v7840, %v7847
        %v7850 = vunpack.c.l.s4 1983009808
        %v7851 = vunpack.c.0.s8 %v7850
        %v7852 = vlaneseq
        %v7853 = vshrl.u32 %v7852, 7
        %v7854 = vsub.s32 %v7851, %v7853
        %v7855 = vrot.slane %v7841, %v7854
        %v7856 = vcombine.low %v7823, %v7835
        %v7857 = vcombine.high %v7823, %v7835
        %v7859 = vunpack.c.l.s4 1983009808
        %v7860 = vunpack.c.0.s8 %v7859
        %v7861 = vlaneseq
        %v7862 = vshrl.u32 %v7861, 7
        %v7863 = vsub.s32 %v7860, %v7862
        %v7864 = vrot.slane %v7856, %v7863
        %v7866 = vunpack.c.l.s4 1983009808
        %v7867 = vunpack.c.0.s8 %v7866
        %v7868 = vlaneseq
        %v7869 = vshrl.u32 %v7868, 7
        %v7870 = vsub.s32 %v7867, %v7869
        %v7871 = vrot.slane %v7857, %v7870
        %v7872 = vcombine.low %v7848, %v7864
        %v7873 = vcombine.high %v7848, %v7864
        %v7875 = vunpack.c.l.s4 1934713408
        %v7876 = vunpack.c.0.s8 %v7875
        %v7877 = vlaneseq
        %v7878 = vshrl.u32 %v7877, 7
        %v7879 = vsub.s32 %v7876, %v7878
        %v7880 = vrot.slane %v7872, %v7879
        %v7882 = vunpack.c.l.s4 1934713408
        %v7883 = vunpack.c.0.s8 %v7882
        %v7884 = vlaneseq
        %v7885 = vshrl.u32 %v7884, 7
        %v7886 = vsub.s32 %v7883, %v7885
        %v7887 = vrot.slane %v7873, %v7886
        %v7888 = vcombine.low %v7855, %v7871
        %v7889 = vcombine.high %v7855, %v7871
        %v7891 = vunpack.c.l.s4 1934713408
        %v7892 = vunpack.c.0.s8 %v7891
        %v7893 = vlaneseq
        %v7894 = vshrl.u32 %v7893, 7
        %v7895 = vsub.s32 %v7892, %v7894
        %v7896 = vrot.slane %v7888, %v7895
        %v7898 = vunpack.c.l.s4 1934713408
        %v7899 = vunpack.c.0.s8 %v7898
        %v7900 = vlaneseq
        %v7901 = vshrl.u32 %v7900, 7
        %v7902 = vsub.s32 %v7899, %v7901
        %v7903 = vrot.slane %v7889, %v7902
        %v7904 = vcombine.high %v7880, 0.0
        %v7905 = vcombine.high %v7887, 0.0
        %v7906 = vcombine.high %v7896, 0.0
        %v7907 = vcombine.high %v7903, 0.0
        %v7908 = vcombine.low %v7525, %v7831
        %v7909 = vcombine.high %v7525, %v7831
        %v7911 = vunpack.c.l.s4 1983009808
        %v7912 = vunpack.c.0.s8 %v7911
        %v7913 = vlaneseq
        %v7914 = vshrl.u32 %v7913, 7
        %v7915 = vsub.s32 %v7912, %v7914
        %v7916 = vrot.slane %v7908, %v7915
        %v7918 = vunpack.c.l.s4 1983009808
        %v7919 = vunpack.c.0.s8 %v7918
        %v7920 = vlaneseq
        %v7921 = vshrl.u32 %v7920, 7
        %v7922 = vsub.s32 %v7919, %v7921
        %v7923 = vrot.slane %v7909, %v7922
        %v7924 = vcombine.low %v7825, %v7837
        %v7925 = vcombine.high %v7825, %v7837
        %v7927 = vunpack.c.l.s4 1983009808
        %v7928 = vunpack.c.0.s8 %v7927
        %v7929 = vlaneseq
        %v7930 = vshrl.u32 %v7929, 7
        %v7931 = vsub.s32 %v7928, %v7930
        %v7932 = vrot.slane %v7924, %v7931
        %v7934 = vunpack.c.l.s4 1983009808
        %v7935 = vunpack.c.0.s8 %v7934
        %v7936 = vlaneseq
        %v7937 = vshrl.u32 %v7936, 7
        %v7938 = vsub.s32 %v7935, %v7937
        %v7939 = vrot.slane %v7925, %v7938
        %v7940 = vcombine.low %v7916, %v7932
        %v7941 = vcombine.high %v7916, %v7932
        %v7943 = vunpack.c.l.s4 1934713408
        %v7944 = vunpack.c.0.s8 %v7943
        %v7945 = vlaneseq
        %v7946 = vshrl.u32 %v7945, 7
        %v7947 = vsub.s32 %v7944, %v7946
        %v7948 = vrot.slane %v7940, %v7947
        %v7950 = vunpack.c.l.s4 1934713408
        %v7951 = vunpack.c.0.s8 %v7950
        %v7952 = vlaneseq
        %v7953 = vshrl.u32 %v7952, 7
        %v7954 = vsub.s32 %v7951, %v7953
        %v7955 = vrot.slane %v7941, %v7954
        %v7956 = vcombine.low %v7923, %v7939
        %v7957 = vcombine.high %v7923, %v7939
        %v7959 = vunpack.c.l.s4 1934713408
        %v7960 = vunpack.c.0.s8 %v7959
        %v7961 = vlaneseq
        %v7962 = vshrl.u32 %v7961, 7
        %v7963 = vsub.s32 %v7960, %v7962
        %v7964 = vrot.slane %v7956, %v7963
        %v7966 = vunpack.c.l.s4 1934713408
        %v7967 = vunpack.c.0.s8 %v7966
        %v7968 = vlaneseq
        %v7969 = vshrl.u32 %v7968, 7
        %v7970 = vsub.s32 %v7967, %v7969
        %v7971 = vrot.slane %v7957, %v7970
        %v7972 = vcombine.high %v7948, 0.0
        %v7973 = vcombine.high %v7955, 0.0
        %v7974 = vcombine.high %v7964, 0.0
        %v7975 = vcombine.high %v7971, 0.0
        %v7976 = vcombine.low %v7880, %v7887
        %v7978 = vunpack.c.l.s4 1983009808
        %v7979 = vunpack.c.0.s8 %v7978
        %v7980 = vlaneseq
        %v7981 = vshrl.u32 %v7980, 7
        %v7982 = vsub.s32 %v7979, %v7981
        %v7983 = vrot.slane %v7976, %v7982
        %v7984 = vcombine.low %v7904, %v7905
        %v7986 = vunpack.c.l.s4 1983009808
        %v7987 = vunpack.c.0.s8 %v7986
        %v7988 = vlaneseq
        %v7989 = vshrl.u32 %v7988, 7
        %v7990 = vsub.s32 %v7987, %v7989
        %v7991 = vrot.slane %v7984, %v7990
        %v7992 = vcombine.low %v7896, %v7903
        %v7994 = vunpack.c.l.s4 1983009808
        %v7995 = vunpack.c.0.s8 %v7994
        %v7996 = vlaneseq
        %v7997 = vshrl.u32 %v7996, 7
        %v7998 = vsub.s32 %v7995, %v7997
        %v7999 = vrot.slane %v7992, %v7998
        %v8000 = vcombine.low %v7906, %v7907
        %v8002 = vunpack.c.l.s4 1983009808
        %v8003 = vunpack.c.0.s8 %v8002
        %v8004 = vlaneseq
        %v8005 = vshrl.u32 %v8004, 7
        %v8006 = vsub.s32 %v8003, %v8005
        %v8007 = vrot.slane %v8000, %v8006
        %v8008 = vcombine.low %v7983, %v7991
        %v8009 = vcombine.high %v7983, %v7991
        %v8011 = vunpack.c.l.s4 1934713408
        %v8012 = vunpack.c.0.s8 %v8011
        %v8013 = vlaneseq
        %v8014 = vshrl.u32 %v8013, 7
        %v8015 = vsub.s32 %v8012, %v8014
        %v8016 = vrot.slane %v8008, %v8015
        %v8018 = vunpack.c.l.s4 1934713408
        %v8019 = vunpack.c.0.s8 %v8018
        %v8020 = vlaneseq
        %v8021 = vshrl.u32 %v8020, 7
        %v8022 = vsub.s32 %v8019, %v8021
        %v8023 = vrot.slane %v8009, %v8022
        %v8024 = vcombine.low %v7999, %v8007
        %v8025 = vcombine.high %v7999, %v8007
        %v8027 = vunpack.c.l.s4 1934713408
        %v8028 = vunpack.c.0.s8 %v8027
        %v8029 = vlaneseq
        %v8030 = vshrl.u32 %v8029, 7
        %v8031 = vsub.s32 %v8028, %v8030
        %v8032 = vrot.slane %v8024, %v8031
        %v8034 = vunpack.c.l.s4 1934713408
        %v8035 = vunpack.c.0.s8 %v8034
        %v8036 = vlaneseq
        %v8037 = vshrl.u32 %v8036, 7
        %v8038 = vsub.s32 %v8035, %v8037
        %v8039 = vrot.slane %v8025, %v8038
        %v8040 = vcombine.low %v8016, %v8032
        %v8041 = vcombine.high %v8016, %v8032
        %v8042 = vcombine.low %v8023, %v8039
        %v8043 = vcombine.high %v8023, %v8039
        %v8044 = vcombine.low %v7948, %v7955
        %v8046 = vunpack.c.l.s4 1983009808
        %v8047 = vunpack.c.0.s8 %v8046
        %v8048 = vlaneseq
        %v8049 = vshrl.u32 %v8048, 7
        %v8050 = vsub.s32 %v8047, %v8049
        %v8051 = vrot.slane %v8044, %v8050
        %v8052 = vcombine.low %v7972, %v7973
        %v8054 = vunpack.c.l.s4 1983009808
        %v8055 = vunpack.c.0.s8 %v8054
        %v8056 = vlaneseq
        %v8057 = vshrl.u32 %v8056, 7
        %v8058 = vsub.s32 %v8055, %v8057
        %v8059 = vrot.slane %v8052, %v8058
        %v8060 = vcombine.low %v7964, %v7971
        %v8062 = vunpack.c.l.s4 1983009808
        %v8063 = vunpack.c.0.s8 %v8062
        %v8064 = vlaneseq
        %v8065 = vshrl.u32 %v8064, 7
        %v8066 = vsub.s32 %v8063, %v8065
        %v8067 = vrot.slane %v8060, %v8066
        %v8068 = vcombine.low %v7974, %v7975
        %v8070 = vunpack.c.l.s4 1983009808
        %v8071 = vunpack.c.0.s8 %v8070
        %v8072 = vlaneseq
        %v8073 = vshrl.u32 %v8072, 7
        %v8074 = vsub.s32 %v8071, %v8073
        %v8075 = vrot.slane %v8068, %v8074
        %v8076 = vcombine.low %v8051, %v8059
        %v8077 = vcombine.high %v8051, %v8059
        %v8079 = vunpack.c.l.s4 1934713408
        %v8080 = vunpack.c.0.s8 %v8079
        %v8081 = vlaneseq
        %v8082 = vshrl.u32 %v8081, 7
        %v8083 = vsub.s32 %v8080, %v8082
        %v8084 = vrot.slane %v8076, %v8083
        %v8086 = vunpack.c.l.s4 1934713408
        %v8087 = vunpack.c.0.s8 %v8086
        %v8088 = vlaneseq
        %v8089 = vshrl.u32 %v8088, 7
        %v8090 = vsub.s32 %v8087, %v8089
        %v8091 = vrot.slane %v8077, %v8090
        %v8092 = vcombine.low %v8067, %v8075
        %v8093 = vcombine.high %v8067, %v8075
        %v8095 = vunpack.c.l.s4 1934713408
        %v8096 = vunpack.c.0.s8 %v8095
        %v8097 = vlaneseq
        %v8098 = vshrl.u32 %v8097, 7
        %v8099 = vsub.s32 %v8096, %v8098
        %v8100 = vrot.slane %v8092, %v8099
        %v8102 = vunpack.c.l.s4 1934713408
        %v8103 = vunpack.c.0.s8 %v8102
        %v8104 = vlaneseq
        %v8105 = vshrl.u32 %v8104, 7
        %v8106 = vsub.s32 %v8103, %v8105
        %v8107 = vrot.slane %v8093, %v8106
        %v8108 = vcombine.low %v8084, %v8100
        %v8109 = vcombine.high %v8084, %v8100
        %v8110 = vcombine.low %v8091, %v8107
        %v8111 = vcombine.high %v8091, %v8107
        %8112 = vrot.lane.b32.xlu0 %v7520, 96
        %v8113 = vpop.permute.xlu0 %8112
        %8114 = vrot.lane.b32.xlu0 %v7525, 96
        %v8115 = vpop.permute.xlu0 %8114
        %8116 = vrot.lane.b32.xlu0 %v7823, 96
        %v8117 = vpop.permute.xlu0 %8116
        %8118 = vrot.lane.b32.xlu0 %v7825, 96
        %v8119 = vpop.permute.xlu0 %8118
        %8120 = vrot.lane.b32.xlu0 %v7829, 96
        %v8121 = vpop.permute.xlu0 %8120
        %8122 = vrot.lane.b32.xlu0 %v7831, 96
        %v8123 = vpop.permute.xlu0 %8122
        %8124 = vrot.lane.b32.xlu0 %v7835, 96
        %v8125 = vpop.permute.xlu0 %8124
        %8126 = vrot.lane.b32.xlu0 %v7837, 96
        %v8127 = vpop.permute.xlu0 %8126
        %v8136 = vcombine.low %v8113, %v8121
        %v8137 = vcombine.high %v8113, %v8121
        %v8139 = vunpack.c.l.s4 1983009808
        %v8140 = vunpack.c.0.s8 %v8139
        %v8141 = vlaneseq
        %v8142 = vshrl.u32 %v8141, 7
        %v8143 = vsub.s32 %v8140, %v8142
        %v8144 = vrot.slane %v8136, %v8143
        %v8146 = vunpack.c.l.s4 1983009808
        %v8147 = vunpack.c.0.s8 %v8146
        %v8148 = vlaneseq
        %v8149 = vshrl.u32 %v8148, 7
        %v8150 = vsub.s32 %v8147, %v8149
        %v8151 = vrot.slane %v8137, %v8150
        %v8152 = vcombine.low %v8117, %v8125
        %v8153 = vcombine.high %v8117, %v8125
        %v8155 = vunpack.c.l.s4 1983009808
        %v8156 = vunpack.c.0.s8 %v8155
        %v8157 = vlaneseq
        %v8158 = vshrl.u32 %v8157, 7
        %v8159 = vsub.s32 %v8156, %v8158
        %v8160 = vrot.slane %v8152, %v8159
        %v8162 = vunpack.c.l.s4 1983009808
        %v8163 = vunpack.c.0.s8 %v8162
        %v8164 = vlaneseq
        %v8165 = vshrl.u32 %v8164, 7
        %v8166 = vsub.s32 %v8163, %v8165
        %v8167 = vrot.slane %v8153, %v8166
        %v8168 = vcombine.low %v8144, %v8160
        %v8169 = vcombine.high %v8144, %v8160
        %v8171 = vunpack.c.l.s4 1934713408
        %v8172 = vunpack.c.0.s8 %v8171
        %v8173 = vlaneseq
        %v8174 = vshrl.u32 %v8173, 7
        %v8175 = vsub.s32 %v8172, %v8174
        %v8176 = vrot.slane %v8168, %v8175
        %v8178 = vunpack.c.l.s4 1934713408
        %v8179 = vunpack.c.0.s8 %v8178
        %v8180 = vlaneseq
        %v8181 = vshrl.u32 %v8180, 7
        %v8182 = vsub.s32 %v8179, %v8181
        %v8183 = vrot.slane %v8169, %v8182
        %v8184 = vcombine.low %v8151, %v8167
        %v8185 = vcombine.high %v8151, %v8167
        %v8187 = vunpack.c.l.s4 1934713408
        %v8188 = vunpack.c.0.s8 %v8187
        %v8189 = vlaneseq
        %v8190 = vshrl.u32 %v8189, 7
        %v8191 = vsub.s32 %v8188, %v8190
        %v8192 = vrot.slane %v8184, %v8191
        %v8194 = vunpack.c.l.s4 1934713408
        %v8195 = vunpack.c.0.s8 %v8194
        %v8196 = vlaneseq
        %v8197 = vshrl.u32 %v8196, 7
        %v8198 = vsub.s32 %v8195, %v8197
        %v8199 = vrot.slane %v8185, %v8198
        %v8200 = vcombine.high %v8176, 0.0
        %v8201 = vcombine.high %v8183, 0.0
        %v8202 = vcombine.high %v8192, 0.0
        %v8203 = vcombine.high %v8199, 0.0
        %v8204 = vcombine.low %v8115, %v8123
        %v8205 = vcombine.high %v8115, %v8123
        %v8207 = vunpack.c.l.s4 1983009808
        %v8208 = vunpack.c.0.s8 %v8207
        %v8209 = vlaneseq
        %v8210 = vshrl.u32 %v8209, 7
        %v8211 = vsub.s32 %v8208, %v8210
        %v8212 = vrot.slane %v8204, %v8211
        %v8214 = vunpack.c.l.s4 1983009808
        %v8215 = vunpack.c.0.s8 %v8214
        %v8216 = vlaneseq
        %v8217 = vshrl.u32 %v8216, 7
        %v8218 = vsub.s32 %v8215, %v8217
        %v8219 = vrot.slane %v8205, %v8218
        %v8220 = vcombine.low %v8119, %v8127
        %v8221 = vcombine.high %v8119, %v8127
        %v8223 = vunpack.c.l.s4 1983009808
        %v8224 = vunpack.c.0.s8 %v8223
        %v8225 = vlaneseq
        %v8226 = vshrl.u32 %v8225, 7
        %v8227 = vsub.s32 %v8224, %v8226
        %v8228 = vrot.slane %v8220, %v8227
        %v8230 = vunpack.c.l.s4 1983009808
        %v8231 = vunpack.c.0.s8 %v8230
        %v8232 = vlaneseq
        %v8233 = vshrl.u32 %v8232, 7
        %v8234 = vsub.s32 %v8231, %v8233
        %v8235 = vrot.slane %v8221, %v8234
        %v8236 = vcombine.low %v8212, %v8228
        %v8237 = vcombine.high %v8212, %v8228
        %v8239 = vunpack.c.l.s4 1934713408
        %v8240 = vunpack.c.0.s8 %v8239
        %v8241 = vlaneseq
        %v8242 = vshrl.u32 %v8241, 7
        %v8243 = vsub.s32 %v8240, %v8242
        %v8244 = vrot.slane %v8236, %v8243
        %v8246 = vunpack.c.l.s4 1934713408
        %v8247 = vunpack.c.0.s8 %v8246
        %v8248 = vlaneseq
        %v8249 = vshrl.u32 %v8248, 7
        %v8250 = vsub.s32 %v8247, %v8249
        %v8251 = vrot.slane %v8237, %v8250
        %v8252 = vcombine.low %v8219, %v8235
        %v8253 = vcombine.high %v8219, %v8235
        %v8255 = vunpack.c.l.s4 1934713408
        %v8256 = vunpack.c.0.s8 %v8255
        %v8257 = vlaneseq
        %v8258 = vshrl.u32 %v8257, 7
        %v8259 = vsub.s32 %v8256, %v8258
        %v8260 = vrot.slane %v8252, %v8259
        %v8262 = vunpack.c.l.s4 1934713408
        %v8263 = vunpack.c.0.s8 %v8262
        %v8264 = vlaneseq
        %v8265 = vshrl.u32 %v8264, 7
        %v8266 = vsub.s32 %v8263, %v8265
        %v8267 = vrot.slane %v8253, %v8266
        %v8268 = vcombine.high %v8244, 0.0
        %v8269 = vcombine.high %v8251, 0.0
        %v8270 = vcombine.high %v8260, 0.0
        %v8271 = vcombine.high %v8267, 0.0
        %v8272 = vcombine.low %v8176, %v8183
        %v8274 = vunpack.c.l.s4 1983009808
        %v8275 = vunpack.c.0.s8 %v8274
        %v8276 = vlaneseq
        %v8277 = vshrl.u32 %v8276, 7
        %v8278 = vsub.s32 %v8275, %v8277
        %v8279 = vrot.slane %v8272, %v8278
        %v8280 = vcombine.low %v8200, %v8201
        %v8282 = vunpack.c.l.s4 1983009808
        %v8283 = vunpack.c.0.s8 %v8282
        %v8284 = vlaneseq
        %v8285 = vshrl.u32 %v8284, 7
        %v8286 = vsub.s32 %v8283, %v8285
        %v8287 = vrot.slane %v8280, %v8286
        %v8288 = vcombine.low %v8192, %v8199
        %v8290 = vunpack.c.l.s4 1983009808
        %v8291 = vunpack.c.0.s8 %v8290
        %v8292 = vlaneseq
        %v8293 = vshrl.u32 %v8292, 7
        %v8294 = vsub.s32 %v8291, %v8293
        %v8295 = vrot.slane %v8288, %v8294
        %v8296 = vcombine.low %v8202, %v8203
        %v8298 = vunpack.c.l.s4 1983009808
        %v8299 = vunpack.c.0.s8 %v8298
        %v8300 = vlaneseq
        %v8301 = vshrl.u32 %v8300, 7
        %v8302 = vsub.s32 %v8299, %v8301
        %v8303 = vrot.slane %v8296, %v8302
        %v8304 = vcombine.low %v8279, %v8287
        %v8305 = vcombine.high %v8279, %v8287
        %v8307 = vunpack.c.l.s4 1934713408
        %v8308 = vunpack.c.0.s8 %v8307
        %v8309 = vlaneseq
        %v8310 = vshrl.u32 %v8309, 7
        %v8311 = vsub.s32 %v8308, %v8310
        %v8312 = vrot.slane %v8304, %v8311
        %v8314 = vunpack.c.l.s4 1934713408
        %v8315 = vunpack.c.0.s8 %v8314
        %v8316 = vlaneseq
        %v8317 = vshrl.u32 %v8316, 7
        %v8318 = vsub.s32 %v8315, %v8317
        %v8319 = vrot.slane %v8305, %v8318
        %v8320 = vcombine.low %v8295, %v8303
        %v8321 = vcombine.high %v8295, %v8303
        %v8323 = vunpack.c.l.s4 1934713408
        %v8324 = vunpack.c.0.s8 %v8323
        %v8325 = vlaneseq
        %v8326 = vshrl.u32 %v8325, 7
        %v8327 = vsub.s32 %v8324, %v8326
        %v8328 = vrot.slane %v8320, %v8327
        %v8330 = vunpack.c.l.s4 1934713408
        %v8331 = vunpack.c.0.s8 %v8330
        %v8332 = vlaneseq
        %v8333 = vshrl.u32 %v8332, 7
        %v8334 = vsub.s32 %v8331, %v8333
        %v8335 = vrot.slane %v8321, %v8334
        %v8336 = vcombine.low %v8312, %v8328
        %v8337 = vcombine.high %v8312, %v8328
        %v8338 = vcombine.low %v8319, %v8335
        %v8339 = vcombine.high %v8319, %v8335
        %v8340 = vcombine.low %v8244, %v8251
        %v8342 = vunpack.c.l.s4 1983009808
        %v8343 = vunpack.c.0.s8 %v8342
        %v8344 = vlaneseq
        %v8345 = vshrl.u32 %v8344, 7
        %v8346 = vsub.s32 %v8343, %v8345
        %v8347 = vrot.slane %v8340, %v8346
        %v8348 = vcombine.low %v8268, %v8269
        %v8350 = vunpack.c.l.s4 1983009808
        %v8351 = vunpack.c.0.s8 %v8350
        %v8352 = vlaneseq
        %v8353 = vshrl.u32 %v8352, 7
        %v8354 = vsub.s32 %v8351, %v8353
        %v8355 = vrot.slane %v8348, %v8354
        %v8356 = vcombine.low %v8260, %v8267
        %v8358 = vunpack.c.l.s4 1983009808
        %v8359 = vunpack.c.0.s8 %v8358
        %v8360 = vlaneseq
        %v8361 = vshrl.u32 %v8360, 7
        %v8362 = vsub.s32 %v8359, %v8361
        %v8363 = vrot.slane %v8356, %v8362
        %v8364 = vcombine.low %v8270, %v8271
        %v8366 = vunpack.c.l.s4 1983009808
        %v8367 = vunpack.c.0.s8 %v8366
        %v8368 = vlaneseq
        %v8369 = vshrl.u32 %v8368, 7
        %v8370 = vsub.s32 %v8367, %v8369
        %v8371 = vrot.slane %v8364, %v8370
        %v8372 = vcombine.low %v8347, %v8355
        %v8373 = vcombine.high %v8347, %v8355
        %v8375 = vunpack.c.l.s4 1934713408
        %v8376 = vunpack.c.0.s8 %v8375
        %v8377 = vlaneseq
        %v8378 = vshrl.u32 %v8377, 7
        %v8379 = vsub.s32 %v8376, %v8378
        %v8380 = vrot.slane %v8372, %v8379
        %v8382 = vunpack.c.l.s4 1934713408
        %v8383 = vunpack.c.0.s8 %v8382
        %v8384 = vlaneseq
        %v8385 = vshrl.u32 %v8384, 7
        %v8386 = vsub.s32 %v8383, %v8385
        %v8387 = vrot.slane %v8373, %v8386
        %v8388 = vcombine.low %v8363, %v8371
        %v8389 = vcombine.high %v8363, %v8371
        %v8391 = vunpack.c.l.s4 1934713408
        %v8392 = vunpack.c.0.s8 %v8391
        %v8393 = vlaneseq
        %v8394 = vshrl.u32 %v8393, 7
        %v8395 = vsub.s32 %v8392, %v8394
        %v8396 = vrot.slane %v8388, %v8395
        %v8398 = vunpack.c.l.s4 1934713408
        %v8399 = vunpack.c.0.s8 %v8398
        %v8400 = vlaneseq
        %v8401 = vshrl.u32 %v8400, 7
        %v8402 = vsub.s32 %v8399, %v8401
        %v8403 = vrot.slane %v8389, %v8402
        %v8404 = vcombine.low %v8380, %v8396
        %v8405 = vcombine.high %v8380, %v8396
        %v8406 = vcombine.low %v8387, %v8403
        %v8407 = vcombine.high %v8387, %v8403
        %v8409 = vsel %vm1417, %v7748, 0
        %v8412 = vsel %vm1417, %v7816, 0
        %v8415 = vsel %vm1417, %v8040, 0
        %v8418 = vsel %vm1417, %v8108, 0
        %8420 = vmatprep.subr.mxu0 0.0
        %8421 = vmatpush1.xpose.msra.mxu0 0.0
        %8422 = vmatprep.subr.mxu0 0.0
        %8423 = vmatpush1.xpose.msra.mxu0 0.0
        %8424 = vmatprep.subr.mxu0 0.0
        %8425 = vmatpush1.xpose.msra.mxu0 0.0
        %8426 = vmatprep.subr.mxu0 0.0
        %8427 = vmatpush1.xpose.msra.mxu0 0.0
        %8428 = vmatprep.subr.mxu0 0.0
        %8429 = vmatpush1.xpose.msra.mxu0 0.0
        %8430 = vmatprep.subr.mxu0 0.0
        %8431 = vmatpush1.xpose.msra.mxu0 0.0
        %8432 = vmatprep.subr.mxu0 0.0
        %8433 = vmatpush1.xpose.msra.mxu0 0.0
        %8434 = vmatprep.subr.mxu0 0.0
        %8435 = vmatpush1.xpose.msra.mxu0 0.0
        %8436 = vmatprep.subr.mxu0 0.0
        %8437 = vmatpush1.xpose.msra.mxu0 0.0
        %8438 = vmatprep.subr.mxu0 0.0
        %8439 = vmatpush1.xpose.msra.mxu0 0.0
        %8440 = vmatprep.subr.mxu0 0.0
        %8441 = vmatpush1.xpose.msra.mxu0 0.0
        %8442 = vmatprep.subr.mxu0 0.0
        %8443 = vmatpush1.xpose.msra.mxu0 0.0
        %8444 = vmatprep.subr.mxu0 0.0
        %8445 = vmatpush1.xpose.msra.mxu0 0.0
        %8446 = vmatprep.subr.mxu0 0.0
        %8447 = vmatpush1.xpose.msra.mxu0 0.0
        %8448 = vmatprep.subr.mxu0 0.0
        %8449 = vmatpush1.xpose.msra.mxu0 %v8418
        %8450 = vmatprep.subr.mxu0 0.0
        %8451 = vmatpush1.xpose.msra.mxu0 %v8415
        %8452 = vmatprep.subr.mxu0 0.0
        %8453 = vmatpush2.xpose.msra.mxu0 0.0
        %8454 = vmatprep.subr.mxu0 0.0
        %8455 = vmatpush2.xpose.msra.mxu0 0.0
        %8456 = vmatprep.subr.mxu0 0.0
        %8457 = vmatpush2.xpose.msra.mxu0 0.0
        %8458 = vmatprep.subr.mxu0 0.0
        %8459 = vmatpush2.xpose.msra.mxu0 0.0
        %8460 = vmatprep.subr.mxu0 0.0
        %8461 = vmatpush2.xpose.msra.mxu0 0.0
        %8462 = vmatprep.subr.mxu0 0.0
        %8463 = vmatpush2.xpose.msra.mxu0 0.0
        %8464 = vmatprep.subr.mxu0 0.0
        %8465 = vmatpush2.xpose.msra.mxu0 0.0
        %8466 = vmatprep.subr.mxu0 0.0
        %8467 = vmatpush2.xpose.msra.mxu0 0.0
        %8468 = vmatprep.subr.mxu0 0.0
        %8469 = vmatpush2.xpose.msra.mxu0 0.0
        %8470 = vmatprep.subr.mxu0 0.0
        %8471 = vmatpush2.xpose.msra.mxu0 0.0
        %8472 = vmatprep.subr.mxu0 0.0
        %8473 = vmatpush2.xpose.msra.mxu0 0.0
        %8474 = vmatprep.subr.mxu0 0.0
        %8475 = vmatpush2.xpose.msra.mxu0 0.0
        %8476 = vmatprep.subr.mxu0 0.0
        %8477 = vmatpush2.xpose.msra.mxu0 0.0
        %8478 = vmatprep.subr.mxu0 0.0
        %8479 = vmatpush2.xpose.msra.mxu0 0.0
        %8480 = vmatprep.subr.mxu0 0.0
        %8481 = vmatpush2.xpose.msra.mxu0 0.0
        %8482 = vmatprep.subr.mxu0 0.0
        %8483 = vmatpush2.xpose.msra.mxu0 0.0
        %8484 = vmatprep.mubr.f32.mxu0 0.0
        %8485 = vmatmul.mubr.f32.gmra.mxu0 %v8409
        %v8486 = vpop.f32.mrf.mxu0
        %v8487 = vadd.f32 %v347, %v8486
        %v8488 = vpop.f32.mrf.mxu0
        %8489 = vmatprep.mubr.f32.mxu0 0.0
        %8490 = vmatmul.mubr.f32.gmra.mxu0 %v8412
        %v8491 = vpop.f32.mrf.mxu0
        %v8492 = vadd.f32 %v348, %v8491
        %v8493 = vpop.f32.mrf.mxu0
        %8494 = vdwg.mxu0
        %v8496 = vsel %vm1417, %v7749, 0
        %v8499 = vsel %vm1417, %v7817, 0
        %v8502 = vsel %vm1417, %v8041, 0
        %v8505 = vsel %vm1417, %v8109, 0
        %8507 = vmatprep.subr.mxu0 0.0
        %8508 = vmatpush1.xpose.msra.mxu0 0.0
        %8509 = vmatprep.subr.mxu0 0.0
        %8510 = vmatpush1.xpose.msra.mxu0 0.0
        %8511 = vmatprep.subr.mxu0 0.0
        %8512 = vmatpush1.xpose.msra.mxu0 0.0
        %8513 = vmatprep.subr.mxu0 0.0
        %8514 = vmatpush1.xpose.msra.mxu0 0.0
        %8515 = vmatprep.subr.mxu0 0.0
        %8516 = vmatpush1.xpose.msra.mxu0 0.0
        %8517 = vmatprep.subr.mxu0 0.0
        %8518 = vmatpush1.xpose.msra.mxu0 0.0
        %8519 = vmatprep.subr.mxu0 0.0
        %8520 = vmatpush1.xpose.msra.mxu0 0.0
        %8521 = vmatprep.subr.mxu0 0.0
        %8522 = vmatpush1.xpose.msra.mxu0 0.0
        %8523 = vmatprep.subr.mxu0 0.0
        %8524 = vmatpush1.xpose.msra.mxu0 0.0
        %8525 = vmatprep.subr.mxu0 0.0
        %8526 = vmatpush1.xpose.msra.mxu0 0.0
        %8527 = vmatprep.subr.mxu0 0.0
        %8528 = vmatpush1.xpose.msra.mxu0 0.0
        %8529 = vmatprep.subr.mxu0 0.0
        %8530 = vmatpush1.xpose.msra.mxu0 0.0
        %8531 = vmatprep.subr.mxu0 0.0
        %8532 = vmatpush1.xpose.msra.mxu0 0.0
        %8533 = vmatprep.subr.mxu0 0.0
        %8534 = vmatpush1.xpose.msra.mxu0 0.0
        %8535 = vmatprep.subr.mxu0 0.0
        %8536 = vmatpush1.xpose.msra.mxu0 %v8505
        %8537 = vmatprep.subr.mxu0 0.0
        %8538 = vmatpush1.xpose.msra.mxu0 %v8502
        %8539 = vmatprep.subr.mxu0 0.0
        %8540 = vmatpush2.xpose.msra.mxu0 0.0
        %8541 = vmatprep.subr.mxu0 0.0
        %8542 = vmatpush2.xpose.msra.mxu0 0.0
        %8543 = vmatprep.subr.mxu0 0.0
        %8544 = vmatpush2.xpose.msra.mxu0 0.0
        %8545 = vmatprep.subr.mxu0 0.0
        %8546 = vmatpush2.xpose.msra.mxu0 0.0
        %8547 = vmatprep.subr.mxu0 0.0
        %8548 = vmatpush2.xpose.msra.mxu0 0.0
        %8549 = vmatprep.subr.mxu0 0.0
        %8550 = vmatpush2.xpose.msra.mxu0 0.0
        %8551 = vmatprep.subr.mxu0 0.0
        %8552 = vmatpush2.xpose.msra.mxu0 0.0
        %8553 = vmatprep.subr.mxu0 0.0
        %8554 = vmatpush2.xpose.msra.mxu0 0.0
        %8555 = vmatprep.subr.mxu0 0.0
        %8556 = vmatpush2.xpose.msra.mxu0 0.0
        %8557 = vmatprep.subr.mxu0 0.0
        %8558 = vmatpush2.xpose.msra.mxu0 0.0
        %8559 = vmatprep.subr.mxu0 0.0
        %8560 = vmatpush2.xpose.msra.mxu0 0.0
        %8561 = vmatprep.subr.mxu0 0.0
        %8562 = vmatpush2.xpose.msra.mxu0 0.0
        %8563 = vmatprep.subr.mxu0 0.0
        %8564 = vmatpush2.xpose.msra.mxu0 0.0
        %8565 = vmatprep.subr.mxu0 0.0
        %8566 = vmatpush2.xpose.msra.mxu0 0.0
        %8567 = vmatprep.subr.mxu0 0.0
        %8568 = vmatpush2.xpose.msra.mxu0 0.0
        %8569 = vmatprep.subr.mxu0 0.0
        %8570 = vmatpush2.xpose.msra.mxu0 0.0
        %8571 = vmatprep.mubr.f32.mxu0 0.0
        %8572 = vmatmul.mubr.f32.gmra.mxu0 %v8496
        %v8573 = vpop.f32.mrf.mxu0
        %v8574 = vadd.f32 %v347, %v8573
        %v8575 = vpop.f32.mrf.mxu0
        %8576 = vmatprep.mubr.f32.mxu0 0.0
        %8577 = vmatmul.mubr.f32.gmra.mxu0 %v8499
        %v8578 = vpop.f32.mrf.mxu0
        %v8579 = vadd.f32 %v348, %v8578
        %v8580 = vpop.f32.mrf.mxu0
        %8581 = vdwg.mxu0
        %v8583 = vsel %vm1417, %v7750, 0
        %v8586 = vsel %vm1417, %v7818, 0
        %v8589 = vsel %vm1417, %v8042, 0
        %v8592 = vsel %vm1417, %v8110, 0
        %8594 = vmatprep.subr.mxu0 0.0
        %8595 = vmatpush1.xpose.msra.mxu0 0.0
        %8596 = vmatprep.subr.mxu0 0.0
        %8597 = vmatpush1.xpose.msra.mxu0 0.0
        %8598 = vmatprep.subr.mxu0 0.0
        %8599 = vmatpush1.xpose.msra.mxu0 0.0
        %8600 = vmatprep.subr.mxu0 0.0
        %8601 = vmatpush1.xpose.msra.mxu0 0.0
        %8602 = vmatprep.subr.mxu0 0.0
        %8603 = vmatpush1.xpose.msra.mxu0 0.0
        %8604 = vmatprep.subr.mxu0 0.0
        %8605 = vmatpush1.xpose.msra.mxu0 0.0
        %8606 = vmatprep.subr.mxu0 0.0
        %8607 = vmatpush1.xpose.msra.mxu0 0.0
        %8608 = vmatprep.subr.mxu0 0.0
        %8609 = vmatpush1.xpose.msra.mxu0 0.0
        %8610 = vmatprep.subr.mxu0 0.0
        %8611 = vmatpush1.xpose.msra.mxu0 0.0
        %8612 = vmatprep.subr.mxu0 0.0
        %8613 = vmatpush1.xpose.msra.mxu0 0.0
        %8614 = vmatprep.subr.mxu0 0.0
        %8615 = vmatpush1.xpose.msra.mxu0 0.0
        %8616 = vmatprep.subr.mxu0 0.0
        %8617 = vmatpush1.xpose.msra.mxu0 0.0
        %8618 = vmatprep.subr.mxu0 0.0
        %8619 = vmatpush1.xpose.msra.mxu0 0.0
        %8620 = vmatprep.subr.mxu0 0.0
        %8621 = vmatpush1.xpose.msra.mxu0 0.0
        %8622 = vmatprep.subr.mxu0 0.0
        %8623 = vmatpush1.xpose.msra.mxu0 %v8592
        %8624 = vmatprep.subr.mxu0 0.0
        %8625 = vmatpush1.xpose.msra.mxu0 %v8589
        %8626 = vmatprep.subr.mxu0 0.0
        %8627 = vmatpush2.xpose.msra.mxu0 0.0
        %8628 = vmatprep.subr.mxu0 0.0
        %8629 = vmatpush2.xpose.msra.mxu0 0.0
        %8630 = vmatprep.subr.mxu0 0.0
        %8631 = vmatpush2.xpose.msra.mxu0 0.0
        %8632 = vmatprep.subr.mxu0 0.0
        %8633 = vmatpush2.xpose.msra.mxu0 0.0
        %8634 = vmatprep.subr.mxu0 0.0
        %8635 = vmatpush2.xpose.msra.mxu0 0.0
        %8636 = vmatprep.subr.mxu0 0.0
        %8637 = vmatpush2.xpose.msra.mxu0 0.0
        %8638 = vmatprep.subr.mxu0 0.0
        %8639 = vmatpush2.xpose.msra.mxu0 0.0
        %8640 = vmatprep.subr.mxu0 0.0
        %8641 = vmatpush2.xpose.msra.mxu0 0.0
        %8642 = vmatprep.subr.mxu0 0.0
        %8643 = vmatpush2.xpose.msra.mxu0 0.0
        %8644 = vmatprep.subr.mxu0 0.0
        %8645 = vmatpush2.xpose.msra.mxu0 0.0
        %8646 = vmatprep.subr.mxu0 0.0
        %8647 = vmatpush2.xpose.msra.mxu0 0.0
        %8648 = vmatprep.subr.mxu0 0.0
        %8649 = vmatpush2.xpose.msra.mxu0 0.0
        %8650 = vmatprep.subr.mxu0 0.0
        %8651 = vmatpush2.xpose.msra.mxu0 0.0
        %8652 = vmatprep.subr.mxu0 0.0
        %8653 = vmatpush2.xpose.msra.mxu0 0.0
        %8654 = vmatprep.subr.mxu0 0.0
        %8655 = vmatpush2.xpose.msra.mxu0 0.0
        %8656 = vmatprep.subr.mxu0 0.0
        %8657 = vmatpush2.xpose.msra.mxu0 0.0
        %8658 = vmatprep.mubr.f32.mxu0 0.0
        %8659 = vmatmul.mubr.f32.gmra.mxu0 %v8583
        %v8660 = vpop.f32.mrf.mxu0
        %v8661 = vadd.f32 %v347, %v8660
        %v8662 = vpop.f32.mrf.mxu0
        %8663 = vmatprep.mubr.f32.mxu0 0.0
        %8664 = vmatmul.mubr.f32.gmra.mxu0 %v8586
        %v8665 = vpop.f32.mrf.mxu0
        %v8666 = vadd.f32 %v348, %v8665
        %v8667 = vpop.f32.mrf.mxu0
        %8668 = vdwg.mxu0
        %v8670 = vsel %vm1417, %v7751, 0
        %v8673 = vsel %vm1417, %v7819, 0
        %v8676 = vsel %vm1417, %v8043, 0
        %v8679 = vsel %vm1417, %v8111, 0
        %8681 = vmatprep.subr.mxu0 0.0
        %8682 = vmatpush1.xpose.msra.mxu0 0.0
        %8683 = vmatprep.subr.mxu0 0.0
        %8684 = vmatpush1.xpose.msra.mxu0 0.0
        %8685 = vmatprep.subr.mxu0 0.0
        %8686 = vmatpush1.xpose.msra.mxu0 0.0
        %8687 = vmatprep.subr.mxu0 0.0
        %8688 = vmatpush1.xpose.msra.mxu0 0.0
        %8689 = vmatprep.subr.mxu0 0.0
        %8690 = vmatpush1.xpose.msra.mxu0 0.0
        %8691 = vmatprep.subr.mxu0 0.0
        %8692 = vmatpush1.xpose.msra.mxu0 0.0
        %8693 = vmatprep.subr.mxu0 0.0
        %8694 = vmatpush1.xpose.msra.mxu0 0.0
        %8695 = vmatprep.subr.mxu0 0.0
        %8696 = vmatpush1.xpose.msra.mxu0 0.0
        %8697 = vmatprep.subr.mxu0 0.0
        %8698 = vmatpush1.xpose.msra.mxu0 0.0
        %8699 = vmatprep.subr.mxu0 0.0
        %8700 = vmatpush1.xpose.msra.mxu0 0.0
        %8701 = vmatprep.subr.mxu0 0.0
        %8702 = vmatpush1.xpose.msra.mxu0 0.0
        %8703 = vmatprep.subr.mxu0 0.0
        %8704 = vmatpush1.xpose.msra.mxu0 0.0
        %8705 = vmatprep.subr.mxu0 0.0
        %8706 = vmatpush1.xpose.msra.mxu0 0.0
        %8707 = vmatprep.subr.mxu0 0.0
        %8708 = vmatpush1.xpose.msra.mxu0 0.0
        %8709 = vmatprep.subr.mxu0 0.0
        %8710 = vmatpush1.xpose.msra.mxu0 %v8679
        %8711 = vmatprep.subr.mxu0 0.0
        %8712 = vmatpush1.xpose.msra.mxu0 %v8676
        %8713 = vmatprep.subr.mxu0 0.0
        %8714 = vmatpush2.xpose.msra.mxu0 0.0
        %8715 = vmatprep.subr.mxu0 0.0
        %8716 = vmatpush2.xpose.msra.mxu0 0.0
        %8717 = vmatprep.subr.mxu0 0.0
        %8718 = vmatpush2.xpose.msra.mxu0 0.0
        %8719 = vmatprep.subr.mxu0 0.0
        %8720 = vmatpush2.xpose.msra.mxu0 0.0
        %8721 = vmatprep.subr.mxu0 0.0
        %8722 = vmatpush2.xpose.msra.mxu0 0.0
        %8723 = vmatprep.subr.mxu0 0.0
        %8724 = vmatpush2.xpose.msra.mxu0 0.0
        %8725 = vmatprep.subr.mxu0 0.0
        %8726 = vmatpush2.xpose.msra.mxu0 0.0
        %8727 = vmatprep.subr.mxu0 0.0
        %8728 = vmatpush2.xpose.msra.mxu0 0.0
        %8729 = vmatprep.subr.mxu0 0.0
        %8730 = vmatpush2.xpose.msra.mxu0 0.0
        %8731 = vmatprep.subr.mxu0 0.0
        %8732 = vmatpush2.xpose.msra.mxu0 0.0
        %8733 = vmatprep.subr.mxu0 0.0
        %8734 = vmatpush2.xpose.msra.mxu0 0.0
        %8735 = vmatprep.subr.mxu0 0.0
        %8736 = vmatpush2.xpose.msra.mxu0 0.0
        %8737 = vmatprep.subr.mxu0 0.0
        %8738 = vmatpush2.xpose.msra.mxu0 0.0
        %8739 = vmatprep.subr.mxu0 0.0
        %8740 = vmatpush2.xpose.msra.mxu0 0.0
        %8741 = vmatprep.subr.mxu0 0.0
        %8742 = vmatpush2.xpose.msra.mxu0 0.0
        %8743 = vmatprep.subr.mxu0 0.0
        %8744 = vmatpush2.xpose.msra.mxu0 0.0
        %8745 = vmatprep.mubr.f32.mxu0 0.0
        %8746 = vmatmul.mubr.f32.gmra.mxu0 %v8670
        %v8747 = vpop.f32.mrf.mxu0
        %v8748 = vadd.f32 %v347, %v8747
        %v8749 = vpop.f32.mrf.mxu0
        %8750 = vmatprep.mubr.f32.mxu0 0.0
        %8751 = vmatmul.mubr.f32.gmra.mxu0 %v8673
        %v8752 = vpop.f32.mrf.mxu0
        %v8753 = vadd.f32 %v348, %v8752
        %v8754 = vpop.f32.mrf.mxu0
        %8755 = vdwg.mxu0
        %v8756 = vsel %vm1766, %v8487, -inf
        %8757 = vmax.xlane.f32.xlu0 %v8756
        %v8758 = vpop.xlane.xlu0 %8757
        %v8759 = vsel %vm1766, %v8492, -inf
        %8760 = vmax.xlane.f32.xlu0 %v8759
        %v8761 = vpop.xlane.xlu0 %8760
        %v8762 = vsel %vm1766, %v8574, -inf
        %8763 = vmax.xlane.f32.xlu0 %v8762
        %v8764 = vpop.xlane.xlu0 %8763
        %v8765 = vsel %vm1766, %v8579, -inf
        %8766 = vmax.xlane.f32.xlu0 %v8765
        %v8767 = vpop.xlane.xlu0 %8766
        %v8768 = vsel %vm1766, %v8661, -inf
        %8769 = vmax.xlane.f32.xlu0 %v8768
        %v8770 = vpop.xlane.xlu0 %8769
        %v8771 = vsel %vm1766, %v8666, -inf
        %8772 = vmax.xlane.f32.xlu0 %v8771
        %v8773 = vpop.xlane.xlu0 %8772
        %v8774 = vsel %vm1766, %v8748, -inf
        %8775 = vmax.xlane.f32.xlu0 %v8774
        %v8776 = vpop.xlane.xlu0 %8775
        %v8777 = vsel %vm1766, %v8753, -inf
        %8778 = vmax.xlane.f32.xlu0 %v8777
        %v8779 = vpop.xlane.xlu0 %8778
        %v8780 = vsub.f32 %v8487, %v8758
        %v8781 = vsub.f32 %v8492, %v8761
        %v8782 = vsub.f32 %v8574, %v8764
        %v8783 = vsub.f32 %v8579, %v8767
        %v8784 = vsub.f32 %v8661, %v8770
        %v8785 = vsub.f32 %v8666, %v8773
        %v8786 = vsub.f32 %v8748, %v8776
        %v8787 = vsub.f32 %v8753, %v8779
        %v8788 = vmul.f32 %v8780, 1.442695
        %v8789 = vpow.pop %v8788
        %v8790 = vmul.f32 %v8781, 1.442695
        %v8791 = vpow.pop %v8790
        %v8792 = vmul.f32 %v8782, 1.442695
        %v8793 = vpow.pop %v8792
        %v8794 = vmul.f32 %v8783, 1.442695
        %v8795 = vpow.pop %v8794
        %v8796 = vmul.f32 %v8784, 1.442695
        %v8797 = vpow.pop %v8796
        %v8798 = vmul.f32 %v8785, 1.442695
        %v8799 = vpow.pop %v8798
        %v8800 = vmul.f32 %v8786, 1.442695
        %v8801 = vpow.pop %v8800
        %v8802 = vmul.f32 %v8787, 1.442695
        %v8803 = vpow.pop %v8802
        %v8804 = vsel %vm1766, %v8789, 0.0
        %8805 = vadd.xlane.f32.xlu0 %v8804
        %v8806 = vpop.xlane.xlu0 %8805
        %v8807 = vsel %vm1766, %v8791, 0.0
        %8808 = vadd.xlane.f32.xlu0 %v8807
        %v8809 = vpop.xlane.xlu0 %8808
        %v8810 = vsel %vm1766, %v8793, 0.0
        %8811 = vadd.xlane.f32.xlu0 %v8810
        %v8812 = vpop.xlane.xlu0 %8811
        %v8813 = vsel %vm1766, %v8795, 0.0
        %8814 = vadd.xlane.f32.xlu0 %v8813
        %v8815 = vpop.xlane.xlu0 %8814
        %v8816 = vsel %vm1766, %v8797, 0.0
        %8817 = vadd.xlane.f32.xlu0 %v8816
        %v8818 = vpop.xlane.xlu0 %8817
        %v8819 = vsel %vm1766, %v8799, 0.0
        %8820 = vadd.xlane.f32.xlu0 %v8819
        %v8821 = vpop.xlane.xlu0 %8820
        %v8822 = vsel %vm1766, %v8801, 0.0
        %8823 = vadd.xlane.f32.xlu0 %v8822
        %v8824 = vpop.xlane.xlu0 %8823
        %v8825 = vsel %vm1766, %v8803, 0.0
        %8826 = vadd.xlane.f32.xlu0 %v8825
        %v8827 = vpop.xlane.xlu0 %8826
        %v8828 = vrcp.pop %v8806
        %v8829 = vmul.f32 %v8789, %v8828
        %v8830 = vrcp.pop %v8809
        %v8831 = vmul.f32 %v8791, %v8830
        %v8832 = vrcp.pop %v8812
        %v8833 = vmul.f32 %v8793, %v8832
        %v8834 = vrcp.pop %v8815
        %v8835 = vmul.f32 %v8795, %v8834
        %v8836 = vrcp.pop %v8818
        %v8837 = vmul.f32 %v8797, %v8836
        %v8838 = vrcp.pop %v8821
        %v8839 = vmul.f32 %v8799, %v8838
        %v8840 = vrcp.pop %v8824
        %v8841 = vmul.f32 %v8801, %v8840
        %v8842 = vrcp.pop %v8827
        %v8843 = vmul.f32 %v8803, %v8842
        %v8845 = vsel %vm1766, %v8829, 0
        %v8848 = vsel %vm1766, %v8831, 0
        %8850 = vmatprep.subr.mxu0 0.0
        %8851 = vmatpush1.msra.mxu0 0.0
        %8852 = vmatprep.subr.mxu0 0.0
        %8853 = vmatpush1.msra.mxu0 0.0
        %8854 = vmatprep.subr.mxu0 0.0
        %8855 = vmatpush1.msra.mxu0 0.0
        %8856 = vmatprep.subr.mxu0 0.0
        %8857 = vmatpush1.msra.mxu0 0.0
        %8858 = vmatprep.subr.mxu0 0.0
        %8859 = vmatpush1.msra.mxu0 0.0
        %8860 = vmatprep.subr.mxu0 0.0
        %8861 = vmatpush1.msra.mxu0 0.0
        %8862 = vmatprep.subr.mxu0 0.0
        %8863 = vmatpush1.msra.mxu0 0.0
        %8864 = vmatprep.subr.mxu0 0.0
        %8865 = vmatpush1.msra.mxu0 0.0
        %8866 = vmatprep.subr.mxu0 0.0
        %8867 = vmatpush1.msra.mxu0 0.0
        %8868 = vmatprep.subr.mxu0 0.0
        %8869 = vmatpush1.msra.mxu0 0.0
        %8870 = vmatprep.subr.mxu0 0.0
        %8871 = vmatpush1.msra.mxu0 0.0
        %8872 = vmatprep.subr.mxu0 0.0
        %8873 = vmatpush1.msra.mxu0 0.0
        %8874 = vmatprep.subr.mxu0 0.0
        %8875 = vmatpush1.msra.mxu0 0.0
        %8876 = vmatprep.subr.mxu0 0.0
        %8877 = vmatpush1.msra.mxu0 0.0
        %8878 = vmatprep.subr.mxu0 0.0
        %8879 = vmatpush1.msra.mxu0 %v8404
        %8880 = vmatprep.subr.mxu0 0.0
        %8881 = vmatpush1.msra.mxu0 %v8336
        %8882 = vmatprep.subr.mxu0 0.0
        %8883 = vmatpush2.msra.mxu0 0.0
        %8884 = vmatprep.subr.mxu0 0.0
        %8885 = vmatpush2.msra.mxu0 0.0
        %8886 = vmatprep.subr.mxu0 0.0
        %8887 = vmatpush2.msra.mxu0 0.0
        %8888 = vmatprep.subr.mxu0 0.0
        %8889 = vmatpush2.msra.mxu0 0.0
        %8890 = vmatprep.subr.mxu0 0.0
        %8891 = vmatpush2.msra.mxu0 0.0
        %8892 = vmatprep.subr.mxu0 0.0
        %8893 = vmatpush2.msra.mxu0 0.0
        %8894 = vmatprep.subr.mxu0 0.0
        %8895 = vmatpush2.msra.mxu0 0.0
        %8896 = vmatprep.subr.mxu0 0.0
        %8897 = vmatpush2.msra.mxu0 0.0
        %8898 = vmatprep.subr.mxu0 0.0
        %8899 = vmatpush2.msra.mxu0 0.0
        %8900 = vmatprep.subr.mxu0 0.0
        %8901 = vmatpush2.msra.mxu0 0.0
        %8902 = vmatprep.subr.mxu0 0.0
        %8903 = vmatpush2.msra.mxu0 0.0
        %8904 = vmatprep.subr.mxu0 0.0
        %8905 = vmatpush2.msra.mxu0 0.0
        %8906 = vmatprep.subr.mxu0 0.0
        %8907 = vmatpush2.msra.mxu0 0.0
        %8908 = vmatprep.subr.mxu0 0.0
        %8909 = vmatpush2.msra.mxu0 0.0
        %8910 = vmatprep.subr.mxu0 0.0
        %8911 = vmatpush2.msra.mxu0 0.0
        %8912 = vmatprep.subr.mxu0 0.0
        %8913 = vmatpush2.msra.mxu0 0.0
        %8914 = vmatprep.mubr.f32.mxu0 0.0
        %8915 = vmatmul.mubr.f32.gmra.mxu0 %v8845
        %v8916 = vpop.f32.mrf.mxu0
        %v8917 = vadd.f32 0.0, %v8916
        %v8918 = vpop.f32.mrf.mxu0
        %8919 = vmatprep.mubr.f32.mxu0 0.0
        %8920 = vmatmul.mubr.f32.gmra.mxu0 %v8848
        %v8921 = vpop.f32.mrf.mxu0
        %v8922 = vadd.f32 0.0, %v8921
        %v8923 = vpop.f32.mrf.mxu0
        %8924 = vdwg.mxu0
        %v8926 = vsel %vm1766, %v8833, 0
        %v8929 = vsel %vm1766, %v8835, 0
        %8931 = vmatprep.subr.mxu0 0.0
        %8932 = vmatpush1.msra.mxu0 0.0
        %8933 = vmatprep.subr.mxu0 0.0
        %8934 = vmatpush1.msra.mxu0 0.0
        %8935 = vmatprep.subr.mxu0 0.0
        %8936 = vmatpush1.msra.mxu0 0.0
        %8937 = vmatprep.subr.mxu0 0.0
        %8938 = vmatpush1.msra.mxu0 0.0
        %8939 = vmatprep.subr.mxu0 0.0
        %8940 = vmatpush1.msra.mxu0 0.0
        %8941 = vmatprep.subr.mxu0 0.0
        %8942 = vmatpush1.msra.mxu0 0.0
        %8943 = vmatprep.subr.mxu0 0.0
        %8944 = vmatpush1.msra.mxu0 0.0
        %8945 = vmatprep.subr.mxu0 0.0
        %8946 = vmatpush1.msra.mxu0 0.0
        %8947 = vmatprep.subr.mxu0 0.0
        %8948 = vmatpush1.msra.mxu0 0.0
        %8949 = vmatprep.subr.mxu0 0.0
        %8950 = vmatpush1.msra.mxu0 0.0
        %8951 = vmatprep.subr.mxu0 0.0
        %8952 = vmatpush1.msra.mxu0 0.0
        %8953 = vmatprep.subr.mxu0 0.0
        %8954 = vmatpush1.msra.mxu0 0.0
        %8955 = vmatprep.subr.mxu0 0.0
        %8956 = vmatpush1.msra.mxu0 0.0
        %8957 = vmatprep.subr.mxu0 0.0
        %8958 = vmatpush1.msra.mxu0 0.0
        %8959 = vmatprep.subr.mxu0 0.0
        %8960 = vmatpush1.msra.mxu0 %v8405
        %8961 = vmatprep.subr.mxu0 0.0
        %8962 = vmatpush1.msra.mxu0 %v8337
        %8963 = vmatprep.subr.mxu0 0.0
        %8964 = vmatpush2.msra.mxu0 0.0
        %8965 = vmatprep.subr.mxu0 0.0
        %8966 = vmatpush2.msra.mxu0 0.0
        %8967 = vmatprep.subr.mxu0 0.0
        %8968 = vmatpush2.msra.mxu0 0.0
        %8969 = vmatprep.subr.mxu0 0.0
        %8970 = vmatpush2.msra.mxu0 0.0
        %8971 = vmatprep.subr.mxu0 0.0
        %8972 = vmatpush2.msra.mxu0 0.0
        %8973 = vmatprep.subr.mxu0 0.0
        %8974 = vmatpush2.msra.mxu0 0.0
        %8975 = vmatprep.subr.mxu0 0.0
        %8976 = vmatpush2.msra.mxu0 0.0
        %8977 = vmatprep.subr.mxu0 0.0
        %8978 = vmatpush2.msra.mxu0 0.0
        %8979 = vmatprep.subr.mxu0 0.0
        %8980 = vmatpush2.msra.mxu0 0.0
        %8981 = vmatprep.subr.mxu0 0.0
        %8982 = vmatpush2.msra.mxu0 0.0
        %8983 = vmatprep.subr.mxu0 0.0
        %8984 = vmatpush2.msra.mxu0 0.0
        %8985 = vmatprep.subr.mxu0 0.0
        %8986 = vmatpush2.msra.mxu0 0.0
        %8987 = vmatprep.subr.mxu0 0.0
        %8988 = vmatpush2.msra.mxu0 0.0
        %8989 = vmatprep.subr.mxu0 0.0
        %8990 = vmatpush2.msra.mxu0 0.0
        %8991 = vmatprep.subr.mxu0 0.0
        %8992 = vmatpush2.msra.mxu0 0.0
        %8993 = vmatprep.subr.mxu0 0.0
        %8994 = vmatpush2.msra.mxu0 0.0
        %8995 = vmatprep.mubr.f32.mxu0 0.0
        %8996 = vmatmul.mubr.f32.gmra.mxu0 %v8926
        %v8997 = vpop.f32.mrf.mxu0
        %v8998 = vadd.f32 0.0, %v8997
        %v8999 = vpop.f32.mrf.mxu0
        %9000 = vmatprep.mubr.f32.mxu0 0.0
        %9001 = vmatmul.mubr.f32.gmra.mxu0 %v8929
        %v9002 = vpop.f32.mrf.mxu0
        %v9003 = vadd.f32 0.0, %v9002
        %v9004 = vpop.f32.mrf.mxu0
        %9005 = vdwg.mxu0
        %v9007 = vsel %vm1766, %v8837, 0
        %v9010 = vsel %vm1766, %v8839, 0
        %9012 = vmatprep.subr.mxu0 0.0
        %9013 = vmatpush1.msra.mxu0 0.0
        %9014 = vmatprep.subr.mxu0 0.0
        %9015 = vmatpush1.msra.mxu0 0.0
        %9016 = vmatprep.subr.mxu0 0.0
        %9017 = vmatpush1.msra.mxu0 0.0
        %9018 = vmatprep.subr.mxu0 0.0
        %9019 = vmatpush1.msra.mxu0 0.0
        %9020 = vmatprep.subr.mxu0 0.0
        %9021 = vmatpush1.msra.mxu0 0.0
        %9022 = vmatprep.subr.mxu0 0.0
        %9023 = vmatpush1.msra.mxu0 0.0
        %9024 = vmatprep.subr.mxu0 0.0
        %9025 = vmatpush1.msra.mxu0 0.0
        %9026 = vmatprep.subr.mxu0 0.0
        %9027 = vmatpush1.msra.mxu0 0.0
        %9028 = vmatprep.subr.mxu0 0.0
        %9029 = vmatpush1.msra.mxu0 0.0
        %9030 = vmatprep.subr.mxu0 0.0
        %9031 = vmatpush1.msra.mxu0 0.0
        %9032 = vmatprep.subr.mxu0 0.0
        %9033 = vmatpush1.msra.mxu0 0.0
        %9034 = vmatprep.subr.mxu0 0.0
        %9035 = vmatpush1.msra.mxu0 0.0
        %9036 = vmatprep.subr.mxu0 0.0
        %9037 = vmatpush1.msra.mxu0 0.0
        %9038 = vmatprep.subr.mxu0 0.0
        %9039 = vmatpush1.msra.mxu0 0.0
        %9040 = vmatprep.subr.mxu0 0.0
        %9041 = vmatpush1.msra.mxu0 %v8406
        %9042 = vmatprep.subr.mxu0 0.0
        %9043 = vmatpush1.msra.mxu0 %v8338
        %9044 = vmatprep.subr.mxu0 0.0
        %9045 = vmatpush2.msra.mxu0 0.0
        %9046 = vmatprep.subr.mxu0 0.0
        %9047 = vmatpush2.msra.mxu0 0.0
        %9048 = vmatprep.subr.mxu0 0.0
        %9049 = vmatpush2.msra.mxu0 0.0
        %9050 = vmatprep.subr.mxu0 0.0
        %9051 = vmatpush2.msra.mxu0 0.0
        %9052 = vmatprep.subr.mxu0 0.0
        %9053 = vmatpush2.msra.mxu0 0.0
        %9054 = vmatprep.subr.mxu0 0.0
        %9055 = vmatpush2.msra.mxu0 0.0
        %9056 = vmatprep.subr.mxu0 0.0
        %9057 = vmatpush2.msra.mxu0 0.0
        %9058 = vmatprep.subr.mxu0 0.0
        %9059 = vmatpush2.msra.mxu0 0.0
        %9060 = vmatprep.subr.mxu0 0.0
        %9061 = vmatpush2.msra.mxu0 0.0
        %9062 = vmatprep.subr.mxu0 0.0
        %9063 = vmatpush2.msra.mxu0 0.0
        %9064 = vmatprep.subr.mxu0 0.0
        %9065 = vmatpush2.msra.mxu0 0.0
        %9066 = vmatprep.subr.mxu0 0.0
        %9067 = vmatpush2.msra.mxu0 0.0
        %9068 = vmatprep.subr.mxu0 0.0
        %9069 = vmatpush2.msra.mxu0 0.0
        %9070 = vmatprep.subr.mxu0 0.0
        %9071 = vmatpush2.msra.mxu0 0.0
        %9072 = vmatprep.subr.mxu0 0.0
        %9073 = vmatpush2.msra.mxu0 0.0
        %9074 = vmatprep.subr.mxu0 0.0
        %9075 = vmatpush2.msra.mxu0 0.0
        %9076 = vmatprep.mubr.f32.mxu0 0.0
        %9077 = vmatmul.mubr.f32.gmra.mxu0 %v9007
        %v9078 = vpop.f32.mrf.mxu0
        %v9079 = vadd.f32 0.0, %v9078
        %v9080 = vpop.f32.mrf.mxu0
        %9081 = vmatprep.mubr.f32.mxu0 0.0
        %9082 = vmatmul.mubr.f32.gmra.mxu0 %v9010
        %v9083 = vpop.f32.mrf.mxu0
        %v9084 = vadd.f32 0.0, %v9083
        %v9085 = vpop.f32.mrf.mxu0
        %9086 = vdwg.mxu0
        %v9088 = vsel %vm1766, %v8841, 0
        %v9091 = vsel %vm1766, %v8843, 0
        %9093 = vmatprep.subr.mxu0 0.0
        %9094 = vmatpush1.msra.mxu0 0.0
        %9095 = vmatprep.subr.mxu0 0.0
        %9096 = vmatpush1.msra.mxu0 0.0
        %9097 = vmatprep.subr.mxu0 0.0
        %9098 = vmatpush1.msra.mxu0 0.0
        %9099 = vmatprep.subr.mxu0 0.0
        %9100 = vmatpush1.msra.mxu0 0.0
        %9101 = vmatprep.subr.mxu0 0.0
        %9102 = vmatpush1.msra.mxu0 0.0
        %9103 = vmatprep.subr.mxu0 0.0
        %9104 = vmatpush1.msra.mxu0 0.0
        %9105 = vmatprep.subr.mxu0 0.0
        %9106 = vmatpush1.msra.mxu0 0.0
        %9107 = vmatprep.subr.mxu0 0.0
        %9108 = vmatpush1.msra.mxu0 0.0
        %9109 = vmatprep.subr.mxu0 0.0
        %9110 = vmatpush1.msra.mxu0 0.0
        %9111 = vmatprep.subr.mxu0 0.0
        %9112 = vmatpush1.msra.mxu0 0.0
        %9113 = vmatprep.subr.mxu0 0.0
        %9114 = vmatpush1.msra.mxu0 0.0
        %9115 = vmatprep.subr.mxu0 0.0
        %9116 = vmatpush1.msra.mxu0 0.0
        %9117 = vmatprep.subr.mxu0 0.0
        %9118 = vmatpush1.msra.mxu0 0.0
        %9119 = vmatprep.subr.mxu0 0.0
        %9120 = vmatpush1.msra.mxu0 0.0
        %9121 = vmatprep.subr.mxu0 0.0
        %9122 = vmatpush1.msra.mxu0 %v8407
        %9123 = vmatprep.subr.mxu0 0.0
        %9124 = vmatpush1.msra.mxu0 %v8339
        %9125 = vmatprep.subr.mxu0 0.0
        %9126 = vmatpush2.msra.mxu0 0.0
        %9127 = vmatprep.subr.mxu0 0.0
        %9128 = vmatpush2.msra.mxu0 0.0
        %9129 = vmatprep.subr.mxu0 0.0
        %9130 = vmatpush2.msra.mxu0 0.0
        %9131 = vmatprep.subr.mxu0 0.0
        %9132 = vmatpush2.msra.mxu0 0.0
        %9133 = vmatprep.subr.mxu0 0.0
        %9134 = vmatpush2.msra.mxu0 0.0
        %9135 = vmatprep.subr.mxu0 0.0
        %9136 = vmatpush2.msra.mxu0 0.0
        %9137 = vmatprep.subr.mxu0 0.0
        %9138 = vmatpush2.msra.mxu0 0.0
        %9139 = vmatprep.subr.mxu0 0.0
        %9140 = vmatpush2.msra.mxu0 0.0
        %9141 = vmatprep.subr.mxu0 0.0
        %9142 = vmatpush2.msra.mxu0 0.0
        %9143 = vmatprep.subr.mxu0 0.0
        %9144 = vmatpush2.msra.mxu0 0.0
        %9145 = vmatprep.subr.mxu0 0.0
        %9146 = vmatpush2.msra.mxu0 0.0
        %9147 = vmatprep.subr.mxu0 0.0
        %9148 = vmatpush2.msra.mxu0 0.0
        %9149 = vmatprep.subr.mxu0 0.0
        %9150 = vmatpush2.msra.mxu0 0.0
        %9151 = vmatprep.subr.mxu0 0.0
        %9152 = vmatpush2.msra.mxu0 0.0
        %9153 = vmatprep.subr.mxu0 0.0
        %9154 = vmatpush2.msra.mxu0 0.0
        %9155 = vmatprep.subr.mxu0 0.0
        %9156 = vmatpush2.msra.mxu0 0.0
        %9157 = vmatprep.mubr.f32.mxu0 0.0
        %9158 = vmatmul.mubr.f32.gmra.mxu0 %v9088
        %v9159 = vpop.f32.mrf.mxu0
        %v9160 = vadd.f32 0.0, %v9159
        %v9161 = vpop.f32.mrf.mxu0
        %9162 = vmatprep.mubr.f32.mxu0 0.0
        %9163 = vmatmul.mubr.f32.gmra.mxu0 %v9091
        %v9164 = vpop.f32.mrf.mxu0
        %v9165 = vadd.f32 0.0, %v9164
        %v9166 = vpop.f32.mrf.mxu0
        %9167 = vdwg.mxu0
        %v9168 = vcombine.low %v8917, %v9079
        %v9169 = vcombine.high %v8917, %v9079
        %v9171 = vunpack.c.l.s4 1983009808
        %v9172 = vunpack.c.0.s8 %v9171
        %v9173 = vlaneseq
        %v9174 = vshrl.u32 %v9173, 7
        %v9175 = vsub.s32 %v9172, %v9174
        %v9176 = vrot.slane %v9168, %v9175
        %v9178 = vunpack.c.l.s4 1983009808
        %v9179 = vunpack.c.0.s8 %v9178
        %v9180 = vlaneseq
        %v9181 = vshrl.u32 %v9180, 7
        %v9182 = vsub.s32 %v9179, %v9181
        %v9183 = vrot.slane %v9169, %v9182
        %v9184 = vcombine.low %v8998, %v9160
        %v9185 = vcombine.high %v8998, %v9160
        %v9187 = vunpack.c.l.s4 1983009808
        %v9188 = vunpack.c.0.s8 %v9187
        %v9189 = vlaneseq
        %v9190 = vshrl.u32 %v9189, 7
        %v9191 = vsub.s32 %v9188, %v9190
        %v9192 = vrot.slane %v9184, %v9191
        %v9194 = vunpack.c.l.s4 1983009808
        %v9195 = vunpack.c.0.s8 %v9194
        %v9196 = vlaneseq
        %v9197 = vshrl.u32 %v9196, 7
        %v9198 = vsub.s32 %v9195, %v9197
        %v9199 = vrot.slane %v9185, %v9198
        %v9200 = vcombine.low %v9176, %v9192
        %v9201 = vcombine.high %v9176, %v9192
        %v9203 = vunpack.c.l.s4 1934713408
        %v9204 = vunpack.c.0.s8 %v9203
        %v9205 = vlaneseq
        %v9206 = vshrl.u32 %v9205, 7
        %v9207 = vsub.s32 %v9204, %v9206
        %v9208 = vrot.slane %v9200, %v9207
        %v9210 = vunpack.c.l.s4 1934713408
        %v9211 = vunpack.c.0.s8 %v9210
        %v9212 = vlaneseq
        %v9213 = vshrl.u32 %v9212, 7
        %v9214 = vsub.s32 %v9211, %v9213
        %v9215 = vrot.slane %v9201, %v9214
        %v9216 = vcombine.low %v9183, %v9199
        %v9217 = vcombine.high %v9183, %v9199
        %v9219 = vunpack.c.l.s4 1934713408
        %v9220 = vunpack.c.0.s8 %v9219
        %v9221 = vlaneseq
        %v9222 = vshrl.u32 %v9221, 7
        %v9223 = vsub.s32 %v9220, %v9222
        %v9224 = vrot.slane %v9216, %v9223
        %v9226 = vunpack.c.l.s4 1934713408
        %v9227 = vunpack.c.0.s8 %v9226
        %v9228 = vlaneseq
        %v9229 = vshrl.u32 %v9228, 7
        %v9230 = vsub.s32 %v9227, %v9229
        %v9231 = vrot.slane %v9217, %v9230
        %v9232 = vcombine.high %v9208, 0.0
        %v9233 = vcombine.high %v9215, 0.0
        %v9234 = vcombine.high %v9224, 0.0
        %v9235 = vcombine.high %v9231, 0.0
        %v9236 = vcombine.low %v8922, %v9084
        %v9237 = vcombine.high %v8922, %v9084
        %v9239 = vunpack.c.l.s4 1983009808
        %v9240 = vunpack.c.0.s8 %v9239
        %v9241 = vlaneseq
        %v9242 = vshrl.u32 %v9241, 7
        %v9243 = vsub.s32 %v9240, %v9242
        %v9244 = vrot.slane %v9236, %v9243
        %v9246 = vunpack.c.l.s4 1983009808
        %v9247 = vunpack.c.0.s8 %v9246
        %v9248 = vlaneseq
        %v9249 = vshrl.u32 %v9248, 7
        %v9250 = vsub.s32 %v9247, %v9249
        %v9251 = vrot.slane %v9237, %v9250
        %v9252 = vcombine.low %v9003, %v9165
        %v9253 = vcombine.high %v9003, %v9165
        %v9255 = vunpack.c.l.s4 1983009808
        %v9256 = vunpack.c.0.s8 %v9255
        %v9257 = vlaneseq
        %v9258 = vshrl.u32 %v9257, 7
        %v9259 = vsub.s32 %v9256, %v9258
        %v9260 = vrot.slane %v9252, %v9259
        %v9262 = vunpack.c.l.s4 1983009808
        %v9263 = vunpack.c.0.s8 %v9262
        %v9264 = vlaneseq
        %v9265 = vshrl.u32 %v9264, 7
        %v9266 = vsub.s32 %v9263, %v9265
        %v9267 = vrot.slane %v9253, %v9266
        %v9268 = vcombine.low %v9244, %v9260
        %v9269 = vcombine.high %v9244, %v9260
        %v9271 = vunpack.c.l.s4 1934713408
        %v9272 = vunpack.c.0.s8 %v9271
        %v9273 = vlaneseq
        %v9274 = vshrl.u32 %v9273, 7
        %v9275 = vsub.s32 %v9272, %v9274
        %v9276 = vrot.slane %v9268, %v9275
        %v9278 = vunpack.c.l.s4 1934713408
        %v9279 = vunpack.c.0.s8 %v9278
        %v9280 = vlaneseq
        %v9281 = vshrl.u32 %v9280, 7
        %v9282 = vsub.s32 %v9279, %v9281
        %v9283 = vrot.slane %v9269, %v9282
        %v9284 = vcombine.low %v9251, %v9267
        %v9285 = vcombine.high %v9251, %v9267
        %v9287 = vunpack.c.l.s4 1934713408
        %v9288 = vunpack.c.0.s8 %v9287
        %v9289 = vlaneseq
        %v9290 = vshrl.u32 %v9289, 7
        %v9291 = vsub.s32 %v9288, %v9290
        %v9292 = vrot.slane %v9284, %v9291
        %v9294 = vunpack.c.l.s4 1934713408
        %v9295 = vunpack.c.0.s8 %v9294
        %v9296 = vlaneseq
        %v9297 = vshrl.u32 %v9296, 7
        %v9298 = vsub.s32 %v9295, %v9297
        %v9299 = vrot.slane %v9285, %v9298
        %v9300 = vcombine.high %v9276, 0.0
        %v9301 = vcombine.high %v9283, 0.0
        %v9302 = vcombine.high %v9292, 0.0
        %v9303 = vcombine.high %v9299, 0.0
        %v9304 = vcombine.low %v9208, %v9215
        %v9306 = vunpack.c.l.s4 1983009808
        %v9307 = vunpack.c.0.s8 %v9306
        %v9308 = vlaneseq
        %v9309 = vshrl.u32 %v9308, 7
        %v9310 = vsub.s32 %v9307, %v9309
        %v9311 = vrot.slane %v9304, %v9310
        %v9312 = vcombine.low %v9232, %v9233
        %v9314 = vunpack.c.l.s4 1983009808
        %v9315 = vunpack.c.0.s8 %v9314
        %v9316 = vlaneseq
        %v9317 = vshrl.u32 %v9316, 7
        %v9318 = vsub.s32 %v9315, %v9317
        %v9319 = vrot.slane %v9312, %v9318
        %v9320 = vcombine.low %v9224, %v9231
        %v9322 = vunpack.c.l.s4 1983009808
        %v9323 = vunpack.c.0.s8 %v9322
        %v9324 = vlaneseq
        %v9325 = vshrl.u32 %v9324, 7
        %v9326 = vsub.s32 %v9323, %v9325
        %v9327 = vrot.slane %v9320, %v9326
        %v9328 = vcombine.low %v9234, %v9235
        %v9330 = vunpack.c.l.s4 1983009808
        %v9331 = vunpack.c.0.s8 %v9330
        %v9332 = vlaneseq
        %v9333 = vshrl.u32 %v9332, 7
        %v9334 = vsub.s32 %v9331, %v9333
        %v9335 = vrot.slane %v9328, %v9334
        %v9336 = vcombine.low %v9311, %v9319
        %v9337 = vcombine.high %v9311, %v9319
        %v9339 = vunpack.c.l.s4 1934713408
        %v9340 = vunpack.c.0.s8 %v9339
        %v9341 = vlaneseq
        %v9342 = vshrl.u32 %v9341, 7
        %v9343 = vsub.s32 %v9340, %v9342
        %v9344 = vrot.slane %v9336, %v9343
        %v9346 = vunpack.c.l.s4 1934713408
        %v9347 = vunpack.c.0.s8 %v9346
        %v9348 = vlaneseq
        %v9349 = vshrl.u32 %v9348, 7
        %v9350 = vsub.s32 %v9347, %v9349
        %v9351 = vrot.slane %v9337, %v9350
        %v9352 = vcombine.low %v9327, %v9335
        %v9353 = vcombine.high %v9327, %v9335
        %v9355 = vunpack.c.l.s4 1934713408
        %v9356 = vunpack.c.0.s8 %v9355
        %v9357 = vlaneseq
        %v9358 = vshrl.u32 %v9357, 7
        %v9359 = vsub.s32 %v9356, %v9358
        %v9360 = vrot.slane %v9352, %v9359
        %v9362 = vunpack.c.l.s4 1934713408
        %v9363 = vunpack.c.0.s8 %v9362
        %v9364 = vlaneseq
        %v9365 = vshrl.u32 %v9364, 7
        %v9366 = vsub.s32 %v9363, %v9365
        %v9367 = vrot.slane %v9353, %v9366
        %v9368 = vcombine.low %v9344, %v9360
        %v9369 = vcombine.high %v9344, %v9360
        %v9370 = vcombine.low %v9351, %v9367
        %v9371 = vcombine.high %v9351, %v9367
        %v9372 = vcombine.low %v9276, %v9283
        %v9374 = vunpack.c.l.s4 1983009808
        %v9375 = vunpack.c.0.s8 %v9374
        %v9376 = vlaneseq
        %v9377 = vshrl.u32 %v9376, 7
        %v9378 = vsub.s32 %v9375, %v9377
        %v9379 = vrot.slane %v9372, %v9378
        %v9380 = vcombine.low %v9300, %v9301
        %v9382 = vunpack.c.l.s4 1983009808
        %v9383 = vunpack.c.0.s8 %v9382
        %v9384 = vlaneseq
        %v9385 = vshrl.u32 %v9384, 7
        %v9386 = vsub.s32 %v9383, %v9385
        %v9387 = vrot.slane %v9380, %v9386
        %v9388 = vcombine.low %v9292, %v9299
        %v9390 = vunpack.c.l.s4 1983009808
        %v9391 = vunpack.c.0.s8 %v9390
        %v9392 = vlaneseq
        %v9393 = vshrl.u32 %v9392, 7
        %v9394 = vsub.s32 %v9391, %v9393
        %v9395 = vrot.slane %v9388, %v9394
        %v9396 = vcombine.low %v9302, %v9303
        %v9398 = vunpack.c.l.s4 1983009808
        %v9399 = vunpack.c.0.s8 %v9398
        %v9400 = vlaneseq
        %v9401 = vshrl.u32 %v9400, 7
        %v9402 = vsub.s32 %v9399, %v9401
        %v9403 = vrot.slane %v9396, %v9402
        %v9404 = vcombine.low %v9379, %v9387
        %v9405 = vcombine.high %v9379, %v9387
        %v9407 = vunpack.c.l.s4 1934713408
        %v9408 = vunpack.c.0.s8 %v9407
        %v9409 = vlaneseq
        %v9410 = vshrl.u32 %v9409, 7
        %v9411 = vsub.s32 %v9408, %v9410
        %v9412 = vrot.slane %v9404, %v9411
        %v9414 = vunpack.c.l.s4 1934713408
        %v9415 = vunpack.c.0.s8 %v9414
        %v9416 = vlaneseq
        %v9417 = vshrl.u32 %v9416, 7
        %v9418 = vsub.s32 %v9415, %v9417
        %v9419 = vrot.slane %v9405, %v9418
        %v9420 = vcombine.low %v9395, %v9403
        %v9421 = vcombine.high %v9395, %v9403
        %v9423 = vunpack.c.l.s4 1934713408
        %v9424 = vunpack.c.0.s8 %v9423
        %v9425 = vlaneseq
        %v9426 = vshrl.u32 %v9425, 7
        %v9427 = vsub.s32 %v9424, %v9426
        %v9428 = vrot.slane %v9420, %v9427
        %v9430 = vunpack.c.l.s4 1934713408
        %v9431 = vunpack.c.0.s8 %v9430
        %v9432 = vlaneseq
        %v9433 = vshrl.u32 %v9432, 7
        %v9434 = vsub.s32 %v9431, %v9433
        %v9435 = vrot.slane %v9421, %v9434
        %v9436 = vcombine.low %v9412, %v9428
        %v9437 = vcombine.high %v9412, %v9428
        %v9438 = vcombine.low %v9419, %v9435
        %v9439 = vcombine.high %v9419, %v9435
        %9442 = vrot.lane.b32.xlu0 %v9369, 8
        %v9443 = vpop.permute.xlu0 %9442
        %9444 = vrot.lane.b32.xlu0 %v9437, 8
        %v9445 = vpop.permute.xlu0 %9444
        %9450 = vrot.lane.b32.xlu0 %v9370, 16
        %v9451 = vpop.permute.xlu0 %9450
        %9452 = vrot.lane.b32.xlu0 %v9438, 16
        %v9453 = vpop.permute.xlu0 %9452
        %9458 = vrot.lane.b32.xlu0 %v9371, 24
        %v9459 = vpop.permute.xlu0 %9458
        %9460 = vrot.lane.b32.xlu0 %v9439, 24
        %v9461 = vpop.permute.xlu0 %9460
        %v9464 = vsel %vm1417, %v9368, %v9443
        %v9465 = vsel %vm1417, %v9436, %v9445
        %v9466 = vsel %vm1766, %v9464, %v9451
        %v9467 = vsel %vm1766, %v9465, %v9453
        %v9468 = vsel %vm2479, %v9466, %v9459
        %v9469 = vsel %vm2479, %v9467, %v9461
        %v9471 = vsel %vm370, %v9468, 0
        %v9474 = vsel %vm370, %v9469, 0
        %9476 = vmatprep.subr.mxu0 0.0
        %9477 = vmatpush1.msra.mxu0 0.0
        %9478 = vmatprep.subr.mxu0 0.0
        %9479 = vmatpush1.msra.mxu0 0.0
        %9480 = vmatprep.subr.mxu0 0.0
        %9481 = vmatpush1.msra.mxu0 0.0
        %9482 = vmatprep.subr.mxu0 0.0
        %9483 = vmatpush1.msra.mxu0 0.0
        %9484 = vmatprep.subr.mxu0 0.0
        %9485 = vmatpush1.msra.mxu0 0.0
        %9486 = vmatprep.subr.mxu0 0.0
        %9487 = vmatpush1.msra.mxu0 0.0
        %9488 = vmatprep.subr.mxu0 0.0
        %9489 = vmatpush1.msra.mxu0 0.0
        %9490 = vmatprep.subr.mxu0 0.0
        %9491 = vmatpush1.msra.mxu0 0.0
        %9492 = vmatprep.subr.mxu0 0.0
        %9493 = vmatpush1.msra.mxu0 0.0
        %9494 = vmatprep.subr.mxu0 0.0
        %9495 = vmatpush1.msra.mxu0 0.0
        %9496 = vmatprep.subr.mxu0 0.0
        %9497 = vmatpush1.msra.mxu0 0.0
        %9498 = vmatprep.subr.mxu0 0.0
        %9499 = vmatpush1.msra.mxu0 0.0
        %9500 = vmatprep.subr.mxu0 0.0
        %9501 = vmatpush1.msra.mxu0 %v7360
        %9502 = vmatprep.subr.mxu0 0.0
        %9503 = vmatpush1.msra.mxu0 %v7359
        %9504 = vmatprep.subr.mxu0 0.0
        %9505 = vmatpush1.msra.mxu0 %v7358
        %9506 = vmatprep.subr.mxu0 0.0
        %9507 = vmatpush1.msra.mxu0 %v7357
        %9508 = vmatprep.subr.mxu0 0.0
        %9509 = vmatpush2.msra.mxu0 0.0
        %9510 = vmatprep.subr.mxu0 0.0
        %9511 = vmatpush2.msra.mxu0 0.0
        %9512 = vmatprep.subr.mxu0 0.0
        %9513 = vmatpush2.msra.mxu0 0.0
        %9514 = vmatprep.subr.mxu0 0.0
        %9515 = vmatpush2.msra.mxu0 0.0
        %9516 = vmatprep.subr.mxu0 0.0
        %9517 = vmatpush2.msra.mxu0 0.0
        %9518 = vmatprep.subr.mxu0 0.0
        %9519 = vmatpush2.msra.mxu0 0.0
        %9520 = vmatprep.subr.mxu0 0.0
        %9521 = vmatpush2.msra.mxu0 0.0
        %9522 = vmatprep.subr.mxu0 0.0
        %9523 = vmatpush2.msra.mxu0 0.0
        %9524 = vmatprep.subr.mxu0 0.0
        %9525 = vmatpush2.msra.mxu0 0.0
        %9526 = vmatprep.subr.mxu0 0.0
        %9527 = vmatpush2.msra.mxu0 0.0
        %9528 = vmatprep.subr.mxu0 0.0
        %9529 = vmatpush2.msra.mxu0 0.0
        %9530 = vmatprep.subr.mxu0 0.0
        %9531 = vmatpush2.msra.mxu0 0.0
        %9532 = vmatprep.subr.mxu0 0.0
        %9533 = vmatpush2.msra.mxu0 0.0
        %9534 = vmatprep.subr.mxu0 0.0
        %9535 = vmatpush2.msra.mxu0 0.0
        %9536 = vmatprep.subr.mxu0 0.0
        %9537 = vmatpush2.msra.mxu0 0.0
        %9538 = vmatprep.subr.mxu0 0.0
        %9539 = vmatpush2.msra.mxu0 0.0
        %9540 = vmatprep.mubr.f32.mxu0 0.0
        %9541 = vmatmul.mubr.f32.gmra.mxu0 %v9471
        %v9542 = vpop.f32.mrf.mxu0
        %v9543 = vadd.f32 0.0, %v9542
        %v9544 = vpop.f32.mrf.mxu0
        %9545 = vmatprep.mubr.f32.mxu0 0.0
        %9546 = vmatmul.mubr.f32.gmra.mxu0 %v9474
        %v9547 = vpop.f32.mrf.mxu0
        %v9548 = vadd.f32 0.0, %v9547
        %v9549 = vpop.f32.mrf.mxu0
        %9550 = vdwg.mxu0
        %v9551 = vadd.f32 %v7345, %v9543
        %v9552 = vadd.f32 %v7346, %v9548
        %v9553 = vlaneseq
        %v9554 = vshrl.u32 %v9553, 7
        %v9555 = vsub.s32 0, %v9554
        %v9556 = vrot.slane %v7361, %v9555
        %v9557 = vadd.f32 %v9551, %v9556
        %v9558 = vadd.f32 %v9552, %v9556
        %v9559 = vsel %vm370, %v9557, 0.0
        %9560 = vadd.xlane.f32.xlu0 %v9559
        %v9561 = vpop.xlane.xlu0 %9560
        %v9562 = vsel %vm370, %v9558, 0.0
        %9563 = vadd.xlane.f32.xlu0 %v9562
        %v9564 = vpop.xlane.xlu0 %9563
        %v9565 = vmul.f32 %v9561, %v2577
        %v9566 = vmul.f32 %v9564, %v2577
        %v9567 = vsub.f32 %v9557, %v9565
        %v9568 = vsub.f32 %v9558, %v9566
        %v9569 = vmul.f32 %v9567, %v9567
        %v9570 = vmul.f32 %v9568, %v9568
        %v9571 = vsel %vm370, %v9569, 0.0
        %9572 = vadd.xlane.f32.xlu0 %v9571
        %v9573 = vpop.xlane.xlu0 %9572
        %v9574 = vsel %vm370, %v9570, 0.0
        %9575 = vadd.xlane.f32.xlu0 %v9574
        %v9576 = vpop.xlane.xlu0 %9575
        %v9577 = vmul.f32 %v9573, %v2577
        %v9578 = vmul.f32 %v9576, %v2577
        %v9579 = vadd.f32 %v9577, 1e-05
        %v9580 = vadd.f32 %v9578, 1e-05
        %v9581 = vrsqrt.pop %v9579
        %v9582 = vrsqrt.pop %v9580
        %v9583 = vmul.f32 %v9567, %v9581
        %v9584 = vmul.f32 %v9568, %v9582
        %v9585 = vlaneseq
        %v9586 = vshrl.u32 %v9585, 7
        %v9587 = vsub.s32 0, %v9586
        %v9588 = vrot.slane %v7362, %v9587
        %v9589 = vmul.f32 %v9583, %v9588
        %v9590 = vmul.f32 %v9584, %v9588
        %v9591 = vlaneseq
        %v9592 = vshrl.u32 %v9591, 7
        %v9593 = vsub.s32 0, %v9592
        %v9594 = vrot.slane %v7363, %v9593
        %v9595 = vadd.f32 %v9589, %v9594
        %v9596 = vadd.f32 %v9590, %v9594
        %v9597 = vld [vmem:[%s232 + $0x2a0] sm:$0xff]
        %v9598 = vld [vmem:[%s232 + $0x2a8] sm:$0xff]
        %v9599 = vld [vmem:[%s232 + $0x2b0] sm:$0xff]
        %v9600 = vld [vmem:[%s232 + $0x2b8] sm:$0xff]
        %v9601 = vld [vmem:[%s232 + $0x300] sm:$0x1]
        %v9602 = vld [vmem:[%s232 + $0x2c0] sm:$0xff]
        %v9603 = vld [vmem:[%s232 + $0x2c8] sm:$0xff]
        %v9604 = vld [vmem:[%s232 + $0x2d0] sm:$0xff]
        %v9605 = vld [vmem:[%s232 + $0x2d8] sm:$0xff]
        %v9606 = vld [vmem:[%s232 + $0x2e0] sm:$0xff]
        %v9607 = vld [vmem:[%s232 + $0x2e8] sm:$0xff]
        %v9608 = vld [vmem:[%s232 + $0x2f0] sm:$0xff]
        %v9609 = vld [vmem:[%s232 + $0x2f8] sm:$0xff]
        %v9610 = vld [vmem:[%s232 + $0x308] sm:$0x1]
        %v9611 = vld [vmem:[%s232 + $0x310] sm:$0x1]
        %v9612 = vld [vmem:[%s232 + $0x318] sm:$0x1]
        %v9613 = vlaneseq
        %v9614 = vshrl.u32 %v9613, 7
        %v9615 = vsub.s32 0, %v9614
        %v9616 = vrot.slane %v9601, %v9615
        %v9618 = vsel %vm370, %v9595, 0
        %v9621 = vsel %vm370, %v9596, 0
        %9623 = vmatprep.subr.mxu0 0.0
        %9624 = vmatpush1.msra.mxu0 0.0
        %9625 = vmatprep.subr.mxu0 0.0
        %9626 = vmatpush1.msra.mxu0 0.0
        %9627 = vmatprep.subr.mxu0 0.0
        %9628 = vmatpush1.msra.mxu0 0.0
        %9629 = vmatprep.subr.mxu0 0.0
        %9630 = vmatpush1.msra.mxu0 0.0
        %9631 = vmatprep.subr.mxu0 0.0
        %9632 = vmatpush1.msra.mxu0 0.0
        %9633 = vmatprep.subr.mxu0 0.0
        %9634 = vmatpush1.msra.mxu0 0.0
        %9635 = vmatprep.subr.mxu0 0.0
        %9636 = vmatpush1.msra.mxu0 0.0
        %9637 = vmatprep.subr.mxu0 0.0
        %9638 = vmatpush1.msra.mxu0 0.0
        %9639 = vmatprep.subr.mxu0 0.0
        %9640 = vmatpush1.msra.mxu0 0.0
        %9641 = vmatprep.subr.mxu0 0.0
        %9642 = vmatpush1.msra.mxu0 0.0
        %9643 = vmatprep.subr.mxu0 0.0
        %9644 = vmatpush1.msra.mxu0 0.0
        %9645 = vmatprep.subr.mxu0 0.0
        %9646 = vmatpush1.msra.mxu0 0.0
        %9647 = vmatprep.subr.mxu0 0.0
        %9648 = vmatpush1.msra.mxu0 %v9600
        %9649 = vmatprep.subr.mxu0 0.0
        %9650 = vmatpush1.msra.mxu0 %v9599
        %9651 = vmatprep.subr.mxu0 0.0
        %9652 = vmatpush1.msra.mxu0 %v9598
        %9653 = vmatprep.subr.mxu0 0.0
        %9654 = vmatpush1.msra.mxu0 %v9597
        %9655 = vmatprep.subr.mxu0 0.0
        %9656 = vmatpush2.msra.mxu0 0.0
        %9657 = vmatprep.subr.mxu0 0.0
        %9658 = vmatpush2.msra.mxu0 0.0
        %9659 = vmatprep.subr.mxu0 0.0
        %9660 = vmatpush2.msra.mxu0 0.0
        %9661 = vmatprep.subr.mxu0 0.0
        %9662 = vmatpush2.msra.mxu0 0.0
        %9663 = vmatprep.subr.mxu0 0.0
        %9664 = vmatpush2.msra.mxu0 0.0
        %9665 = vmatprep.subr.mxu0 0.0
        %9666 = vmatpush2.msra.mxu0 0.0
        %9667 = vmatprep.subr.mxu0 0.0
        %9668 = vmatpush2.msra.mxu0 0.0
        %9669 = vmatprep.subr.mxu0 0.0
        %9670 = vmatpush2.msra.mxu0 0.0
        %9671 = vmatprep.subr.mxu0 0.0
        %9672 = vmatpush2.msra.mxu0 0.0
        %9673 = vmatprep.subr.mxu0 0.0
        %9674 = vmatpush2.msra.mxu0 0.0
        %9675 = vmatprep.subr.mxu0 0.0
        %9676 = vmatpush2.msra.mxu0 0.0
        %9677 = vmatprep.subr.mxu0 0.0
        %9678 = vmatpush2.msra.mxu0 0.0
        %9679 = vmatprep.subr.mxu0 0.0
        %9680 = vmatpush2.msra.mxu0 0.0
        %9681 = vmatprep.subr.mxu0 0.0
        %9682 = vmatpush2.msra.mxu0 0.0
        %9683 = vmatprep.subr.mxu0 0.0
        %9684 = vmatpush2.msra.mxu0 0.0
        %9685 = vmatprep.subr.mxu0 0.0
        %9686 = vmatpush2.msra.mxu0 0.0
        %9687 = vmatprep.mubr.f32.mxu0 0.0
        %9688 = vmatmul.mubr.f32.gmra.mxu0 %v9618
        %v9689 = vpop.f32.mrf.mxu0
        %v9690 = vadd.f32 %v9616, %v9689
        %v9691 = vpop.f32.mrf.mxu0
        %9692 = vmatprep.mubr.f32.mxu0 0.0
        %9693 = vmatmul.mubr.f32.gmra.mxu0 %v9621
        %v9694 = vpop.f32.mrf.mxu0
        %v9695 = vadd.f32 %v9616, %v9694
        %v9696 = vpop.f32.mrf.mxu0
        %9697 = vdwg.mxu0
        %v9698 = vmax.f32 %v9690, 0.0
        %v9699 = vmax.f32 %v9695, 0.0
        %v9701 = vsel %vm4969, %v9698, 0
        %v9704 = vsel %vm4969, %v9699, 0
        %9706 = vmatprep.subr.mxu0 0.0
        %9707 = vmatpush1.msra.mxu0 0.0
        %9708 = vmatprep.subr.mxu0 0.0
        %9709 = vmatpush1.msra.mxu0 0.0
        %9710 = vmatprep.subr.mxu0 0.0
        %9711 = vmatpush1.msra.mxu0 0.0
        %9712 = vmatprep.subr.mxu0 0.0
        %9713 = vmatpush1.msra.mxu0 0.0
        %9714 = vmatprep.subr.mxu0 0.0
        %9715 = vmatpush1.msra.mxu0 0.0
        %9716 = vmatprep.subr.mxu0 0.0
        %9717 = vmatpush1.msra.mxu0 0.0
        %9718 = vmatprep.subr.mxu0 0.0
        %9719 = vmatpush1.msra.mxu0 0.0
        %9720 = vmatprep.subr.mxu0 0.0
        %9721 = vmatpush1.msra.mxu0 0.0
        %9722 = vmatprep.subr.mxu0 0.0
        %9723 = vmatpush1.msra.mxu0 %v9609
        %9724 = vmatprep.subr.mxu0 0.0
        %9725 = vmatpush1.msra.mxu0 %v9608
        %9726 = vmatprep.subr.mxu0 0.0
        %9727 = vmatpush1.msra.mxu0 %v9607
        %9728 = vmatprep.subr.mxu0 0.0
        %9729 = vmatpush1.msra.mxu0 %v9606
        %9730 = vmatprep.subr.mxu0 0.0
        %9731 = vmatpush1.msra.mxu0 %v9605
        %9732 = vmatprep.subr.mxu0 0.0
        %9733 = vmatpush1.msra.mxu0 %v9604
        %9734 = vmatprep.subr.mxu0 0.0
        %9735 = vmatpush1.msra.mxu0 %v9603
        %9736 = vmatprep.subr.mxu0 0.0
        %9737 = vmatpush1.msra.mxu0 %v9602
        %9738 = vmatprep.subr.mxu0 0.0
        %9739 = vmatpush2.msra.mxu0 0.0
        %9740 = vmatprep.subr.mxu0 0.0
        %9741 = vmatpush2.msra.mxu0 0.0
        %9742 = vmatprep.subr.mxu0 0.0
        %9743 = vmatpush2.msra.mxu0 0.0
        %9744 = vmatprep.subr.mxu0 0.0
        %9745 = vmatpush2.msra.mxu0 0.0
        %9746 = vmatprep.subr.mxu0 0.0
        %9747 = vmatpush2.msra.mxu0 0.0
        %9748 = vmatprep.subr.mxu0 0.0
        %9749 = vmatpush2.msra.mxu0 0.0
        %9750 = vmatprep.subr.mxu0 0.0
        %9751 = vmatpush2.msra.mxu0 0.0
        %9752 = vmatprep.subr.mxu0 0.0
        %9753 = vmatpush2.msra.mxu0 0.0
        %9754 = vmatprep.subr.mxu0 0.0
        %9755 = vmatpush2.msra.mxu0 0.0
        %9756 = vmatprep.subr.mxu0 0.0
        %9757 = vmatpush2.msra.mxu0 0.0
        %9758 = vmatprep.subr.mxu0 0.0
        %9759 = vmatpush2.msra.mxu0 0.0
        %9760 = vmatprep.subr.mxu0 0.0
        %9761 = vmatpush2.msra.mxu0 0.0
        %9762 = vmatprep.subr.mxu0 0.0
        %9763 = vmatpush2.msra.mxu0 0.0
        %9764 = vmatprep.subr.mxu0 0.0
        %9765 = vmatpush2.msra.mxu0 0.0
        %9766 = vmatprep.subr.mxu0 0.0
        %9767 = vmatpush2.msra.mxu0 0.0
        %9768 = vmatprep.subr.mxu0 0.0
        %9769 = vmatpush2.msra.mxu0 0.0
        %9770 = vmatprep.mubr.f32.mxu0 0.0
        %9771 = vmatmul.mubr.f32.gmra.mxu0 %v9701
        %v9772 = vpop.f32.mrf.mxu0
        %v9773 = vadd.f32 0.0, %v9772
        %v9774 = vpop.f32.mrf.mxu0
        %9775 = vmatprep.mubr.f32.mxu0 0.0
        %9776 = vmatmul.mubr.f32.gmra.mxu0 %v9704
        %v9777 = vpop.f32.mrf.mxu0
        %v9778 = vadd.f32 0.0, %v9777
        %v9779 = vpop.f32.mrf.mxu0
        %9780 = vdwg.mxu0
        %v9781 = vadd.f32 %v9595, %v9773
        %v9782 = vadd.f32 %v9596, %v9778
        %v9783 = vlaneseq
        %v9784 = vshrl.u32 %v9783, 7
        %v9785 = vsub.s32 0, %v9784
        %v9786 = vrot.slane %v9610, %v9785
        %v9787 = vadd.f32 %v9781, %v9786
        %v9788 = vadd.f32 %v9782, %v9786
        %v9789 = vsel %vm370, %v9787, 0.0
        %9790 = vadd.xlane.f32.xlu0 %v9789
        %v9791 = vpop.xlane.xlu0 %9790
        %v9792 = vsel %vm370, %v9788, 0.0
        %9793 = vadd.xlane.f32.xlu0 %v9792
        %v9794 = vpop.xlane.xlu0 %9793
        %v9795 = vmul.f32 %v9791, %v2577
        %v9796 = vmul.f32 %v9794, %v2577
        %v9797 = vsub.f32 %v9787, %v9795
        %v9798 = vsub.f32 %v9788, %v9796
        %v9799 = vmul.f32 %v9797, %v9797
        %v9800 = vmul.f32 %v9798, %v9798
        %v9801 = vsel %vm370, %v9799, 0.0
        %9802 = vadd.xlane.f32.xlu0 %v9801
        %v9803 = vpop.xlane.xlu0 %9802
        %v9804 = vsel %vm370, %v9800, 0.0
        %9805 = vadd.xlane.f32.xlu0 %v9804
        %v9806 = vpop.xlane.xlu0 %9805
        %v9807 = vmul.f32 %v9803, %v2577
        %v9808 = vmul.f32 %v9806, %v2577
        %v9809 = vadd.f32 %v9807, 1e-05
        %v9810 = vadd.f32 %v9808, 1e-05
        %v9811 = vrsqrt.pop %v9809
        %v9812 = vrsqrt.pop %v9810
        %v9813 = vmul.f32 %v9797, %v9811
        %v9814 = vmul.f32 %v9798, %v9812
        %v9815 = vlaneseq
        %v9816 = vshrl.u32 %v9815, 7
        %v9817 = vsub.s32 0, %v9816
        %v9818 = vrot.slane %v9611, %v9817
        %v9819 = vmul.f32 %v9813, %v9818
        %v9820 = vmul.f32 %v9814, %v9818
        %v9821 = vlaneseq
        %v9822 = vshrl.u32 %v9821, 7
        %v9823 = vsub.s32 0, %v9822
        %v9824 = vrot.slane %v9612, %v9823
        %v9825 = vadd.f32 %v9819, %v9824
        %v9826 = vadd.f32 %v9820, %v9824
        %9827 = vst.msk [vmem:[%s261] sm:$0xff] %vm370, %v9825
        %9828 = vst.msk [vmem:[%s261 + $0x8] sm:$0xff] %vm370, %v9826
        // Predicated region
        $region57: #{multiattn_model_forward.1} parent=35 // pred_check
          %p9829 = pneg %p262
        $region58: #{multiattn_model_forward.1} parent=35 // pred_check_branch
          %9831 = sbr.rel (%p9829) target = $region60
        $region59: #{multiattn_model_forward.1} parent=35 // pred_region
          %9832 = vst.msk [vmem:[#allocation2] sm:$0xff] %vm370, %v9825
          %9833 = vst.msk [vmem:[#allocation2 + $0x8] sm:$0xff] %vm370, %v9826
        $region60: #{multiattn_model_forward.1} parent=35 // pred_fallthru
          _
        %p9834 = scmp.lt.s32.totalorder %s20, 3
        %s9835 = scalar_select %p9834, %s20, 3
        %s9836 = smul.addr %s9835, 2
        %s9837 = smul.addr %s9836, 8
        %s9838 = scalar_lea.vmem %s4, %s9837
        // Predicated region
        $region61: #{multiattn_model_forward.1} parent=35 // pred_check
          %p9839 = pneg %p127
        $region62: #{multiattn_model_forward.1} parent=35 // pred_check_branch
          %9841 = sbr.rel (%p9839) target = $region64
        $region63: #{multiattn_model_forward.1} parent=35 // pred_region
          _
        $region64: #{multiattn_model_forward.1} parent=35 // pred_fallthru
          _
      $region36: #{multiattn_model_forward.1} parent=5 // pred_fallthru
        _
      %p9842 = scmp.le.s32.totalorder 2, %s15
      // Predicated region
      $region65: #{multiattn_model_forward.1} parent=5 // pred_check
        %p9843 = pneg %p9842
      $region66: #{multiattn_model_forward.1} parent=5 // pred_check_branch
        %9845 = sbr.rel (%p9843) target = $region68
      $region67: #{multiattn_model_forward.1} parent=5 // pred_region
        %s9846 = ssub.s32 %s15, 2
        // Predicated region
        $region69: #{multiattn_model_forward.1} parent=67 // pred_check
          %p9847 = pneg %p133
        $region70: #{multiattn_model_forward.1} parent=67 // pred_check_branch
          %9849 = sbr.rel (%p9847) target = $region72
        $region71: #{multiattn_model_forward.1} parent=67 // pred_region
          %p9850 = scmp.lt.s32.totalorder %s21, 3
          %s9851 = scalar_select %p9850, %s21, 3
          %s9852 = smul.addr %s9851, 2
          %s9853 = smul.addr %s9852, 8
          %s9854 = scalar_lea.vmem %s4, %s9853
        $region72: #{multiattn_model_forward.1} parent=67 // pred_fallthru
          _
      $region68: #{multiattn_model_forward.1} parent=5 // pred_fallthru
        _
    $region6: #{multiattn_model_forward.1} parent=1 // loop_footer
      %s19 = sadd.s32 1, %s15
    $region7: #{multiattn_model_forward.1} parent=1 // loop_footer_branch
      %14 = sbr.rel target = $region3
    $region8: #{multiattn_model_forward.1} parent=1 // loop_exit
      _
    %9855 = vsyncpa [#allocation4], 1
    %s9856 = scalar_lea.sflag [#allocation4], 1
    %9857 = vsyncpa %s9856, 1
    %9858 = vsyncpa [#allocation6], 1
    %9859 = vsyncpa [#allocation9], 1
    %s9860 = scalar_lea.sflag [#allocation9], 1
    %9861 = vsyncpa %s9860, 1

</llo_original>
